<compile_context>
chip_gen: v5e
topology: v5e:2x2
jax: 0.10.0
libtpu: 0.0.40
codegen_flags: <defaults>
</compile_context>

<pallas_src>
import functools

import jax
import jax.numpy as jnp
from jax import lax
from jax.experimental import pallas as pl
from jax.experimental.pallas import tpu as pltpu


def _round_up(x, m):
    return (x + m - 1) // m * m


def _pad_gate_cols(w, h, hp):
    """Pad an LSTM (in, 4h) weight/bias to (in, 4hp), zero-padding each gate block."""
    if h == hp:
        return w
    parts = [jnp.pad(w[:, k * h:(k + 1) * h], ((0, 0), (0, hp - h))) for k in range(4)]
    return jnp.concatenate(parts, axis=1)


def _pad_rows(w, h, hp):
    if h == hp:
        return w
    return jnp.pad(w, ((0, hp - h), (0, 0)))


def _vmem_limit_bytes():
    """96 MiB on v5e/v6e (128 MiB physical VMEM); conservative 48 MiB otherwise (v7x: 64 MiB)."""
    try:
        kind = jax.devices()[0].device_kind.lower()
    except Exception:
        kind = ""
    if ("v5 lite" in kind) or ("v5e" in kind) or ("v6" in kind):
        return 96 * 1024 * 1024
    return 48 * 1024 * 1024


def elmo_kernel(x_ref, wih1_ref, whh1_ref, b1_ref,
                wih2_ref, whh2_ref, b2_ref,
                wlin_ref, blin_ref,
                out_ref,
                xg_ref, h12_ref,
                *, B, T, H):
    """Grid: (num_v_tiles,) ["arbitrary"].  The LSTM recurrence runs on V-tile 0 only;
    the (T*B, 2H) bf16 h-sequence persists in VMEM scratch across the V tiles."""
    wd = wih1_ref.dtype          # MXU compute dtype (bf16); accumulation stays f32.
    rows = T * B

    @pl.when(pl.program_id(0) == 0)
    def _recurrence():
        # Layer-1 input projection hoisted out of the time loop: (T*B, E) @ (E, 4H) + b.
        xg_ref[...] = (
            jnp.dot(x_ref[...], wih1_ref[...], preferred_element_type=jnp.float32)
            + b1_ref[...])

        whh1 = whh1_ref[...]
        whh2 = whh2_ref[...]

        def cell(pre, h, c, whh):
            # pre already holds x_t @ W_ih + b; only the recurrent matmul stays per-step.
            gates = pre + jnp.dot(h.astype(wd), whh, preferred_element_type=jnp.float32)
            i = jax.nn.sigmoid(gates[:, 0 * H:1 * H])   # H is a multiple of 128 ->
            f = jax.nn.sigmoid(gates[:, 1 * H:2 * H])   # lane-aligned gate slices
            g = jnp.tanh(gates[:, 2 * H:3 * H])
            o = jax.nn.sigmoid(gates[:, 3 * H:4 * H])
            c_new = f * c + i * g                       # gate math stays f32 (v5e: no bf16 VPU/EUP)
            h_new = o * jnp.tanh(c_new)
            return h_new, c_new

        z = jnp.zeros((B, H), jnp.float32)
        unroll = min(T, 8)   # bounded unroll: LLO visibility without vreg/compile blowup

        # TODO(synk): if profiling shows the recurrence (not the GEMMs) dominates,
        # interleave layer-2 step t with layer-1 step t+1 in one loop to hide latency.
        def step1(t, carry):
            h, c = carry
            r = pl.multiple_of(t * B, 8)                # B padded to a multiple of 8
            h, c = cell(xg_ref[pl.ds(r, B), :], h, c, whh1)
            h12_ref[pl.ds(r, B), pl.ds(0, H)] = h.astype(h12_ref.dtype)
            return (h, c)

        lax.fori_loop(0, T, step1, (z, z), unroll=unroll)

        # Layer-2 input projection over the whole stored (bf16) h1 sequence.
        xg_ref[...] = (
            jnp.dot(h12_ref[pl.ds(0, rows), pl.ds(0, H)], wih2_ref[...],
                    preferred_element_type=jnp.float32)
            + b2_ref[...])

        def step2(t, carry):
            h, c = carry
            r = pl.multiple_of(t * B, 8)
            h, c = cell(xg_ref[pl.ds(r, B), :], h, c, whh2)
            h12_ref[pl.ds(r, B), pl.ds(H, H)] = h.astype(h12_ref.dtype)
            return (h, c)

        lax.fori_loop(0, T, step2, (z, z), unroll=unroll)

    # Output projection for this V tile: a single K=2H GEMM against the original w_lin.
    # The (., 2H) concat IS the scratch layout -- no concat, no partial-sum add.
    out_ref[...] = (
        jnp.dot(h12_ref[...], wlin_ref[...], preferred_element_type=jnp.float32)
        + blin_ref[...]).astype(out_ref.dtype)


def elmo_pallas(embedded, w_ih1, w_hh1, b1, w_ih2, w_hh2, b2, w_lin, b_lin,
                *, weight_dtype=jnp.bfloat16, out_dtype=jnp.float32, tile_v=None):
    B, T, E = embedded.shape
    H = w_hh1.shape[0]
    V = w_lin.shape[1]

    # (8,128)-grain padding: H -> multiple of 128 (gate-blocked zero padding keeps padded
    # hidden units exactly 0 -> math unchanged), B -> multiple of 8 (sublane grain).
    Hp = _round_up(H, 128)
    Bp = _round_up(B, 8)
    rows = T * Bp

    vmem_limit = _vmem_limit_bytes()
    budget = int(vmem_limit * 0.85)

    # --- choose the widest lane-dense vocab tile that fits the VMEM budget ---
    if tile_v is None:
        cap = min(_round_up(V, 128), 2048)
        fixed = (2 * rows * E * 2                            # x (bf16, worst case 2-buffered)
                 + 2 * (E + 3 * Hp) * 4 * Hp * 2             # LSTM weights (bf16)
                 + 2 * 2 * 4 * Hp * 4                        # LSTM biases (f32)
                 + rows * 4 * Hp * 4                         # xg scratch (f32)
                 + rows * 2 * Hp * 2)                        # h12 scratch (bf16)
        tile_v = 128
        t = 128
        while t <= cap:
            per_tile = (2 * rows * t * 4                     # output block (2-buffered, f32)
                        + 2 * 2 * Hp * t * 2                 # w_lin tile (2-buffered, bf16)
                        + 2 * t * 4)                         # b_lin tile
            if fixed + per_tile <= budget:
                tile_v = t
            t += 128
    assert tile_v % 128 == 0, "vocab tile must be lane-dense (multiple of 128)"
    Vp = _round_up(V, tile_v)
    num_v_tiles = Vp // tile_v

    # --- time-major, flattened input: row r = t*Bp + b -> contiguous per-step windows ---
    if Bp != B:
        embedded = jnp.pad(embedded, ((0, Bp - B), (0, 0), (0, 0)))
    x2d = jnp.swapaxes(embedded, 0, 1).reshape(rows, E).astype(weight_dtype)

    # --- pad / cast weights (gate-blocked H padding, V padded to the tile) ---
    wih1p = _pad_gate_cols(w_ih1, H, Hp).astype(weight_dtype)                    # (E, 4Hp)
    whh1p = _pad_rows(_pad_gate_cols(w_hh1, H, Hp), H, Hp).astype(weight_dtype)  # (Hp, 4Hp)
    b1p = _pad_gate_cols(b1, H, Hp).astype(jnp.float32)                          # (1, 4Hp)
    wih2p = _pad_rows(_pad_gate_cols(w_ih2, H, Hp), H, Hp).astype(weight_dtype)
    whh2p = _pad_rows(_pad_gate_cols(w_hh2, H, Hp), H, Hp).astype(weight_dtype)
    b2p = _pad_gate_cols(b2, H, Hp).astype(jnp.float32)
    wlinp = jnp.zeros((2 * Hp, Vp), jnp.float32)
    wlinp = wlinp.at[:H, :V].set(w_lin[:H, :]).at[Hp:Hp + H, :V].set(w_lin[H:, :])
    wlinp = wlinp.astype(weight_dtype)
    blinp = jnp.pad(b_lin, ((0, 0), (0, Vp - V))).astype(jnp.float32)

    args = (x2d, wih1p, whh1p, b1p, wih2p, whh2p, b2p, wlinp, blinp)

    def build(single_buffer_invariants):
        def inv(shape):
            # Grid-invariant blocks: single-buffer so the default 2-deep pipelining does
            # not double their VMEM footprint (the reclaimed VMEM funds a wider tile_v).
            if single_buffer_invariants:
                return pl.BlockSpec(shape, lambda j: (0, 0), pipeline_mode=pl.Buffered(1))
            return pl.BlockSpec(shape, lambda j: (0, 0))

        grid_spec = pltpu.PrefetchScalarGridSpec(
            num_scalar_prefetch=0,
            grid=(num_v_tiles,),
            in_specs=[
                inv((rows, E)),                                   # x (time-major, flat)
                inv((E, 4 * Hp)),                                 # w_ih1
                inv((Hp, 4 * Hp)),                                # w_hh1
                inv((1, 4 * Hp)),                                 # b1
                inv((Hp, 4 * Hp)),                                # w_ih2
                inv((Hp, 4 * Hp)),                                # w_hh2
                inv((1, 4 * Hp)),                                 # b2
                pl.BlockSpec((2 * Hp, tile_v), lambda j: (0, j)),  # w_lin, V-tiled
                pl.BlockSpec((1, tile_v), lambda j: (0, j)),       # b_lin, V-tiled
            ],
            out_specs=pl.BlockSpec((rows, tile_v), lambda j: (0, j)),
            scratch_shapes=[
                pltpu.VMEM((rows, 4 * Hp), jnp.float32),          # pre-gate buffer (L1/L2 reuse)
                pltpu.VMEM((rows, 2 * Hp), weight_dtype),         # h1|h2 sequence (bf16), persists
            ],
        )
        return pl.pallas_call(
            functools.partial(elmo_kernel, B=Bp, T=T, H=Hp),
            out_shape=jax.ShapeDtypeStruct((rows, Vp), out_dtype),
            grid_spec=grid_spec,
            compiler_params=pltpu.CompilerParams(
                # V axis must be "arbitrary": the recurrence runs on V-tile 0 only and its
                # h-sequence persists in VMEM scratch across the remaining tiles.
                dimension_semantics=("arbitrary",),
                vmem_limit_bytes=vmem_limit,
            ),
        )

    # TODO(synk): for v7x (64 MiB VMEM, 2 TensorCores) at production T*B, add a row-tiled
    # output grid axis (out block (tm, tile_v)) plus a leading "parallel" batch-tile axis
    # so each core runs an independent batch slice of the recurrence.
    try:
        out2d = build(True)(*args)
        out2d.block_until_ready()
    except Exception:
        # pipeline_mode=pl.Buffered(1) not supported by this JAX build -> default buffering.
        out2d = build(False)(*args)

    out = out2d.reshape(T, Bp, Vp)[:, :B, :V]
    return jnp.swapaxes(out, 0, 1)


def elmo_forward(token_ids, params, mode):
    """Mirrors ELMo.forward(input_data, mode)."""
    emb = jnp.take(params["embedding"], token_ids, axis=0)   # nn.Embedding lookup (glue)
    p = params["mode1"] if mode == 1 else params["mode2"]
    return elmo_pallas(emb, p["w_ih1"], p["w_hh1"], p["b1"],
                       p["w_ih2"], p["w_hh2"], p["b2"],
                       p["w_lin"], p["b_lin"])


def elmo_reference(token_ids, params, mode):
    """Pure-JAX f32 reference (same math, no Pallas) for the correctness check."""
    emb = jnp.take(params["embedding"], token_ids, axis=0)
    p = params["mode1"] if mode == 1 else params["mode2"]
    B, T, _ = emb.shape
    H = p["w_hh1"].shape[0]

    def cell(x_t, h, c, wih, whh, b):
        gates = x_t @ wih + h @ whh + b
        i = jax.nn.sigmoid(gates[:, 0 * H:1 * H])
        f = jax.nn.sigmoid(gates[:, 1 * H:2 * H])
        g = jnp.tanh(gates[:, 2 * H:3 * H])
        o = jax.nn.sigmoid(gates[:, 3 * H:4 * H])
        c = f * c + i * g
        return o * jnp.tanh(c), c

    h1 = c1 = h2 = c2 = jnp.zeros((B, H), jnp.float32)
    outs = []
    for t in range(T):
        h1, c1 = cell(emb[:, t, :], h1, c1, p["w_ih1"], p["w_hh1"], p["b1"])
        h2, c2 = cell(h1, h2, c2, p["w_ih2"], p["w_hh2"], p["b2"])
        outs.append(jnp.concatenate([h1, h2], axis=-1) @ p["w_lin"] + p["b_lin"])
    return jnp.stack(outs, axis=1)


def make_params(key, vocab_size, embedding_dim, hidden_dim):
    ks = jax.random.split(key, 17)
    s = 0.1  # keep activations in a well-conditioned range

    def lstm(k0, k1, k2, in_dim):
        return (s * jax.random.normal(k0, (in_dim, 4 * hidden_dim), jnp.float32),
                s * jax.random.normal(k1, (hidden_dim, 4 * hidden_dim), jnp.float32),
                s * jax.random.normal(k2, (1, 4 * hidden_dim), jnp.float32))

    def mode_params(koff):
        w_ih1, w_hh1, b1 = lstm(ks[koff + 0], ks[koff + 1], ks[koff + 2], embedding_dim)
        w_ih2, w_hh2, b2 = lstm(ks[koff + 3], ks[koff + 4], ks[koff + 5], hidden_dim)
        w_lin = s * jax.random.normal(ks[koff + 6], (2 * hidden_dim, vocab_size), jnp.float32)
        b_lin = s * jax.random.normal(ks[koff + 7], (1, vocab_size), jnp.float32)
        return dict(w_ih1=w_ih1, w_hh1=w_hh1, b1=b1,
                    w_ih2=w_ih2, w_hh2=w_hh2, b2=b2,
                    w_lin=w_lin, b_lin=b_lin)

    # NOTE: the PyTorch module builds the embedding matrix as zeros; we use random
    # values so the kernel exercises non-trivial data (shapes are what matter).
    embedding = s * jax.random.normal(ks[16], (vocab_size, embedding_dim), jnp.float32)
    return dict(embedding=embedding, mode1=mode_params(0), mode2=mode_params(8))


if __name__ == "__main__":
    B, T = 2, 8
    vocab_size, embedding_dim, hidden_dim = 256, 32, 32

    key = jax.random.PRNGKey(0)
    k_tok, k_par = jax.random.split(key)
    params = make_params(k_par, vocab_size, embedding_dim, hidden_dim)
    token_ids = jax.random.randint(k_tok, (B, T), 0, vocab_size, dtype=jnp.int32)

    ok = True
    for mode in (1, 2):
        out = jax.block_until_ready(elmo_forward(token_ids, params, mode))
        ref = elmo_reference(token_ids, params, mode)
        assert out.shape == (B, T, vocab_size)
        # bf16 weights with f32 accumulation vs f32 reference: 2e-2 has ample margin at T=8.
        if not jnp.allclose(out, ref, atol=2e-2, rtol=2e-2):
            ok = False

    if ok:
        print("KERNEL_OK")
</pallas_src>

<mosaic_0001>
module attributes {stable_mosaic.version = 11 : i64} {
  func.func @elmo_kernel(%arg0: i32, %arg1: memref<64x32xbf16, #tpu.memory_space<vmem>>, %arg2: memref<32x512xbf16, #tpu.memory_space<vmem>>, %arg3: memref<128x512xbf16, #tpu.memory_space<vmem>>, %arg4: memref<1x512xf32, #tpu.memory_space<vmem>>, %arg5: memref<128x512xbf16, #tpu.memory_space<vmem>>, %arg6: memref<128x512xbf16, #tpu.memory_space<vmem>>, %arg7: memref<1x512xf32, #tpu.memory_space<vmem>>, %arg8: memref<256x256xbf16, #tpu.memory_space<vmem>>, %arg9: memref<1x256xf32, #tpu.memory_space<vmem>>, %arg10: memref<64x256xf32, #tpu.memory_space<vmem>>, %arg11: memref<64x512xf32, #tpu.memory_space<vmem>>, %arg12: memref<64x256xbf16, #tpu.memory_space<vmem>>) attributes {dimension_semantics = [#tpu.dimension_semantics<arbitrary>], iteration_bounds = array<i64: 1>, scalar_prefetch = 0 : i64, scratch_operands = 2 : i64, tpu.core_type = #tpu.core_type<tc>, window_params = [{pipeline_mode = #tpu.pipeline_mode<synchronous>, transform_indices = @transform_0, window_bounds = array<i64: 64, 32>}, {pipeline_mode = #tpu.pipeline_mode<synchronous>, transform_indices = @transform_1, window_bounds = array<i64: 32, 512>}, {pipeline_mode = #tpu.pipeline_mode<synchronous>, transform_indices = @transform_2, window_bounds = array<i64: 128, 512>}, {pipeline_mode = #tpu.pipeline_mode<synchronous>, transform_indices = @transform_3, window_bounds = array<i64: 1, 512>}, {pipeline_mode = #tpu.pipeline_mode<synchronous>, transform_indices = @transform_4, window_bounds = array<i64: 128, 512>}, {pipeline_mode = #tpu.pipeline_mode<synchronous>, transform_indices = @transform_5, window_bounds = array<i64: 128, 512>}, {pipeline_mode = #tpu.pipeline_mode<synchronous>, transform_indices = @transform_6, window_bounds = array<i64: 1, 512>}, {transform_indices = @transform_7, window_bounds = array<i64: 256, 256>}, {transform_indices = @transform_8, window_bounds = array<i64: 1, 256>}, {transform_indices = @transform_9, window_bounds = array<i64: 64, 256>}]} {
    %c0_i32 = arith.constant 0 : i32
    %0 = arith.cmpi eq, %arg0, %c0_i32 : i32
    %1 = arith.extui %0 : i1 to i32
    %c0_i32_0 = arith.constant 0 : i32
    %2 = arith.cmpi ne, %1, %c0_i32_0 : i32
    scf.if %2 {
      %c0_8 = arith.constant 0 : index
      %c0_9 = arith.constant 0 : index
      %10 = vector.load %arg1[%c0_8, %c0_9] : memref<64x32xbf16, #tpu.memory_space<vmem>>, vector<64x32xbf16>
      %c0_10 = arith.constant 0 : index
      %c0_11 = arith.constant 0 : index
      %11 = vector.load %arg2[%c0_10, %c0_11] : memref<32x512xbf16, #tpu.memory_space<vmem>>, vector<32x512xbf16>
      %cst_12 = arith.constant dense<0.000000e+00> : vector<64x512xf32>
      %12 = tpu.matmul %10, %11, %cst_12 {dimension_numbers = #tpu.dot_dimension_numbers<[1], [0], [0], [1], [0, 0, 1, 1], [], []>} : vector<64x32xbf16>, vector<32x512xbf16>, vector<64x512xf32> -> vector<64x512xf32>
      %c0_13 = arith.constant 0 : index
      %c0_14 = arith.constant 0 : index
      %13 = vector.load %arg4[%c0_13, %c0_14] : memref<1x512xf32, #tpu.memory_space<vmem>>, vector<1x512xf32>
      %14 = vector.broadcast %13 : vector<1x512xf32> to vector<64x512xf32>
      %15 = arith.addf %12, %14 : vector<64x512xf32>
      %c0_15 = arith.constant 0 : index
      %c0_16 = arith.constant 0 : index
      %16 = vector.load %arg11[%c0_15, %c0_16] : memref<64x512xf32, #tpu.memory_space<vmem>>, vector<64x512xf32>
      tpu.vector_store %arg11[%c0_15, %c0_16], %15 {strides = array<i32>} : memref<64x512xf32, #tpu.memory_space<vmem>>, vector<64x512xf32>,
      %c0_17 = arith.constant 0 : index
      %c0_18 = arith.constant 0 : index
      %17 = vector.load %arg3[%c0_17, %c0_18] : memref<128x512xbf16, #tpu.memory_space<vmem>>, vector<128x512xbf16>
      %c0_19 = arith.constant 0 : index
      %c0_20 = arith.constant 0 : index
      %18 = vector.load %arg6[%c0_19, %c0_20] : memref<128x512xbf16, #tpu.memory_space<vmem>>, vector<128x512xbf16>
      %cst_21 = arith.constant 0.000000e+00 : f32
      %19 = vector.broadcast %cst_21 : f32 to vector<8x128xf32>
      %c0_i32_22 = arith.constant 0 : i32
      %c8_i32 = arith.constant 8 : i32
      %20 = arith.muli %c0_i32_22, %c8_i32 : i32
      %21 = tpu.assume_multiple %20, 8 : i32
      %22 = arith.index_cast %21 : i32 to index
      %c0_23 = arith.constant 0 : index
      %23 = vector.load %arg11[%22, %c0_23] : memref<64x512xf32, #tpu.memory_space<vmem>>, vector<8x512xf32>
      %24 = arith.truncf %19 : vector<8x128xf32> to vector<8x128xbf16>
      %cst_24 = arith.constant dense<0.000000e+00> : vector<8x512xf32>
      %25 = tpu.matmul %24, %17, %cst_24 {dimension_numbers = #tpu.dot_dimension_numbers<[1], [0], [0], [1], [0, 0, 1, 1], [], []>} : vector<8x128xbf16>, vector<128x512xbf16>, vector<8x512xf32> -> vector<8x512xf32>
      %26 = arith.addf %23, %25 : vector<8x512xf32>
      %27 = vector.extract_strided_slice %26 {offsets = [0, 0], sizes = [8, 128], strides = [1, 1]} : vector<8x512xf32> to vector<8x128xf32>
      %28 = arith.negf %27 : vector<8x128xf32>
      %29 = math.exp %28 : vector<8x128xf32>
      %cst_25 = arith.constant 1.000000e+00 : f32
      %30 = vector.broadcast %cst_25 : f32 to vector<8x128xf32>
      %31 = arith.addf %30, %29 : vector<8x128xf32>
      %32 = arith.divf %30, %31 : vector<8x128xf32>
      %33 = vector.extract_strided_slice %26 {offsets = [0, 128], sizes = [8, 128], strides = [1, 1]} : vector<8x512xf32> to vector<8x128xf32>
      %34 = arith.negf %33 : vector<8x128xf32>
      %35 = math.exp %34 : vector<8x128xf32>
      %cst_26 = arith.constant 1.000000e+00 : f32
      %36 = vector.broadcast %cst_26 : f32 to vector<8x128xf32>
      %37 = arith.addf %36, %35 : vector<8x128xf32>
      %38 = arith.divf %36, %37 : vector<8x128xf32>
      %39 = vector.extract_strided_slice %26 {offsets = [0, 256], sizes = [8, 128], strides = [1, 1]} : vector<8x512xf32> to vector<8x128xf32>
      %40 = math.tanh %39 : vector<8x128xf32>
      %41 = vector.extract_strided_slice %26 {offsets = [0, 384], sizes = [8, 128], strides = [1, 1]} : vector<8x512xf32> to vector<8x128xf32>
      %42 = arith.negf %41 : vector<8x128xf32>
      %43 = math.exp %42 : vector<8x128xf32>
      %cst_27 = arith.constant 1.000000e+00 : f32
      %44 = vector.broadcast %cst_27 : f32 to vector<8x128xf32>
      %45 = arith.addf %44, %43 : vector<8x128xf32>
      %46 = arith.divf %44, %45 : vector<8x128xf32>
      %47 = arith.mulf %38, %19 : vector<8x128xf32>
      %48 = arith.mulf %32, %40 : vector<8x128xf32>
      %49 = arith.addf %47, %48 : vector<8x128xf32>
      %50 = math.tanh %49 : vector<8x128xf32>
      %51 = arith.mulf %46, %50 : vector<8x128xf32>
      %52 = arith.truncf %51 : vector<8x128xf32> to vector<8x128xbf16>
      %53 = arith.index_cast %21 : i32 to index
      %c0_28 = arith.constant 0 : index
      %54 = vector.load %arg12[%53, %c0_28] : memref<64x256xbf16, #tpu.memory_space<vmem>>, vector<8x128xbf16>
      tpu.vector_store %arg12[%53, %c0_28], %52 {strides = array<i32>} : memref<64x256xbf16, #tpu.memory_space<vmem>>, vector<8x128xbf16>,
      %c1_i32 = arith.constant 1 : i32
      %c8_i32_29 = arith.constant 8 : i32
      %55 = arith.muli %c1_i32, %c8_i32_29 : i32
      %56 = tpu.assume_multiple %55, 8 : i32
      %57 = arith.index_cast %56 : i32 to index
      %c0_30 = arith.constant 0 : index
      %58 = vector.load %arg11[%57, %c0_30] : memref<64x512xf32, #tpu.memory_space<vmem>>, vector<8x512xf32>
      %59 = arith.truncf %51 : vector<8x128xf32> to vector<8x128xbf16>
      %cst_31 = arith.constant dense<0.000000e+00> : vector<8x512xf32>
      %60 = tpu.matmul %59, %17, %cst_31 {dimension_numbers = #tpu.dot_dimension_numbers<[1], [0], [0], [1], [0, 0, 1, 1], [], []>} : vector<8x128xbf16>, vector<128x512xbf16>, vector<8x512xf32> -> vector<8x512xf32>
      %61 = arith.addf %58, %60 : vector<8x512xf32>
      %62 = vector.extract_strided_slice %61 {offsets = [0, 0], sizes = [8, 128], strides = [1, 1]} : vector<8x512xf32> to vector<8x128xf32>
      %63 = arith.negf %62 : vector<8x128xf32>
      %64 = math.exp %63 : vector<8x128xf32>
      %cst_32 = arith.constant 1.000000e+00 : f32
      %65 = vector.broadcast %cst_32 : f32 to vector<8x128xf32>
      %66 = arith.addf %65, %64 : vector<8x128xf32>
      %67 = arith.divf %65, %66 : vector<8x128xf32>
      %68 = vector.extract_strided_slice %61 {offsets = [0, 128], sizes = [8, 128], strides = [1, 1]} : vector<8x512xf32> to vector<8x128xf32>
      %69 = arith.negf %68 : vector<8x128xf32>
      %70 = math.exp %69 : vector<8x128xf32>
      %cst_33 = arith.constant 1.000000e+00 : f32
      %71 = vector.broadcast %cst_33 : f32 to vector<8x128xf32>
      %72 = arith.addf %71, %70 : vector<8x128xf32>
      %73 = arith.divf %71, %72 : vector<8x128xf32>
      %74 = vector.extract_strided_slice %61 {offsets = [0, 256], sizes = [8, 128], strides = [1, 1]} : vector<8x512xf32> to vector<8x128xf32>
      %75 = math.tanh %74 : vector<8x128xf32>
      %76 = vector.extract_strided_slice %61 {offsets = [0, 384], sizes = [8, 128], strides = [1, 1]} : vector<8x512xf32> to vector<8x128xf32>
      %77 = arith.negf %76 : vector<8x128xf32>
      %78 = math.exp %77 : vector<8x128xf32>
      %cst_34 = arith.constant 1.000000e+00 : f32
      %79 = vector.broadcast %cst_34 : f32 to vector<8x128xf32>
      %80 = arith.addf %79, %78 : vector<8x128xf32>
      %81 = arith.divf %79, %80 : vector<8x128xf32>
      %82 = arith.mulf %73, %49 : vector<8x128xf32>
      %83 = arith.mulf %67, %75 : vector<8x128xf32>
      %84 = arith.addf %82, %83 : vector<8x128xf32>
      %85 = math.tanh %84 : vector<8x128xf32>
      %86 = arith.mulf %81, %85 : vector<8x128xf32>
      %87 = arith.truncf %86 : vector<8x128xf32> to vector<8x128xbf16>
      %88 = arith.index_cast %56 : i32 to index
      %c0_35 = arith.constant 0 : index
      %89 = vector.load %arg12[%88, %c0_35] : memref<64x256xbf16, #tpu.memory_space<vmem>>, vector<8x128xbf16>
      tpu.vector_store %arg12[%88, %c0_35], %87 {strides = array<i32>} : memref<64x256xbf16, #tpu.memory_space<vmem>>, vector<8x128xbf16>,
      %c2_i32 = arith.constant 2 : i32
      %c8_i32_36 = arith.constant 8 : i32
      %90 = arith.muli %c2_i32, %c8_i32_36 : i32
      %91 = tpu.assume_multiple %90, 8 : i32
      %92 = arith.index_cast %91 : i32 to index
      %c0_37 = arith.constant 0 : index
      %93 = vector.load %arg11[%92, %c0_37] : memref<64x512xf32, #tpu.memory_space<vmem>>, vector<8x512xf32>
      %94 = arith.truncf %86 : vector<8x128xf32> to vector<8x128xbf16>
      %cst_38 = arith.constant dense<0.000000e+00> : vector<8x512xf32>
      %95 = tpu.matmul %94, %17, %cst_38 {dimension_numbers = #tpu.dot_dimension_numbers<[1], [0], [0], [1], [0, 0, 1, 1], [], []>} : vector<8x128xbf16>, vector<128x512xbf16>, vector<8x512xf32> -> vector<8x512xf32>
      %96 = arith.addf %93, %95 : vector<8x512xf32>
      %97 = vector.extract_strided_slice %96 {offsets = [0, 0], sizes = [8, 128], strides = [1, 1]} : vector<8x512xf32> to vector<8x128xf32>
      %98 = arith.negf %97 : vector<8x128xf32>
      %99 = math.exp %98 : vector<8x128xf32>
      %cst_39 = arith.constant 1.000000e+00 : f32
      %100 = vector.broadcast %cst_39 : f32 to vector<8x128xf32>
      %101 = arith.addf %100, %99 : vector<8x128xf32>
      %102 = arith.divf %100, %101 : vector<8x128xf32>
      %103 = vector.extract_strided_slice %96 {offsets = [0, 128], sizes = [8, 128], strides = [1, 1]} : vector<8x512xf32> to vector<8x128xf32>
      %104 = arith.negf %103 : vector<8x128xf32>
      %105 = math.exp %104 : vector<8x128xf32>
      %cst_40 = arith.constant 1.000000e+00 : f32
      %106 = vector.broadcast %cst_40 : f32 to vector<8x128xf32>
      %107 = arith.addf %106, %105 : vector<8x128xf32>
      %108 = arith.divf %106, %107 : vector<8x128xf32>
      %109 = vector.extract_strided_slice %96 {offsets = [0, 256], sizes = [8, 128], strides = [1, 1]} : vector<8x512xf32> to vector<8x128xf32>
      %110 = math.tanh %109 : vector<8x128xf32>
      %111 = vector.extract_strided_slice %96 {offsets = [0, 384], sizes = [8, 128], strides = [1, 1]} : vector<8x512xf32> to vector<8x128xf32>
      %112 = arith.negf %111 : vector<8x128xf32>
      %113 = math.exp %112 : vector<8x128xf32>
      %cst_41 = arith.constant 1.000000e+00 : f32
      %114 = vector.broadcast %cst_41 : f32 to vector<8x128xf32>
      %115 = arith.addf %114, %113 : vector<8x128xf32>
      %116 = arith.divf %114, %115 : vector<8x128xf32>
      %117 = arith.mulf %108, %84 : vector<8x128xf32>
      %118 = arith.mulf %102, %110 : vector<8x128xf32>
      %119 = arith.addf %117, %118 : vector<8x128xf32>
      %120 = math.tanh %119 : vector<8x128xf32>
      %121 = arith.mulf %116, %120 : vector<8x128xf32>
      %122 = arith.truncf %121 : vector<8x128xf32> to vector<8x128xbf16>
      %123 = arith.index_cast %91 : i32 to index
      %c0_42 = arith.constant 0 : index
      %124 = vector.load %arg12[%123, %c0_42] : memref<64x256xbf16, #tpu.memory_space<vmem>>, vector<8x128xbf16>
      tpu.vector_store %arg12[%123, %c0_42], %122 {strides = array<i32>} : memref<64x256xbf16, #tpu.memory_space<vmem>>, vector<8x128xbf16>,
      %c3_i32 = arith.constant 3 : i32
      %c8_i32_43 = arith.constant 8 : i32
      %125 = arith.muli %c3_i32, %c8_i32_43 : i32
      %126 = tpu.assume_multiple %125, 8 : i32
      %127 = arith.index_cast %126 : i32 to index
      %c0_44 = arith.constant 0 : index
      %128 = vector.load %arg11[%127, %c0_44] : memref<64x512xf32, #tpu.memory_space<vmem>>, vector<8x512xf32>
      %129 = arith.truncf %121 : vector<8x128xf32> to vector<8x128xbf16>
      %cst_45 = arith.constant dense<0.000000e+00> : vector<8x512xf32>
      %130 = tpu.matmul %129, %17, %cst_45 {dimension_numbers = #tpu.dot_dimension_numbers<[1], [0], [0], [1], [0, 0, 1, 1], [], []>} : vector<8x128xbf16>, vector<128x512xbf16>, vector<8x512xf32> -> vector<8x512xf32>
      %131 = arith.addf %128, %130 : vector<8x512xf32>
      %132 = vector.extract_strided_slice %131 {offsets = [0, 0], sizes = [8, 128], strides = [1, 1]} : vector<8x512xf32> to vector<8x128xf32>
      %133 = arith.negf %132 : vector<8x128xf32>
      %134 = math.exp %133 : vector<8x128xf32>
      %cst_46 = arith.constant 1.000000e+00 : f32
      %135 = vector.broadcast %cst_46 : f32 to vector<8x128xf32>
      %136 = arith.addf %135, %134 : vector<8x128xf32>
      %137 = arith.divf %135, %136 : vector<8x128xf32>
      %138 = vector.extract_strided_slice %131 {offsets = [0, 128], sizes = [8, 128], strides = [1, 1]} : vector<8x512xf32> to vector<8x128xf32>
      %139 = arith.negf %138 : vector<8x128xf32>
      %140 = math.exp %139 : vector<8x128xf32>
      %cst_47 = arith.constant 1.000000e+00 : f32
      %141 = vector.broadcast %cst_47 : f32 to vector<8x128xf32>
      %142 = arith.addf %141, %140 : vector<8x128xf32>
      %143 = arith.divf %141, %142 : vector<8x128xf32>
      %144 = vector.extract_strided_slice %131 {offsets = [0, 256], sizes = [8, 128], strides = [1, 1]} : vector<8x512xf32> to vector<8x128xf32>
      %145 = math.tanh %144 : vector<8x128xf32>
      %146 = vector.extract_strided_slice %131 {offsets = [0, 384], sizes = [8, 128], strides = [1, 1]} : vector<8x512xf32> to vector<8x128xf32>
      %147 = arith.negf %146 : vector<8x128xf32>
      %148 = math.exp %147 : vector<8x128xf32>
      %cst_48 = arith.constant 1.000000e+00 : f32
      %149 = vector.broadcast %cst_48 : f32 to vector<8x128xf32>
      %150 = arith.addf %149, %148 : vector<8x128xf32>
      %151 = arith.divf %149, %150 : vector<8x128xf32>
      %152 = arith.mulf %143, %119 : vector<8x128xf32>
      %153 = arith.mulf %137, %145 : vector<8x128xf32>
      %154 = arith.addf %152, %153 : vector<8x128xf32>
      %155 = math.tanh %154 : vector<8x128xf32>
      %156 = arith.mulf %151, %155 : vector<8x128xf32>
      %157 = arith.truncf %156 : vector<8x128xf32> to vector<8x128xbf16>
      %158 = arith.index_cast %126 : i32 to index
      %c0_49 = arith.constant 0 : index
      %159 = vector.load %arg12[%158, %c0_49] : memref<64x256xbf16, #tpu.memory_space<vmem>>, vector<8x128xbf16>
      tpu.vector_store %arg12[%158, %c0_49], %157 {strides = array<i32>} : memref<64x256xbf16, #tpu.memory_space<vmem>>, vector<8x128xbf16>,
      %c4_i32 = arith.constant 4 : i32
      %c8_i32_50 = arith.constant 8 : i32
      %160 = arith.muli %c4_i32, %c8_i32_50 : i32
      %161 = tpu.assume_multiple %160, 8 : i32
      %162 = arith.index_cast %161 : i32 to index
      %c0_51 = arith.constant 0 : index
      %163 = vector.load %arg11[%162, %c0_51] : memref<64x512xf32, #tpu.memory_space<vmem>>, vector<8x512xf32>
      %164 = arith.truncf %156 : vector<8x128xf32> to vector<8x128xbf16>
      %cst_52 = arith.constant dense<0.000000e+00> : vector<8x512xf32>
      %165 = tpu.matmul %164, %17, %cst_52 {dimension_numbers = #tpu.dot_dimension_numbers<[1], [0], [0], [1], [0, 0, 1, 1], [], []>} : vector<8x128xbf16>, vector<128x512xbf16>, vector<8x512xf32> -> vector<8x512xf32>
      %166 = arith.addf %163, %165 : vector<8x512xf32>
      %167 = vector.extract_strided_slice %166 {offsets = [0, 0], sizes = [8, 128], strides = [1, 1]} : vector<8x512xf32> to vector<8x128xf32>
      %168 = arith.negf %167 : vector<8x128xf32>
      %169 = math.exp %168 : vector<8x128xf32>
      %cst_53 = arith.constant 1.000000e+00 : f32
      %170 = vector.broadcast %cst_53 : f32 to vector<8x128xf32>
      %171 = arith.addf %170, %169 : vector<8x128xf32>
      %172 = arith.divf %170, %171 : vector<8x128xf32>
      %173 = vector.extract_strided_slice %166 {offsets = [0, 128], sizes = [8, 128], strides = [1, 1]} : vector<8x512xf32> to vector<8x128xf32>
      %174 = arith.negf %173 : vector<8x128xf32>
      %175 = math.exp %174 : vector<8x128xf32>
      %cst_54 = arith.constant 1.000000e+00 : f32
      %176 = vector.broadcast %cst_54 : f32 to vector<8x128xf32>
      %177 = arith.addf %176, %175 : vector<8x128xf32>
      %178 = arith.divf %176, %177 : vector<8x128xf32>
      %179 = vector.extract_strided_slice %166 {offsets = [0, 256], sizes = [8, 128], strides = [1, 1]} : vector<8x512xf32> to vector<8x128xf32>
      %180 = math.tanh %179 : vector<8x128xf32>
      %181 = vector.extract_strided_slice %166 {offsets = [0, 384], sizes = [8, 128], strides = [1, 1]} : vector<8x512xf32> to vector<8x128xf32>
      %182 = arith.negf %181 : vector<8x128xf32>
      %183 = math.exp %182 : vector<8x128xf32>
      %cst_55 = arith.constant 1.000000e+00 : f32
      %184 = vector.broadcast %cst_55 : f32 to vector<8x128xf32>
      %185 = arith.addf %184, %183 : vector<8x128xf32>
      %186 = arith.divf %184, %185 : vector<8x128xf32>
      %187 = arith.mulf %178, %154 : vector<8x128xf32>
      %188 = arith.mulf %172, %180 : vector<8x128xf32>
      %189 = arith.addf %187, %188 : vector<8x128xf32>
      %190 = math.tanh %189 : vector<8x128xf32>
      %191 = arith.mulf %186, %190 : vector<8x128xf32>
      %192 = arith.truncf %191 : vector<8x128xf32> to vector<8x128xbf16>
      %193 = arith.index_cast %161 : i32 to index
      %c0_56 = arith.constant 0 : index
      %194 = vector.load %arg12[%193, %c0_56] : memref<64x256xbf16, #tpu.memory_space<vmem>>, vector<8x128xbf16>
      tpu.vector_store %arg12[%193, %c0_56], %192 {strides = array<i32>} : memref<64x256xbf16, #tpu.memory_space<vmem>>, vector<8x128xbf16>,
      %c5_i32 = arith.constant 5 : i32
      %c8_i32_57 = arith.constant 8 : i32
      %195 = arith.muli %c5_i32, %c8_i32_57 : i32
      %196 = tpu.assume_multiple %195, 8 : i32
      %197 = arith.index_cast %196 : i32 to index
      %c0_58 = arith.constant 0 : index
      %198 = vector.load %arg11[%197, %c0_58] : memref<64x512xf32, #tpu.memory_space<vmem>>, vector<8x512xf32>
      %199 = arith.truncf %191 : vector<8x128xf32> to vector<8x128xbf16>
      %cst_59 = arith.constant dense<0.000000e+00> : vector<8x512xf32>
      %200 = tpu.matmul %199, %17, %cst_59 {dimension_numbers = #tpu.dot_dimension_numbers<[1], [0], [0], [1], [0, 0, 1, 1], [], []>} : vector<8x128xbf16>, vector<128x512xbf16>, vector<8x512xf32> -> vector<8x512xf32>
      %201 = arith.addf %198, %200 : vector<8x512xf32>
      %202 = vector.extract_strided_slice %201 {offsets = [0, 0], sizes = [8, 128], strides = [1, 1]} : vector<8x512xf32> to vector<8x128xf32>
      %203 = arith.negf %202 : vector<8x128xf32>
      %204 = math.exp %203 : vector<8x128xf32>
      %cst_60 = arith.constant 1.000000e+00 : f32
      %205 = vector.broadcast %cst_60 : f32 to vector<8x128xf32>
      %206 = arith.addf %205, %204 : vector<8x128xf32>
      %207 = arith.divf %205, %206 : vector<8x128xf32>
      %208 = vector.extract_strided_slice %201 {offsets = [0, 128], sizes = [8, 128], strides = [1, 1]} : vector<8x512xf32> to vector<8x128xf32>
      %209 = arith.negf %208 : vector<8x128xf32>
      %210 = math.exp %209 : vector<8x128xf32>
      %cst_61 = arith.constant 1.000000e+00 : f32
      %211 = vector.broadcast %cst_61 : f32 to vector<8x128xf32>
      %212 = arith.addf %211, %210 : vector<8x128xf32>
      %213 = arith.divf %211, %212 : vector<8x128xf32>
      %214 = vector.extract_strided_slice %201 {offsets = [0, 256], sizes = [8, 128], strides = [1, 1]} : vector<8x512xf32> to vector<8x128xf32>
      %215 = math.tanh %214 : vector<8x128xf32>
      %216 = vector.extract_strided_slice %201 {offsets = [0, 384], sizes = [8, 128], strides = [1, 1]} : vector<8x512xf32> to vector<8x128xf32>
      %217 = arith.negf %216 : vector<8x128xf32>
      %218 = math.exp %217 : vector<8x128xf32>
      %cst_62 = arith.constant 1.000000e+00 : f32
      %219 = vector.broadcast %cst_62 : f32 to vector<8x128xf32>
      %220 = arith.addf %219, %218 : vector<8x128xf32>
      %221 = arith.divf %219, %220 : vector<8x128xf32>
      %222 = arith.mulf %213, %189 : vector<8x128xf32>
      %223 = arith.mulf %207, %215 : vector<8x128xf32>
      %224 = arith.addf %222, %223 : vector<8x128xf32>
      %225 = math.tanh %224 : vector<8x128xf32>
      %226 = arith.mulf %221, %225 : vector<8x128xf32>
      %227 = arith.truncf %226 : vector<8x128xf32> to vector<8x128xbf16>
      %228 = arith.index_cast %196 : i32 to index
      %c0_63 = arith.constant 0 : index
      %229 = vector.load %arg12[%228, %c0_63] : memref<64x256xbf16, #tpu.memory_space<vmem>>, vector<8x128xbf16>
      tpu.vector_store %arg12[%228, %c0_63], %227 {strides = array<i32>} : memref<64x256xbf16, #tpu.memory_space<vmem>>, vector<8x128xbf16>,
      %c6_i32 = arith.constant 6 : i32
      %c8_i32_64 = arith.constant 8 : i32
      %230 = arith.muli %c6_i32, %c8_i32_64 : i32
      %231 = tpu.assume_multiple %230, 8 : i32
      %232 = arith.index_cast %231 : i32 to index
      %c0_65 = arith.constant 0 : index
      %233 = vector.load %arg11[%232, %c0_65] : memref<64x512xf32, #tpu.memory_space<vmem>>, vector<8x512xf32>
      %234 = arith.truncf %226 : vector<8x128xf32> to vector<8x128xbf16>
      %cst_66 = arith.constant dense<0.000000e+00> : vector<8x512xf32>
      %235 = tpu.matmul %234, %17, %cst_66 {dimension_numbers = #tpu.dot_dimension_numbers<[1], [0], [0], [1], [0, 0, 1, 1], [], []>} : vector<8x128xbf16>, vector<128x512xbf16>, vector<8x512xf32> -> vector<8x512xf32>
      %236 = arith.addf %233, %235 : vector<8x512xf32>
      %237 = vector.extract_strided_slice %236 {offsets = [0, 0], sizes = [8, 128], strides = [1, 1]} : vector<8x512xf32> to vector<8x128xf32>
      %238 = arith.negf %237 : vector<8x128xf32>
      %239 = math.exp %238 : vector<8x128xf32>
      %cst_67 = arith.constant 1.000000e+00 : f32
      %240 = vector.broadcast %cst_67 : f32 to vector<8x128xf32>
      %241 = arith.addf %240, %239 : vector<8x128xf32>
      %242 = arith.divf %240, %241 : vector<8x128xf32>
      %243 = vector.extract_strided_slice %236 {offsets = [0, 128], sizes = [8, 128], strides = [1, 1]} : vector<8x512xf32> to vector<8x128xf32>
      %244 = arith.negf %243 : vector<8x128xf32>
      %245 = math.exp %244 : vector<8x128xf32>
      %cst_68 = arith.constant 1.000000e+00 : f32
      %246 = vector.broadcast %cst_68 : f32 to vector<8x128xf32>
      %247 = arith.addf %246, %245 : vector<8x128xf32>
      %248 = arith.divf %246, %247 : vector<8x128xf32>
      %249 = vector.extract_strided_slice %236 {offsets = [0, 256], sizes = [8, 128], strides = [1, 1]} : vector<8x512xf32> to vector<8x128xf32>
      %250 = math.tanh %249 : vector<8x128xf32>
      %251 = vector.extract_strided_slice %236 {offsets = [0, 384], sizes = [8, 128], strides = [1, 1]} : vector<8x512xf32> to vector<8x128xf32>
      %252 = arith.negf %251 : vector<8x128xf32>
      %253 = math.exp %252 : vector<8x128xf32>
      %cst_69 = arith.constant 1.000000e+00 : f32
      %254 = vector.broadcast %cst_69 : f32 to vector<8x128xf32>
      %255 = arith.addf %254, %253 : vector<8x128xf32>
      %256 = arith.divf %254, %255 : vector<8x128xf32>
      %257 = arith.mulf %248, %224 : vector<8x128xf32>
      %258 = arith.mulf %242, %250 : vector<8x128xf32>
      %259 = arith.addf %257, %258 : vector<8x128xf32>
      %260 = math.tanh %259 : vector<8x128xf32>
      %261 = arith.mulf %256, %260 : vector<8x128xf32>
      %262 = arith.truncf %261 : vector<8x128xf32> to vector<8x128xbf16>
      %263 = arith.index_cast %231 : i32 to index
      %c0_70 = arith.constant 0 : index
      %264 = vector.load %arg12[%263, %c0_70] : memref<64x256xbf16, #tpu.memory_space<vmem>>, vector<8x128xbf16>
      tpu.vector_store %arg12[%263, %c0_70], %262 {strides = array<i32>} : memref<64x256xbf16, #tpu.memory_space<vmem>>, vector<8x128xbf16>,
      %c7_i32 = arith.constant 7 : i32
      %c8_i32_71 = arith.constant 8 : i32
      %265 = arith.muli %c7_i32, %c8_i32_71 : i32
      %266 = tpu.assume_multiple %265, 8 : i32
      %267 = arith.index_cast %266 : i32 to index
      %c0_72 = arith.constant 0 : index
      %268 = vector.load %arg11[%267, %c0_72] : memref<64x512xf32, #tpu.memory_space<vmem>>, vector<8x512xf32>
      %269 = arith.truncf %261 : vector<8x128xf32> to vector<8x128xbf16>
      %cst_73 = arith.constant dense<0.000000e+00> : vector<8x512xf32>
      %270 = tpu.matmul %269, %17, %cst_73 {dimension_numbers = #tpu.dot_dimension_numbers<[1], [0], [0], [1], [0, 0, 1, 1], [], []>} : vector<8x128xbf16>, vector<128x512xbf16>, vector<8x512xf32> -> vector<8x512xf32>
      %271 = arith.addf %268, %270 : vector<8x512xf32>
      %272 = vector.extract_strided_slice %271 {offsets = [0, 0], sizes = [8, 128], strides = [1, 1]} : vector<8x512xf32> to vector<8x128xf32>
      %273 = arith.negf %272 : vector<8x128xf32>
      %274 = math.exp %273 : vector<8x128xf32>
      %cst_74 = arith.constant 1.000000e+00 : f32
      %275 = vector.broadcast %cst_74 : f32 to vector<8x128xf32>
      %276 = arith.addf %275, %274 : vector<8x128xf32>
      %277 = arith.divf %275, %276 : vector<8x128xf32>
      %278 = vector.extract_strided_slice %271 {offsets = [0, 128], sizes = [8, 128], strides = [1, 1]} : vector<8x512xf32> to vector<8x128xf32>
      %279 = arith.negf %278 : vector<8x128xf32>
      %280 = math.exp %279 : vector<8x128xf32>
      %cst_75 = arith.constant 1.000000e+00 : f32
      %281 = vector.broadcast %cst_75 : f32 to vector<8x128xf32>
      %282 = arith.addf %281, %280 : vector<8x128xf32>
      %283 = arith.divf %281, %282 : vector<8x128xf32>
      %284 = vector.extract_strided_slice %271 {offsets = [0, 256], sizes = [8, 128], strides = [1, 1]} : vector<8x512xf32> to vector<8x128xf32>
      %285 = math.tanh %284 : vector<8x128xf32>
      %286 = vector.extract_strided_slice %271 {offsets = [0, 384], sizes = [8, 128], strides = [1, 1]} : vector<8x512xf32> to vector<8x128xf32>
      %287 = arith.negf %286 : vector<8x128xf32>
      %288 = math.exp %287 : vector<8x128xf32>
      %cst_76 = arith.constant 1.000000e+00 : f32
      %289 = vector.broadcast %cst_76 : f32 to vector<8x128xf32>
      %290 = arith.addf %289, %288 : vector<8x128xf32>
      %291 = arith.divf %289, %290 : vector<8x128xf32>
      %292 = arith.mulf %283, %259 : vector<8x128xf32>
      %293 = arith.mulf %277, %285 : vector<8x128xf32>
      %294 = arith.addf %292, %293 : vector<8x128xf32>
      %295 = math.tanh %294 : vector<8x128xf32>
      %296 = arith.mulf %291, %295 : vector<8x128xf32>
      %297 = arith.truncf %296 : vector<8x128xf32> to vector<8x128xbf16>
      %298 = arith.index_cast %266 : i32 to index
      %c0_77 = arith.constant 0 : index
      %299 = vector.load %arg12[%298, %c0_77] : memref<64x256xbf16, #tpu.memory_space<vmem>>, vector<8x128xbf16>
      tpu.vector_store %arg12[%298, %c0_77], %297 {strides = array<i32>} : memref<64x256xbf16, #tpu.memory_space<vmem>>, vector<8x128xbf16>,
      %c8_i32_78 = arith.constant 8 : i32
      %c0_79 = arith.constant 0 : index
      %c0_80 = arith.constant 0 : index
      %300 = vector.load %arg12[%c0_79, %c0_80] : memref<64x256xbf16, #tpu.memory_space<vmem>>, vector<64x128xbf16>
      %c0_81 = arith.constant 0 : index
      %c0_82 = arith.constant 0 : index
      %301 = vector.load %arg5[%c0_81, %c0_82] : memref<128x512xbf16, #tpu.memory_space<vmem>>, vector<128x512xbf16>
      %cst_83 = arith.constant dense<0.000000e+00> : vector<64x512xf32>
      %302 = tpu.matmul %300, %301, %cst_83 {dimension_numbers = #tpu.dot_dimension_numbers<[1], [0], [0], [1], [0, 0, 1, 1], [], []>} : vector<64x128xbf16>, vector<128x512xbf16>, vector<64x512xf32> -> vector<64x512xf32>
      %c0_84 = arith.constant 0 : index
      %c0_85 = arith.constant 0 : index
      %303 = vector.load %arg7[%c0_84, %c0_85] : memref<1x512xf32, #tpu.memory_space<vmem>>, vector<1x512xf32>
      %304 = vector.broadcast %303 : vector<1x512xf32> to vector<64x512xf32>
      %305 = arith.addf %302, %304 : vector<64x512xf32>
      %c0_86 = arith.constant 0 : index
      %c0_87 = arith.constant 0 : index
      %306 = vector.load %arg11[%c0_86, %c0_87] : memref<64x512xf32, #tpu.memory_space<vmem>>, vector<64x512xf32>
      tpu.vector_store %arg11[%c0_86, %c0_87], %305 {strides = array<i32>} : memref<64x512xf32, #tpu.memory_space<vmem>>, vector<64x512xf32>,
      %c0_i32_88 = arith.constant 0 : i32
      %c8_i32_89 = arith.constant 8 : i32
      %307 = arith.muli %c0_i32_88, %c8_i32_89 : i32
      %308 = tpu.assume_multiple %307, 8 : i32
      %309 = arith.index_cast %308 : i32 to index
      %c0_90 = arith.constant 0 : index
      %310 = vector.load %arg11[%309, %c0_90] : memref<64x512xf32, #tpu.memory_space<vmem>>, vector<8x512xf32>
      %311 = arith.truncf %19 : vector<8x128xf32> to vector<8x128xbf16>
      %cst_91 = arith.constant dense<0.000000e+00> : vector<8x512xf32>
      %312 = tpu.matmul %311, %18, %cst_91 {dimension_numbers = #tpu.dot_dimension_numbers<[1], [0], [0], [1], [0, 0, 1, 1], [], []>} : vector<8x128xbf16>, vector<128x512xbf16>, vector<8x512xf32> -> vector<8x512xf32>
      %313 = arith.addf %310, %312 : vector<8x512xf32>
      %314 = vector.extract_strided_slice %313 {offsets = [0, 0], sizes = [8, 128], strides = [1, 1]} : vector<8x512xf32> to vector<8x128xf32>
      %315 = arith.negf %314 : vector<8x128xf32>
      %316 = math.exp %315 : vector<8x128xf32>
      %cst_92 = arith.constant 1.000000e+00 : f32
      %317 = vector.broadcast %cst_92 : f32 to vector<8x128xf32>
      %318 = arith.addf %317, %316 : vector<8x128xf32>
      %319 = arith.divf %317, %318 : vector<8x128xf32>
      %320 = vector.extract_strided_slice %313 {offsets = [0, 128], sizes = [8, 128], strides = [1, 1]} : vector<8x512xf32> to vector<8x128xf32>
      %321 = arith.negf %320 : vector<8x128xf32>
      %322 = math.exp %321 : vector<8x128xf32>
      %cst_93 = arith.constant 1.000000e+00 : f32
      %323 = vector.broadcast %cst_93 : f32 to vector<8x128xf32>
      %324 = arith.addf %323, %322 : vector<8x128xf32>
      %325 = arith.divf %323, %324 : vector<8x128xf32>
      %326 = vector.extract_strided_slice %313 {offsets = [0, 256], sizes = [8, 128], strides = [1, 1]} : vector<8x512xf32> to vector<8x128xf32>
      %327 = math.tanh %326 : vector<8x128xf32>
      %328 = vector.extract_strided_slice %313 {offsets = [0, 384], sizes = [8, 128], strides = [1, 1]} : vector<8x512xf32> to vector<8x128xf32>
      %329 = arith.negf %328 : vector<8x128xf32>
      %330 = math.exp %329 : vector<8x128xf32>
      %cst_94 = arith.constant 1.000000e+00 : f32
      %331 = vector.broadcast %cst_94 : f32 to vector<8x128xf32>
      %332 = arith.addf %331, %330 : vector<8x128xf32>
      %333 = arith.divf %331, %332 : vector<8x128xf32>
      %334 = arith.mulf %325, %19 : vector<8x128xf32>
      %335 = arith.mulf %319, %327 : vector<8x128xf32>
      %336 = arith.addf %334, %335 : vector<8x128xf32>
      %337 = math.tanh %336 : vector<8x128xf32>
      %338 = arith.mulf %333, %337 : vector<8x128xf32>
      %339 = arith.truncf %338 : vector<8x128xf32> to vector<8x128xbf16>
      %340 = arith.index_cast %308 : i32 to index
      %c128 = arith.constant 128 : index
      %341 = vector.load %arg12[%340, %c128] : memref<64x256xbf16, #tpu.memory_space<vmem>>, vector<8x128xbf16>
      tpu.vector_store %arg12[%340, %c128], %339 {strides = array<i32>} : memref<64x256xbf16, #tpu.memory_space<vmem>>, vector<8x128xbf16>,
      %c1_i32_95 = arith.constant 1 : i32
      %c8_i32_96 = arith.constant 8 : i32
      %342 = arith.muli %c1_i32_95, %c8_i32_96 : i32
      %343 = tpu.assume_multiple %342, 8 : i32
      %344 = arith.index_cast %343 : i32 to index
      %c0_97 = arith.constant 0 : index
      %345 = vector.load %arg11[%344, %c0_97] : memref<64x512xf32, #tpu.memory_space<vmem>>, vector<8x512xf32>
      %346 = arith.truncf %338 : vector<8x128xf32> to vector<8x128xbf16>
      %cst_98 = arith.constant dense<0.000000e+00> : vector<8x512xf32>
      %347 = tpu.matmul %346, %18, %cst_98 {dimension_numbers = #tpu.dot_dimension_numbers<[1], [0], [0], [1], [0, 0, 1, 1], [], []>} : vector<8x128xbf16>, vector<128x512xbf16>, vector<8x512xf32> -> vector<8x512xf32>
      %348 = arith.addf %345, %347 : vector<8x512xf32>
      %349 = vector.extract_strided_slice %348 {offsets = [0, 0], sizes = [8, 128], strides = [1, 1]} : vector<8x512xf32> to vector<8x128xf32>
      %350 = arith.negf %349 : vector<8x128xf32>
      %351 = math.exp %350 : vector<8x128xf32>
      %cst_99 = arith.constant 1.000000e+00 : f32
      %352 = vector.broadcast %cst_99 : f32 to vector<8x128xf32>
      %353 = arith.addf %352, %351 : vector<8x128xf32>
      %354 = arith.divf %352, %353 : vector<8x128xf32>
      %355 = vector.extract_strided_slice %348 {offsets = [0, 128], sizes = [8, 128], strides = [1, 1]} : vector<8x512xf32> to vector<8x128xf32>
      %356 = arith.negf %355 : vector<8x128xf32>
      %357 = math.exp %356 : vector<8x128xf32>
      %cst_100 = arith.constant 1.000000e+00 : f32
      %358 = vector.broadcast %cst_100 : f32 to vector<8x128xf32>
      %359 = arith.addf %358, %357 : vector<8x128xf32>
      %360 = arith.divf %358, %359 : vector<8x128xf32>
      %361 = vector.extract_strided_slice %348 {offsets = [0, 256], sizes = [8, 128], strides = [1, 1]} : vector<8x512xf32> to vector<8x128xf32>
      %362 = math.tanh %361 : vector<8x128xf32>
      %363 = vector.extract_strided_slice %348 {offsets = [0, 384], sizes = [8, 128], strides = [1, 1]} : vector<8x512xf32> to vector<8x128xf32>
      %364 = arith.negf %363 : vector<8x128xf32>
      %365 = math.exp %364 : vector<8x128xf32>
      %cst_101 = arith.constant 1.000000e+00 : f32
      %366 = vector.broadcast %cst_101 : f32 to vector<8x128xf32>
      %367 = arith.addf %366, %365 : vector<8x128xf32>
      %368 = arith.divf %366, %367 : vector<8x128xf32>
      %369 = arith.mulf %360, %336 : vector<8x128xf32>
      %370 = arith.mulf %354, %362 : vector<8x128xf32>
      %371 = arith.addf %369, %370 : vector<8x128xf32>
      %372 = math.tanh %371 : vector<8x128xf32>
      %373 = arith.mulf %368, %372 : vector<8x128xf32>
      %374 = arith.truncf %373 : vector<8x128xf32> to vector<8x128xbf16>
      %375 = arith.index_cast %343 : i32 to index
      %c128_102 = arith.constant 128 : index
      %376 = vector.load %arg12[%375, %c128_102] : memref<64x256xbf16, #tpu.memory_space<vmem>>, vector<8x128xbf16>
      tpu.vector_store %arg12[%375, %c128_102], %374 {strides = array<i32>} : memref<64x256xbf16, #tpu.memory_space<vmem>>, vector<8x128xbf16>,
      %c2_i32_103 = arith.constant 2 : i32
      %c8_i32_104 = arith.constant 8 : i32
      %377 = arith.muli %c2_i32_103, %c8_i32_104 : i32
      %378 = tpu.assume_multiple %377, 8 : i32
      %379 = arith.index_cast %378 : i32 to index
      %c0_105 = arith.constant 0 : index
      %380 = vector.load %arg11[%379, %c0_105] : memref<64x512xf32, #tpu.memory_space<vmem>>, vector<8x512xf32>
      %381 = arith.truncf %373 : vector<8x128xf32> to vector<8x128xbf16>
      %cst_106 = arith.constant dense<0.000000e+00> : vector<8x512xf32>
      %382 = tpu.matmul %381, %18, %cst_106 {dimension_numbers = #tpu.dot_dimension_numbers<[1], [0], [0], [1], [0, 0, 1, 1], [], []>} : vector<8x128xbf16>, vector<128x512xbf16>, vector<8x512xf32> -> vector<8x512xf32>
      %383 = arith.addf %380, %382 : vector<8x512xf32>
      %384 = vector.extract_strided_slice %383 {offsets = [0, 0], sizes = [8, 128], strides = [1, 1]} : vector<8x512xf32> to vector<8x128xf32>
      %385 = arith.negf %384 : vector<8x128xf32>
      %386 = math.exp %385 : vector<8x128xf32>
      %cst_107 = arith.constant 1.000000e+00 : f32
      %387 = vector.broadcast %cst_107 : f32 to vector<8x128xf32>
      %388 = arith.addf %387, %386 : vector<8x128xf32>
      %389 = arith.divf %387, %388 : vector<8x128xf32>
      %390 = vector.extract_strided_slice %383 {offsets = [0, 128], sizes = [8, 128], strides = [1, 1]} : vector<8x512xf32> to vector<8x128xf32>
      %391 = arith.negf %390 : vector<8x128xf32>
      %392 = math.exp %391 : vector<8x128xf32>
      %cst_108 = arith.constant 1.000000e+00 : f32
      %393 = vector.broadcast %cst_108 : f32 to vector<8x128xf32>
      %394 = arith.addf %393, %392 : vector<8x128xf32>
      %395 = arith.divf %393, %394 : vector<8x128xf32>
      %396 = vector.extract_strided_slice %383 {offsets = [0, 256], sizes = [8, 128], strides = [1, 1]} : vector<8x512xf32> to vector<8x128xf32>
      %397 = math.tanh %396 : vector<8x128xf32>
      %398 = vector.extract_strided_slice %383 {offsets = [0, 384], sizes = [8, 128], strides = [1, 1]} : vector<8x512xf32> to vector<8x128xf32>
      %399 = arith.negf %398 : vector<8x128xf32>
      %400 = math.exp %399 : vector<8x128xf32>
      %cst_109 = arith.constant 1.000000e+00 : f32
      %401 = vector.broadcast %cst_109 : f32 to vector<8x128xf32>
      %402 = arith.addf %401, %400 : vector<8x128xf32>
      %403 = arith.divf %401, %402 : vector<8x128xf32>
      %404 = arith.mulf %395, %371 : vector<8x128xf32>
      %405 = arith.mulf %389, %397 : vector<8x128xf32>
      %406 = arith.addf %404, %405 : vector<8x128xf32>
      %407 = math.tanh %406 : vector<8x128xf32>
      %408 = arith.mulf %403, %407 : vector<8x128xf32>
      %409 = arith.truncf %408 : vector<8x128xf32> to vector<8x128xbf16>
      %410 = arith.index_cast %378 : i32 to index
      %c128_110 = arith.constant 128 : index
      %411 = vector.load %arg12[%410, %c128_110] : memref<64x256xbf16, #tpu.memory_space<vmem>>, vector<8x128xbf16>
      tpu.vector_store %arg12[%410, %c128_110], %409 {strides = array<i32>} : memref<64x256xbf16, #tpu.memory_space<vmem>>, vector<8x128xbf16>,
      %c3_i32_111 = arith.constant 3 : i32
      %c8_i32_112 = arith.constant 8 : i32
      %412 = arith.muli %c3_i32_111, %c8_i32_112 : i32
      %413 = tpu.assume_multiple %412, 8 : i32
      %414 = arith.index_cast %413 : i32 to index
      %c0_113 = arith.constant 0 : index
      %415 = vector.load %arg11[%414, %c0_113] : memref<64x512xf32, #tpu.memory_space<vmem>>, vector<8x512xf32>
      %416 = arith.truncf %408 : vector<8x128xf32> to vector<8x128xbf16>
      %cst_114 = arith.constant dense<0.000000e+00> : vector<8x512xf32>
      %417 = tpu.matmul %416, %18, %cst_114 {dimension_numbers = #tpu.dot_dimension_numbers<[1], [0], [0], [1], [0, 0, 1, 1], [], []>} : vector<8x128xbf16>, vector<128x512xbf16>, vector<8x512xf32> -> vector<8x512xf32>
      %418 = arith.addf %415, %417 : vector<8x512xf32>
      %419 = vector.extract_strided_slice %418 {offsets = [0, 0], sizes = [8, 128], strides = [1, 1]} : vector<8x512xf32> to vector<8x128xf32>
      %420 = arith.negf %419 : vector<8x128xf32>
      %421 = math.exp %420 : vector<8x128xf32>
      %cst_115 = arith.constant 1.000000e+00 : f32
      %422 = vector.broadcast %cst_115 : f32 to vector<8x128xf32>
      %423 = arith.addf %422, %421 : vector<8x128xf32>
      %424 = arith.divf %422, %423 : vector<8x128xf32>
      %425 = vector.extract_strided_slice %418 {offsets = [0, 128], sizes = [8, 128], strides = [1, 1]} : vector<8x512xf32> to vector<8x128xf32>
      %426 = arith.negf %425 : vector<8x128xf32>
      %427 = math.exp %426 : vector<8x128xf32>
      %cst_116 = arith.constant 1.000000e+00 : f32
      %428 = vector.broadcast %cst_116 : f32 to vector<8x128xf32>
      %429 = arith.addf %428, %427 : vector<8x128xf32>
      %430 = arith.divf %428, %429 : vector<8x128xf32>
      %431 = vector.extract_strided_slice %418 {offsets = [0, 256], sizes = [8, 128], strides = [1, 1]} : vector<8x512xf32> to vector<8x128xf32>
      %432 = math.tanh %431 : vector<8x128xf32>
      %433 = vector.extract_strided_slice %418 {offsets = [0, 384], sizes = [8, 128], strides = [1, 1]} : vector<8x512xf32> to vector<8x128xf32>
      %434 = arith.negf %433 : vector<8x128xf32>
      %435 = math.exp %434 : vector<8x128xf32>
      %cst_117 = arith.constant 1.000000e+00 : f32
      %436 = vector.broadcast %cst_117 : f32 to vector<8x128xf32>
      %437 = arith.addf %436, %435 : vector<8x128xf32>
      %438 = arith.divf %436, %437 : vector<8x128xf32>
      %439 = arith.mulf %430, %406 : vector<8x128xf32>
      %440 = arith.mulf %424, %432 : vector<8x128xf32>
      %441 = arith.addf %439, %440 : vector<8x128xf32>
      %442 = math.tanh %441 : vector<8x128xf32>
      %443 = arith.mulf %438, %442 : vector<8x128xf32>
      %444 = arith.truncf %443 : vector<8x128xf32> to vector<8x128xbf16>
      %445 = arith.index_cast %413 : i32 to index
      %c128_118 = arith.constant 128 : index
      %446 = vector.load %arg12[%445, %c128_118] : memref<64x256xbf16, #tpu.memory_space<vmem>>, vector<8x128xbf16>
      tpu.vector_store %arg12[%445, %c128_118], %444 {strides = array<i32>} : memref<64x256xbf16, #tpu.memory_space<vmem>>, vector<8x128xbf16>,
      %c4_i32_119 = arith.constant 4 : i32
      %c8_i32_120 = arith.constant 8 : i32
      %447 = arith.muli %c4_i32_119, %c8_i32_120 : i32
      %448 = tpu.assume_multiple %447, 8 : i32
      %449 = arith.index_cast %448 : i32 to index
      %c0_121 = arith.constant 0 : index
      %450 = vector.load %arg11[%449, %c0_121] : memref<64x512xf32, #tpu.memory_space<vmem>>, vector<8x512xf32>
      %451 = arith.truncf %443 : vector<8x128xf32> to vector<8x128xbf16>
      %cst_122 = arith.constant dense<0.000000e+00> : vector<8x512xf32>
      %452 = tpu.matmul %451, %18, %cst_122 {dimension_numbers = #tpu.dot_dimension_numbers<[1], [0], [0], [1], [0, 0, 1, 1], [], []>} : vector<8x128xbf16>, vector<128x512xbf16>, vector<8x512xf32> -> vector<8x512xf32>
      %453 = arith.addf %450, %452 : vector<8x512xf32>
      %454 = vector.extract_strided_slice %453 {offsets = [0, 0], sizes = [8, 128], strides = [1, 1]} : vector<8x512xf32> to vector<8x128xf32>
      %455 = arith.negf %454 : vector<8x128xf32>
      %456 = math.exp %455 : vector<8x128xf32>
      %cst_123 = arith.constant 1.000000e+00 : f32
      %457 = vector.broadcast %cst_123 : f32 to vector<8x128xf32>
      %458 = arith.addf %457, %456 : vector<8x128xf32>
      %459 = arith.divf %457, %458 : vector<8x128xf32>
      %460 = vector.extract_strided_slice %453 {offsets = [0, 128], sizes = [8, 128], strides = [1, 1]} : vector<8x512xf32> to vector<8x128xf32>
      %461 = arith.negf %460 : vector<8x128xf32>
      %462 = math.exp %461 : vector<8x128xf32>
      %cst_124 = arith.constant 1.000000e+00 : f32
      %463 = vector.broadcast %cst_124 : f32 to vector<8x128xf32>
      %464 = arith.addf %463, %462 : vector<8x128xf32>
      %465 = arith.divf %463, %464 : vector<8x128xf32>
      %466 = vector.extract_strided_slice %453 {offsets = [0, 256], sizes = [8, 128], strides = [1, 1]} : vector<8x512xf32> to vector<8x128xf32>
      %467 = math.tanh %466 : vector<8x128xf32>
      %468 = vector.extract_strided_slice %453 {offsets = [0, 384], sizes = [8, 128], strides = [1, 1]} : vector<8x512xf32> to vector<8x128xf32>
      %469 = arith.negf %468 : vector<8x128xf32>
      %470 = math.exp %469 : vector<8x128xf32>
      %cst_125 = arith.constant 1.000000e+00 : f32
      %471 = vector.broadcast %cst_125 : f32 to vector<8x128xf32>
      %472 = arith.addf %471, %470 : vector<8x128xf32>
      %473 = arith.divf %471, %472 : vector<8x128xf32>
      %474 = arith.mulf %465, %441 : vector<8x128xf32>
      %475 = arith.mulf %459, %467 : vector<8x128xf32>
      %476 = arith.addf %474, %475 : vector<8x128xf32>
      %477 = math.tanh %476 : vector<8x128xf32>
      %478 = arith.mulf %473, %477 : vector<8x128xf32>
      %479 = arith.truncf %478 : vector<8x128xf32> to vector<8x128xbf16>
      %480 = arith.index_cast %448 : i32 to index
      %c128_126 = arith.constant 128 : index
      %481 = vector.load %arg12[%480, %c128_126] : memref<64x256xbf16, #tpu.memory_space<vmem>>, vector<8x128xbf16>
      tpu.vector_store %arg12[%480, %c128_126], %479 {strides = array<i32>} : memref<64x256xbf16, #tpu.memory_space<vmem>>, vector<8x128xbf16>,
      %c5_i32_127 = arith.constant 5 : i32
      %c8_i32_128 = arith.constant 8 : i32
      %482 = arith.muli %c5_i32_127, %c8_i32_128 : i32
      %483 = tpu.assume_multiple %482, 8 : i32
      %484 = arith.index_cast %483 : i32 to index
      %c0_129 = arith.constant 0 : index
      %485 = vector.load %arg11[%484, %c0_129] : memref<64x512xf32, #tpu.memory_space<vmem>>, vector<8x512xf32>
      %486 = arith.truncf %478 : vector<8x128xf32> to vector<8x128xbf16>
      %cst_130 = arith.constant dense<0.000000e+00> : vector<8x512xf32>
      %487 = tpu.matmul %486, %18, %cst_130 {dimension_numbers = #tpu.dot_dimension_numbers<[1], [0], [0], [1], [0, 0, 1, 1], [], []>} : vector<8x128xbf16>, vector<128x512xbf16>, vector<8x512xf32> -> vector<8x512xf32>
      %488 = arith.addf %485, %487 : vector<8x512xf32>
      %489 = vector.extract_strided_slice %488 {offsets = [0, 0], sizes = [8, 128], strides = [1, 1]} : vector<8x512xf32> to vector<8x128xf32>
      %490 = arith.negf %489 : vector<8x128xf32>
      %491 = math.exp %490 : vector<8x128xf32>
      %cst_131 = arith.constant 1.000000e+00 : f32
      %492 = vector.broadcast %cst_131 : f32 to vector<8x128xf32>
      %493 = arith.addf %492, %491 : vector<8x128xf32>
      %494 = arith.divf %492, %493 : vector<8x128xf32>
      %495 = vector.extract_strided_slice %488 {offsets = [0, 128], sizes = [8, 128], strides = [1, 1]} : vector<8x512xf32> to vector<8x128xf32>
      %496 = arith.negf %495 : vector<8x128xf32>
      %497 = math.exp %496 : vector<8x128xf32>
      %cst_132 = arith.constant 1.000000e+00 : f32
      %498 = vector.broadcast %cst_132 : f32 to vector<8x128xf32>
      %499 = arith.addf %498, %497 : vector<8x128xf32>
      %500 = arith.divf %498, %499 : vector<8x128xf32>
      %501 = vector.extract_strided_slice %488 {offsets = [0, 256], sizes = [8, 128], strides = [1, 1]} : vector<8x512xf32> to vector<8x128xf32>
      %502 = math.tanh %501 : vector<8x128xf32>
      %503 = vector.extract_strided_slice %488 {offsets = [0, 384], sizes = [8, 128], strides = [1, 1]} : vector<8x512xf32> to vector<8x128xf32>
      %504 = arith.negf %503 : vector<8x128xf32>
      %505 = math.exp %504 : vector<8x128xf32>
      %cst_133 = arith.constant 1.000000e+00 : f32
      %506 = vector.broadcast %cst_133 : f32 to vector<8x128xf32>
      %507 = arith.addf %506, %505 : vector<8x128xf32>
      %508 = arith.divf %506, %507 : vector<8x128xf32>
      %509 = arith.mulf %500, %476 : vector<8x128xf32>
      %510 = arith.mulf %494, %502 : vector<8x128xf32>
      %511 = arith.addf %509, %510 : vector<8x128xf32>
      %512 = math.tanh %511 : vector<8x128xf32>
      %513 = arith.mulf %508, %512 : vector<8x128xf32>
      %514 = arith.truncf %513 : vector<8x128xf32> to vector<8x128xbf16>
      %515 = arith.index_cast %483 : i32 to index
      %c128_134 = arith.constant 128 : index
      %516 = vector.load %arg12[%515, %c128_134] : memref<64x256xbf16, #tpu.memory_space<vmem>>, vector<8x128xbf16>
      tpu.vector_store %arg12[%515, %c128_134], %514 {strides = array<i32>} : memref<64x256xbf16, #tpu.memory_space<vmem>>, vector<8x128xbf16>,
      %c6_i32_135 = arith.constant 6 : i32
      %c8_i32_136 = arith.constant 8 : i32
      %517 = arith.muli %c6_i32_135, %c8_i32_136 : i32
      %518 = tpu.assume_multiple %517, 8 : i32
      %519 = arith.index_cast %518 : i32 to index
      %c0_137 = arith.constant 0 : index
      %520 = vector.load %arg11[%519, %c0_137] : memref<64x512xf32, #tpu.memory_space<vmem>>, vector<8x512xf32>
      %521 = arith.truncf %513 : vector<8x128xf32> to vector<8x128xbf16>
      %cst_138 = arith.constant dense<0.000000e+00> : vector<8x512xf32>
      %522 = tpu.matmul %521, %18, %cst_138 {dimension_numbers = #tpu.dot_dimension_numbers<[1], [0], [0], [1], [0, 0, 1, 1], [], []>} : vector<8x128xbf16>, vector<128x512xbf16>, vector<8x512xf32> -> vector<8x512xf32>
      %523 = arith.addf %520, %522 : vector<8x512xf32>
      %524 = vector.extract_strided_slice %523 {offsets = [0, 0], sizes = [8, 128], strides = [1, 1]} : vector<8x512xf32> to vector<8x128xf32>
      %525 = arith.negf %524 : vector<8x128xf32>
      %526 = math.exp %525 : vector<8x128xf32>
      %cst_139 = arith.constant 1.000000e+00 : f32
      %527 = vector.broadcast %cst_139 : f32 to vector<8x128xf32>
      %528 = arith.addf %527, %526 : vector<8x128xf32>
      %529 = arith.divf %527, %528 : vector<8x128xf32>
      %530 = vector.extract_strided_slice %523 {offsets = [0, 128], sizes = [8, 128], strides = [1, 1]} : vector<8x512xf32> to vector<8x128xf32>
      %531 = arith.negf %530 : vector<8x128xf32>
      %532 = math.exp %531 : vector<8x128xf32>
      %cst_140 = arith.constant 1.000000e+00 : f32
      %533 = vector.broadcast %cst_140 : f32 to vector<8x128xf32>
      %534 = arith.addf %533, %532 : vector<8x128xf32>
      %535 = arith.divf %533, %534 : vector<8x128xf32>
      %536 = vector.extract_strided_slice %523 {offsets = [0, 256], sizes = [8, 128], strides = [1, 1]} : vector<8x512xf32> to vector<8x128xf32>
      %537 = math.tanh %536 : vector<8x128xf32>
      %538 = vector.extract_strided_slice %523 {offsets = [0, 384], sizes = [8, 128], strides = [1, 1]} : vector<8x512xf32> to vector<8x128xf32>
      %539 = arith.negf %538 : vector<8x128xf32>
      %540 = math.exp %539 : vector<8x128xf32>
      %cst_141 = arith.constant 1.000000e+00 : f32
      %541 = vector.broadcast %cst_141 : f32 to vector<8x128xf32>
      %542 = arith.addf %541, %540 : vector<8x128xf32>
      %543 = arith.divf %541, %542 : vector<8x128xf32>
      %544 = arith.mulf %535, %511 : vector<8x128xf32>
      %545 = arith.mulf %529, %537 : vector<8x128xf32>
      %546 = arith.addf %544, %545 : vector<8x128xf32>
      %547 = math.tanh %546 : vector<8x128xf32>
      %548 = arith.mulf %543, %547 : vector<8x128xf32>
      %549 = arith.truncf %548 : vector<8x128xf32> to vector<8x128xbf16>
      %550 = arith.index_cast %518 : i32 to index
      %c128_142 = arith.constant 128 : index
      %551 = vector.load %arg12[%550, %c128_142] : memref<64x256xbf16, #tpu.memory_space<vmem>>, vector<8x128xbf16>
      tpu.vector_store %arg12[%550, %c128_142], %549 {strides = array<i32>} : memref<64x256xbf16, #tpu.memory_space<vmem>>, vector<8x128xbf16>,
      %c7_i32_143 = arith.constant 7 : i32
      %c8_i32_144 = arith.constant 8 : i32
      %552 = arith.muli %c7_i32_143, %c8_i32_144 : i32
      %553 = tpu.assume_multiple %552, 8 : i32
      %554 = arith.index_cast %553 : i32 to index
      %c0_145 = arith.constant 0 : index
      %555 = vector.load %arg11[%554, %c0_145] : memref<64x512xf32, #tpu.memory_space<vmem>>, vector<8x512xf32>
      %556 = arith.truncf %548 : vector<8x128xf32> to vector<8x128xbf16>
      %cst_146 = arith.constant dense<0.000000e+00> : vector<8x512xf32>
      %557 = tpu.matmul %556, %18, %cst_146 {dimension_numbers = #tpu.dot_dimension_numbers<[1], [0], [0], [1], [0, 0, 1, 1], [], []>} : vector<8x128xbf16>, vector<128x512xbf16>, vector<8x512xf32> -> vector<8x512xf32>
      %558 = arith.addf %555, %557 : vector<8x512xf32>
      %559 = vector.extract_strided_slice %558 {offsets = [0, 0], sizes = [8, 128], strides = [1, 1]} : vector<8x512xf32> to vector<8x128xf32>
      %560 = arith.negf %559 : vector<8x128xf32>
      %561 = math.exp %560 : vector<8x128xf32>
      %cst_147 = arith.constant 1.000000e+00 : f32
      %562 = vector.broadcast %cst_147 : f32 to vector<8x128xf32>
      %563 = arith.addf %562, %561 : vector<8x128xf32>
      %564 = arith.divf %562, %563 : vector<8x128xf32>
      %565 = vector.extract_strided_slice %558 {offsets = [0, 128], sizes = [8, 128], strides = [1, 1]} : vector<8x512xf32> to vector<8x128xf32>
      %566 = arith.negf %565 : vector<8x128xf32>
      %567 = math.exp %566 : vector<8x128xf32>
      %cst_148 = arith.constant 1.000000e+00 : f32
      %568 = vector.broadcast %cst_148 : f32 to vector<8x128xf32>
      %569 = arith.addf %568, %567 : vector<8x128xf32>
      %570 = arith.divf %568, %569 : vector<8x128xf32>
      %571 = vector.extract_strided_slice %558 {offsets = [0, 256], sizes = [8, 128], strides = [1, 1]} : vector<8x512xf32> to vector<8x128xf32>
      %572 = math.tanh %571 : vector<8x128xf32>
      %573 = vector.extract_strided_slice %558 {offsets = [0, 384], sizes = [8, 128], strides = [1, 1]} : vector<8x512xf32> to vector<8x128xf32>
      %574 = arith.negf %573 : vector<8x128xf32>
      %575 = math.exp %574 : vector<8x128xf32>
      %cst_149 = arith.constant 1.000000e+00 : f32
      %576 = vector.broadcast %cst_149 : f32 to vector<8x128xf32>
      %577 = arith.addf %576, %575 : vector<8x128xf32>
      %578 = arith.divf %576, %577 : vector<8x128xf32>
      %579 = arith.mulf %570, %546 : vector<8x128xf32>
      %580 = arith.mulf %564, %572 : vector<8x128xf32>
      %581 = arith.addf %579, %580 : vector<8x128xf32>
      %582 = math.tanh %581 : vector<8x128xf32>
      %583 = arith.mulf %578, %582 : vector<8x128xf32>
      %584 = arith.truncf %583 : vector<8x128xf32> to vector<8x128xbf16>
      %585 = arith.index_cast %553 : i32 to index
      %c128_150 = arith.constant 128 : index
      %586 = vector.load %arg12[%585, %c128_150] : memref<64x256xbf16, #tpu.memory_space<vmem>>, vector<8x128xbf16>
      tpu.vector_store %arg12[%585, %c128_150], %584 {strides = array<i32>} : memref<64x256xbf16, #tpu.memory_space<vmem>>, vector<8x128xbf16>,
      %c8_i32_151 = arith.constant 8 : i32
    } else {
    }
    %c0 = arith.constant 0 : index
    %c0_1 = arith.constant 0 : index
    %3 = vector.load %arg12[%c0, %c0_1] : memref<64x256xbf16, #tpu.memory_space<vmem>>, vector<64x256xbf16>
    %c0_2 = arith.constant 0 : index
    %c0_3 = arith.constant 0 : index
    %4 = vector.load %arg8[%c0_2, %c0_3] : memref<256x256xbf16, #tpu.memory_space<vmem>>, vector<256x256xbf16>
    %cst = arith.constant dense<0.000000e+00> : vector<64x256xf32>
    %5 = tpu.matmul %3, %4, %cst {dimension_numbers = #tpu.dot_dimension_numbers<[1], [0], [0], [1], [0, 0, 1, 1], [], []>} : vector<64x256xbf16>, vector<256x256xbf16>, vector<64x256xf32> -> vector<64x256xf32>
    %c0_4 = arith.constant 0 : index
    %c0_5 = arith.constant 0 : index
    %6 = vector.load %arg9[%c0_4, %c0_5] : memref<1x256xf32, #tpu.memory_space<vmem>>, vector<1x256xf32>
    %7 = vector.broadcast %6 : vector<1x256xf32> to vector<64x256xf32>
    %8 = arith.addf %5, %7 : vector<64x256xf32>
    %c0_6 = arith.constant 0 : index
    %c0_7 = arith.constant 0 : index
    %9 = vector.load %arg10[%c0_6, %c0_7] : memref<64x256xf32, #tpu.memory_space<vmem>>, vector<64x256xf32>
    tpu.vector_store %arg10[%c0_6, %c0_7], %8 {strides = array<i32>} : memref<64x256xf32, #tpu.memory_space<vmem>>, vector<64x256xf32>,
    return
  }
  func.func @transform_0(%arg0: i32) -> (i32, i32) {
    %c0_i32 = arith.constant 0 : i32
    %c0_i32_0 = arith.constant 0 : i32
    %c0_i32_1 = arith.constant 0 : i32
    return %c0_i32, %c0_i32_0 : i32, i32
  }
  func.func @transform_1(%arg0: i32) -> (i32, i32) {
    %c0_i32 = arith.constant 0 : i32
    %c0_i32_0 = arith.constant 0 : i32
    %c0_i32_1 = arith.constant 0 : i32
    return %c0_i32, %c0_i32_0 : i32, i32
  }
  func.func @transform_2(%arg0: i32) -> (i32, i32) {
    %c0_i32 = arith.constant 0 : i32
    %c0_i32_0 = arith.constant 0 : i32
    %c0_i32_1 = arith.constant 0 : i32
    return %c0_i32, %c0_i32_0 : i32, i32
  }
  func.func @transform_3(%arg0: i32) -> (i32, i32) {
    %c0_i32 = arith.constant 0 : i32
    %c0_i32_0 = arith.constant 0 : i32
    %c0_i32_1 = arith.constant 0 : i32
    return %c0_i32, %c0_i32_0 : i32, i32
  }
  func.func @transform_4(%arg0: i32) -> (i32, i32) {
    %c0_i32 = arith.constant 0 : i32
    %c0_i32_0 = arith.constant 0 : i32
    %c0_i32_1 = arith.constant 0 : i32
    return %c0_i32, %c0_i32_0 : i32, i32
  }
  func.func @transform_5(%arg0: i32) -> (i32, i32) {
    %c0_i32 = arith.constant 0 : i32
    %c0_i32_0 = arith.constant 0 : i32
    %c0_i32_1 = arith.constant 0 : i32
    return %c0_i32, %c0_i32_0 : i32, i32
  }
  func.func @transform_6(%arg0: i32) -> (i32, i32) {
    %c0_i32 = arith.constant 0 : i32
    %c0_i32_0 = arith.constant 0 : i32
    %c0_i32_1 = arith.constant 0 : i32
    return %c0_i32, %c0_i32_0 : i32, i32
  }
  func.func @transform_7(%arg0: i32) -> (i32, i32) {
    %c0_i32 = arith.constant 0 : i32
    %c0_i32_0 = arith.constant 0 : i32
    return %c0_i32, %arg0 : i32, i32
  }
  func.func @transform_8(%arg0: i32) -> (i32, i32) {
    %c0_i32 = arith.constant 0 : i32
    %c0_i32_0 = arith.constant 0 : i32
    return %c0_i32, %arg0 : i32, i32
  }
  func.func @transform_9(%arg0: i32) -> (i32, i32) {
    %c0_i32 = arith.constant 0 : i32
    %c0_i32_0 = arith.constant 0 : i32
    return %c0_i32, %arg0 : i32, i32
  }
}

module attributes {stable_mosaic.version = 11 : i64} {
  func.func @elmo_kernel(%arg0: i32, %arg1: memref<64x32xbf16, #tpu.memory_space<vmem>>, %arg2: memref<32x512xbf16, #tpu.memory_space<vmem>>, %arg3: memref<128x512xbf16, #tpu.memory_space<vmem>>, %arg4: memref<1x512xf32, #tpu.memory_space<vmem>>, %arg5: memref<128x512xbf16, #tpu.memory_space<vmem>>, %arg6: memref<128x512xbf16, #tpu.memory_space<vmem>>, %arg7: memref<1x512xf32, #tpu.memory_space<vmem>>, %arg8: memref<256x256xbf16, #tpu.memory_space<vmem>>, %arg9: memref<1x256xf32, #tpu.memory_space<vmem>>, %arg10: memref<64x256xf32, #tpu.memory_space<vmem>>, %arg11: memref<64x512xf32, #tpu.memory_space<vmem>>, %arg12: memref<64x256xbf16, #tpu.memory_space<vmem>>) attributes {dimension_semantics = [#tpu.dimension_semantics<arbitrary>], iteration_bounds = array<i64: 1>, scalar_prefetch = 0 : i64, scratch_operands = 2 : i64, tpu.core_type = #tpu.core_type<tc>, window_params = [{pipeline_mode = #tpu.pipeline_mode<synchronous>, transform_indices = @transform_0, window_bounds = array<i64: 64, 32>}, {pipeline_mode = #tpu.pipeline_mode<synchronous>, transform_indices = @transform_1, window_bounds = array<i64: 32, 512>}, {pipeline_mode = #tpu.pipeline_mode<synchronous>, transform_indices = @transform_2, window_bounds = array<i64: 128, 512>}, {pipeline_mode = #tpu.pipeline_mode<synchronous>, transform_indices = @transform_3, window_bounds = array<i64: 1, 512>}, {pipeline_mode = #tpu.pipeline_mode<synchronous>, transform_indices = @transform_4, window_bounds = array<i64: 128, 512>}, {pipeline_mode = #tpu.pipeline_mode<synchronous>, transform_indices = @transform_5, window_bounds = array<i64: 128, 512>}, {pipeline_mode = #tpu.pipeline_mode<synchronous>, transform_indices = @transform_6, window_bounds = array<i64: 1, 512>}, {transform_indices = @transform_7, window_bounds = array<i64: 256, 256>}, {transform_indices = @transform_8, window_bounds = array<i64: 1, 256>}, {transform_indices = @transform_9, window_bounds = array<i64: 64, 256>}]} {
    %c0_i32 = arith.constant 0 : i32
    %0 = arith.cmpi eq, %arg0, %c0_i32 : i32
    %1 = arith.extui %0 : i1 to i32
    %c0_i32_0 = arith.constant 0 : i32
    %2 = arith.cmpi ne, %1, %c0_i32_0 : i32
    scf.if %2 {
      %c0_8 = arith.constant 0 : index
      %c0_9 = arith.constant 0 : index
      %10 = vector.load %arg1[%c0_8, %c0_9] : memref<64x32xbf16, #tpu.memory_space<vmem>>, vector<64x32xbf16>
      %c0_10 = arith.constant 0 : index
      %c0_11 = arith.constant 0 : index
      %11 = vector.load %arg2[%c0_10, %c0_11] : memref<32x512xbf16, #tpu.memory_space<vmem>>, vector<32x512xbf16>
      %cst_12 = arith.constant dense<0.000000e+00> : vector<64x512xf32>
      %12 = tpu.matmul %10, %11, %cst_12 {dimension_numbers = #tpu.dot_dimension_numbers<[1], [0], [0], [1], [0, 0, 1, 1], [], []>} : vector<64x32xbf16>, vector<32x512xbf16>, vector<64x512xf32> -> vector<64x512xf32>
      %c0_13 = arith.constant 0 : index
      %c0_14 = arith.constant 0 : index
      %13 = vector.load %arg4[%c0_13, %c0_14] : memref<1x512xf32, #tpu.memory_space<vmem>>, vector<1x512xf32>
      %14 = vector.broadcast %13 : vector<1x512xf32> to vector<64x512xf32>
      %15 = arith.addf %12, %14 : vector<64x512xf32>
      %c0_15 = arith.constant 0 : index
      %c0_16 = arith.constant 0 : index
      %16 = vector.load %arg11[%c0_15, %c0_16] : memref<64x512xf32, #tpu.memory_space<vmem>>, vector<64x512xf32>
      tpu.vector_store %arg11[%c0_15, %c0_16], %15 {strides = array<i32>} : memref<64x512xf32, #tpu.memory_space<vmem>>, vector<64x512xf32>,
      %c0_17 = arith.constant 0 : index
      %c0_18 = arith.constant 0 : index
      %17 = vector.load %arg3[%c0_17, %c0_18] : memref<128x512xbf16, #tpu.memory_space<vmem>>, vector<128x512xbf16>
      %c0_19 = arith.constant 0 : index
      %c0_20 = arith.constant 0 : index
      %18 = vector.load %arg6[%c0_19, %c0_20] : memref<128x512xbf16, #tpu.memory_space<vmem>>, vector<128x512xbf16>
      %cst_21 = arith.constant 0.000000e+00 : f32
      %19 = vector.broadcast %cst_21 : f32 to vector<8x128xf32>
      %c0_i32_22 = arith.constant 0 : i32
      %c8_i32 = arith.constant 8 : i32
      %20 = arith.muli %c0_i32_22, %c8_i32 : i32
      %21 = tpu.assume_multiple %20, 8 : i32
      %22 = arith.index_cast %21 : i32 to index
      %c0_23 = arith.constant 0 : index
      %23 = vector.load %arg11[%22, %c0_23] : memref<64x512xf32, #tpu.memory_space<vmem>>, vector<8x512xf32>
      %24 = arith.truncf %19 : vector<8x128xf32> to vector<8x128xbf16>
      %cst_24 = arith.constant dense<0.000000e+00> : vector<8x512xf32>
      %25 = tpu.matmul %24, %17, %cst_24 {dimension_numbers = #tpu.dot_dimension_numbers<[1], [0], [0], [1], [0, 0, 1, 1], [], []>} : vector<8x128xbf16>, vector<128x512xbf16>, vector<8x512xf32> -> vector<8x512xf32>
      %26 = arith.addf %23, %25 : vector<8x512xf32>
      %27 = vector.extract_strided_slice %26 {offsets = [0, 0], sizes = [8, 128], strides = [1, 1]} : vector<8x512xf32> to vector<8x128xf32>
      %28 = arith.negf %27 : vector<8x128xf32>
      %29 = math.exp %28 : vector<8x128xf32>
      %cst_25 = arith.constant 1.000000e+00 : f32
      %30 = vector.broadcast %cst_25 : f32 to vector<8x128xf32>
      %31 = arith.addf %30, %29 : vector<8x128xf32>
      %32 = arith.divf %30, %31 : vector<8x128xf32>
      %33 = vector.extract_strided_slice %26 {offsets = [0, 128], sizes = [8, 128], strides = [1, 1]} : vector<8x512xf32> to vector<8x128xf32>
      %34 = arith.negf %33 : vector<8x128xf32>
      %35 = math.exp %34 : vector<8x128xf32>
      %cst_26 = arith.constant 1.000000e+00 : f32
      %36 = vector.broadcast %cst_26 : f32 to vector<8x128xf32>
      %37 = arith.addf %36, %35 : vector<8x128xf32>
      %38 = arith.divf %36, %37 : vector<8x128xf32>
      %39 = vector.extract_strided_slice %26 {offsets = [0, 256], sizes = [8, 128], strides = [1, 1]} : vector<8x512xf32> to vector<8x128xf32>
      %40 = math.tanh %39 : vector<8x128xf32>
      %41 = vector.extract_strided_slice %26 {offsets = [0, 384], sizes = [8, 128], strides = [1, 1]} : vector<8x512xf32> to vector<8x128xf32>
      %42 = arith.negf %41 : vector<8x128xf32>
      %43 = math.exp %42 : vector<8x128xf32>
      %cst_27 = arith.constant 1.000000e+00 : f32
      %44 = vector.broadcast %cst_27 : f32 to vector<8x128xf32>
      %45 = arith.addf %44, %43 : vector<8x128xf32>
      %46 = arith.divf %44, %45 : vector<8x128xf32>
      %47 = arith.mulf %38, %19 : vector<8x128xf32>
      %48 = arith.mulf %32, %40 : vector<8x128xf32>
      %49 = arith.addf %47, %48 : vector<8x128xf32>
      %50 = math.tanh %49 : vector<8x128xf32>
      %51 = arith.mulf %46, %50 : vector<8x128xf32>
      %52 = arith.truncf %51 : vector<8x128xf32> to vector<8x128xbf16>
      %53 = arith.index_cast %21 : i32 to index
      %c0_28 = arith.constant 0 : index
      %54 = vector.load %arg12[%53, %c0_28] : memref<64x256xbf16, #tpu.memory_space<vmem>>, vector<8x128xbf16>
      tpu.vector_store %arg12[%53, %c0_28], %52 {strides = array<i32>} : memref<64x256xbf16, #tpu.memory_space<vmem>>, vector<8x128xbf16>,
      %c1_i32 = arith.constant 1 : i32
      %c8_i32_29 = arith.constant 8 : i32
      %55 = arith.muli %c1_i32, %c8_i32_29 : i32
      %56 = tpu.assume_multiple %55, 8 : i32
      %57 = arith.index_cast %56 : i32 to index
      %c0_30 = arith.constant 0 : index
      %58 = vector.load %arg11[%57, %c0_30] : memref<64x512xf32, #tpu.memory_space<vmem>>, vector<8x512xf32>
      %59 = arith.truncf %51 : vector<8x128xf32> to vector<8x128xbf16>
      %cst_31 = arith.constant dense<0.000000e+00> : vector<8x512xf32>
      %60 = tpu.matmul %59, %17, %cst_31 {dimension_numbers = #tpu.dot_dimension_numbers<[1], [0], [0], [1], [0, 0, 1, 1], [], []>} : vector<8x128xbf16>, vector<128x512xbf16>, vector<8x512xf32> -> vector<8x512xf32>
      %61 = arith.addf %58, %60 : vector<8x512xf32>
      %62 = vector.extract_strided_slice %61 {offsets = [0, 0], sizes = [8, 128], strides = [1, 1]} : vector<8x512xf32> to vector<8x128xf32>
      %63 = arith.negf %62 : vector<8x128xf32>
      %64 = math.exp %63 : vector<8x128xf32>
      %cst_32 = arith.constant 1.000000e+00 : f32
      %65 = vector.broadcast %cst_32 : f32 to vector<8x128xf32>
      %66 = arith.addf %65, %64 : vector<8x128xf32>
      %67 = arith.divf %65, %66 : vector<8x128xf32>
      %68 = vector.extract_strided_slice %61 {offsets = [0, 128], sizes = [8, 128], strides = [1, 1]} : vector<8x512xf32> to vector<8x128xf32>
      %69 = arith.negf %68 : vector<8x128xf32>
      %70 = math.exp %69 : vector<8x128xf32>
      %cst_33 = arith.constant 1.000000e+00 : f32
      %71 = vector.broadcast %cst_33 : f32 to vector<8x128xf32>
      %72 = arith.addf %71, %70 : vector<8x128xf32>
      %73 = arith.divf %71, %72 : vector<8x128xf32>
      %74 = vector.extract_strided_slice %61 {offsets = [0, 256], sizes = [8, 128], strides = [1, 1]} : vector<8x512xf32> to vector<8x128xf32>
      %75 = math.tanh %74 : vector<8x128xf32>
      %76 = vector.extract_strided_slice %61 {offsets = [0, 384], sizes = [8, 128], strides = [1, 1]} : vector<8x512xf32> to vector<8x128xf32>
      %77 = arith.negf %76 : vector<8x128xf32>
      %78 = math.exp %77 : vector<8x128xf32>
      %cst_34 = arith.constant 1.000000e+00 : f32
      %79 = vector.broadcast %cst_34 : f32 to vector<8x128xf32>
      %80 = arith.addf %79, %78 : vector<8x128xf32>
      %81 = arith.divf %79, %80 : vector<8x128xf32>
      %82 = arith.mulf %73, %49 : vector<8x128xf32>
      %83 = arith.mulf %67, %75 : vector<8x128xf32>
      %84 = arith.addf %82, %83 : vector<8x128xf32>
      %85 = math.tanh %84 : vector<8x128xf32>
      %86 = arith.mulf %81, %85 : vector<8x128xf32>
      %87 = arith.truncf %86 : vector<8x128xf32> to vector<8x128xbf16>
      %88 = arith.index_cast %56 : i32 to index
      %c0_35 = arith.constant 0 : index
      %89 = vector.load %arg12[%88, %c0_35] : memref<64x256xbf16, #tpu.memory_space<vmem>>, vector<8x128xbf16>
      tpu.vector_store %arg12[%88, %c0_35], %87 {strides = array<i32>} : memref<64x256xbf16, #tpu.memory_space<vmem>>, vector<8x128xbf16>,
      %c2_i32 = arith.constant 2 : i32
      %c8_i32_36 = arith.constant 8 : i32
      %90 = arith.muli %c2_i32, %c8_i32_36 : i32
      %91 = tpu.assume_multiple %90, 8 : i32
      %92 = arith.index_cast %91 : i32 to index
      %c0_37 = arith.constant 0 : index
      %93 = vector.load %arg11[%92, %c0_37] : memref<64x512xf32, #tpu.memory_space<vmem>>, vector<8x512xf32>
      %94 = arith.truncf %86 : vector<8x128xf32> to vector<8x128xbf16>
      %cst_38 = arith.constant dense<0.000000e+00> : vector<8x512xf32>
      %95 = tpu.matmul %94, %17, %cst_38 {dimension_numbers = #tpu.dot_dimension_numbers<[1], [0], [0], [1], [0, 0, 1, 1], [], []>} : vector<8x128xbf16>, vector<128x512xbf16>, vector<8x512xf32> -> vector<8x512xf32>
      %96 = arith.addf %93, %95 : vector<8x512xf32>
      %97 = vector.extract_strided_slice %96 {offsets = [0, 0], sizes = [8, 128], strides = [1, 1]} : vector<8x512xf32> to vector<8x128xf32>
      %98 = arith.negf %97 : vector<8x128xf32>
      %99 = math.exp %98 : vector<8x128xf32>
      %cst_39 = arith.constant 1.000000e+00 : f32
      %100 = vector.broadcast %cst_39 : f32 to vector<8x128xf32>
      %101 = arith.addf %100, %99 : vector<8x128xf32>
      %102 = arith.divf %100, %101 : vector<8x128xf32>
      %103 = vector.extract_strided_slice %96 {offsets = [0, 128], sizes = [8, 128], strides = [1, 1]} : vector<8x512xf32> to vector<8x128xf32>
      %104 = arith.negf %103 : vector<8x128xf32>
      %105 = math.exp %104 : vector<8x128xf32>
      %cst_40 = arith.constant 1.000000e+00 : f32
      %106 = vector.broadcast %cst_40 : f32 to vector<8x128xf32>
      %107 = arith.addf %106, %105 : vector<8x128xf32>
      %108 = arith.divf %106, %107 : vector<8x128xf32>
      %109 = vector.extract_strided_slice %96 {offsets = [0, 256], sizes = [8, 128], strides = [1, 1]} : vector<8x512xf32> to vector<8x128xf32>
      %110 = math.tanh %109 : vector<8x128xf32>
      %111 = vector.extract_strided_slice %96 {offsets = [0, 384], sizes = [8, 128], strides = [1, 1]} : vector<8x512xf32> to vector<8x128xf32>
      %112 = arith.negf %111 : vector<8x128xf32>
      %113 = math.exp %112 : vector<8x128xf32>
      %cst_41 = arith.constant 1.000000e+00 : f32
      %114 = vector.broadcast %cst_41 : f32 to vector<8x128xf32>
      %115 = arith.addf %114, %113 : vector<8x128xf32>
      %116 = arith.divf %114, %115 : vector<8x128xf32>
      %117 = arith.mulf %108, %84 : vector<8x128xf32>
      %118 = arith.mulf %102, %110 : vector<8x128xf32>
      %119 = arith.addf %117, %118 : vector<8x128xf32>
      %120 = math.tanh %119 : vector<8x128xf32>
      %121 = arith.mulf %116, %120 : vector<8x128xf32>
      %122 = arith.truncf %121 : vector<8x128xf32> to vector<8x128xbf16>
      %123 = arith.index_cast %91 : i32 to index
      %c0_42 = arith.constant 0 : index
      %124 = vector.load %arg12[%123, %c0_42] : memref<64x256xbf16, #tpu.memory_space<vmem>>, vector<8x128xbf16>
      tpu.vector_store %arg12[%123, %c0_42], %122 {strides = array<i32>} : memref<64x256xbf16, #tpu.memory_space<vmem>>, vector<8x128xbf16>,
      %c3_i32 = arith.constant 3 : i32
      %c8_i32_43 = arith.constant 8 : i32
      %125 = arith.muli %c3_i32, %c8_i32_43 : i32
      %126 = tpu.assume_multiple %125, 8 : i32
      %127 = arith.index_cast %126 : i32 to index
      %c0_44 = arith.constant 0 : index
      %128 = vector.load %arg11[%127, %c0_44] : memref<64x512xf32, #tpu.memory_space<vmem>>, vector<8x512xf32>
      %129 = arith.truncf %121 : vector<8x128xf32> to vector<8x128xbf16>
      %cst_45 = arith.constant dense<0.000000e+00> : vector<8x512xf32>
      %130 = tpu.matmul %129, %17, %cst_45 {dimension_numbers = #tpu.dot_dimension_numbers<[1], [0], [0], [1], [0, 0, 1, 1], [], []>} : vector<8x128xbf16>, vector<128x512xbf16>, vector<8x512xf32> -> vector<8x512xf32>
      %131 = arith.addf %128, %130 : vector<8x512xf32>
      %132 = vector.extract_strided_slice %131 {offsets = [0, 0], sizes = [8, 128], strides = [1, 1]} : vector<8x512xf32> to vector<8x128xf32>
      %133 = arith.negf %132 : vector<8x128xf32>
      %134 = math.exp %133 : vector<8x128xf32>
      %cst_46 = arith.constant 1.000000e+00 : f32
      %135 = vector.broadcast %cst_46 : f32 to vector<8x128xf32>
      %136 = arith.addf %135, %134 : vector<8x128xf32>
      %137 = arith.divf %135, %136 : vector<8x128xf32>
      %138 = vector.extract_strided_slice %131 {offsets = [0, 128], sizes = [8, 128], strides = [1, 1]} : vector<8x512xf32> to vector<8x128xf32>
      %139 = arith.negf %138 : vector<8x128xf32>
      %140 = math.exp %139 : vector<8x128xf32>
      %cst_47 = arith.constant 1.000000e+00 : f32
      %141 = vector.broadcast %cst_47 : f32 to vector<8x128xf32>
      %142 = arith.addf %141, %140 : vector<8x128xf32>
      %143 = arith.divf %141, %142 : vector<8x128xf32>
      %144 = vector.extract_strided_slice %131 {offsets = [0, 256], sizes = [8, 128], strides = [1, 1]} : vector<8x512xf32> to vector<8x128xf32>
      %145 = math.tanh %144 : vector<8x128xf32>
      %146 = vector.extract_strided_slice %131 {offsets = [0, 384], sizes = [8, 128], strides = [1, 1]} : vector<8x512xf32> to vector<8x128xf32>
      %147 = arith.negf %146 : vector<8x128xf32>
      %148 = math.exp %147 : vector<8x128xf32>
      %cst_48 = arith.constant 1.000000e+00 : f32
      %149 = vector.broadcast %cst_48 : f32 to vector<8x128xf32>
      %150 = arith.addf %149, %148 : vector<8x128xf32>
      %151 = arith.divf %149, %150 : vector<8x128xf32>
      %152 = arith.mulf %143, %119 : vector<8x128xf32>
      %153 = arith.mulf %137, %145 : vector<8x128xf32>
      %154 = arith.addf %152, %153 : vector<8x128xf32>
      %155 = math.tanh %154 : vector<8x128xf32>
      %156 = arith.mulf %151, %155 : vector<8x128xf32>
      %157 = arith.truncf %156 : vector<8x128xf32> to vector<8x128xbf16>
      %158 = arith.index_cast %126 : i32 to index
      %c0_49 = arith.constant 0 : index
      %159 = vector.load %arg12[%158, %c0_49] : memref<64x256xbf16, #tpu.memory_space<vmem>>, vector<8x128xbf16>
      tpu.vector_store %arg12[%158, %c0_49], %157 {strides = array<i32>} : memref<64x256xbf16, #tpu.memory_space<vmem>>, vector<8x128xbf16>,
      %c4_i32 = arith.constant 4 : i32
      %c8_i32_50 = arith.constant 8 : i32
      %160 = arith.muli %c4_i32, %c8_i32_50 : i32
      %161 = tpu.assume_multiple %160, 8 : i32
      %162 = arith.index_cast %161 : i32 to index
      %c0_51 = arith.constant 0 : index
      %163 = vector.load %arg11[%162, %c0_51] : memref<64x512xf32, #tpu.memory_space<vmem>>, vector<8x512xf32>
      %164 = arith.truncf %156 : vector<8x128xf32> to vector<8x128xbf16>
      %cst_52 = arith.constant dense<0.000000e+00> : vector<8x512xf32>
      %165 = tpu.matmul %164, %17, %cst_52 {dimension_numbers = #tpu.dot_dimension_numbers<[1], [0], [0], [1], [0, 0, 1, 1], [], []>} : vector<8x128xbf16>, vector<128x512xbf16>, vector<8x512xf32> -> vector<8x512xf32>
      %166 = arith.addf %163, %165 : vector<8x512xf32>
      %167 = vector.extract_strided_slice %166 {offsets = [0, 0], sizes = [8, 128], strides = [1, 1]} : vector<8x512xf32> to vector<8x128xf32>
      %168 = arith.negf %167 : vector<8x128xf32>
      %169 = math.exp %168 : vector<8x128xf32>
      %cst_53 = arith.constant 1.000000e+00 : f32
      %170 = vector.broadcast %cst_53 : f32 to vector<8x128xf32>
      %171 = arith.addf %170, %169 : vector<8x128xf32>
      %172 = arith.divf %170, %171 : vector<8x128xf32>
      %173 = vector.extract_strided_slice %166 {offsets = [0, 128], sizes = [8, 128], strides = [1, 1]} : vector<8x512xf32> to vector<8x128xf32>
      %174 = arith.negf %173 : vector<8x128xf32>
      %175 = math.exp %174 : vector<8x128xf32>
      %cst_54 = arith.constant 1.000000e+00 : f32
      %176 = vector.broadcast %cst_54 : f32 to vector<8x128xf32>
      %177 = arith.addf %176, %175 : vector<8x128xf32>
      %178 = arith.divf %176, %177 : vector<8x128xf32>
      %179 = vector.extract_strided_slice %166 {offsets = [0, 256], sizes = [8, 128], strides = [1, 1]} : vector<8x512xf32> to vector<8x128xf32>
      %180 = math.tanh %179 : vector<8x128xf32>
      %181 = vector.extract_strided_slice %166 {offsets = [0, 384], sizes = [8, 128], strides = [1, 1]} : vector<8x512xf32> to vector<8x128xf32>
      %182 = arith.negf %181 : vector<8x128xf32>
      %183 = math.exp %182 : vector<8x128xf32>
      %cst_55 = arith.constant 1.000000e+00 : f32
      %184 = vector.broadcast %cst_55 : f32 to vector<8x128xf32>
      %185 = arith.addf %184, %183 : vector<8x128xf32>
      %186 = arith.divf %184, %185 : vector<8x128xf32>
      %187 = arith.mulf %178, %154 : vector<8x128xf32>
      %188 = arith.mulf %172, %180 : vector<8x128xf32>
      %189 = arith.addf %187, %188 : vector<8x128xf32>
      %190 = math.tanh %189 : vector<8x128xf32>
      %191 = arith.mulf %186, %190 : vector<8x128xf32>
      %192 = arith.truncf %191 : vector<8x128xf32> to vector<8x128xbf16>
      %193 = arith.index_cast %161 : i32 to index
      %c0_56 = arith.constant 0 : index
      %194 = vector.load %arg12[%193, %c0_56] : memref<64x256xbf16, #tpu.memory_space<vmem>>, vector<8x128xbf16>
      tpu.vector_store %arg12[%193, %c0_56], %192 {strides = array<i32>} : memref<64x256xbf16, #tpu.memory_space<vmem>>, vector<8x128xbf16>,
      %c5_i32 = arith.constant 5 : i32
      %c8_i32_57 = arith.constant 8 : i32
      %195 = arith.muli %c5_i32, %c8_i32_57 : i32
      %196 = tpu.assume_multiple %195, 8 : i32
      %197 = arith.index_cast %196 : i32 to index
      %c0_58 = arith.constant 0 : index
      %198 = vector.load %arg11[%197, %c0_58] : memref<64x512xf32, #tpu.memory_space<vmem>>, vector<8x512xf32>
      %199 = arith.truncf %191 : vector<8x128xf32> to vector<8x128xbf16>
      %cst_59 = arith.constant dense<0.000000e+00> : vector<8x512xf32>
      %200 = tpu.matmul %199, %17, %cst_59 {dimension_numbers = #tpu.dot_dimension_numbers<[1], [0], [0], [1], [0, 0, 1, 1], [], []>} : vector<8x128xbf16>, vector<128x512xbf16>, vector<8x512xf32> -> vector<8x512xf32>
      %201 = arith.addf %198, %200 : vector<8x512xf32>
      %202 = vector.extract_strided_slice %201 {offsets = [0, 0], sizes = [8, 128], strides = [1, 1]} : vector<8x512xf32> to vector<8x128xf32>
      %203 = arith.negf %202 : vector<8x128xf32>
      %204 = math.exp %203 : vector<8x128xf32>
      %cst_60 = arith.constant 1.000000e+00 : f32
      %205 = vector.broadcast %cst_60 : f32 to vector<8x128xf32>
      %206 = arith.addf %205, %204 : vector<8x128xf32>
      %207 = arith.divf %205, %206 : vector<8x128xf32>
      %208 = vector.extract_strided_slice %201 {offsets = [0, 128], sizes = [8, 128], strides = [1, 1]} : vector<8x512xf32> to vector<8x128xf32>
      %209 = arith.negf %208 : vector<8x128xf32>
      %210 = math.exp %209 : vector<8x128xf32>
      %cst_61 = arith.constant 1.000000e+00 : f32
      %211 = vector.broadcast %cst_61 : f32 to vector<8x128xf32>
      %212 = arith.addf %211, %210 : vector<8x128xf32>
      %213 = arith.divf %211, %212 : vector<8x128xf32>
      %214 = vector.extract_strided_slice %201 {offsets = [0, 256], sizes = [8, 128], strides = [1, 1]} : vector<8x512xf32> to vector<8x128xf32>
      %215 = math.tanh %214 : vector<8x128xf32>
      %216 = vector.extract_strided_slice %201 {offsets = [0, 384], sizes = [8, 128], strides = [1, 1]} : vector<8x512xf32> to vector<8x128xf32>
      %217 = arith.negf %216 : vector<8x128xf32>
      %218 = math.exp %217 : vector<8x128xf32>
      %cst_62 = arith.constant 1.000000e+00 : f32
      %219 = vector.broadcast %cst_62 : f32 to vector<8x128xf32>
      %220 = arith.addf %219, %218 : vector<8x128xf32>
      %221 = arith.divf %219, %220 : vector<8x128xf32>
      %222 = arith.mulf %213, %189 : vector<8x128xf32>
      %223 = arith.mulf %207, %215 : vector<8x128xf32>
      %224 = arith.addf %222, %223 : vector<8x128xf32>
      %225 = math.tanh %224 : vector<8x128xf32>
      %226 = arith.mulf %221, %225 : vector<8x128xf32>
      %227 = arith.truncf %226 : vector<8x128xf32> to vector<8x128xbf16>
      %228 = arith.index_cast %196 : i32 to index
      %c0_63 = arith.constant 0 : index
      %229 = vector.load %arg12[%228, %c0_63] : memref<64x256xbf16, #tpu.memory_space<vmem>>, vector<8x128xbf16>
      tpu.vector_store %arg12[%228, %c0_63], %227 {strides = array<i32>} : memref<64x256xbf16, #tpu.memory_space<vmem>>, vector<8x128xbf16>,
      %c6_i32 = arith.constant 6 : i32
      %c8_i32_64 = arith.constant 8 : i32
      %230 = arith.muli %c6_i32, %c8_i32_64 : i32
      %231 = tpu.assume_multiple %230, 8 : i32
      %232 = arith.index_cast %231 : i32 to index
      %c0_65 = arith.constant 0 : index
      %233 = vector.load %arg11[%232, %c0_65] : memref<64x512xf32, #tpu.memory_space<vmem>>, vector<8x512xf32>
      %234 = arith.truncf %226 : vector<8x128xf32> to vector<8x128xbf16>
      %cst_66 = arith.constant dense<0.000000e+00> : vector<8x512xf32>
      %235 = tpu.matmul %234, %17, %cst_66 {dimension_numbers = #tpu.dot_dimension_numbers<[1], [0], [0], [1], [0, 0, 1, 1], [], []>} : vector<8x128xbf16>, vector<128x512xbf16>, vector<8x512xf32> -> vector<8x512xf32>
      %236 = arith.addf %233, %235 : vector<8x512xf32>
      %237 = vector.extract_strided_slice %236 {offsets = [0, 0], sizes = [8, 128], strides = [1, 1]} : vector<8x512xf32> to vector<8x128xf32>
      %238 = arith.negf %237 : vector<8x128xf32>
      %239 = math.exp %238 : vector<8x128xf32>
      %cst_67 = arith.constant 1.000000e+00 : f32
      %240 = vector.broadcast %cst_67 : f32 to vector<8x128xf32>
      %241 = arith.addf %240, %239 : vector<8x128xf32>
      %242 = arith.divf %240, %241 : vector<8x128xf32>
      %243 = vector.extract_strided_slice %236 {offsets = [0, 128], sizes = [8, 128], strides = [1, 1]} : vector<8x512xf32> to vector<8x128xf32>
      %244 = arith.negf %243 : vector<8x128xf32>
      %245 = math.exp %244 : vector<8x128xf32>
      %cst_68 = arith.constant 1.000000e+00 : f32
      %246 = vector.broadcast %cst_68 : f32 to vector<8x128xf32>
      %247 = arith.addf %246, %245 : vector<8x128xf32>
      %248 = arith.divf %246, %247 : vector<8x128xf32>
      %249 = vector.extract_strided_slice %236 {offsets = [0, 256], sizes = [8, 128], strides = [1, 1]} : vector<8x512xf32> to vector<8x128xf32>
      %250 = math.tanh %249 : vector<8x128xf32>
      %251 = vector.extract_strided_slice %236 {offsets = [0, 384], sizes = [8, 128], strides = [1, 1]} : vector<8x512xf32> to vector<8x128xf32>
      %252 = arith.negf %251 : vector<8x128xf32>
      %253 = math.exp %252 : vector<8x128xf32>
      %cst_69 = arith.constant 1.000000e+00 : f32
      %254 = vector.broadcast %cst_69 : f32 to vector<8x128xf32>
      %255 = arith.addf %254, %253 : vector<8x128xf32>
      %256 = arith.divf %254, %255 : vector<8x128xf32>
      %257 = arith.mulf %248, %224 : vector<8x128xf32>
      %258 = arith.mulf %242, %250 : vector<8x128xf32>
      %259 = arith.addf %257, %258 : vector<8x128xf32>
      %260 = math.tanh %259 : vector<8x128xf32>
      %261 = arith.mulf %256, %260 : vector<8x128xf32>
      %262 = arith.truncf %261 : vector<8x128xf32> to vector<8x128xbf16>
      %263 = arith.index_cast %231 : i32 to index
      %c0_70 = arith.constant 0 : index
      %264 = vector.load %arg12[%263, %c0_70] : memref<64x256xbf16, #tpu.memory_space<vmem>>, vector<8x128xbf16>
      tpu.vector_store %arg12[%263, %c0_70], %262 {strides = array<i32>} : memref<64x256xbf16, #tpu.memory_space<vmem>>, vector<8x128xbf16>,
      %c7_i32 = arith.constant 7 : i32
      %c8_i32_71 = arith.constant 8 : i32
      %265 = arith.muli %c7_i32, %c8_i32_71 : i32
      %266 = tpu.assume_multiple %265, 8 : i32
      %267 = arith.index_cast %266 : i32 to index
      %c0_72 = arith.constant 0 : index
      %268 = vector.load %arg11[%267, %c0_72] : memref<64x512xf32, #tpu.memory_space<vmem>>, vector<8x512xf32>
      %269 = arith.truncf %261 : vector<8x128xf32> to vector<8x128xbf16>
      %cst_73 = arith.constant dense<0.000000e+00> : vector<8x512xf32>
      %270 = tpu.matmul %269, %17, %cst_73 {dimension_numbers = #tpu.dot_dimension_numbers<[1], [0], [0], [1], [0, 0, 1, 1], [], []>} : vector<8x128xbf16>, vector<128x512xbf16>, vector<8x512xf32> -> vector<8x512xf32>
      %271 = arith.addf %268, %270 : vector<8x512xf32>
      %272 = vector.extract_strided_slice %271 {offsets = [0, 0], sizes = [8, 128], strides = [1, 1]} : vector<8x512xf32> to vector<8x128xf32>
      %273 = arith.negf %272 : vector<8x128xf32>
      %274 = math.exp %273 : vector<8x128xf32>
      %cst_74 = arith.constant 1.000000e+00 : f32
      %275 = vector.broadcast %cst_74 : f32 to vector<8x128xf32>
      %276 = arith.addf %275, %274 : vector<8x128xf32>
      %277 = arith.divf %275, %276 : vector<8x128xf32>
      %278 = vector.extract_strided_slice %271 {offsets = [0, 128], sizes = [8, 128], strides = [1, 1]} : vector<8x512xf32> to vector<8x128xf32>
      %279 = arith.negf %278 : vector<8x128xf32>
      %280 = math.exp %279 : vector<8x128xf32>
      %cst_75 = arith.constant 1.000000e+00 : f32
      %281 = vector.broadcast %cst_75 : f32 to vector<8x128xf32>
      %282 = arith.addf %281, %280 : vector<8x128xf32>
      %283 = arith.divf %281, %282 : vector<8x128xf32>
      %284 = vector.extract_strided_slice %271 {offsets = [0, 256], sizes = [8, 128], strides = [1, 1]} : vector<8x512xf32> to vector<8x128xf32>
      %285 = math.tanh %284 : vector<8x128xf32>
      %286 = vector.extract_strided_slice %271 {offsets = [0, 384], sizes = [8, 128], strides = [1, 1]} : vector<8x512xf32> to vector<8x128xf32>
      %287 = arith.negf %286 : vector<8x128xf32>
      %288 = math.exp %287 : vector<8x128xf32>
      %cst_76 = arith.constant 1.000000e+00 : f32
      %289 = vector.broadcast %cst_76 : f32 to vector<8x128xf32>
      %290 = arith.addf %289, %288 : vector<8x128xf32>
      %291 = arith.divf %289, %290 : vector<8x128xf32>
      %292 = arith.mulf %283, %259 : vector<8x128xf32>
      %293 = arith.mulf %277, %285 : vector<8x128xf32>
      %294 = arith.addf %292, %293 : vector<8x128xf32>
      %295 = math.tanh %294 : vector<8x128xf32>
      %296 = arith.mulf %291, %295 : vector<8x128xf32>
      %297 = arith.truncf %296 : vector<8x128xf32> to vector<8x128xbf16>
      %298 = arith.index_cast %266 : i32 to index
      %c0_77 = arith.constant 0 : index
      %299 = vector.load %arg12[%298, %c0_77] : memref<64x256xbf16, #tpu.memory_space<vmem>>, vector<8x128xbf16>
      tpu.vector_store %arg12[%298, %c0_77], %297 {strides = array<i32>} : memref<64x256xbf16, #tpu.memory_space<vmem>>, vector<8x128xbf16>,
      %c8_i32_78 = arith.constant 8 : i32
      %c0_79 = arith.constant 0 : index
      %c0_80 = arith.constant 0 : index
      %300 = vector.load %arg12[%c0_79, %c0_80] : memref<64x256xbf16, #tpu.memory_space<vmem>>, vector<64x128xbf16>
      %c0_81 = arith.constant 0 : index
      %c0_82 = arith.constant 0 : index
      %301 = vector.load %arg5[%c0_81, %c0_82] : memref<128x512xbf16, #tpu.memory_space<vmem>>, vector<128x512xbf16>
      %cst_83 = arith.constant dense<0.000000e+00> : vector<64x512xf32>
      %302 = tpu.matmul %300, %301, %cst_83 {dimension_numbers = #tpu.dot_dimension_numbers<[1], [0], [0], [1], [0, 0, 1, 1], [], []>} : vector<64x128xbf16>, vector<128x512xbf16>, vector<64x512xf32> -> vector<64x512xf32>
      %c0_84 = arith.constant 0 : index
      %c0_85 = arith.constant 0 : index
      %303 = vector.load %arg7[%c0_84, %c0_85] : memref<1x512xf32, #tpu.memory_space<vmem>>, vector<1x512xf32>
      %304 = vector.broadcast %303 : vector<1x512xf32> to vector<64x512xf32>
      %305 = arith.addf %302, %304 : vector<64x512xf32>
      %c0_86 = arith.constant 0 : index
      %c0_87 = arith.constant 0 : index
      %306 = vector.load %arg11[%c0_86, %c0_87] : memref<64x512xf32, #tpu.memory_space<vmem>>, vector<64x512xf32>
      tpu.vector_store %arg11[%c0_86, %c0_87], %305 {strides = array<i32>} : memref<64x512xf32, #tpu.memory_space<vmem>>, vector<64x512xf32>,
      %c0_i32_88 = arith.constant 0 : i32
      %c8_i32_89 = arith.constant 8 : i32
      %307 = arith.muli %c0_i32_88, %c8_i32_89 : i32
      %308 = tpu.assume_multiple %307, 8 : i32
      %309 = arith.index_cast %308 : i32 to index
      %c0_90 = arith.constant 0 : index
      %310 = vector.load %arg11[%309, %c0_90] : memref<64x512xf32, #tpu.memory_space<vmem>>, vector<8x512xf32>
      %311 = arith.truncf %19 : vector<8x128xf32> to vector<8x128xbf16>
      %cst_91 = arith.constant dense<0.000000e+00> : vector<8x512xf32>
      %312 = tpu.matmul %311, %18, %cst_91 {dimension_numbers = #tpu.dot_dimension_numbers<[1], [0], [0], [1], [0, 0, 1, 1], [], []>} : vector<8x128xbf16>, vector<128x512xbf16>, vector<8x512xf32> -> vector<8x512xf32>
      %313 = arith.addf %310, %312 : vector<8x512xf32>
      %314 = vector.extract_strided_slice %313 {offsets = [0, 0], sizes = [8, 128], strides = [1, 1]} : vector<8x512xf32> to vector<8x128xf32>
      %315 = arith.negf %314 : vector<8x128xf32>
      %316 = math.exp %315 : vector<8x128xf32>
      %cst_92 = arith.constant 1.000000e+00 : f32
      %317 = vector.broadcast %cst_92 : f32 to vector<8x128xf32>
      %318 = arith.addf %317, %316 : vector<8x128xf32>
      %319 = arith.divf %317, %318 : vector<8x128xf32>
      %320 = vector.extract_strided_slice %313 {offsets = [0, 128], sizes = [8, 128], strides = [1, 1]} : vector<8x512xf32> to vector<8x128xf32>
      %321 = arith.negf %320 : vector<8x128xf32>
      %322 = math.exp %321 : vector<8x128xf32>
      %cst_93 = arith.constant 1.000000e+00 : f32
      %323 = vector.broadcast %cst_93 : f32 to vector<8x128xf32>
      %324 = arith.addf %323, %322 : vector<8x128xf32>
      %325 = arith.divf %323, %324 : vector<8x128xf32>
      %326 = vector.extract_strided_slice %313 {offsets = [0, 256], sizes = [8, 128], strides = [1, 1]} : vector<8x512xf32> to vector<8x128xf32>
      %327 = math.tanh %326 : vector<8x128xf32>
      %328 = vector.extract_strided_slice %313 {offsets = [0, 384], sizes = [8, 128], strides = [1, 1]} : vector<8x512xf32> to vector<8x128xf32>
      %329 = arith.negf %328 : vector<8x128xf32>
      %330 = math.exp %329 : vector<8x128xf32>
      %cst_94 = arith.constant 1.000000e+00 : f32
      %331 = vector.broadcast %cst_94 : f32 to vector<8x128xf32>
      %332 = arith.addf %331, %330 : vector<8x128xf32>
      %333 = arith.divf %331, %332 : vector<8x128xf32>
      %334 = arith.mulf %325, %19 : vector<8x128xf32>
      %335 = arith.mulf %319, %327 : vector<8x128xf32>
      %336 = arith.addf %334, %335 : vector<8x128xf32>
      %337 = math.tanh %336 : vector<8x128xf32>
      %338 = arith.mulf %333, %337 : vector<8x128xf32>
      %339 = arith.truncf %338 : vector<8x128xf32> to vector<8x128xbf16>
      %340 = arith.index_cast %308 : i32 to index
      %c128 = arith.constant 128 : index
      %341 = vector.load %arg12[%340, %c128] : memref<64x256xbf16, #tpu.memory_space<vmem>>, vector<8x128xbf16>
      tpu.vector_store %arg12[%340, %c128], %339 {strides = array<i32>} : memref<64x256xbf16, #tpu.memory_space<vmem>>, vector<8x128xbf16>,
      %c1_i32_95 = arith.constant 1 : i32
      %c8_i32_96 = arith.constant 8 : i32
      %342 = arith.muli %c1_i32_95, %c8_i32_96 : i32
      %343 = tpu.assume_multiple %342, 8 : i32
      %344 = arith.index_cast %343 : i32 to index
      %c0_97 = arith.constant 0 : index
      %345 = vector.load %arg11[%344, %c0_97] : memref<64x512xf32, #tpu.memory_space<vmem>>, vector<8x512xf32>
      %346 = arith.truncf %338 : vector<8x128xf32> to vector<8x128xbf16>
      %cst_98 = arith.constant dense<0.000000e+00> : vector<8x512xf32>
      %347 = tpu.matmul %346, %18, %cst_98 {dimension_numbers = #tpu.dot_dimension_numbers<[1], [0], [0], [1], [0, 0, 1, 1], [], []>} : vector<8x128xbf16>, vector<128x512xbf16>, vector<8x512xf32> -> vector<8x512xf32>
      %348 = arith.addf %345, %347 : vector<8x512xf32>
      %349 = vector.extract_strided_slice %348 {offsets = [0, 0], sizes = [8, 128], strides = [1, 1]} : vector<8x512xf32> to vector<8x128xf32>
      %350 = arith.negf %349 : vector<8x128xf32>
      %351 = math.exp %350 : vector<8x128xf32>
      %cst_99 = arith.constant 1.000000e+00 : f32
      %352 = vector.broadcast %cst_99 : f32 to vector<8x128xf32>
      %353 = arith.addf %352, %351 : vector<8x128xf32>
      %354 = arith.divf %352, %353 : vector<8x128xf32>
      %355 = vector.extract_strided_slice %348 {offsets = [0, 128], sizes = [8, 128], strides = [1, 1]} : vector<8x512xf32> to vector<8x128xf32>
      %356 = arith.negf %355 : vector<8x128xf32>
      %357 = math.exp %356 : vector<8x128xf32>
      %cst_100 = arith.constant 1.000000e+00 : f32
      %358 = vector.broadcast %cst_100 : f32 to vector<8x128xf32>
      %359 = arith.addf %358, %357 : vector<8x128xf32>
      %360 = arith.divf %358, %359 : vector<8x128xf32>
      %361 = vector.extract_strided_slice %348 {offsets = [0, 256], sizes = [8, 128], strides = [1, 1]} : vector<8x512xf32> to vector<8x128xf32>
      %362 = math.tanh %361 : vector<8x128xf32>
      %363 = vector.extract_strided_slice %348 {offsets = [0, 384], sizes = [8, 128], strides = [1, 1]} : vector<8x512xf32> to vector<8x128xf32>
      %364 = arith.negf %363 : vector<8x128xf32>
      %365 = math.exp %364 : vector<8x128xf32>
      %cst_101 = arith.constant 1.000000e+00 : f32
      %366 = vector.broadcast %cst_101 : f32 to vector<8x128xf32>
      %367 = arith.addf %366, %365 : vector<8x128xf32>
      %368 = arith.divf %366, %367 : vector<8x128xf32>
      %369 = arith.mulf %360, %336 : vector<8x128xf32>
      %370 = arith.mulf %354, %362 : vector<8x128xf32>
      %371 = arith.addf %369, %370 : vector<8x128xf32>
      %372 = math.tanh %371 : vector<8x128xf32>
      %373 = arith.mulf %368, %372 : vector<8x128xf32>
      %374 = arith.truncf %373 : vector<8x128xf32> to vector<8x128xbf16>
      %375 = arith.index_cast %343 : i32 to index
      %c128_102 = arith.constant 128 : index
      %376 = vector.load %arg12[%375, %c128_102] : memref<64x256xbf16, #tpu.memory_space<vmem>>, vector<8x128xbf16>
      tpu.vector_store %arg12[%375, %c128_102], %374 {strides = array<i32>} : memref<64x256xbf16, #tpu.memory_space<vmem>>, vector<8x128xbf16>,
      %c2_i32_103 = arith.constant 2 : i32
      %c8_i32_104 = arith.constant 8 : i32
      %377 = arith.muli %c2_i32_103, %c8_i32_104 : i32
      %378 = tpu.assume_multiple %377, 8 : i32
      %379 = arith.index_cast %378 : i32 to index
      %c0_105 = arith.constant 0 : index
      %380 = vector.load %arg11[%379, %c0_105] : memref<64x512xf32, #tpu.memory_space<vmem>>, vector<8x512xf32>
      %381 = arith.truncf %373 : vector<8x128xf32> to vector<8x128xbf16>
      %cst_106 = arith.constant dense<0.000000e+00> : vector<8x512xf32>
      %382 = tpu.matmul %381, %18, %cst_106 {dimension_numbers = #tpu.dot_dimension_numbers<[1], [0], [0], [1], [0, 0, 1, 1], [], []>} : vector<8x128xbf16>, vector<128x512xbf16>, vector<8x512xf32> -> vector<8x512xf32>
      %383 = arith.addf %380, %382 : vector<8x512xf32>
      %384 = vector.extract_strided_slice %383 {offsets = [0, 0], sizes = [8, 128], strides = [1, 1]} : vector<8x512xf32> to vector<8x128xf32>
      %385 = arith.negf %384 : vector<8x128xf32>
      %386 = math.exp %385 : vector<8x128xf32>
      %cst_107 = arith.constant 1.000000e+00 : f32
      %387 = vector.broadcast %cst_107 : f32 to vector<8x128xf32>
      %388 = arith.addf %387, %386 : vector<8x128xf32>
      %389 = arith.divf %387, %388 : vector<8x128xf32>
      %390 = vector.extract_strided_slice %383 {offsets = [0, 128], sizes = [8, 128], strides = [1, 1]} : vector<8x512xf32> to vector<8x128xf32>
      %391 = arith.negf %390 : vector<8x128xf32>
      %392 = math.exp %391 : vector<8x128xf32>
      %cst_108 = arith.constant 1.000000e+00 : f32
      %393 = vector.broadcast %cst_108 : f32 to vector<8x128xf32>
      %394 = arith.addf %393, %392 : vector<8x128xf32>
      %395 = arith.divf %393, %394 : vector<8x128xf32>
      %396 = vector.extract_strided_slice %383 {offsets = [0, 256], sizes = [8, 128], strides = [1, 1]} : vector<8x512xf32> to vector<8x128xf32>
      %397 = math.tanh %396 : vector<8x128xf32>
      %398 = vector.extract_strided_slice %383 {offsets = [0, 384], sizes = [8, 128], strides = [1, 1]} : vector<8x512xf32> to vector<8x128xf32>
      %399 = arith.negf %398 : vector<8x128xf32>
      %400 = math.exp %399 : vector<8x128xf32>
      %cst_109 = arith.constant 1.000000e+00 : f32
      %401 = vector.broadcast %cst_109 : f32 to vector<8x128xf32>
      %402 = arith.addf %401, %400 : vector<8x128xf32>
      %403 = arith.divf %401, %402 : vector<8x128xf32>
      %404 = arith.mulf %395, %371 : vector<8x128xf32>
      %405 = arith.mulf %389, %397 : vector<8x128xf32>
      %406 = arith.addf %404, %405 : vector<8x128xf32>
      %407 = math.tanh %406 : vector<8x128xf32>
      %408 = arith.mulf %403, %407 : vector<8x128xf32>
      %409 = arith.truncf %408 : vector<8x128xf32> to vector<8x128xbf16>
      %410 = arith.index_cast %378 : i32 to index
      %c128_110 = arith.constant 128 : index
      %411 = vector.load %arg12[%410, %c128_110] : memref<64x256xbf16, #tpu.memory_space<vmem>>, vector<8x128xbf16>
      tpu.vector_store %arg12[%410, %c128_110], %409 {strides = array<i32>} : memref<64x256xbf16, #tpu.memory_space<vmem>>, vector<8x128xbf16>,
      %c3_i32_111 = arith.constant 3 : i32
      %c8_i32_112 = arith.constant 8 : i32
      %412 = arith.muli %c3_i32_111, %c8_i32_112 : i32
      %413 = tpu.assume_multiple %412, 8 : i32
      %414 = arith.index_cast %413 : i32 to index
      %c0_113 = arith.constant 0 : index
      %415 = vector.load %arg11[%414, %c0_113] : memref<64x512xf32, #tpu.memory_space<vmem>>, vector<8x512xf32>
      %416 = arith.truncf %408 : vector<8x128xf32> to vector<8x128xbf16>
      %cst_114 = arith.constant dense<0.000000e+00> : vector<8x512xf32>
      %417 = tpu.matmul %416, %18, %cst_114 {dimension_numbers = #tpu.dot_dimension_numbers<[1], [0], [0], [1], [0, 0, 1, 1], [], []>} : vector<8x128xbf16>, vector<128x512xbf16>, vector<8x512xf32> -> vector<8x512xf32>
      %418 = arith.addf %415, %417 : vector<8x512xf32>
      %419 = vector.extract_strided_slice %418 {offsets = [0, 0], sizes = [8, 128], strides = [1, 1]} : vector<8x512xf32> to vector<8x128xf32>
      %420 = arith.negf %419 : vector<8x128xf32>
      %421 = math.exp %420 : vector<8x128xf32>
      %cst_115 = arith.constant 1.000000e+00 : f32
      %422 = vector.broadcast %cst_115 : f32 to vector<8x128xf32>
      %423 = arith.addf %422, %421 : vector<8x128xf32>
      %424 = arith.divf %422, %423 : vector<8x128xf32>
      %425 = vector.extract_strided_slice %418 {offsets = [0, 128], sizes = [8, 128], strides = [1, 1]} : vector<8x512xf32> to vector<8x128xf32>
      %426 = arith.negf %425 : vector<8x128xf32>
      %427 = math.exp %426 : vector<8x128xf32>
      %cst_116 = arith.constant 1.000000e+00 : f32
      %428 = vector.broadcast %cst_116 : f32 to vector<8x128xf32>
      %429 = arith.addf %428, %427 : vector<8x128xf32>
      %430 = arith.divf %428, %429 : vector<8x128xf32>
      %431 = vector.extract_strided_slice %418 {offsets = [0, 256], sizes = [8, 128], strides = [1, 1]} : vector<8x512xf32> to vector<8x128xf32>
      %432 = math.tanh %431 : vector<8x128xf32>
      %433 = vector.extract_strided_slice %418 {offsets = [0, 384], sizes = [8, 128], strides = [1, 1]} : vector<8x512xf32> to vector<8x128xf32>
      %434 = arith.negf %433 : vector<8x128xf32>
      %435 = math.exp %434 : vector<8x128xf32>
      %cst_117 = arith.constant 1.000000e+00 : f32
      %436 = vector.broadcast %cst_117 : f32 to vector<8x128xf32>
      %437 = arith.addf %436, %435 : vector<8x128xf32>
      %438 = arith.divf %436, %437 : vector<8x128xf32>
      %439 = arith.mulf %430, %406 : vector<8x128xf32>
      %440 = arith.mulf %424, %432 : vector<8x128xf32>
      %441 = arith.addf %439, %440 : vector<8x128xf32>
      %442 = math.tanh %441 : vector<8x128xf32>
      %443 = arith.mulf %438, %442 : vector<8x128xf32>
      %444 = arith.truncf %443 : vector<8x128xf32> to vector<8x128xbf16>
      %445 = arith.index_cast %413 : i32 to index
      %c128_118 = arith.constant 128 : index
      %446 = vector.load %arg12[%445, %c128_118] : memref<64x256xbf16, #tpu.memory_space<vmem>>, vector<8x128xbf16>
      tpu.vector_store %arg12[%445, %c128_118], %444 {strides = array<i32>} : memref<64x256xbf16, #tpu.memory_space<vmem>>, vector<8x128xbf16>,
      %c4_i32_119 = arith.constant 4 : i32
      %c8_i32_120 = arith.constant 8 : i32
      %447 = arith.muli %c4_i32_119, %c8_i32_120 : i32
      %448 = tpu.assume_multiple %447, 8 : i32
      %449 = arith.index_cast %448 : i32 to index
      %c0_121 = arith.constant 0 : index
      %450 = vector.load %arg11[%449, %c0_121] : memref<64x512xf32, #tpu.memory_space<vmem>>, vector<8x512xf32>
      %451 = arith.truncf %443 : vector<8x128xf32> to vector<8x128xbf16>
      %cst_122 = arith.constant dense<0.000000e+00> : vector<8x512xf32>
      %452 = tpu.matmul %451, %18, %cst_122 {dimension_numbers = #tpu.dot_dimension_numbers<[1], [0], [0], [1], [0, 0, 1, 1], [], []>} : vector<8x128xbf16>, vector<128x512xbf16>, vector<8x512xf32> -> vector<8x512xf32>
      %453 = arith.addf %450, %452 : vector<8x512xf32>
      %454 = vector.extract_strided_slice %453 {offsets = [0, 0], sizes = [8, 128], strides = [1, 1]} : vector<8x512xf32> to vector<8x128xf32>
      %455 = arith.negf %454 : vector<8x128xf32>
      %456 = math.exp %455 : vector<8x128xf32>
      %cst_123 = arith.constant 1.000000e+00 : f32
      %457 = vector.broadcast %cst_123 : f32 to vector<8x128xf32>
      %458 = arith.addf %457, %456 : vector<8x128xf32>
      %459 = arith.divf %457, %458 : vector<8x128xf32>
      %460 = vector.extract_strided_slice %453 {offsets = [0, 128], sizes = [8, 128], strides = [1, 1]} : vector<8x512xf32> to vector<8x128xf32>
      %461 = arith.negf %460 : vector<8x128xf32>
      %462 = math.exp %461 : vector<8x128xf32>
      %cst_124 = arith.constant 1.000000e+00 : f32
      %463 = vector.broadcast %cst_124 : f32 to vector<8x128xf32>
      %464 = arith.addf %463, %462 : vector<8x128xf32>
      %465 = arith.divf %463, %464 : vector<8x128xf32>
      %466 = vector.extract_strided_slice %453 {offsets = [0, 256], sizes = [8, 128], strides = [1, 1]} : vector<8x512xf32> to vector<8x128xf32>
      %467 = math.tanh %466 : vector<8x128xf32>
      %468 = vector.extract_strided_slice %453 {offsets = [0, 384], sizes = [8, 128], strides = [1, 1]} : vector<8x512xf32> to vector<8x128xf32>
      %469 = arith.negf %468 : vector<8x128xf32>
      %470 = math.exp %469 : vector<8x128xf32>
      %cst_125 = arith.constant 1.000000e+00 : f32
      %471 = vector.broadcast %cst_125 : f32 to vector<8x128xf32>
      %472 = arith.addf %471, %470 : vector<8x128xf32>
      %473 = arith.divf %471, %472 : vector<8x128xf32>
      %474 = arith.mulf %465, %441 : vector<8x128xf32>
      %475 = arith.mulf %459, %467 : vector<8x128xf32>
      %476 = arith.addf %474, %475 : vector<8x128xf32>
      %477 = math.tanh %476 : vector<8x128xf32>
      %478 = arith.mulf %473, %477 : vector<8x128xf32>
      %479 = arith.truncf %478 : vector<8x128xf32> to vector<8x128xbf16>
      %480 = arith.index_cast %448 : i32 to index
      %c128_126 = arith.constant 128 : index
      %481 = vector.load %arg12[%480, %c128_126] : memref<64x256xbf16, #tpu.memory_space<vmem>>, vector<8x128xbf16>
      tpu.vector_store %arg12[%480, %c128_126], %479 {strides = array<i32>} : memref<64x256xbf16, #tpu.memory_space<vmem>>, vector<8x128xbf16>,
      %c5_i32_127 = arith.constant 5 : i32
      %c8_i32_128 = arith.constant 8 : i32
      %482 = arith.muli %c5_i32_127, %c8_i32_128 : i32
      %483 = tpu.assume_multiple %482, 8 : i32
      %484 = arith.index_cast %483 : i32 to index
      %c0_129 = arith.constant 0 : index
      %485 = vector.load %arg11[%484, %c0_129] : memref<64x512xf32, #tpu.memory_space<vmem>>, vector<8x512xf32>
      %486 = arith.truncf %478 : vector<8x128xf32> to vector<8x128xbf16>
      %cst_130 = arith.constant dense<0.000000e+00> : vector<8x512xf32>
      %487 = tpu.matmul %486, %18, %cst_130 {dimension_numbers = #tpu.dot_dimension_numbers<[1], [0], [0], [1], [0, 0, 1, 1], [], []>} : vector<8x128xbf16>, vector<128x512xbf16>, vector<8x512xf32> -> vector<8x512xf32>
      %488 = arith.addf %485, %487 : vector<8x512xf32>
      %489 = vector.extract_strided_slice %488 {offsets = [0, 0], sizes = [8, 128], strides = [1, 1]} : vector<8x512xf32> to vector<8x128xf32>
      %490 = arith.negf %489 : vector<8x128xf32>
      %491 = math.exp %490 : vector<8x128xf32>
      %cst_131 = arith.constant 1.000000e+00 : f32
      %492 = vector.broadcast %cst_131 : f32 to vector<8x128xf32>
      %493 = arith.addf %492, %491 : vector<8x128xf32>
      %494 = arith.divf %492, %493 : vector<8x128xf32>
      %495 = vector.extract_strided_slice %488 {offsets = [0, 128], sizes = [8, 128], strides = [1, 1]} : vector<8x512xf32> to vector<8x128xf32>
      %496 = arith.negf %495 : vector<8x128xf32>
      %497 = math.exp %496 : vector<8x128xf32>
      %cst_132 = arith.constant 1.000000e+00 : f32
      %498 = vector.broadcast %cst_132 : f32 to vector<8x128xf32>
      %499 = arith.addf %498, %497 : vector<8x128xf32>
      %500 = arith.divf %498, %499 : vector<8x128xf32>
      %501 = vector.extract_strided_slice %488 {offsets = [0, 256], sizes = [8, 128], strides = [1, 1]} : vector<8x512xf32> to vector<8x128xf32>
      %502 = math.tanh %501 : vector<8x128xf32>
      %503 = vector.extract_strided_slice %488 {offsets = [0, 384], sizes = [8, 128], strides = [1, 1]} : vector<8x512xf32> to vector<8x128xf32>
      %504 = arith.negf %503 : vector<8x128xf32>
      %505 = math.exp %504 : vector<8x128xf32>
      %cst_133 = arith.constant 1.000000e+00 : f32
      %506 = vector.broadcast %cst_133 : f32 to vector<8x128xf32>
      %507 = arith.addf %506, %505 : vector<8x128xf32>
      %508 = arith.divf %506, %507 : vector<8x128xf32>
      %509 = arith.mulf %500, %476 : vector<8x128xf32>
      %510 = arith.mulf %494, %502 : vector<8x128xf32>
      %511 = arith.addf %509, %510 : vector<8x128xf32>
      %512 = math.tanh %511 : vector<8x128xf32>
      %513 = arith.mulf %508, %512 : vector<8x128xf32>
      %514 = arith.truncf %513 : vector<8x128xf32> to vector<8x128xbf16>
      %515 = arith.index_cast %483 : i32 to index
      %c128_134 = arith.constant 128 : index
      %516 = vector.load %arg12[%515, %c128_134] : memref<64x256xbf16, #tpu.memory_space<vmem>>, vector<8x128xbf16>
      tpu.vector_store %arg12[%515, %c128_134], %514 {strides = array<i32>} : memref<64x256xbf16, #tpu.memory_space<vmem>>, vector<8x128xbf16>,
      %c6_i32_135 = arith.constant 6 : i32
      %c8_i32_136 = arith.constant 8 : i32
      %517 = arith.muli %c6_i32_135, %c8_i32_136 : i32
      %518 = tpu.assume_multiple %517, 8 : i32
      %519 = arith.index_cast %518 : i32 to index
      %c0_137 = arith.constant 0 : index
      %520 = vector.load %arg11[%519, %c0_137] : memref<64x512xf32, #tpu.memory_space<vmem>>, vector<8x512xf32>
      %521 = arith.truncf %513 : vector<8x128xf32> to vector<8x128xbf16>
      %cst_138 = arith.constant dense<0.000000e+00> : vector<8x512xf32>
      %522 = tpu.matmul %521, %18, %cst_138 {dimension_numbers = #tpu.dot_dimension_numbers<[1], [0], [0], [1], [0, 0, 1, 1], [], []>} : vector<8x128xbf16>, vector<128x512xbf16>, vector<8x512xf32> -> vector<8x512xf32>
      %523 = arith.addf %520, %522 : vector<8x512xf32>
      %524 = vector.extract_strided_slice %523 {offsets = [0, 0], sizes = [8, 128], strides = [1, 1]} : vector<8x512xf32> to vector<8x128xf32>
      %525 = arith.negf %524 : vector<8x128xf32>
      %526 = math.exp %525 : vector<8x128xf32>
      %cst_139 = arith.constant 1.000000e+00 : f32
      %527 = vector.broadcast %cst_139 : f32 to vector<8x128xf32>
      %528 = arith.addf %527, %526 : vector<8x128xf32>
      %529 = arith.divf %527, %528 : vector<8x128xf32>
      %530 = vector.extract_strided_slice %523 {offsets = [0, 128], sizes = [8, 128], strides = [1, 1]} : vector<8x512xf32> to vector<8x128xf32>
      %531 = arith.negf %530 : vector<8x128xf32>
      %532 = math.exp %531 : vector<8x128xf32>
      %cst_140 = arith.constant 1.000000e+00 : f32
      %533 = vector.broadcast %cst_140 : f32 to vector<8x128xf32>
      %534 = arith.addf %533, %532 : vector<8x128xf32>
      %535 = arith.divf %533, %534 : vector<8x128xf32>
      %536 = vector.extract_strided_slice %523 {offsets = [0, 256], sizes = [8, 128], strides = [1, 1]} : vector<8x512xf32> to vector<8x128xf32>
      %537 = math.tanh %536 : vector<8x128xf32>
      %538 = vector.extract_strided_slice %523 {offsets = [0, 384], sizes = [8, 128], strides = [1, 1]} : vector<8x512xf32> to vector<8x128xf32>
      %539 = arith.negf %538 : vector<8x128xf32>
      %540 = math.exp %539 : vector<8x128xf32>
      %cst_141 = arith.constant 1.000000e+00 : f32
      %541 = vector.broadcast %cst_141 : f32 to vector<8x128xf32>
      %542 = arith.addf %541, %540 : vector<8x128xf32>
      %543 = arith.divf %541, %542 : vector<8x128xf32>
      %544 = arith.mulf %535, %511 : vector<8x128xf32>
      %545 = arith.mulf %529, %537 : vector<8x128xf32>
      %546 = arith.addf %544, %545 : vector<8x128xf32>
      %547 = math.tanh %546 : vector<8x128xf32>
      %548 = arith.mulf %543, %547 : vector<8x128xf32>
      %549 = arith.truncf %548 : vector<8x128xf32> to vector<8x128xbf16>
      %550 = arith.index_cast %518 : i32 to index
      %c128_142 = arith.constant 128 : index
      %551 = vector.load %arg12[%550, %c128_142] : memref<64x256xbf16, #tpu.memory_space<vmem>>, vector<8x128xbf16>
      tpu.vector_store %arg12[%550, %c128_142], %549 {strides = array<i32>} : memref<64x256xbf16, #tpu.memory_space<vmem>>, vector<8x128xbf16>,
      %c7_i32_143 = arith.constant 7 : i32
      %c8_i32_144 = arith.constant 8 : i32
      %552 = arith.muli %c7_i32_143, %c8_i32_144 : i32
      %553 = tpu.assume_multiple %552, 8 : i32
      %554 = arith.index_cast %553 : i32 to index
      %c0_145 = arith.constant 0 : index
      %555 = vector.load %arg11[%554, %c0_145] : memref<64x512xf32, #tpu.memory_space<vmem>>, vector<8x512xf32>
      %556 = arith.truncf %548 : vector<8x128xf32> to vector<8x128xbf16>
      %cst_146 = arith.constant dense<0.000000e+00> : vector<8x512xf32>
      %557 = tpu.matmul %556, %18, %cst_146 {dimension_numbers = #tpu.dot_dimension_numbers<[1], [0], [0], [1], [0, 0, 1, 1], [], []>} : vector<8x128xbf16>, vector<128x512xbf16>, vector<8x512xf32> -> vector<8x512xf32>
      %558 = arith.addf %555, %557 : vector<8x512xf32>
      %559 = vector.extract_strided_slice %558 {offsets = [0, 0], sizes = [8, 128], strides = [1, 1]} : vector<8x512xf32> to vector<8x128xf32>
      %560 = arith.negf %559 : vector<8x128xf32>
      %561 = math.exp %560 : vector<8x128xf32>
      %cst_147 = arith.constant 1.000000e+00 : f32
      %562 = vector.broadcast %cst_147 : f32 to vector<8x128xf32>
      %563 = arith.addf %562, %561 : vector<8x128xf32>
      %564 = arith.divf %562, %563 : vector<8x128xf32>
      %565 = vector.extract_strided_slice %558 {offsets = [0, 128], sizes = [8, 128], strides = [1, 1]} : vector<8x512xf32> to vector<8x128xf32>
      %566 = arith.negf %565 : vector<8x128xf32>
      %567 = math.exp %566 : vector<8x128xf32>
      %cst_148 = arith.constant 1.000000e+00 : f32
      %568 = vector.broadcast %cst_148 : f32 to vector<8x128xf32>
      %569 = arith.addf %568, %567 : vector<8x128xf32>
      %570 = arith.divf %568, %569 : vector<8x128xf32>
      %571 = vector.extract_strided_slice %558 {offsets = [0, 256], sizes = [8, 128], strides = [1, 1]} : vector<8x512xf32> to vector<8x128xf32>
      %572 = math.tanh %571 : vector<8x128xf32>
      %573 = vector.extract_strided_slice %558 {offsets = [0, 384], sizes = [8, 128], strides = [1, 1]} : vector<8x512xf32> to vector<8x128xf32>
      %574 = arith.negf %573 : vector<8x128xf32>
      %575 = math.exp %574 : vector<8x128xf32>
      %cst_149 = arith.constant 1.000000e+00 : f32
      %576 = vector.broadcast %cst_149 : f32 to vector<8x128xf32>
      %577 = arith.addf %576, %575 : vector<8x128xf32>
      %578 = arith.divf %576, %577 : vector<8x128xf32>
      %579 = arith.mulf %570, %546 : vector<8x128xf32>
      %580 = arith.mulf %564, %572 : vector<8x128xf32>
      %581 = arith.addf %579, %580 : vector<8x128xf32>
      %582 = math.tanh %581 : vector<8x128xf32>
      %583 = arith.mulf %578, %582 : vector<8x128xf32>
      %584 = arith.truncf %583 : vector<8x128xf32> to vector<8x128xbf16>
      %585 = arith.index_cast %553 : i32 to index
      %c128_150 = arith.constant 128 : index
      %586 = vector.load %arg12[%585, %c128_150] : memref<64x256xbf16, #tpu.memory_space<vmem>>, vector<8x128xbf16>
      tpu.vector_store %arg12[%585, %c128_150], %584 {strides = array<i32>} : memref<64x256xbf16, #tpu.memory_space<vmem>>, vector<8x128xbf16>,
      %c8_i32_151 = arith.constant 8 : i32
    } else {
    }
    %c0 = arith.constant 0 : index
    %c0_1 = arith.constant 0 : index
    %3 = vector.load %arg12[%c0, %c0_1] : memref<64x256xbf16, #tpu.memory_space<vmem>>, vector<64x256xbf16>
    %c0_2 = arith.constant 0 : index
    %c0_3 = arith.constant 0 : index
    %4 = vector.load %arg8[%c0_2, %c0_3] : memref<256x256xbf16, #tpu.memory_space<vmem>>, vector<256x256xbf16>
    %cst = arith.constant dense<0.000000e+00> : vector<64x256xf32>
    %5 = tpu.matmul %3, %4, %cst {dimension_numbers = #tpu.dot_dimension_numbers<[1], [0], [0], [1], [0, 0, 1, 1], [], []>} : vector<64x256xbf16>, vector<256x256xbf16>, vector<64x256xf32> -> vector<64x256xf32>
    %c0_4 = arith.constant 0 : index
    %c0_5 = arith.constant 0 : index
    %6 = vector.load %arg9[%c0_4, %c0_5] : memref<1x256xf32, #tpu.memory_space<vmem>>, vector<1x256xf32>
    %7 = vector.broadcast %6 : vector<1x256xf32> to vector<64x256xf32>
    %8 = arith.addf %5, %7 : vector<64x256xf32>
    %c0_6 = arith.constant 0 : index
    %c0_7 = arith.constant 0 : index
    %9 = vector.load %arg10[%c0_6, %c0_7] : memref<64x256xf32, #tpu.memory_space<vmem>>, vector<64x256xf32>
    tpu.vector_store %arg10[%c0_6, %c0_7], %8 {strides = array<i32>} : memref<64x256xf32, #tpu.memory_space<vmem>>, vector<64x256xf32>,
    return
  }
  func.func @transform_0(%arg0: i32) -> (i32, i32) {
    %c0_i32 = arith.constant 0 : i32
    %c0_i32_0 = arith.constant 0 : i32
    %c0_i32_1 = arith.constant 0 : i32
    return %c0_i32, %c0_i32_0 : i32, i32
  }
  func.func @transform_1(%arg0: i32) -> (i32, i32) {
    %c0_i32 = arith.constant 0 : i32
    %c0_i32_0 = arith.constant 0 : i32
    %c0_i32_1 = arith.constant 0 : i32
    return %c0_i32, %c0_i32_0 : i32, i32
  }
  func.func @transform_2(%arg0: i32) -> (i32, i32) {
    %c0_i32 = arith.constant 0 : i32
    %c0_i32_0 = arith.constant 0 : i32
    %c0_i32_1 = arith.constant 0 : i32
    return %c0_i32, %c0_i32_0 : i32, i32
  }
  func.func @transform_3(%arg0: i32) -> (i32, i32) {
    %c0_i32 = arith.constant 0 : i32
    %c0_i32_0 = arith.constant 0 : i32
    %c0_i32_1 = arith.constant 0 : i32
    return %c0_i32, %c0_i32_0 : i32, i32
  }
  func.func @transform_4(%arg0: i32) -> (i32, i32) {
    %c0_i32 = arith.constant 0 : i32
    %c0_i32_0 = arith.constant 0 : i32
    %c0_i32_1 = arith.constant 0 : i32
    return %c0_i32, %c0_i32_0 : i32, i32
  }
  func.func @transform_5(%arg0: i32) -> (i32, i32) {
    %c0_i32 = arith.constant 0 : i32
    %c0_i32_0 = arith.constant 0 : i32
    %c0_i32_1 = arith.constant 0 : i32
    return %c0_i32, %c0_i32_0 : i32, i32
  }
  func.func @transform_6(%arg0: i32) -> (i32, i32) {
    %c0_i32 = arith.constant 0 : i32
    %c0_i32_0 = arith.constant 0 : i32
    %c0_i32_1 = arith.constant 0 : i32
    return %c0_i32, %c0_i32_0 : i32, i32
  }
  func.func @transform_7(%arg0: i32) -> (i32, i32) {
    %c0_i32 = arith.constant 0 : i32
    %c0_i32_0 = arith.constant 0 : i32
    return %c0_i32, %arg0 : i32, i32
  }
  func.func @transform_8(%arg0: i32) -> (i32, i32) {
    %c0_i32 = arith.constant 0 : i32
    %c0_i32_0 = arith.constant 0 : i32
    return %c0_i32, %arg0 : i32, i32
  }
  func.func @transform_9(%arg0: i32) -> (i32, i32) {
    %c0_i32 = arith.constant 0 : i32
    %c0_i32_0 = arith.constant 0 : i32
    return %c0_i32, %arg0 : i32, i32
  }
}

</mosaic_0001>

<llo_original>
// kernel: tpu_custom_call.1
$region0: #{tpu_custom_call.1}
  #allocation0 [shape = 'u32[]', space=smem, size = 0x4, offset = 0x4, fixed_abs, tag = 'smem constant byte address 0x4 - core index']
  #allocation1 [shape = 'u32[72,128]{1,0:T(1,128)}', space=vmem, size = 0x9000, scoped, tag = 'internal scratch']
  #allocation2 [shape = 'f32[64,512]{1,0:T(8,128)}', space=vmem, size = 0x20000, scoped, tag = 'scratch operand']
  #allocation3 [shape = 'bf16[64,256]{1,0:T(8,128)(2,1)}', space=vmem, size = 0x8000, scoped, tag = 'scratch operand']
  %s0 = inlined_call_operand.vmem [shape: bf16[64,32], index: 0, kind: input, shape index: {}]
  %s1 = inlined_call_operand.hbm [shape: bf16[32,512], index: 1, kind: input, shape index: {}]
  %s2 = inlined_call_operand.hbm [shape: bf16[128,512], index: 2, kind: input, shape index: {}]
  %s3 = inlined_call_operand.vmem [shape: f32[1,512], index: 3, kind: input, shape index: {}]
  %s4 = inlined_call_operand.hbm [shape: bf16[128,512], index: 4, kind: input, shape index: {}]
  %s5 = inlined_call_operand.hbm [shape: bf16[128,512], index: 5, kind: input, shape index: {}]
  %s6 = inlined_call_operand.vmem [shape: f32[1,512], index: 6, kind: input, shape index: {}]
  %s7 = inlined_call_operand.hbm [shape: bf16[256,256], index: 7, kind: input, shape index: {}]
  %s8 = inlined_call_operand.vmem [shape: f32[1,256], index: 8, kind: input, shape index: {}]
  %s9 = inlined_call_operand.hbm [shape: f32[64,256], index: 9, kind: output, shape index: {}]
  %s10 = sld [smem:[#allocation0]]
  $region70: #{tpu_custom_call.1} parent=0
    _
  %s12 = ssub.s32 1, %s10
  %s13 = scalar_select 0, %s12, %s10
  $region1: #{tpu_custom_call.1} parent=0
    #allocation4 [shape = 'u8[32768]{0}', space=vmem, size = 0x8000, scoped, tag = 'input window, operand 1, single buffered']
    #allocation5 [shape = 's32[1]{0}', space=sflag, size = 0x4, scoped, tag = 'scoped memory for tpu_custom_call.1']
    #allocation6 [shape = 's32[1]{0}', space=sflag, size = 0x4, scoped, tag = 'scoped memory for tpu_custom_call.1']
    #allocation7 [shape = 'u8[131072]{0}', space=vmem, size = 0x20000, scoped, tag = 'input window, operand 2, single buffered']
    #allocation8 [shape = 's32[1]{0}', space=sflag, size = 0x4, scoped, tag = 'scoped memory for tpu_custom_call.1']
    #allocation9 [shape = 'u8[131072]{0}', space=vmem, size = 0x20000, scoped, tag = 'input window, operand 4, single buffered']
    #allocation10 [shape = 'u8[131072]{0}', space=vmem, size = 0x20000, scoped, tag = 'input window, operand 5, single buffered']
    #allocation11 [shape = 's32[1]{0}', space=sflag, size = 0x4, scoped, tag = 'scoped memory for tpu_custom_call.1']
    #allocation12 [shape = 'u8[131072]{0}', space=vmem, size = 0x20000, scoped, tag = 'input window, operand 7, single buffered']
    #allocation13 [shape = 'u8[65536]{0}', space=vmem, size = 0x10000, scoped, tag = 'output window, operand 0, single buffered']
    %14 = vsyncpa [#allocation5], 0
    %15 = vsyncpa [#allocation8], 0
    %16 = vsyncpa [#allocation11], 0
    %17 = vsyncpa [#allocation6], 0
    // Predicated region
    $region2: #{tpu_custom_call.1} parent=1 // pred_check
      _
    $region3: #{tpu_custom_call.1} parent=1 // pred_check_branch
      %19 = sbr.rel (0) target = $region5
    $region4: #{tpu_custom_call.1} parent=1 // pred_region
      _
    $region5: #{tpu_custom_call.1} parent=1 // pred_fallthru
      _
    // Predicated region
    $region6: #{tpu_custom_call.1} parent=1 // pred_check
      _
    $region7: #{tpu_custom_call.1} parent=1 // pred_check_branch
      %21 = sbr.rel (0) target = $region9
    $region8: #{tpu_custom_call.1} parent=1 // pred_region
      %23 = vsyncadd [#allocation5], 0
      %s24 = sshll.u32 %s1, 4
      %s25 = int_to_ptr.hbm [resolvable:$true] %s24
      %s26 = sshll.u32 [#allocation4], 4
      %s27 = int_to_ptr.vmem [resolvable:$true] %s26
      %32 = dma.hbm_to_vmem [thread:$0]  %s25, 1024, %s27, [#allocation5], 256, 256, 16
    $region9: #{tpu_custom_call.1} parent=1 // pred_fallthru
      _
    // Predicated region
    $region10: #{tpu_custom_call.1} parent=1 // pred_check
      _
    $region11: #{tpu_custom_call.1} parent=1 // pred_check_branch
      %34 = sbr.rel (0) target = $region13
    $region12: #{tpu_custom_call.1} parent=1 // pred_region
      %36 = vsyncadd [#allocation8], 0
      %s37 = sshll.u32 %s2, 4
      %s38 = int_to_ptr.hbm [resolvable:$true] %s37
      %s39 = sshll.u32 [#allocation7], 4
      %s40 = int_to_ptr.vmem [resolvable:$true] %s39
      %45 = dma.hbm_to_vmem [thread:$0]  %s38, 4096, %s40, [#allocation8], 256, 256, 16
    $region13: #{tpu_custom_call.1} parent=1 // pred_fallthru
      _
    // Predicated region
    $region14: #{tpu_custom_call.1} parent=1 // pred_check
      _
    $region15: #{tpu_custom_call.1} parent=1 // pred_check_branch
      %47 = sbr.rel (0) target = $region17
    $region16: #{tpu_custom_call.1} parent=1 // pred_region
      _
    $region17: #{tpu_custom_call.1} parent=1 // pred_fallthru
      _
    // Predicated region
    $region18: #{tpu_custom_call.1} parent=1 // pred_check
      _
    $region19: #{tpu_custom_call.1} parent=1 // pred_check_branch
      %49 = sbr.rel (0) target = $region21
    $region20: #{tpu_custom_call.1} parent=1 // pred_region
      %51 = vsyncadd [#allocation8], 0
      %s52 = sshll.u32 %s4, 4
      %s53 = int_to_ptr.hbm [resolvable:$true] %s52
      %s54 = sshll.u32 [#allocation9], 4
      %s55 = int_to_ptr.vmem [resolvable:$true] %s54
      %60 = dma.hbm_to_vmem [thread:$0]  %s53, 4096, %s55, [#allocation8], 256, 256, 16
    $region21: #{tpu_custom_call.1} parent=1 // pred_fallthru
      _
    // Predicated region
    $region22: #{tpu_custom_call.1} parent=1 // pred_check
      _
    $region23: #{tpu_custom_call.1} parent=1 // pred_check_branch
      %62 = sbr.rel (0) target = $region25
    $region24: #{tpu_custom_call.1} parent=1 // pred_region
      %64 = vsyncadd [#allocation11], 0
      %s65 = sshll.u32 %s5, 4
      %s66 = int_to_ptr.hbm [resolvable:$true] %s65
      %s67 = sshll.u32 [#allocation10], 4
      %s68 = int_to_ptr.vmem [resolvable:$true] %s67
      %73 = dma.hbm_to_vmem [thread:$0]  %s66, 4096, %s68, [#allocation11], 256, 256, 16
    $region25: #{tpu_custom_call.1} parent=1 // pred_fallthru
      _
    // Predicated region
    $region26: #{tpu_custom_call.1} parent=1 // pred_check
      _
    $region27: #{tpu_custom_call.1} parent=1 // pred_check_branch
      %75 = sbr.rel (0) target = $region29
    $region28: #{tpu_custom_call.1} parent=1 // pred_region
      _
    $region29: #{tpu_custom_call.1} parent=1 // pred_fallthru
      _
    // Predicated region
    $region30: #{tpu_custom_call.1} parent=1 // pred_check
      _
    $region31: #{tpu_custom_call.1} parent=1 // pred_check_branch
      %77 = sbr.rel (0) target = $region33
    $region32: #{tpu_custom_call.1} parent=1 // pred_region
      %79 = vsyncadd [#allocation11], 0
      %s80 = sshll.u32 %s7, 4
      %s81 = int_to_ptr.hbm [resolvable:$true] %s80
      %s82 = sshll.u32 [#allocation12], 4
      %s83 = int_to_ptr.vmem [resolvable:$true] %s82
      %88 = dma.hbm_to_vmem [thread:$0]  %s81, 4096, %s83, [#allocation11], 128, 128, 8
    $region33: #{tpu_custom_call.1} parent=1 // pred_fallthru
      _
    // Predicated region
    $region34: #{tpu_custom_call.1} parent=1 // pred_check
      _
    $region35: #{tpu_custom_call.1} parent=1 // pred_check_branch
      %90 = sbr.rel (0) target = $region37
    $region36: #{tpu_custom_call.1} parent=1 // pred_region
      _
    $region37: #{tpu_custom_call.1} parent=1 // pred_fallthru
      _
    // Predicated region
    $region38: #{tpu_custom_call.1} parent=1 // pred_check
      _
    $region39: #{tpu_custom_call.1} parent=1 // pred_check_branch
      %92 = sbr.rel (0) target = $region41
    $region40: #{tpu_custom_call.1} parent=1 // pred_region
      %94 = dma.done [#allocation5], 1024
    $region41: #{tpu_custom_call.1} parent=1 // pred_fallthru
      _
    // Predicated region
    $region42: #{tpu_custom_call.1} parent=1 // pred_check
      _
    $region43: #{tpu_custom_call.1} parent=1 // pred_check_branch
      %96 = sbr.rel (0) target = $region45
    $region44: #{tpu_custom_call.1} parent=1 // pred_region
      %98 = dma.done [#allocation8], 4096
    $region45: #{tpu_custom_call.1} parent=1 // pred_fallthru
      _
    // Predicated region
    $region46: #{tpu_custom_call.1} parent=1 // pred_check
      _
    $region47: #{tpu_custom_call.1} parent=1 // pred_check_branch
      %100 = sbr.rel (0) target = $region49
    $region48: #{tpu_custom_call.1} parent=1 // pred_region
      %102 = dma.done [#allocation8], 4096
    $region49: #{tpu_custom_call.1} parent=1 // pred_fallthru
      _
    // Predicated region
    $region50: #{tpu_custom_call.1} parent=1 // pred_check
      _
    $region51: #{tpu_custom_call.1} parent=1 // pred_check_branch
      %104 = sbr.rel (0) target = $region53
    $region52: #{tpu_custom_call.1} parent=1 // pred_region
      %106 = dma.done [#allocation11], 4096
    $region53: #{tpu_custom_call.1} parent=1 // pred_fallthru
      _
    // Predicated region
    $region54: #{tpu_custom_call.1} parent=1 // pred_check
      _
    $region55: #{tpu_custom_call.1} parent=1 // pred_check_branch
      %108 = sbr.rel (0) target = $region57
    $region56: #{tpu_custom_call.1} parent=1 // pred_region
      %110 = dma.done [#allocation11], 4096
    $region57: #{tpu_custom_call.1} parent=1 // pred_fallthru
      _
    %p112 = scmp.eq.s32.totalorder 0, 0
    // Predicated region
    $region58: #{tpu_custom_call.1} parent=1 // pred_check
      %p113 = pneg %p112
    $region59: #{tpu_custom_call.1} parent=1 // pred_check_branch
      %115 = sbr.rel (%p113) target = $region61
    $region60: #{tpu_custom_call.1} parent=1 // pred_region
      %v116 = vld [vmem:[%s0] sm:$0xf]
      %v117 = vld [vmem:[%s0 + $0x4] sm:$0xf]
      %v118 = vld [vmem:[%s0 + $0x8] sm:$0xf]
      %v119 = vld [vmem:[%s0 + $0xc] sm:$0xf]
      %v120 = vld [vmem:[%s0 + $0x10] sm:$0xf]
      %v121 = vld [vmem:[%s0 + $0x14] sm:$0xf]
      %v122 = vld [vmem:[%s0 + $0x18] sm:$0xf]
      %v123 = vld [vmem:[%s0 + $0x1c] sm:$0xf]
      %v124 = vld [vmem:[#allocation4] sm:$0xff]
      %v125 = vld [vmem:[#allocation4 + $0x8] sm:$0xff]
      %v126 = vld [vmem:[#allocation4 + $0x10] sm:$0xff]
      %v127 = vld [vmem:[#allocation4 + $0x18] sm:$0xff]
      %v128 = vld [vmem:[#allocation4 + $0x20] sm:$0xff]
      %v129 = vld [vmem:[#allocation4 + $0x28] sm:$0xff]
      %v130 = vld [vmem:[#allocation4 + $0x30] sm:$0xff]
      %v131 = vld [vmem:[#allocation4 + $0x38] sm:$0xff]
      %v132 = vld [vmem:[%s3] sm:$0xf]
      %v134 = vperm.slane %v132, 0
      %v135 = vperm.slane %v132, 1
      %v136 = vperm.slane %v132, 2
      %v137 = vperm.slane %v132, 3
      %v150 = vunpack.c.l.b16 %v116
      %v151 = vunpack.c.l.b16 %v117
      %v152 = vunpack.c.l.b16 %v118
      %v153 = vunpack.c.l.b16 %v119
      %v154 = vunpack.c.l.b16 %v120
      %v155 = vunpack.c.l.b16 %v121
      %v156 = vunpack.c.l.b16 %v122
      %v157 = vunpack.c.l.b16 %v123
      %v158 = vpack.c.b16 %v151, %v150
      %v159 = vpack.c.b16 %v153, %v152
      %v160 = vpack.c.b16 %v155, %v154
      %v161 = vpack.c.b16 %v157, %v156
      %v170 = vunpack.c.l.b16 %v124
      %v171 = vunpack.c.h.b16 %v124
      %v172 = vunpack.c.l.b16 %v125
      %v173 = vunpack.c.h.b16 %v125
      %v174 = vunpack.c.l.b16 %v126
      %v175 = vunpack.c.h.b16 %v126
      %v176 = vunpack.c.l.b16 %v127
      %v177 = vunpack.c.h.b16 %v127
      %v178 = vunpack.c.l.b16 %v128
      %v179 = vunpack.c.h.b16 %v128
      %v180 = vunpack.c.l.b16 %v129
      %v181 = vunpack.c.h.b16 %v129
      %v182 = vunpack.c.l.b16 %v130
      %v183 = vunpack.c.h.b16 %v130
      %v184 = vunpack.c.l.b16 %v131
      %v185 = vunpack.c.h.b16 %v131
      %v186 = vpack.c.b16 %v174, %v170
      %v187 = vpack.c.b16 %v175, %v171
      %v188 = vpack.c.b16 %v176, %v172
      %v189 = vpack.c.b16 %v177, %v173
      %v190 = vpack.c.b16 %v182, %v178
      %v191 = vpack.c.b16 %v183, %v179
      %v192 = vpack.c.b16 %v184, %v180
      %v193 = vpack.c.b16 %v185, %v181
      %vm202 = vcmask 261120
      %v204 = vsel %vm202, %v158, 0
      %v207 = vsel %vm202, %v159, 0
      %v210 = vsel %vm202, %v160, 0
      %v213 = vsel %vm202, %v161, 0
      %215 = vmatpush.bf16.msra.mxu0 0
      %216 = vmatpush.bf16.msra.mxu0 0
      %217 = vmatpush.bf16.msra.mxu0 0
      %218 = vmatpush.bf16.msra.mxu0 0
      %219 = vmatpush.bf16.msra.mxu0 0
      %220 = vmatpush.bf16.msra.mxu0 0
      %221 = vmatpush.bf16.msra.mxu0 %v190
      %222 = vmatpush.bf16.msra.mxu0 %v186
      %223 = vmatmul.bf16.gmra.mxu0 %v204
      %v224 = vpop.f32.mrf.mxu0
      %v225 = vadd.f32 %v134, %v224
      %v226 = vpop.f32.mrf.mxu0
      %v227 = vadd.f32 %v134, %v226
      %228 = vmatmul.bf16.gmra.mxu0 %v207
      %v229 = vpop.f32.mrf.mxu0
      %v230 = vadd.f32 %v134, %v229
      %v231 = vpop.f32.mrf.mxu0
      %v232 = vadd.f32 %v134, %v231
      %233 = vmatmul.bf16.gmra.mxu0 %v210
      %v234 = vpop.f32.mrf.mxu0
      %v235 = vadd.f32 %v134, %v234
      %v236 = vpop.f32.mrf.mxu0
      %v237 = vadd.f32 %v134, %v236
      %238 = vmatmul.bf16.gmra.mxu0 %v213
      %v239 = vpop.f32.mrf.mxu0
      %v240 = vadd.f32 %v134, %v239
      %v241 = vpop.f32.mrf.mxu0
      %v242 = vadd.f32 %v134, %v241
      %243 = vdwg.mxu0
      %244 = vmatpush.bf16.msra.mxu0 0
      %245 = vmatpush.bf16.msra.mxu0 0
      %246 = vmatpush.bf16.msra.mxu0 0
      %247 = vmatpush.bf16.msra.mxu0 0
      %248 = vmatpush.bf16.msra.mxu0 0
      %249 = vmatpush.bf16.msra.mxu0 0
      %250 = vmatpush.bf16.msra.mxu0 %v191
      %251 = vmatpush.bf16.msra.mxu0 %v187
      %252 = vmatmul.bf16.gmra.mxu0 %v204
      %v253 = vpop.f32.mrf.mxu0
      %v254 = vadd.f32 %v135, %v253
      %v255 = vpop.f32.mrf.mxu0
      %v256 = vadd.f32 %v135, %v255
      %257 = vmatmul.bf16.gmra.mxu0 %v207
      %v258 = vpop.f32.mrf.mxu0
      %v259 = vadd.f32 %v135, %v258
      %v260 = vpop.f32.mrf.mxu0
      %v261 = vadd.f32 %v135, %v260
      %262 = vmatmul.bf16.gmra.mxu0 %v210
      %v263 = vpop.f32.mrf.mxu0
      %v264 = vadd.f32 %v135, %v263
      %v265 = vpop.f32.mrf.mxu0
      %v266 = vadd.f32 %v135, %v265
      %267 = vmatmul.bf16.gmra.mxu0 %v213
      %v268 = vpop.f32.mrf.mxu0
      %v269 = vadd.f32 %v135, %v268
      %v270 = vpop.f32.mrf.mxu0
      %v271 = vadd.f32 %v135, %v270
      %272 = vdwg.mxu0
      %273 = vmatpush.bf16.msra.mxu0 0
      %274 = vmatpush.bf16.msra.mxu0 0
      %275 = vmatpush.bf16.msra.mxu0 0
      %276 = vmatpush.bf16.msra.mxu0 0
      %277 = vmatpush.bf16.msra.mxu0 0
      %278 = vmatpush.bf16.msra.mxu0 0
      %279 = vmatpush.bf16.msra.mxu0 %v192
      %280 = vmatpush.bf16.msra.mxu0 %v188
      %281 = vmatmul.bf16.gmra.mxu0 %v204
      %v282 = vpop.f32.mrf.mxu0
      %v283 = vadd.f32 %v136, %v282
      %v284 = vpop.f32.mrf.mxu0
      %v285 = vadd.f32 %v136, %v284
      %286 = vmatmul.bf16.gmra.mxu0 %v207
      %v287 = vpop.f32.mrf.mxu0
      %v288 = vadd.f32 %v136, %v287
      %v289 = vpop.f32.mrf.mxu0
      %v290 = vadd.f32 %v136, %v289
      %291 = vmatmul.bf16.gmra.mxu0 %v210
      %v292 = vpop.f32.mrf.mxu0
      %v293 = vadd.f32 %v136, %v292
      %v294 = vpop.f32.mrf.mxu0
      %v295 = vadd.f32 %v136, %v294
      %296 = vmatmul.bf16.gmra.mxu0 %v213
      %v297 = vpop.f32.mrf.mxu0
      %v298 = vadd.f32 %v136, %v297
      %v299 = vpop.f32.mrf.mxu0
      %v300 = vadd.f32 %v136, %v299
      %301 = vdwg.mxu0
      %302 = vmatpush.bf16.msra.mxu0 0
      %303 = vmatpush.bf16.msra.mxu0 0
      %304 = vmatpush.bf16.msra.mxu0 0
      %305 = vmatpush.bf16.msra.mxu0 0
      %306 = vmatpush.bf16.msra.mxu0 0
      %307 = vmatpush.bf16.msra.mxu0 0
      %308 = vmatpush.bf16.msra.mxu0 %v193
      %309 = vmatpush.bf16.msra.mxu0 %v189
      %310 = vmatmul.bf16.gmra.mxu0 %v204
      %v311 = vpop.f32.mrf.mxu0
      %v312 = vadd.f32 %v137, %v311
      %v313 = vpop.f32.mrf.mxu0
      %v314 = vadd.f32 %v137, %v313
      %315 = vmatmul.bf16.gmra.mxu0 %v207
      %v316 = vpop.f32.mrf.mxu0
      %v317 = vadd.f32 %v137, %v316
      %v318 = vpop.f32.mrf.mxu0
      %v319 = vadd.f32 %v137, %v318
      %320 = vmatmul.bf16.gmra.mxu0 %v210
      %v321 = vpop.f32.mrf.mxu0
      %v322 = vadd.f32 %v137, %v321
      %v323 = vpop.f32.mrf.mxu0
      %v324 = vadd.f32 %v137, %v323
      %325 = vmatmul.bf16.gmra.mxu0 %v213
      %v326 = vpop.f32.mrf.mxu0
      %v327 = vadd.f32 %v137, %v326
      %v328 = vpop.f32.mrf.mxu0
      %v329 = vadd.f32 %v137, %v328
      %330 = vdwg.mxu0
      %331 = vst [vmem:[#allocation2] sm:$0xff] %v225
      %332 = vst [vmem:[#allocation2 + $0x8] sm:$0xff] %v254
      %333 = vst [vmem:[#allocation2 + $0x10] sm:$0xff] %v283
      %334 = vst [vmem:[#allocation2 + $0x18] sm:$0xff] %v312
      %335 = vst [vmem:[#allocation2 + $0x20] sm:$0xff] %v227
      %336 = vst [vmem:[#allocation2 + $0x28] sm:$0xff] %v256
      %337 = vst [vmem:[#allocation2 + $0x30] sm:$0xff] %v285
      %338 = vst [vmem:[#allocation2 + $0x38] sm:$0xff] %v314
      %339 = vst [vmem:[#allocation2 + $0x40] sm:$0xff] %v230
      %340 = vst [vmem:[#allocation2 + $0x48] sm:$0xff] %v259
      %341 = vst [vmem:[#allocation2 + $0x50] sm:$0xff] %v288
      %342 = vst [vmem:[#allocation2 + $0x58] sm:$0xff] %v317
      %343 = vst [vmem:[#allocation2 + $0x60] sm:$0xff] %v232
      %344 = vst [vmem:[#allocation2 + $0x68] sm:$0xff] %v261
      %345 = vst [vmem:[#allocation2 + $0x70] sm:$0xff] %v290
      %346 = vst [vmem:[#allocation2 + $0x78] sm:$0xff] %v319
      %347 = vst [vmem:[#allocation2 + $0x80] sm:$0xff] %v235
      %348 = vst [vmem:[#allocation2 + $0x88] sm:$0xff] %v264
      %349 = vst [vmem:[#allocation2 + $0x90] sm:$0xff] %v293
      %350 = vst [vmem:[#allocation2 + $0x98] sm:$0xff] %v322
      %351 = vst [vmem:[#allocation2 + $0xa0] sm:$0xff] %v237
      %352 = vst [vmem:[#allocation2 + $0xa8] sm:$0xff] %v266
      %353 = vst [vmem:[#allocation2 + $0xb0] sm:$0xff] %v295
      %354 = vst [vmem:[#allocation2 + $0xb8] sm:$0xff] %v324
      %355 = vst [vmem:[#allocation2 + $0xc0] sm:$0xff] %v240
      %356 = vst [vmem:[#allocation2 + $0xc8] sm:$0xff] %v269
      %357 = vst [vmem:[#allocation2 + $0xd0] sm:$0xff] %v298
      %358 = vst [vmem:[#allocation2 + $0xd8] sm:$0xff] %v327
      %359 = vst [vmem:[#allocation2 + $0xe0] sm:$0xff] %v242
      %360 = vst [vmem:[#allocation2 + $0xe8] sm:$0xff] %v271
      %361 = vst [vmem:[#allocation2 + $0xf0] sm:$0xff] %v300
      %362 = vst [vmem:[#allocation2 + $0xf8] sm:$0xff] %v329
      %v363 = vld [vmem:[#allocation7] sm:$0xff]
      %v364 = vld [vmem:[#allocation7 + $0x8] sm:$0xff]
      %v365 = vld [vmem:[#allocation7 + $0x10] sm:$0xff]
      %v366 = vld [vmem:[#allocation7 + $0x18] sm:$0xff]
      %v367 = vld [vmem:[#allocation7 + $0x20] sm:$0xff]
      %v368 = vld [vmem:[#allocation7 + $0x28] sm:$0xff]
      %v369 = vld [vmem:[#allocation7 + $0x30] sm:$0xff]
      %v370 = vld [vmem:[#allocation7 + $0x38] sm:$0xff]
      %v371 = vld [vmem:[#allocation7 + $0x40] sm:$0xff]
      %v372 = vld [vmem:[#allocation7 + $0x48] sm:$0xff]
      %v373 = vld [vmem:[#allocation7 + $0x50] sm:$0xff]
      %v374 = vld [vmem:[#allocation7 + $0x58] sm:$0xff]
      %v375 = vld [vmem:[#allocation7 + $0x60] sm:$0xff]
      %v376 = vld [vmem:[#allocation7 + $0x68] sm:$0xff]
      %v377 = vld [vmem:[#allocation7 + $0x70] sm:$0xff]
      %v378 = vld [vmem:[#allocation7 + $0x78] sm:$0xff]
      %v379 = vld [vmem:[#allocation7 + $0x80] sm:$0xff]
      %v380 = vld [vmem:[#allocation7 + $0x88] sm:$0xff]
      %v381 = vld [vmem:[#allocation7 + $0x90] sm:$0xff]
      %v382 = vld [vmem:[#allocation7 + $0x98] sm:$0xff]
      %v383 = vld [vmem:[#allocation7 + $0xa0] sm:$0xff]
      %v384 = vld [vmem:[#allocation7 + $0xa8] sm:$0xff]
      %v385 = vld [vmem:[#allocation7 + $0xb0] sm:$0xff]
      %v386 = vld [vmem:[#allocation7 + $0xb8] sm:$0xff]
      %v387 = vld [vmem:[#allocation7 + $0xc0] sm:$0xff]
      %v388 = vld [vmem:[#allocation7 + $0xc8] sm:$0xff]
      %v389 = vld [vmem:[#allocation7 + $0xd0] sm:$0xff]
      %v390 = vld [vmem:[#allocation7 + $0xd8] sm:$0xff]
      %v391 = vld [vmem:[#allocation7 + $0xe0] sm:$0xff]
      %v392 = vld [vmem:[#allocation7 + $0xe8] sm:$0xff]
      %v393 = vld [vmem:[#allocation7 + $0xf0] sm:$0xff]
      %v394 = vld [vmem:[#allocation7 + $0xf8] sm:$0xff]
      %v395 = vld [vmem:[#allocation10] sm:$0xff]
      %v396 = vld [vmem:[#allocation10 + $0x8] sm:$0xff]
      %v397 = vld [vmem:[#allocation10 + $0x10] sm:$0xff]
      %v398 = vld [vmem:[#allocation10 + $0x18] sm:$0xff]
      %v399 = vld [vmem:[#allocation10 + $0x20] sm:$0xff]
      %v400 = vld [vmem:[#allocation10 + $0x28] sm:$0xff]
      %v401 = vld [vmem:[#allocation10 + $0x30] sm:$0xff]
      %v402 = vld [vmem:[#allocation10 + $0x38] sm:$0xff]
      %v403 = vld [vmem:[#allocation10 + $0x40] sm:$0xff]
      %v404 = vld [vmem:[#allocation10 + $0x48] sm:$0xff]
      %v405 = vld [vmem:[#allocation10 + $0x50] sm:$0xff]
      %v406 = vld [vmem:[#allocation10 + $0x58] sm:$0xff]
      %v407 = vld [vmem:[#allocation10 + $0x60] sm:$0xff]
      %v408 = vld [vmem:[#allocation10 + $0x68] sm:$0xff]
      %v409 = vld [vmem:[#allocation10 + $0x70] sm:$0xff]
      %v410 = vld [vmem:[#allocation10 + $0x78] sm:$0xff]
      %v411 = vld [vmem:[#allocation10 + $0x80] sm:$0xff]
      %v412 = vld [vmem:[#allocation10 + $0x88] sm:$0xff]
      %v413 = vld [vmem:[#allocation10 + $0x90] sm:$0xff]
      %v414 = vld [vmem:[#allocation10 + $0x98] sm:$0xff]
      %v415 = vld [vmem:[#allocation10 + $0xa0] sm:$0xff]
      %v416 = vld [vmem:[#allocation10 + $0xa8] sm:$0xff]
      %v417 = vld [vmem:[#allocation10 + $0xb0] sm:$0xff]
      %v418 = vld [vmem:[#allocation10 + $0xb8] sm:$0xff]
      %v419 = vld [vmem:[#allocation10 + $0xc0] sm:$0xff]
      %v420 = vld [vmem:[#allocation10 + $0xc8] sm:$0xff]
      %v421 = vld [vmem:[#allocation10 + $0xd0] sm:$0xff]
      %v422 = vld [vmem:[#allocation10 + $0xd8] sm:$0xff]
      %v423 = vld [vmem:[#allocation10 + $0xe0] sm:$0xff]
      %v424 = vld [vmem:[#allocation10 + $0xe8] sm:$0xff]
      %v425 = vld [vmem:[#allocation10 + $0xf0] sm:$0xff]
      %v426 = vld [vmem:[#allocation10 + $0xf8] sm:$0xff]
      %s427 = smul.u32 0, 4
      %s428 = smul.addr %s427, 8
      %s429 = scalar_lea.vmem [#allocation2], %s428
      %v430 = vld [vmem:[%s429] sm:$0xff]
      %v431 = vld [vmem:[%s429 + $0x8] sm:$0xff]
      %v432 = vld [vmem:[%s429 + $0x10] sm:$0xff]
      %v433 = vld [vmem:[%s429 + $0x18] sm:$0xff]
      %v466 = vunpack.c.l.b16 %v363
      %v467 = vunpack.c.h.b16 %v363
      %v468 = vunpack.c.l.b16 %v364
      %v469 = vunpack.c.h.b16 %v364
      %v470 = vunpack.c.l.b16 %v365
      %v471 = vunpack.c.h.b16 %v365
      %v472 = vunpack.c.l.b16 %v366
      %v473 = vunpack.c.h.b16 %v366
      %v474 = vunpack.c.l.b16 %v367
      %v475 = vunpack.c.h.b16 %v367
      %v476 = vunpack.c.l.b16 %v368
      %v477 = vunpack.c.h.b16 %v368
      %v478 = vunpack.c.l.b16 %v369
      %v479 = vunpack.c.h.b16 %v369
      %v480 = vunpack.c.l.b16 %v370
      %v481 = vunpack.c.h.b16 %v370
      %v482 = vunpack.c.l.b16 %v371
      %v483 = vunpack.c.h.b16 %v371
      %v484 = vunpack.c.l.b16 %v372
      %v485 = vunpack.c.h.b16 %v372
      %v486 = vunpack.c.l.b16 %v373
      %v487 = vunpack.c.h.b16 %v373
      %v488 = vunpack.c.l.b16 %v374
      %v489 = vunpack.c.h.b16 %v374
      %v490 = vunpack.c.l.b16 %v375
      %v491 = vunpack.c.h.b16 %v375
      %v492 = vunpack.c.l.b16 %v376
      %v493 = vunpack.c.h.b16 %v376
      %v494 = vunpack.c.l.b16 %v377
      %v495 = vunpack.c.h.b16 %v377
      %v496 = vunpack.c.l.b16 %v378
      %v497 = vunpack.c.h.b16 %v378
      %v498 = vunpack.c.l.b16 %v379
      %v499 = vunpack.c.h.b16 %v379
      %v500 = vunpack.c.l.b16 %v380
      %v501 = vunpack.c.h.b16 %v380
      %v502 = vunpack.c.l.b16 %v381
      %v503 = vunpack.c.h.b16 %v381
      %v504 = vunpack.c.l.b16 %v382
      %v505 = vunpack.c.h.b16 %v382
      %v506 = vunpack.c.l.b16 %v383
      %v507 = vunpack.c.h.b16 %v383
      %v508 = vunpack.c.l.b16 %v384
      %v509 = vunpack.c.h.b16 %v384
      %v510 = vunpack.c.l.b16 %v385
      %v511 = vunpack.c.h.b16 %v385
      %v512 = vunpack.c.l.b16 %v386
      %v513 = vunpack.c.h.b16 %v386
      %v514 = vunpack.c.l.b16 %v387
      %v515 = vunpack.c.h.b16 %v387
      %v516 = vunpack.c.l.b16 %v388
      %v517 = vunpack.c.h.b16 %v388
      %v518 = vunpack.c.l.b16 %v389
      %v519 = vunpack.c.h.b16 %v389
      %v520 = vunpack.c.l.b16 %v390
      %v521 = vunpack.c.h.b16 %v390
      %v522 = vunpack.c.l.b16 %v391
      %v523 = vunpack.c.h.b16 %v391
      %v524 = vunpack.c.l.b16 %v392
      %v525 = vunpack.c.h.b16 %v392
      %v526 = vunpack.c.l.b16 %v393
      %v527 = vunpack.c.h.b16 %v393
      %v528 = vunpack.c.l.b16 %v394
      %v529 = vunpack.c.h.b16 %v394
      %v530 = vpack.c.b16 %v470, %v466
      %v531 = vpack.c.b16 %v471, %v467
      %v532 = vpack.c.b16 %v472, %v468
      %v533 = vpack.c.b16 %v473, %v469
      %v534 = vpack.c.b16 %v478, %v474
      %v535 = vpack.c.b16 %v479, %v475
      %v536 = vpack.c.b16 %v480, %v476
      %v537 = vpack.c.b16 %v481, %v477
      %v538 = vpack.c.b16 %v486, %v482
      %v539 = vpack.c.b16 %v487, %v483
      %v540 = vpack.c.b16 %v488, %v484
      %v541 = vpack.c.b16 %v489, %v485
      %v542 = vpack.c.b16 %v494, %v490
      %v543 = vpack.c.b16 %v495, %v491
      %v544 = vpack.c.b16 %v496, %v492
      %v545 = vpack.c.b16 %v497, %v493
      %v546 = vpack.c.b16 %v502, %v498
      %v547 = vpack.c.b16 %v503, %v499
      %v548 = vpack.c.b16 %v504, %v500
      %v549 = vpack.c.b16 %v505, %v501
      %v550 = vpack.c.b16 %v510, %v506
      %v551 = vpack.c.b16 %v511, %v507
      %v552 = vpack.c.b16 %v512, %v508
      %v553 = vpack.c.b16 %v513, %v509
      %v554 = vpack.c.b16 %v518, %v514
      %v555 = vpack.c.b16 %v519, %v515
      %v556 = vpack.c.b16 %v520, %v516
      %v557 = vpack.c.b16 %v521, %v517
      %v558 = vpack.c.b16 %v526, %v522
      %v559 = vpack.c.b16 %v527, %v523
      %v560 = vpack.c.b16 %v528, %v524
      %v561 = vpack.c.b16 %v529, %v525
      %594 = vmatpush.bf16.msra.mxu0 %v558
      %595 = vmatpush.bf16.msra.mxu0 %v554
      %596 = vmatpush.bf16.msra.mxu0 %v550
      %597 = vmatpush.bf16.msra.mxu0 %v546
      %598 = vmatpush.bf16.msra.mxu0 %v542
      %599 = vmatpush.bf16.msra.mxu0 %v538
      %600 = vmatpush.bf16.msra.mxu0 %v534
      %601 = vmatpush.bf16.msra.mxu0 %v530
      %602 = vmatmul.bf16.gmra.mxu0 0
      %v603 = vpop.f32.mrf.mxu0
      %v604 = vadd.f32 0.0, %v603
      %v605 = vpop.f32.mrf.mxu0
      %606 = vdwg.mxu0
      %607 = vmatpush.bf16.msra.mxu0 %v559
      %608 = vmatpush.bf16.msra.mxu0 %v555
      %609 = vmatpush.bf16.msra.mxu0 %v551
      %610 = vmatpush.bf16.msra.mxu0 %v547
      %611 = vmatpush.bf16.msra.mxu0 %v543
      %612 = vmatpush.bf16.msra.mxu0 %v539
      %613 = vmatpush.bf16.msra.mxu0 %v535
      %614 = vmatpush.bf16.msra.mxu0 %v531
      %615 = vmatmul.bf16.gmra.mxu0 0
      %v616 = vpop.f32.mrf.mxu0
      %v617 = vadd.f32 0.0, %v616
      %v618 = vpop.f32.mrf.mxu0
      %619 = vdwg.mxu0
      %620 = vmatpush.bf16.msra.mxu0 %v560
      %621 = vmatpush.bf16.msra.mxu0 %v556
      %622 = vmatpush.bf16.msra.mxu0 %v552
      %623 = vmatpush.bf16.msra.mxu0 %v548
      %624 = vmatpush.bf16.msra.mxu0 %v544
      %625 = vmatpush.bf16.msra.mxu0 %v540
      %626 = vmatpush.bf16.msra.mxu0 %v536
      %627 = vmatpush.bf16.msra.mxu0 %v532
      %628 = vmatmul.bf16.gmra.mxu0 0
      %v629 = vpop.f32.mrf.mxu0
      %v630 = vadd.f32 0.0, %v629
      %v631 = vpop.f32.mrf.mxu0
      %632 = vdwg.mxu0
      %633 = vmatpush.bf16.msra.mxu0 %v561
      %634 = vmatpush.bf16.msra.mxu0 %v557
      %635 = vmatpush.bf16.msra.mxu0 %v553
      %636 = vmatpush.bf16.msra.mxu0 %v549
      %637 = vmatpush.bf16.msra.mxu0 %v545
      %638 = vmatpush.bf16.msra.mxu0 %v541
      %639 = vmatpush.bf16.msra.mxu0 %v537
      %640 = vmatpush.bf16.msra.mxu0 %v533
      %641 = vmatmul.bf16.gmra.mxu0 0
      %v642 = vpop.f32.mrf.mxu0
      %v643 = vadd.f32 0.0, %v642
      %v644 = vpop.f32.mrf.mxu0
      %645 = vdwg.mxu0
      %v646 = vadd.f32 %v430, %v604
      %v647 = vadd.f32 %v431, %v617
      %v648 = vadd.f32 %v432, %v630
      %v649 = vadd.f32 %v433, %v643
      %v650 = vxor.u32 %v646, 2147483648
      %v651 = vmul.f32 %v650, 1.442695
      %v652 = vpow.pop %v651
      %v653 = vadd.f32 %v652, 1.0
      %v654 = vrcp.pop %v653
      %v655 = vmul.f32 %v653, %v654
      %v656 = vsub.f32 1.0, %v655
      %v657 = vmul.f32 %v654, %v656
      %v658 = vadd.f32 %v654, %v657
      %vm659 = vweird.f32 %v653
      %vm660 = vweird.f32 %v654
      %vm661 = vmor %vm659, %vm660
      %v662 = vsel %vm661, %v654, %v658
      %v663 = vand.u32 2147483647, %v653
      %vm664 = vcmp.eq.f32.partialorder %v663, 8.507059e+37
      %v665 = vand.u32 %v653, 2147483648
      %v666 = vor.u32 1.1754944e-38, %v665
      %v667 = vsel %vm664, %v666, %v662
      %v668 = vmul.f32 1.0, %v667
      %v669 = vxor.u32 %v647, 2147483648
      %v670 = vmul.f32 %v669, 1.442695
      %v671 = vpow.pop %v670
      %v672 = vadd.f32 %v671, 1.0
      %v673 = vrcp.pop %v672
      %v674 = vmul.f32 %v672, %v673
      %v675 = vsub.f32 1.0, %v674
      %v676 = vmul.f32 %v673, %v675
      %v677 = vadd.f32 %v673, %v676
      %vm678 = vweird.f32 %v672
      %vm679 = vweird.f32 %v673
      %vm680 = vmor %vm678, %vm679
      %v681 = vsel %vm680, %v673, %v677
      %v682 = vand.u32 2147483647, %v672
      %vm683 = vcmp.eq.f32.partialorder %v682, 8.507059e+37
      %v684 = vand.u32 %v672, 2147483648
      %v685 = vor.u32 1.1754944e-38, %v684
      %v686 = vsel %vm683, %v685, %v681
      %v687 = vmul.f32 1.0, %v686
      %v688 = vtanh.pop %v648
      %v689 = vxor.u32 %v649, 2147483648
      %v690 = vmul.f32 %v689, 1.442695
      %v691 = vpow.pop %v690
      %v692 = vadd.f32 %v691, 1.0
      %v693 = vrcp.pop %v692
      %v694 = vmul.f32 %v692, %v693
      %v695 = vsub.f32 1.0, %v694
      %v696 = vmul.f32 %v693, %v695
      %v697 = vadd.f32 %v693, %v696
      %vm698 = vweird.f32 %v692
      %vm699 = vweird.f32 %v693
      %vm700 = vmor %vm698, %vm699
      %v701 = vsel %vm700, %v693, %v697
      %v702 = vand.u32 2147483647, %v692
      %vm703 = vcmp.eq.f32.partialorder %v702, 8.507059e+37
      %v704 = vand.u32 %v692, 2147483648
      %v705 = vor.u32 1.1754944e-38, %v704
      %v706 = vsel %vm703, %v705, %v701
      %v707 = vmul.f32 1.0, %v706
      %v708 = vmul.f32 %v687, 0.0
      %v709 = vmul.f32 %v668, %v688
      %v710 = vadd.f32 %v708, %v709
      %v711 = vtanh.pop %v710
      %v712 = vmul.f32 %v707, %v711
      %v713 = vpack.c.bf16 %v712, %v712
      %s714 = smul.u32 0, 2
      %s715 = smul.addr %s714, 4
      %s716 = scalar_lea.vmem [#allocation3], %s715
      %717 = vst [vmem:[%s716] sm:$0xf] %v713
      %s718 = smul.u32 1, 4
      %s719 = smul.addr %s718, 8
      %s720 = scalar_lea.vmem [#allocation2], %s719
      %v721 = vld [vmem:[%s720] sm:$0xff]
      %v722 = vld [vmem:[%s720 + $0x8] sm:$0xff]
      %v723 = vld [vmem:[%s720 + $0x10] sm:$0xff]
      %v724 = vld [vmem:[%s720 + $0x18] sm:$0xff]
      %725 = vmatpush.bf16.msra.mxu0 %v558
      %726 = vmatpush.bf16.msra.mxu0 %v554
      %727 = vmatpush.bf16.msra.mxu0 %v550
      %728 = vmatpush.bf16.msra.mxu0 %v546
      %729 = vmatpush.bf16.msra.mxu0 %v542
      %730 = vmatpush.bf16.msra.mxu0 %v538
      %731 = vmatpush.bf16.msra.mxu0 %v534
      %732 = vmatpush.bf16.msra.mxu0 %v530
      %733 = vmatmul.bf16.gmra.mxu0 %v713
      %v734 = vpop.f32.mrf.mxu0
      %v735 = vadd.f32 0.0, %v734
      %v736 = vpop.f32.mrf.mxu0
      %737 = vdwg.mxu0
      %738 = vmatpush.bf16.msra.mxu0 %v559
      %739 = vmatpush.bf16.msra.mxu0 %v555
      %740 = vmatpush.bf16.msra.mxu0 %v551
      %741 = vmatpush.bf16.msra.mxu0 %v547
      %742 = vmatpush.bf16.msra.mxu0 %v543
      %743 = vmatpush.bf16.msra.mxu0 %v539
      %744 = vmatpush.bf16.msra.mxu0 %v535
      %745 = vmatpush.bf16.msra.mxu0 %v531
      %746 = vmatmul.bf16.gmra.mxu0 %v713
      %v747 = vpop.f32.mrf.mxu0
      %v748 = vadd.f32 0.0, %v747
      %v749 = vpop.f32.mrf.mxu0
      %750 = vdwg.mxu0
      %751 = vmatpush.bf16.msra.mxu0 %v560
      %752 = vmatpush.bf16.msra.mxu0 %v556
      %753 = vmatpush.bf16.msra.mxu0 %v552
      %754 = vmatpush.bf16.msra.mxu0 %v548
      %755 = vmatpush.bf16.msra.mxu0 %v544
      %756 = vmatpush.bf16.msra.mxu0 %v540
      %757 = vmatpush.bf16.msra.mxu0 %v536
      %758 = vmatpush.bf16.msra.mxu0 %v532
      %759 = vmatmul.bf16.gmra.mxu0 %v713
      %v760 = vpop.f32.mrf.mxu0
      %v761 = vadd.f32 0.0, %v760
      %v762 = vpop.f32.mrf.mxu0
      %763 = vdwg.mxu0
      %764 = vmatpush.bf16.msra.mxu0 %v561
      %765 = vmatpush.bf16.msra.mxu0 %v557
      %766 = vmatpush.bf16.msra.mxu0 %v553
      %767 = vmatpush.bf16.msra.mxu0 %v549
      %768 = vmatpush.bf16.msra.mxu0 %v545
      %769 = vmatpush.bf16.msra.mxu0 %v541
      %770 = vmatpush.bf16.msra.mxu0 %v537
      %771 = vmatpush.bf16.msra.mxu0 %v533
      %772 = vmatmul.bf16.gmra.mxu0 %v713
      %v773 = vpop.f32.mrf.mxu0
      %v774 = vadd.f32 0.0, %v773
      %v775 = vpop.f32.mrf.mxu0
      %776 = vdwg.mxu0
      %v777 = vadd.f32 %v721, %v735
      %v778 = vadd.f32 %v722, %v748
      %v779 = vadd.f32 %v723, %v761
      %v780 = vadd.f32 %v724, %v774
      %v781 = vxor.u32 %v777, 2147483648
      %v782 = vmul.f32 %v781, 1.442695
      %v783 = vpow.pop %v782
      %v784 = vadd.f32 %v783, 1.0
      %v785 = vrcp.pop %v784
      %v786 = vmul.f32 %v784, %v785
      %v787 = vsub.f32 1.0, %v786
      %v788 = vmul.f32 %v785, %v787
      %v789 = vadd.f32 %v785, %v788
      %vm790 = vweird.f32 %v784
      %vm791 = vweird.f32 %v785
      %vm792 = vmor %vm790, %vm791
      %v793 = vsel %vm792, %v785, %v789
      %v794 = vand.u32 2147483647, %v784
      %vm795 = vcmp.eq.f32.partialorder %v794, 8.507059e+37
      %v796 = vand.u32 %v784, 2147483648
      %v797 = vor.u32 1.1754944e-38, %v796
      %v798 = vsel %vm795, %v797, %v793
      %v799 = vmul.f32 1.0, %v798
      %v800 = vxor.u32 %v778, 2147483648
      %v801 = vmul.f32 %v800, 1.442695
      %v802 = vpow.pop %v801
      %v803 = vadd.f32 %v802, 1.0
      %v804 = vrcp.pop %v803
      %v805 = vmul.f32 %v803, %v804
      %v806 = vsub.f32 1.0, %v805
      %v807 = vmul.f32 %v804, %v806
      %v808 = vadd.f32 %v804, %v807
      %vm809 = vweird.f32 %v803
      %vm810 = vweird.f32 %v804
      %vm811 = vmor %vm809, %vm810
      %v812 = vsel %vm811, %v804, %v808
      %v813 = vand.u32 2147483647, %v803
      %vm814 = vcmp.eq.f32.partialorder %v813, 8.507059e+37
      %v815 = vand.u32 %v803, 2147483648
      %v816 = vor.u32 1.1754944e-38, %v815
      %v817 = vsel %vm814, %v816, %v812
      %v818 = vmul.f32 1.0, %v817
      %v819 = vtanh.pop %v779
      %v820 = vxor.u32 %v780, 2147483648
      %v821 = vmul.f32 %v820, 1.442695
      %v822 = vpow.pop %v821
      %v823 = vadd.f32 %v822, 1.0
      %v824 = vrcp.pop %v823
      %v825 = vmul.f32 %v823, %v824
      %v826 = vsub.f32 1.0, %v825
      %v827 = vmul.f32 %v824, %v826
      %v828 = vadd.f32 %v824, %v827
      %vm829 = vweird.f32 %v823
      %vm830 = vweird.f32 %v824
      %vm831 = vmor %vm829, %vm830
      %v832 = vsel %vm831, %v824, %v828
      %v833 = vand.u32 2147483647, %v823
      %vm834 = vcmp.eq.f32.partialorder %v833, 8.507059e+37
      %v835 = vand.u32 %v823, 2147483648
      %v836 = vor.u32 1.1754944e-38, %v835
      %v837 = vsel %vm834, %v836, %v832
      %v838 = vmul.f32 1.0, %v837
      %v839 = vmul.f32 %v818, %v710
      %v840 = vmul.f32 %v799, %v819
      %v841 = vadd.f32 %v839, %v840
      %v842 = vtanh.pop %v841
      %v843 = vmul.f32 %v838, %v842
      %v844 = vpack.c.bf16 %v843, %v843
      %s845 = smul.u32 1, 2
      %s846 = smul.addr %s845, 4
      %s847 = scalar_lea.vmem [#allocation3], %s846
      %848 = vst [vmem:[%s847] sm:$0xf] %v844
      %s849 = smul.u32 2, 4
      %s850 = smul.addr %s849, 8
      %s851 = scalar_lea.vmem [#allocation2], %s850
      %v852 = vld [vmem:[%s851] sm:$0xff]
      %v853 = vld [vmem:[%s851 + $0x8] sm:$0xff]
      %v854 = vld [vmem:[%s851 + $0x10] sm:$0xff]
      %v855 = vld [vmem:[%s851 + $0x18] sm:$0xff]
      %856 = vmatpush.bf16.msra.mxu0 %v558
      %857 = vmatpush.bf16.msra.mxu0 %v554
      %858 = vmatpush.bf16.msra.mxu0 %v550
      %859 = vmatpush.bf16.msra.mxu0 %v546
      %860 = vmatpush.bf16.msra.mxu0 %v542
      %861 = vmatpush.bf16.msra.mxu0 %v538
      %862 = vmatpush.bf16.msra.mxu0 %v534
      %863 = vmatpush.bf16.msra.mxu0 %v530
      %864 = vmatmul.bf16.gmra.mxu0 %v844
      %v865 = vpop.f32.mrf.mxu0
      %v866 = vadd.f32 0.0, %v865
      %v867 = vpop.f32.mrf.mxu0
      %868 = vdwg.mxu0
      %869 = vmatpush.bf16.msra.mxu0 %v559
      %870 = vmatpush.bf16.msra.mxu0 %v555
      %871 = vmatpush.bf16.msra.mxu0 %v551
      %872 = vmatpush.bf16.msra.mxu0 %v547
      %873 = vmatpush.bf16.msra.mxu0 %v543
      %874 = vmatpush.bf16.msra.mxu0 %v539
      %875 = vmatpush.bf16.msra.mxu0 %v535
      %876 = vmatpush.bf16.msra.mxu0 %v531
      %877 = vmatmul.bf16.gmra.mxu0 %v844
      %v878 = vpop.f32.mrf.mxu0
      %v879 = vadd.f32 0.0, %v878
      %v880 = vpop.f32.mrf.mxu0
      %881 = vdwg.mxu0
      %882 = vmatpush.bf16.msra.mxu0 %v560
      %883 = vmatpush.bf16.msra.mxu0 %v556
      %884 = vmatpush.bf16.msra.mxu0 %v552
      %885 = vmatpush.bf16.msra.mxu0 %v548
      %886 = vmatpush.bf16.msra.mxu0 %v544
      %887 = vmatpush.bf16.msra.mxu0 %v540
      %888 = vmatpush.bf16.msra.mxu0 %v536
      %889 = vmatpush.bf16.msra.mxu0 %v532
      %890 = vmatmul.bf16.gmra.mxu0 %v844
      %v891 = vpop.f32.mrf.mxu0
      %v892 = vadd.f32 0.0, %v891
      %v893 = vpop.f32.mrf.mxu0
      %894 = vdwg.mxu0
      %895 = vmatpush.bf16.msra.mxu0 %v561
      %896 = vmatpush.bf16.msra.mxu0 %v557
      %897 = vmatpush.bf16.msra.mxu0 %v553
      %898 = vmatpush.bf16.msra.mxu0 %v549
      %899 = vmatpush.bf16.msra.mxu0 %v545
      %900 = vmatpush.bf16.msra.mxu0 %v541
      %901 = vmatpush.bf16.msra.mxu0 %v537
      %902 = vmatpush.bf16.msra.mxu0 %v533
      %903 = vmatmul.bf16.gmra.mxu0 %v844
      %v904 = vpop.f32.mrf.mxu0
      %v905 = vadd.f32 0.0, %v904
      %v906 = vpop.f32.mrf.mxu0
      %907 = vdwg.mxu0
      %v908 = vadd.f32 %v852, %v866
      %v909 = vadd.f32 %v853, %v879
      %v910 = vadd.f32 %v854, %v892
      %v911 = vadd.f32 %v855, %v905
      %v912 = vxor.u32 %v908, 2147483648
      %v913 = vmul.f32 %v912, 1.442695
      %v914 = vpow.pop %v913
      %v915 = vadd.f32 %v914, 1.0
      %v916 = vrcp.pop %v915
      %v917 = vmul.f32 %v915, %v916
      %v918 = vsub.f32 1.0, %v917
      %v919 = vmul.f32 %v916, %v918
      %v920 = vadd.f32 %v916, %v919
      %vm921 = vweird.f32 %v915
      %vm922 = vweird.f32 %v916
      %vm923 = vmor %vm921, %vm922
      %v924 = vsel %vm923, %v916, %v920
      %v925 = vand.u32 2147483647, %v915
      %vm926 = vcmp.eq.f32.partialorder %v925, 8.507059e+37
      %v927 = vand.u32 %v915, 2147483648
      %v928 = vor.u32 1.1754944e-38, %v927
      %v929 = vsel %vm926, %v928, %v924
      %v930 = vmul.f32 1.0, %v929
      %v931 = vxor.u32 %v909, 2147483648
      %v932 = vmul.f32 %v931, 1.442695
      %v933 = vpow.pop %v932
      %v934 = vadd.f32 %v933, 1.0
      %v935 = vrcp.pop %v934
      %v936 = vmul.f32 %v934, %v935
      %v937 = vsub.f32 1.0, %v936
      %v938 = vmul.f32 %v935, %v937
      %v939 = vadd.f32 %v935, %v938
      %vm940 = vweird.f32 %v934
      %vm941 = vweird.f32 %v935
      %vm942 = vmor %vm940, %vm941
      %v943 = vsel %vm942, %v935, %v939
      %v944 = vand.u32 2147483647, %v934
      %vm945 = vcmp.eq.f32.partialorder %v944, 8.507059e+37
      %v946 = vand.u32 %v934, 2147483648
      %v947 = vor.u32 1.1754944e-38, %v946
      %v948 = vsel %vm945, %v947, %v943
      %v949 = vmul.f32 1.0, %v948
      %v950 = vtanh.pop %v910
      %v951 = vxor.u32 %v911, 2147483648
      %v952 = vmul.f32 %v951, 1.442695
      %v953 = vpow.pop %v952
      %v954 = vadd.f32 %v953, 1.0
      %v955 = vrcp.pop %v954
      %v956 = vmul.f32 %v954, %v955
      %v957 = vsub.f32 1.0, %v956
      %v958 = vmul.f32 %v955, %v957
      %v959 = vadd.f32 %v955, %v958
      %vm960 = vweird.f32 %v954
      %vm961 = vweird.f32 %v955
      %vm962 = vmor %vm960, %vm961
      %v963 = vsel %vm962, %v955, %v959
      %v964 = vand.u32 2147483647, %v954
      %vm965 = vcmp.eq.f32.partialorder %v964, 8.507059e+37
      %v966 = vand.u32 %v954, 2147483648
      %v967 = vor.u32 1.1754944e-38, %v966
      %v968 = vsel %vm965, %v967, %v963
      %v969 = vmul.f32 1.0, %v968
      %v970 = vmul.f32 %v949, %v841
      %v971 = vmul.f32 %v930, %v950
      %v972 = vadd.f32 %v970, %v971
      %v973 = vtanh.pop %v972
      %v974 = vmul.f32 %v969, %v973
      %v975 = vpack.c.bf16 %v974, %v974
      %s976 = smul.u32 2, 2
      %s977 = smul.addr %s976, 4
      %s978 = scalar_lea.vmem [#allocation3], %s977
      %979 = vst [vmem:[%s978] sm:$0xf] %v975
      %s980 = smul.u32 3, 4
      %s981 = smul.addr %s980, 8
      %s982 = scalar_lea.vmem [#allocation2], %s981
      %v983 = vld [vmem:[%s982] sm:$0xff]
      %v984 = vld [vmem:[%s982 + $0x8] sm:$0xff]
      %v985 = vld [vmem:[%s982 + $0x10] sm:$0xff]
      %v986 = vld [vmem:[%s982 + $0x18] sm:$0xff]
      %987 = vmatpush.bf16.msra.mxu0 %v558
      %988 = vmatpush.bf16.msra.mxu0 %v554
      %989 = vmatpush.bf16.msra.mxu0 %v550
      %990 = vmatpush.bf16.msra.mxu0 %v546
      %991 = vmatpush.bf16.msra.mxu0 %v542
      %992 = vmatpush.bf16.msra.mxu0 %v538
      %993 = vmatpush.bf16.msra.mxu0 %v534
      %994 = vmatpush.bf16.msra.mxu0 %v530
      %995 = vmatmul.bf16.gmra.mxu0 %v975
      %v996 = vpop.f32.mrf.mxu0
      %v997 = vadd.f32 0.0, %v996
      %v998 = vpop.f32.mrf.mxu0
      %999 = vdwg.mxu0
      %1000 = vmatpush.bf16.msra.mxu0 %v559
      %1001 = vmatpush.bf16.msra.mxu0 %v555
      %1002 = vmatpush.bf16.msra.mxu0 %v551
      %1003 = vmatpush.bf16.msra.mxu0 %v547
      %1004 = vmatpush.bf16.msra.mxu0 %v543
      %1005 = vmatpush.bf16.msra.mxu0 %v539
      %1006 = vmatpush.bf16.msra.mxu0 %v535
      %1007 = vmatpush.bf16.msra.mxu0 %v531
      %1008 = vmatmul.bf16.gmra.mxu0 %v975
      %v1009 = vpop.f32.mrf.mxu0
      %v1010 = vadd.f32 0.0, %v1009
      %v1011 = vpop.f32.mrf.mxu0
      %1012 = vdwg.mxu0
      %1013 = vmatpush.bf16.msra.mxu0 %v560
      %1014 = vmatpush.bf16.msra.mxu0 %v556
      %1015 = vmatpush.bf16.msra.mxu0 %v552
      %1016 = vmatpush.bf16.msra.mxu0 %v548
      %1017 = vmatpush.bf16.msra.mxu0 %v544
      %1018 = vmatpush.bf16.msra.mxu0 %v540
      %1019 = vmatpush.bf16.msra.mxu0 %v536
      %1020 = vmatpush.bf16.msra.mxu0 %v532
      %1021 = vmatmul.bf16.gmra.mxu0 %v975
      %v1022 = vpop.f32.mrf.mxu0
      %v1023 = vadd.f32 0.0, %v1022
      %v1024 = vpop.f32.mrf.mxu0
      %1025 = vdwg.mxu0
      %1026 = vmatpush.bf16.msra.mxu0 %v561
      %1027 = vmatpush.bf16.msra.mxu0 %v557
      %1028 = vmatpush.bf16.msra.mxu0 %v553
      %1029 = vmatpush.bf16.msra.mxu0 %v549
      %1030 = vmatpush.bf16.msra.mxu0 %v545
      %1031 = vmatpush.bf16.msra.mxu0 %v541
      %1032 = vmatpush.bf16.msra.mxu0 %v537
      %1033 = vmatpush.bf16.msra.mxu0 %v533
      %1034 = vmatmul.bf16.gmra.mxu0 %v975
      %v1035 = vpop.f32.mrf.mxu0
      %v1036 = vadd.f32 0.0, %v1035
      %v1037 = vpop.f32.mrf.mxu0
      %1038 = vdwg.mxu0
      %v1039 = vadd.f32 %v983, %v997
      %v1040 = vadd.f32 %v984, %v1010
      %v1041 = vadd.f32 %v985, %v1023
      %v1042 = vadd.f32 %v986, %v1036
      %v1043 = vxor.u32 %v1039, 2147483648
      %v1044 = vmul.f32 %v1043, 1.442695
      %v1045 = vpow.pop %v1044
      %v1046 = vadd.f32 %v1045, 1.0
      %v1047 = vrcp.pop %v1046
      %v1048 = vmul.f32 %v1046, %v1047
      %v1049 = vsub.f32 1.0, %v1048
      %v1050 = vmul.f32 %v1047, %v1049
      %v1051 = vadd.f32 %v1047, %v1050
      %vm1052 = vweird.f32 %v1046
      %vm1053 = vweird.f32 %v1047
      %vm1054 = vmor %vm1052, %vm1053
      %v1055 = vsel %vm1054, %v1047, %v1051
      %v1056 = vand.u32 2147483647, %v1046
      %vm1057 = vcmp.eq.f32.partialorder %v1056, 8.507059e+37
      %v1058 = vand.u32 %v1046, 2147483648
      %v1059 = vor.u32 1.1754944e-38, %v1058
      %v1060 = vsel %vm1057, %v1059, %v1055
      %v1061 = vmul.f32 1.0, %v1060
      %v1062 = vxor.u32 %v1040, 2147483648
      %v1063 = vmul.f32 %v1062, 1.442695
      %v1064 = vpow.pop %v1063
      %v1065 = vadd.f32 %v1064, 1.0
      %v1066 = vrcp.pop %v1065
      %v1067 = vmul.f32 %v1065, %v1066
      %v1068 = vsub.f32 1.0, %v1067
      %v1069 = vmul.f32 %v1066, %v1068
      %v1070 = vadd.f32 %v1066, %v1069
      %vm1071 = vweird.f32 %v1065
      %vm1072 = vweird.f32 %v1066
      %vm1073 = vmor %vm1071, %vm1072
      %v1074 = vsel %vm1073, %v1066, %v1070
      %v1075 = vand.u32 2147483647, %v1065
      %vm1076 = vcmp.eq.f32.partialorder %v1075, 8.507059e+37
      %v1077 = vand.u32 %v1065, 2147483648
      %v1078 = vor.u32 1.1754944e-38, %v1077
      %v1079 = vsel %vm1076, %v1078, %v1074
      %v1080 = vmul.f32 1.0, %v1079
      %v1081 = vtanh.pop %v1041
      %v1082 = vxor.u32 %v1042, 2147483648
      %v1083 = vmul.f32 %v1082, 1.442695
      %v1084 = vpow.pop %v1083
      %v1085 = vadd.f32 %v1084, 1.0
      %v1086 = vrcp.pop %v1085
      %v1087 = vmul.f32 %v1085, %v1086
      %v1088 = vsub.f32 1.0, %v1087
      %v1089 = vmul.f32 %v1086, %v1088
      %v1090 = vadd.f32 %v1086, %v1089
      %vm1091 = vweird.f32 %v1085
      %vm1092 = vweird.f32 %v1086
      %vm1093 = vmor %vm1091, %vm1092
      %v1094 = vsel %vm1093, %v1086, %v1090
      %v1095 = vand.u32 2147483647, %v1085
      %vm1096 = vcmp.eq.f32.partialorder %v1095, 8.507059e+37
      %v1097 = vand.u32 %v1085, 2147483648
      %v1098 = vor.u32 1.1754944e-38, %v1097
      %v1099 = vsel %vm1096, %v1098, %v1094
      %v1100 = vmul.f32 1.0, %v1099
      %v1101 = vmul.f32 %v1080, %v972
      %v1102 = vmul.f32 %v1061, %v1081
      %v1103 = vadd.f32 %v1101, %v1102
      %v1104 = vtanh.pop %v1103
      %v1105 = vmul.f32 %v1100, %v1104
      %v1106 = vpack.c.bf16 %v1105, %v1105
      %s1107 = smul.u32 3, 2
      %s1108 = smul.addr %s1107, 4
      %s1109 = scalar_lea.vmem [#allocation3], %s1108
      %1110 = vst [vmem:[%s1109] sm:$0xf] %v1106
      %s1111 = smul.u32 4, 4
      %s1112 = smul.addr %s1111, 8
      %s1113 = scalar_lea.vmem [#allocation2], %s1112
      %v1114 = vld [vmem:[%s1113] sm:$0xff]
      %v1115 = vld [vmem:[%s1113 + $0x8] sm:$0xff]
      %v1116 = vld [vmem:[%s1113 + $0x10] sm:$0xff]
      %v1117 = vld [vmem:[%s1113 + $0x18] sm:$0xff]
      %1118 = vmatpush.bf16.msra.mxu0 %v558
      %1119 = vmatpush.bf16.msra.mxu0 %v554
      %1120 = vmatpush.bf16.msra.mxu0 %v550
      %1121 = vmatpush.bf16.msra.mxu0 %v546
      %1122 = vmatpush.bf16.msra.mxu0 %v542
      %1123 = vmatpush.bf16.msra.mxu0 %v538
      %1124 = vmatpush.bf16.msra.mxu0 %v534
      %1125 = vmatpush.bf16.msra.mxu0 %v530
      %1126 = vmatmul.bf16.gmra.mxu0 %v1106
      %v1127 = vpop.f32.mrf.mxu0
      %v1128 = vadd.f32 0.0, %v1127
      %v1129 = vpop.f32.mrf.mxu0
      %1130 = vdwg.mxu0
      %1131 = vmatpush.bf16.msra.mxu0 %v559
      %1132 = vmatpush.bf16.msra.mxu0 %v555
      %1133 = vmatpush.bf16.msra.mxu0 %v551
      %1134 = vmatpush.bf16.msra.mxu0 %v547
      %1135 = vmatpush.bf16.msra.mxu0 %v543
      %1136 = vmatpush.bf16.msra.mxu0 %v539
      %1137 = vmatpush.bf16.msra.mxu0 %v535
      %1138 = vmatpush.bf16.msra.mxu0 %v531
      %1139 = vmatmul.bf16.gmra.mxu0 %v1106
      %v1140 = vpop.f32.mrf.mxu0
      %v1141 = vadd.f32 0.0, %v1140
      %v1142 = vpop.f32.mrf.mxu0
      %1143 = vdwg.mxu0
      %1144 = vmatpush.bf16.msra.mxu0 %v560
      %1145 = vmatpush.bf16.msra.mxu0 %v556
      %1146 = vmatpush.bf16.msra.mxu0 %v552
      %1147 = vmatpush.bf16.msra.mxu0 %v548
      %1148 = vmatpush.bf16.msra.mxu0 %v544
      %1149 = vmatpush.bf16.msra.mxu0 %v540
      %1150 = vmatpush.bf16.msra.mxu0 %v536
      %1151 = vmatpush.bf16.msra.mxu0 %v532
      %1152 = vmatmul.bf16.gmra.mxu0 %v1106
      %v1153 = vpop.f32.mrf.mxu0
      %v1154 = vadd.f32 0.0, %v1153
      %v1155 = vpop.f32.mrf.mxu0
      %1156 = vdwg.mxu0
      %1157 = vmatpush.bf16.msra.mxu0 %v561
      %1158 = vmatpush.bf16.msra.mxu0 %v557
      %1159 = vmatpush.bf16.msra.mxu0 %v553
      %1160 = vmatpush.bf16.msra.mxu0 %v549
      %1161 = vmatpush.bf16.msra.mxu0 %v545
      %1162 = vmatpush.bf16.msra.mxu0 %v541
      %1163 = vmatpush.bf16.msra.mxu0 %v537
      %1164 = vmatpush.bf16.msra.mxu0 %v533
      %1165 = vmatmul.bf16.gmra.mxu0 %v1106
      %v1166 = vpop.f32.mrf.mxu0
      %v1167 = vadd.f32 0.0, %v1166
      %v1168 = vpop.f32.mrf.mxu0
      %1169 = vdwg.mxu0
      %v1170 = vadd.f32 %v1114, %v1128
      %v1171 = vadd.f32 %v1115, %v1141
      %v1172 = vadd.f32 %v1116, %v1154
      %v1173 = vadd.f32 %v1117, %v1167
      %v1174 = vxor.u32 %v1170, 2147483648
      %v1175 = vmul.f32 %v1174, 1.442695
      %v1176 = vpow.pop %v1175
      %v1177 = vadd.f32 %v1176, 1.0
      %v1178 = vrcp.pop %v1177
      %v1179 = vmul.f32 %v1177, %v1178
      %v1180 = vsub.f32 1.0, %v1179
      %v1181 = vmul.f32 %v1178, %v1180
      %v1182 = vadd.f32 %v1178, %v1181
      %vm1183 = vweird.f32 %v1177
      %vm1184 = vweird.f32 %v1178
      %vm1185 = vmor %vm1183, %vm1184
      %v1186 = vsel %vm1185, %v1178, %v1182
      %v1187 = vand.u32 2147483647, %v1177
      %vm1188 = vcmp.eq.f32.partialorder %v1187, 8.507059e+37
      %v1189 = vand.u32 %v1177, 2147483648
      %v1190 = vor.u32 1.1754944e-38, %v1189
      %v1191 = vsel %vm1188, %v1190, %v1186
      %v1192 = vmul.f32 1.0, %v1191
      %v1193 = vxor.u32 %v1171, 2147483648
      %v1194 = vmul.f32 %v1193, 1.442695
      %v1195 = vpow.pop %v1194
      %v1196 = vadd.f32 %v1195, 1.0
      %v1197 = vrcp.pop %v1196
      %v1198 = vmul.f32 %v1196, %v1197
      %v1199 = vsub.f32 1.0, %v1198
      %v1200 = vmul.f32 %v1197, %v1199
      %v1201 = vadd.f32 %v1197, %v1200
      %vm1202 = vweird.f32 %v1196
      %vm1203 = vweird.f32 %v1197
      %vm1204 = vmor %vm1202, %vm1203
      %v1205 = vsel %vm1204, %v1197, %v1201
      %v1206 = vand.u32 2147483647, %v1196
      %vm1207 = vcmp.eq.f32.partialorder %v1206, 8.507059e+37
      %v1208 = vand.u32 %v1196, 2147483648
      %v1209 = vor.u32 1.1754944e-38, %v1208
      %v1210 = vsel %vm1207, %v1209, %v1205
      %v1211 = vmul.f32 1.0, %v1210
      %v1212 = vtanh.pop %v1172
      %v1213 = vxor.u32 %v1173, 2147483648
      %v1214 = vmul.f32 %v1213, 1.442695
      %v1215 = vpow.pop %v1214
      %v1216 = vadd.f32 %v1215, 1.0
      %v1217 = vrcp.pop %v1216
      %v1218 = vmul.f32 %v1216, %v1217
      %v1219 = vsub.f32 1.0, %v1218
      %v1220 = vmul.f32 %v1217, %v1219
      %v1221 = vadd.f32 %v1217, %v1220
      %vm1222 = vweird.f32 %v1216
      %vm1223 = vweird.f32 %v1217
      %vm1224 = vmor %vm1222, %vm1223
      %v1225 = vsel %vm1224, %v1217, %v1221
      %v1226 = vand.u32 2147483647, %v1216
      %vm1227 = vcmp.eq.f32.partialorder %v1226, 8.507059e+37
      %v1228 = vand.u32 %v1216, 2147483648
      %v1229 = vor.u32 1.1754944e-38, %v1228
      %v1230 = vsel %vm1227, %v1229, %v1225
      %v1231 = vmul.f32 1.0, %v1230
      %v1232 = vmul.f32 %v1211, %v1103
      %v1233 = vmul.f32 %v1192, %v1212
      %v1234 = vadd.f32 %v1232, %v1233
      %v1235 = vtanh.pop %v1234
      %v1236 = vmul.f32 %v1231, %v1235
      %v1237 = vpack.c.bf16 %v1236, %v1236
      %s1238 = smul.u32 4, 2
      %s1239 = smul.addr %s1238, 4
      %s1240 = scalar_lea.vmem [#allocation3], %s1239
      %1241 = vst [vmem:[%s1240] sm:$0xf] %v1237
      %s1242 = smul.u32 5, 4
      %s1243 = smul.addr %s1242, 8
      %s1244 = scalar_lea.vmem [#allocation2], %s1243
      %v1245 = vld [vmem:[%s1244] sm:$0xff]
      %v1246 = vld [vmem:[%s1244 + $0x8] sm:$0xff]
      %v1247 = vld [vmem:[%s1244 + $0x10] sm:$0xff]
      %v1248 = vld [vmem:[%s1244 + $0x18] sm:$0xff]
      %1249 = vmatpush.bf16.msra.mxu0 %v558
      %1250 = vmatpush.bf16.msra.mxu0 %v554
      %1251 = vmatpush.bf16.msra.mxu0 %v550
      %1252 = vmatpush.bf16.msra.mxu0 %v546
      %1253 = vmatpush.bf16.msra.mxu0 %v542
      %1254 = vmatpush.bf16.msra.mxu0 %v538
      %1255 = vmatpush.bf16.msra.mxu0 %v534
      %1256 = vmatpush.bf16.msra.mxu0 %v530
      %1257 = vmatmul.bf16.gmra.mxu0 %v1237
      %v1258 = vpop.f32.mrf.mxu0
      %v1259 = vadd.f32 0.0, %v1258
      %v1260 = vpop.f32.mrf.mxu0
      %1261 = vdwg.mxu0
      %1262 = vmatpush.bf16.msra.mxu0 %v559
      %1263 = vmatpush.bf16.msra.mxu0 %v555
      %1264 = vmatpush.bf16.msra.mxu0 %v551
      %1265 = vmatpush.bf16.msra.mxu0 %v547
      %1266 = vmatpush.bf16.msra.mxu0 %v543
      %1267 = vmatpush.bf16.msra.mxu0 %v539
      %1268 = vmatpush.bf16.msra.mxu0 %v535
      %1269 = vmatpush.bf16.msra.mxu0 %v531
      %1270 = vmatmul.bf16.gmra.mxu0 %v1237
      %v1271 = vpop.f32.mrf.mxu0
      %v1272 = vadd.f32 0.0, %v1271
      %v1273 = vpop.f32.mrf.mxu0
      %1274 = vdwg.mxu0
      %1275 = vmatpush.bf16.msra.mxu0 %v560
      %1276 = vmatpush.bf16.msra.mxu0 %v556
      %1277 = vmatpush.bf16.msra.mxu0 %v552
      %1278 = vmatpush.bf16.msra.mxu0 %v548
      %1279 = vmatpush.bf16.msra.mxu0 %v544
      %1280 = vmatpush.bf16.msra.mxu0 %v540
      %1281 = vmatpush.bf16.msra.mxu0 %v536
      %1282 = vmatpush.bf16.msra.mxu0 %v532
      %1283 = vmatmul.bf16.gmra.mxu0 %v1237
      %v1284 = vpop.f32.mrf.mxu0
      %v1285 = vadd.f32 0.0, %v1284
      %v1286 = vpop.f32.mrf.mxu0
      %1287 = vdwg.mxu0
      %1288 = vmatpush.bf16.msra.mxu0 %v561
      %1289 = vmatpush.bf16.msra.mxu0 %v557
      %1290 = vmatpush.bf16.msra.mxu0 %v553
      %1291 = vmatpush.bf16.msra.mxu0 %v549
      %1292 = vmatpush.bf16.msra.mxu0 %v545
      %1293 = vmatpush.bf16.msra.mxu0 %v541
      %1294 = vmatpush.bf16.msra.mxu0 %v537
      %1295 = vmatpush.bf16.msra.mxu0 %v533
      %1296 = vmatmul.bf16.gmra.mxu0 %v1237
      %v1297 = vpop.f32.mrf.mxu0
      %v1298 = vadd.f32 0.0, %v1297
      %v1299 = vpop.f32.mrf.mxu0
      %1300 = vdwg.mxu0
      %v1301 = vadd.f32 %v1245, %v1259
      %v1302 = vadd.f32 %v1246, %v1272
      %v1303 = vadd.f32 %v1247, %v1285
      %v1304 = vadd.f32 %v1248, %v1298
      %v1305 = vxor.u32 %v1301, 2147483648
      %v1306 = vmul.f32 %v1305, 1.442695
      %v1307 = vpow.pop %v1306
      %v1308 = vadd.f32 %v1307, 1.0
      %v1309 = vrcp.pop %v1308
      %v1310 = vmul.f32 %v1308, %v1309
      %v1311 = vsub.f32 1.0, %v1310
      %v1312 = vmul.f32 %v1309, %v1311
      %v1313 = vadd.f32 %v1309, %v1312
      %vm1314 = vweird.f32 %v1308
      %vm1315 = vweird.f32 %v1309
      %vm1316 = vmor %vm1314, %vm1315
      %v1317 = vsel %vm1316, %v1309, %v1313
      %v1318 = vand.u32 2147483647, %v1308
      %vm1319 = vcmp.eq.f32.partialorder %v1318, 8.507059e+37
      %v1320 = vand.u32 %v1308, 2147483648
      %v1321 = vor.u32 1.1754944e-38, %v1320
      %v1322 = vsel %vm1319, %v1321, %v1317
      %v1323 = vmul.f32 1.0, %v1322
      %v1324 = vxor.u32 %v1302, 2147483648
      %v1325 = vmul.f32 %v1324, 1.442695
      %v1326 = vpow.pop %v1325
      %v1327 = vadd.f32 %v1326, 1.0
      %v1328 = vrcp.pop %v1327
      %v1329 = vmul.f32 %v1327, %v1328
      %v1330 = vsub.f32 1.0, %v1329
      %v1331 = vmul.f32 %v1328, %v1330
      %v1332 = vadd.f32 %v1328, %v1331
      %vm1333 = vweird.f32 %v1327
      %vm1334 = vweird.f32 %v1328
      %vm1335 = vmor %vm1333, %vm1334
      %v1336 = vsel %vm1335, %v1328, %v1332
      %v1337 = vand.u32 2147483647, %v1327
      %vm1338 = vcmp.eq.f32.partialorder %v1337, 8.507059e+37
      %v1339 = vand.u32 %v1327, 2147483648
      %v1340 = vor.u32 1.1754944e-38, %v1339
      %v1341 = vsel %vm1338, %v1340, %v1336
      %v1342 = vmul.f32 1.0, %v1341
      %v1343 = vtanh.pop %v1303
      %v1344 = vxor.u32 %v1304, 2147483648
      %v1345 = vmul.f32 %v1344, 1.442695
      %v1346 = vpow.pop %v1345
      %v1347 = vadd.f32 %v1346, 1.0
      %v1348 = vrcp.pop %v1347
      %v1349 = vmul.f32 %v1347, %v1348
      %v1350 = vsub.f32 1.0, %v1349
      %v1351 = vmul.f32 %v1348, %v1350
      %v1352 = vadd.f32 %v1348, %v1351
      %vm1353 = vweird.f32 %v1347
      %vm1354 = vweird.f32 %v1348
      %vm1355 = vmor %vm1353, %vm1354
      %v1356 = vsel %vm1355, %v1348, %v1352
      %v1357 = vand.u32 2147483647, %v1347
      %vm1358 = vcmp.eq.f32.partialorder %v1357, 8.507059e+37
      %v1359 = vand.u32 %v1347, 2147483648
      %v1360 = vor.u32 1.1754944e-38, %v1359
      %v1361 = vsel %vm1358, %v1360, %v1356
      %v1362 = vmul.f32 1.0, %v1361
      %v1363 = vmul.f32 %v1342, %v1234
      %v1364 = vmul.f32 %v1323, %v1343
      %v1365 = vadd.f32 %v1363, %v1364
      %v1366 = vtanh.pop %v1365
      %v1367 = vmul.f32 %v1362, %v1366
      %v1368 = vpack.c.bf16 %v1367, %v1367
      %s1369 = smul.u32 5, 2
      %s1370 = smul.addr %s1369, 4
      %s1371 = scalar_lea.vmem [#allocation3], %s1370
      %1372 = vst [vmem:[%s1371] sm:$0xf] %v1368
      %s1373 = smul.u32 6, 4
      %s1374 = smul.addr %s1373, 8
      %s1375 = scalar_lea.vmem [#allocation2], %s1374
      %v1376 = vld [vmem:[%s1375] sm:$0xff]
      %v1377 = vld [vmem:[%s1375 + $0x8] sm:$0xff]
      %v1378 = vld [vmem:[%s1375 + $0x10] sm:$0xff]
      %v1379 = vld [vmem:[%s1375 + $0x18] sm:$0xff]
      %1380 = vmatpush.bf16.msra.mxu0 %v558
      %1381 = vmatpush.bf16.msra.mxu0 %v554
      %1382 = vmatpush.bf16.msra.mxu0 %v550
      %1383 = vmatpush.bf16.msra.mxu0 %v546
      %1384 = vmatpush.bf16.msra.mxu0 %v542
      %1385 = vmatpush.bf16.msra.mxu0 %v538
      %1386 = vmatpush.bf16.msra.mxu0 %v534
      %1387 = vmatpush.bf16.msra.mxu0 %v530
      %1388 = vmatmul.bf16.gmra.mxu0 %v1368
      %v1389 = vpop.f32.mrf.mxu0
      %v1390 = vadd.f32 0.0, %v1389
      %v1391 = vpop.f32.mrf.mxu0
      %1392 = vdwg.mxu0
      %1393 = vmatpush.bf16.msra.mxu0 %v559
      %1394 = vmatpush.bf16.msra.mxu0 %v555
      %1395 = vmatpush.bf16.msra.mxu0 %v551
      %1396 = vmatpush.bf16.msra.mxu0 %v547
      %1397 = vmatpush.bf16.msra.mxu0 %v543
      %1398 = vmatpush.bf16.msra.mxu0 %v539
      %1399 = vmatpush.bf16.msra.mxu0 %v535
      %1400 = vmatpush.bf16.msra.mxu0 %v531
      %1401 = vmatmul.bf16.gmra.mxu0 %v1368
      %v1402 = vpop.f32.mrf.mxu0
      %v1403 = vadd.f32 0.0, %v1402
      %v1404 = vpop.f32.mrf.mxu0
      %1405 = vdwg.mxu0
      %1406 = vmatpush.bf16.msra.mxu0 %v560
      %1407 = vmatpush.bf16.msra.mxu0 %v556
      %1408 = vmatpush.bf16.msra.mxu0 %v552
      %1409 = vmatpush.bf16.msra.mxu0 %v548
      %1410 = vmatpush.bf16.msra.mxu0 %v544
      %1411 = vmatpush.bf16.msra.mxu0 %v540
      %1412 = vmatpush.bf16.msra.mxu0 %v536
      %1413 = vmatpush.bf16.msra.mxu0 %v532
      %1414 = vmatmul.bf16.gmra.mxu0 %v1368
      %v1415 = vpop.f32.mrf.mxu0
      %v1416 = vadd.f32 0.0, %v1415
      %v1417 = vpop.f32.mrf.mxu0
      %1418 = vdwg.mxu0
      %1419 = vmatpush.bf16.msra.mxu0 %v561
      %1420 = vmatpush.bf16.msra.mxu0 %v557
      %1421 = vmatpush.bf16.msra.mxu0 %v553
      %1422 = vmatpush.bf16.msra.mxu0 %v549
      %1423 = vmatpush.bf16.msra.mxu0 %v545
      %1424 = vmatpush.bf16.msra.mxu0 %v541
      %1425 = vmatpush.bf16.msra.mxu0 %v537
      %1426 = vmatpush.bf16.msra.mxu0 %v533
      %1427 = vmatmul.bf16.gmra.mxu0 %v1368
      %v1428 = vpop.f32.mrf.mxu0
      %v1429 = vadd.f32 0.0, %v1428
      %v1430 = vpop.f32.mrf.mxu0
      %1431 = vdwg.mxu0
      %v1432 = vadd.f32 %v1376, %v1390
      %v1433 = vadd.f32 %v1377, %v1403
      %v1434 = vadd.f32 %v1378, %v1416
      %v1435 = vadd.f32 %v1379, %v1429
      %v1436 = vxor.u32 %v1432, 2147483648
      %v1437 = vmul.f32 %v1436, 1.442695
      %v1438 = vpow.pop %v1437
      %v1439 = vadd.f32 %v1438, 1.0
      %v1440 = vrcp.pop %v1439
      %v1441 = vmul.f32 %v1439, %v1440
      %v1442 = vsub.f32 1.0, %v1441
      %v1443 = vmul.f32 %v1440, %v1442
      %v1444 = vadd.f32 %v1440, %v1443
      %vm1445 = vweird.f32 %v1439
      %vm1446 = vweird.f32 %v1440
      %vm1447 = vmor %vm1445, %vm1446
      %v1448 = vsel %vm1447, %v1440, %v1444
      %v1449 = vand.u32 2147483647, %v1439
      %vm1450 = vcmp.eq.f32.partialorder %v1449, 8.507059e+37
      %v1451 = vand.u32 %v1439, 2147483648
      %v1452 = vor.u32 1.1754944e-38, %v1451
      %v1453 = vsel %vm1450, %v1452, %v1448
      %v1454 = vmul.f32 1.0, %v1453
      %v1455 = vxor.u32 %v1433, 2147483648
      %v1456 = vmul.f32 %v1455, 1.442695
      %v1457 = vpow.pop %v1456
      %v1458 = vadd.f32 %v1457, 1.0
      %v1459 = vrcp.pop %v1458
      %v1460 = vmul.f32 %v1458, %v1459
      %v1461 = vsub.f32 1.0, %v1460
      %v1462 = vmul.f32 %v1459, %v1461
      %v1463 = vadd.f32 %v1459, %v1462
      %vm1464 = vweird.f32 %v1458
      %vm1465 = vweird.f32 %v1459
      %vm1466 = vmor %vm1464, %vm1465
      %v1467 = vsel %vm1466, %v1459, %v1463
      %v1468 = vand.u32 2147483647, %v1458
      %vm1469 = vcmp.eq.f32.partialorder %v1468, 8.507059e+37
      %v1470 = vand.u32 %v1458, 2147483648
      %v1471 = vor.u32 1.1754944e-38, %v1470
      %v1472 = vsel %vm1469, %v1471, %v1467
      %v1473 = vmul.f32 1.0, %v1472
      %v1474 = vtanh.pop %v1434
      %v1475 = vxor.u32 %v1435, 2147483648
      %v1476 = vmul.f32 %v1475, 1.442695
      %v1477 = vpow.pop %v1476
      %v1478 = vadd.f32 %v1477, 1.0
      %v1479 = vrcp.pop %v1478
      %v1480 = vmul.f32 %v1478, %v1479
      %v1481 = vsub.f32 1.0, %v1480
      %v1482 = vmul.f32 %v1479, %v1481
      %v1483 = vadd.f32 %v1479, %v1482
      %vm1484 = vweird.f32 %v1478
      %vm1485 = vweird.f32 %v1479
      %vm1486 = vmor %vm1484, %vm1485
      %v1487 = vsel %vm1486, %v1479, %v1483
      %v1488 = vand.u32 2147483647, %v1478
      %vm1489 = vcmp.eq.f32.partialorder %v1488, 8.507059e+37
      %v1490 = vand.u32 %v1478, 2147483648
      %v1491 = vor.u32 1.1754944e-38, %v1490
      %v1492 = vsel %vm1489, %v1491, %v1487
      %v1493 = vmul.f32 1.0, %v1492
      %v1494 = vmul.f32 %v1473, %v1365
      %v1495 = vmul.f32 %v1454, %v1474
      %v1496 = vadd.f32 %v1494, %v1495
      %v1497 = vtanh.pop %v1496
      %v1498 = vmul.f32 %v1493, %v1497
      %v1499 = vpack.c.bf16 %v1498, %v1498
      %s1500 = smul.u32 6, 2
      %s1501 = smul.addr %s1500, 4
      %s1502 = scalar_lea.vmem [#allocation3], %s1501
      %1503 = vst [vmem:[%s1502] sm:$0xf] %v1499
      %s1504 = smul.u32 7, 4
      %s1505 = smul.addr %s1504, 8
      %s1506 = scalar_lea.vmem [#allocation2], %s1505
      %v1507 = vld [vmem:[%s1506] sm:$0xff]
      %v1508 = vld [vmem:[%s1506 + $0x8] sm:$0xff]
      %v1509 = vld [vmem:[%s1506 + $0x10] sm:$0xff]
      %v1510 = vld [vmem:[%s1506 + $0x18] sm:$0xff]
      %1511 = vmatpush.bf16.msra.mxu0 %v558
      %1512 = vmatpush.bf16.msra.mxu0 %v554
      %1513 = vmatpush.bf16.msra.mxu0 %v550
      %1514 = vmatpush.bf16.msra.mxu0 %v546
      %1515 = vmatpush.bf16.msra.mxu0 %v542
      %1516 = vmatpush.bf16.msra.mxu0 %v538
      %1517 = vmatpush.bf16.msra.mxu0 %v534
      %1518 = vmatpush.bf16.msra.mxu0 %v530
      %1519 = vmatmul.bf16.gmra.mxu0 %v1499
      %v1520 = vpop.f32.mrf.mxu0
      %v1521 = vadd.f32 0.0, %v1520
      %v1522 = vpop.f32.mrf.mxu0
      %1523 = vdwg.mxu0
      %1524 = vmatpush.bf16.msra.mxu0 %v559
      %1525 = vmatpush.bf16.msra.mxu0 %v555
      %1526 = vmatpush.bf16.msra.mxu0 %v551
      %1527 = vmatpush.bf16.msra.mxu0 %v547
      %1528 = vmatpush.bf16.msra.mxu0 %v543
      %1529 = vmatpush.bf16.msra.mxu0 %v539
      %1530 = vmatpush.bf16.msra.mxu0 %v535
      %1531 = vmatpush.bf16.msra.mxu0 %v531
      %1532 = vmatmul.bf16.gmra.mxu0 %v1499
      %v1533 = vpop.f32.mrf.mxu0
      %v1534 = vadd.f32 0.0, %v1533
      %v1535 = vpop.f32.mrf.mxu0
      %1536 = vdwg.mxu0
      %1537 = vmatpush.bf16.msra.mxu0 %v560
      %1538 = vmatpush.bf16.msra.mxu0 %v556
      %1539 = vmatpush.bf16.msra.mxu0 %v552
      %1540 = vmatpush.bf16.msra.mxu0 %v548
      %1541 = vmatpush.bf16.msra.mxu0 %v544
      %1542 = vmatpush.bf16.msra.mxu0 %v540
      %1543 = vmatpush.bf16.msra.mxu0 %v536
      %1544 = vmatpush.bf16.msra.mxu0 %v532
      %1545 = vmatmul.bf16.gmra.mxu0 %v1499
      %v1546 = vpop.f32.mrf.mxu0
      %v1547 = vadd.f32 0.0, %v1546
      %v1548 = vpop.f32.mrf.mxu0
      %1549 = vdwg.mxu0
      %1550 = vmatpush.bf16.msra.mxu0 %v561
      %1551 = vmatpush.bf16.msra.mxu0 %v557
      %1552 = vmatpush.bf16.msra.mxu0 %v553
      %1553 = vmatpush.bf16.msra.mxu0 %v549
      %1554 = vmatpush.bf16.msra.mxu0 %v545
      %1555 = vmatpush.bf16.msra.mxu0 %v541
      %1556 = vmatpush.bf16.msra.mxu0 %v537
      %1557 = vmatpush.bf16.msra.mxu0 %v533
      %1558 = vmatmul.bf16.gmra.mxu0 %v1499
      %v1559 = vpop.f32.mrf.mxu0
      %v1560 = vadd.f32 0.0, %v1559
      %v1561 = vpop.f32.mrf.mxu0
      %1562 = vdwg.mxu0
      %v1563 = vadd.f32 %v1507, %v1521
      %v1564 = vadd.f32 %v1508, %v1534
      %v1565 = vadd.f32 %v1509, %v1547
      %v1566 = vadd.f32 %v1510, %v1560
      %v1567 = vxor.u32 %v1563, 2147483648
      %v1568 = vmul.f32 %v1567, 1.442695
      %v1569 = vpow.pop %v1568
      %v1570 = vadd.f32 %v1569, 1.0
      %v1571 = vrcp.pop %v1570
      %v1572 = vmul.f32 %v1570, %v1571
      %v1573 = vsub.f32 1.0, %v1572
      %v1574 = vmul.f32 %v1571, %v1573
      %v1575 = vadd.f32 %v1571, %v1574
      %vm1576 = vweird.f32 %v1570
      %vm1577 = vweird.f32 %v1571
      %vm1578 = vmor %vm1576, %vm1577
      %v1579 = vsel %vm1578, %v1571, %v1575
      %v1580 = vand.u32 2147483647, %v1570
      %vm1581 = vcmp.eq.f32.partialorder %v1580, 8.507059e+37
      %v1582 = vand.u32 %v1570, 2147483648
      %v1583 = vor.u32 1.1754944e-38, %v1582
      %v1584 = vsel %vm1581, %v1583, %v1579
      %v1585 = vmul.f32 1.0, %v1584
      %v1586 = vxor.u32 %v1564, 2147483648
      %v1587 = vmul.f32 %v1586, 1.442695
      %v1588 = vpow.pop %v1587
      %v1589 = vadd.f32 %v1588, 1.0
      %v1590 = vrcp.pop %v1589
      %v1591 = vmul.f32 %v1589, %v1590
      %v1592 = vsub.f32 1.0, %v1591
      %v1593 = vmul.f32 %v1590, %v1592
      %v1594 = vadd.f32 %v1590, %v1593
      %vm1595 = vweird.f32 %v1589
      %vm1596 = vweird.f32 %v1590
      %vm1597 = vmor %vm1595, %vm1596
      %v1598 = vsel %vm1597, %v1590, %v1594
      %v1599 = vand.u32 2147483647, %v1589
      %vm1600 = vcmp.eq.f32.partialorder %v1599, 8.507059e+37
      %v1601 = vand.u32 %v1589, 2147483648
      %v1602 = vor.u32 1.1754944e-38, %v1601
      %v1603 = vsel %vm1600, %v1602, %v1598
      %v1604 = vmul.f32 1.0, %v1603
      %v1605 = vtanh.pop %v1565
      %v1606 = vxor.u32 %v1566, 2147483648
      %v1607 = vmul.f32 %v1606, 1.442695
      %v1608 = vpow.pop %v1607
      %v1609 = vadd.f32 %v1608, 1.0
      %v1610 = vrcp.pop %v1609
      %v1611 = vmul.f32 %v1609, %v1610
      %v1612 = vsub.f32 1.0, %v1611
      %v1613 = vmul.f32 %v1610, %v1612
      %v1614 = vadd.f32 %v1610, %v1613
      %vm1615 = vweird.f32 %v1609
      %vm1616 = vweird.f32 %v1610
      %vm1617 = vmor %vm1615, %vm1616
      %v1618 = vsel %vm1617, %v1610, %v1614
      %v1619 = vand.u32 2147483647, %v1609
      %vm1620 = vcmp.eq.f32.partialorder %v1619, 8.507059e+37
      %v1621 = vand.u32 %v1609, 2147483648
      %v1622 = vor.u32 1.1754944e-38, %v1621
      %v1623 = vsel %vm1620, %v1622, %v1618
      %v1624 = vmul.f32 1.0, %v1623
      %v1625 = vmul.f32 %v1604, %v1496
      %v1626 = vmul.f32 %v1585, %v1605
      %v1627 = vadd.f32 %v1625, %v1626
      %v1628 = vtanh.pop %v1627
      %v1629 = vmul.f32 %v1624, %v1628
      %v1630 = vpack.c.bf16 %v1629, %v1629
      %s1631 = smul.u32 7, 2
      %s1632 = smul.addr %s1631, 4
      %s1633 = scalar_lea.vmem [#allocation3], %s1632
      %1634 = vst [vmem:[%s1633] sm:$0xf] %v1630
      %v1635 = vld [vmem:[#allocation3] sm:$0xf]
      %v1636 = vld [vmem:[#allocation3 + $0x8] sm:$0xf]
      %v1637 = vld [vmem:[#allocation3 + $0x10] sm:$0xf]
      %v1638 = vld [vmem:[#allocation3 + $0x18] sm:$0xf]
      %v1639 = vld [vmem:[#allocation3 + $0x20] sm:$0xf]
      %v1640 = vld [vmem:[#allocation3 + $0x28] sm:$0xf]
      %v1641 = vld [vmem:[#allocation3 + $0x30] sm:$0xf]
      %v1642 = vld [vmem:[#allocation3 + $0x38] sm:$0xf]
      %v1643 = vld [vmem:[#allocation9] sm:$0xff]
      %v1644 = vld [vmem:[#allocation9 + $0x8] sm:$0xff]
      %v1645 = vld [vmem:[#allocation9 + $0x10] sm:$0xff]
      %v1646 = vld [vmem:[#allocation9 + $0x18] sm:$0xff]
      %v1647 = vld [vmem:[#allocation9 + $0x20] sm:$0xff]
      %v1648 = vld [vmem:[#allocation9 + $0x28] sm:$0xff]
      %v1649 = vld [vmem:[#allocation9 + $0x30] sm:$0xff]
      %v1650 = vld [vmem:[#allocation9 + $0x38] sm:$0xff]
      %v1651 = vld [vmem:[#allocation9 + $0x40] sm:$0xff]
      %v1652 = vld [vmem:[#allocation9 + $0x48] sm:$0xff]
      %v1653 = vld [vmem:[#allocation9 + $0x50] sm:$0xff]
      %v1654 = vld [vmem:[#allocation9 + $0x58] sm:$0xff]
      %v1655 = vld [vmem:[#allocation9 + $0x60] sm:$0xff]
      %v1656 = vld [vmem:[#allocation9 + $0x68] sm:$0xff]
      %v1657 = vld [vmem:[#allocation9 + $0x70] sm:$0xff]
      %v1658 = vld [vmem:[#allocation9 + $0x78] sm:$0xff]
      %v1659 = vld [vmem:[#allocation9 + $0x80] sm:$0xff]
      %v1660 = vld [vmem:[#allocation9 + $0x88] sm:$0xff]
      %v1661 = vld [vmem:[#allocation9 + $0x90] sm:$0xff]
      %v1662 = vld [vmem:[#allocation9 + $0x98] sm:$0xff]
      %v1663 = vld [vmem:[#allocation9 + $0xa0] sm:$0xff]
      %v1664 = vld [vmem:[#allocation9 + $0xa8] sm:$0xff]
      %v1665 = vld [vmem:[#allocation9 + $0xb0] sm:$0xff]
      %v1666 = vld [vmem:[#allocation9 + $0xb8] sm:$0xff]
      %v1667 = vld [vmem:[#allocation9 + $0xc0] sm:$0xff]
      %v1668 = vld [vmem:[#allocation9 + $0xc8] sm:$0xff]
      %v1669 = vld [vmem:[#allocation9 + $0xd0] sm:$0xff]
      %v1670 = vld [vmem:[#allocation9 + $0xd8] sm:$0xff]
      %v1671 = vld [vmem:[#allocation9 + $0xe0] sm:$0xff]
      %v1672 = vld [vmem:[#allocation9 + $0xe8] sm:$0xff]
      %v1673 = vld [vmem:[#allocation9 + $0xf0] sm:$0xff]
      %v1674 = vld [vmem:[#allocation9 + $0xf8] sm:$0xff]
      %v1675 = vld [vmem:[%s6] sm:$0xf]
      %v1677 = vperm.slane %v1675, 0
      %v1678 = vperm.slane %v1675, 1
      %v1679 = vperm.slane %v1675, 2
      %v1680 = vperm.slane %v1675, 3
      %v1693 = vunpack.c.l.b16 %v1635
      %v1694 = vunpack.c.l.b16 %v1636
      %v1695 = vunpack.c.l.b16 %v1637
      %v1696 = vunpack.c.l.b16 %v1638
      %v1697 = vunpack.c.l.b16 %v1639
      %v1698 = vunpack.c.l.b16 %v1640
      %v1699 = vunpack.c.l.b16 %v1641
      %v1700 = vunpack.c.l.b16 %v1642
      %v1701 = vpack.c.b16 %v1694, %v1693
      %v1702 = vpack.c.b16 %v1696, %v1695
      %v1703 = vpack.c.b16 %v1698, %v1697
      %v1704 = vpack.c.b16 %v1700, %v1699
      %v1741 = vunpack.c.l.b16 %v1643
      %v1742 = vunpack.c.h.b16 %v1643
      %v1743 = vunpack.c.l.b16 %v1644
      %v1744 = vunpack.c.h.b16 %v1644
      %v1745 = vunpack.c.l.b16 %v1645
      %v1746 = vunpack.c.h.b16 %v1645
      %v1747 = vunpack.c.l.b16 %v1646
      %v1748 = vunpack.c.h.b16 %v1646
      %v1749 = vunpack.c.l.b16 %v1647
      %v1750 = vunpack.c.h.b16 %v1647
      %v1751 = vunpack.c.l.b16 %v1648
      %v1752 = vunpack.c.h.b16 %v1648
      %v1753 = vunpack.c.l.b16 %v1649
      %v1754 = vunpack.c.h.b16 %v1649
      %v1755 = vunpack.c.l.b16 %v1650
      %v1756 = vunpack.c.h.b16 %v1650
      %v1757 = vunpack.c.l.b16 %v1651
      %v1758 = vunpack.c.h.b16 %v1651
      %v1759 = vunpack.c.l.b16 %v1652
      %v1760 = vunpack.c.h.b16 %v1652
      %v1761 = vunpack.c.l.b16 %v1653
      %v1762 = vunpack.c.h.b16 %v1653
      %v1763 = vunpack.c.l.b16 %v1654
      %v1764 = vunpack.c.h.b16 %v1654
      %v1765 = vunpack.c.l.b16 %v1655
      %v1766 = vunpack.c.h.b16 %v1655
      %v1767 = vunpack.c.l.b16 %v1656
      %v1768 = vunpack.c.h.b16 %v1656
      %v1769 = vunpack.c.l.b16 %v1657
      %v1770 = vunpack.c.h.b16 %v1657
      %v1771 = vunpack.c.l.b16 %v1658
      %v1772 = vunpack.c.h.b16 %v1658
      %v1773 = vunpack.c.l.b16 %v1659
      %v1774 = vunpack.c.h.b16 %v1659
      %v1775 = vunpack.c.l.b16 %v1660
      %v1776 = vunpack.c.h.b16 %v1660
      %v1777 = vunpack.c.l.b16 %v1661
      %v1778 = vunpack.c.h.b16 %v1661
      %v1779 = vunpack.c.l.b16 %v1662
      %v1780 = vunpack.c.h.b16 %v1662
      %v1781 = vunpack.c.l.b16 %v1663
      %v1782 = vunpack.c.h.b16 %v1663
      %v1783 = vunpack.c.l.b16 %v1664
      %v1784 = vunpack.c.h.b16 %v1664
      %v1785 = vunpack.c.l.b16 %v1665
      %v1786 = vunpack.c.h.b16 %v1665
      %v1787 = vunpack.c.l.b16 %v1666
      %v1788 = vunpack.c.h.b16 %v1666
      %v1789 = vunpack.c.l.b16 %v1667
      %v1790 = vunpack.c.h.b16 %v1667
      %v1791 = vunpack.c.l.b16 %v1668
      %v1792 = vunpack.c.h.b16 %v1668
      %v1793 = vunpack.c.l.b16 %v1669
      %v1794 = vunpack.c.h.b16 %v1669
      %v1795 = vunpack.c.l.b16 %v1670
      %v1796 = vunpack.c.h.b16 %v1670
      %v1797 = vunpack.c.l.b16 %v1671
      %v1798 = vunpack.c.h.b16 %v1671
      %v1799 = vunpack.c.l.b16 %v1672
      %v1800 = vunpack.c.h.b16 %v1672
      %v1801 = vunpack.c.l.b16 %v1673
      %v1802 = vunpack.c.h.b16 %v1673
      %v1803 = vunpack.c.l.b16 %v1674
      %v1804 = vunpack.c.h.b16 %v1674
      %v1805 = vpack.c.b16 %v1745, %v1741
      %v1806 = vpack.c.b16 %v1746, %v1742
      %v1807 = vpack.c.b16 %v1747, %v1743
      %v1808 = vpack.c.b16 %v1748, %v1744
      %v1809 = vpack.c.b16 %v1753, %v1749
      %v1810 = vpack.c.b16 %v1754, %v1750
      %v1811 = vpack.c.b16 %v1755, %v1751
      %v1812 = vpack.c.b16 %v1756, %v1752
      %v1813 = vpack.c.b16 %v1761, %v1757
      %v1814 = vpack.c.b16 %v1762, %v1758
      %v1815 = vpack.c.b16 %v1763, %v1759
      %v1816 = vpack.c.b16 %v1764, %v1760
      %v1817 = vpack.c.b16 %v1769, %v1765
      %v1818 = vpack.c.b16 %v1770, %v1766
      %v1819 = vpack.c.b16 %v1771, %v1767
      %v1820 = vpack.c.b16 %v1772, %v1768
      %v1821 = vpack.c.b16 %v1777, %v1773
      %v1822 = vpack.c.b16 %v1778, %v1774
      %v1823 = vpack.c.b16 %v1779, %v1775
      %v1824 = vpack.c.b16 %v1780, %v1776
      %v1825 = vpack.c.b16 %v1785, %v1781
      %v1826 = vpack.c.b16 %v1786, %v1782
      %v1827 = vpack.c.b16 %v1787, %v1783
      %v1828 = vpack.c.b16 %v1788, %v1784
      %v1829 = vpack.c.b16 %v1793, %v1789
      %v1830 = vpack.c.b16 %v1794, %v1790
      %v1831 = vpack.c.b16 %v1795, %v1791
      %v1832 = vpack.c.b16 %v1796, %v1792
      %v1833 = vpack.c.b16 %v1801, %v1797
      %v1834 = vpack.c.b16 %v1802, %v1798
      %v1835 = vpack.c.b16 %v1803, %v1799
      %v1836 = vpack.c.b16 %v1804, %v1800
      %1869 = vmatpush.bf16.msra.mxu0 %v1833
      %1870 = vmatpush.bf16.msra.mxu0 %v1829
      %1871 = vmatpush.bf16.msra.mxu0 %v1825
      %1872 = vmatpush.bf16.msra.mxu0 %v1821
      %1873 = vmatpush.bf16.msra.mxu0 %v1817
      %1874 = vmatpush.bf16.msra.mxu0 %v1813
      %1875 = vmatpush.bf16.msra.mxu0 %v1809
      %1876 = vmatpush.bf16.msra.mxu0 %v1805
      %1877 = vmatmul.bf16.gmra.mxu0 %v1701
      %v1878 = vpop.f32.mrf.mxu0
      %v1879 = vadd.f32 %v1677, %v1878
      %v1880 = vpop.f32.mrf.mxu0
      %v1881 = vadd.f32 %v1677, %v1880
      %1882 = vmatmul.bf16.gmra.mxu0 %v1702
      %v1883 = vpop.f32.mrf.mxu0
      %v1884 = vadd.f32 %v1677, %v1883
      %v1885 = vpop.f32.mrf.mxu0
      %v1886 = vadd.f32 %v1677, %v1885
      %1887 = vmatmul.bf16.gmra.mxu0 %v1703
      %v1888 = vpop.f32.mrf.mxu0
      %v1889 = vadd.f32 %v1677, %v1888
      %v1890 = vpop.f32.mrf.mxu0
      %v1891 = vadd.f32 %v1677, %v1890
      %1892 = vmatmul.bf16.gmra.mxu0 %v1704
      %v1893 = vpop.f32.mrf.mxu0
      %v1894 = vadd.f32 %v1677, %v1893
      %v1895 = vpop.f32.mrf.mxu0
      %v1896 = vadd.f32 %v1677, %v1895
      %1897 = vdwg.mxu0
      %1898 = vmatpush.bf16.msra.mxu0 %v1834
      %1899 = vmatpush.bf16.msra.mxu0 %v1830
      %1900 = vmatpush.bf16.msra.mxu0 %v1826
      %1901 = vmatpush.bf16.msra.mxu0 %v1822
      %1902 = vmatpush.bf16.msra.mxu0 %v1818
      %1903 = vmatpush.bf16.msra.mxu0 %v1814
      %1904 = vmatpush.bf16.msra.mxu0 %v1810
      %1905 = vmatpush.bf16.msra.mxu0 %v1806
      %1906 = vmatmul.bf16.gmra.mxu0 %v1701
      %v1907 = vpop.f32.mrf.mxu0
      %v1908 = vadd.f32 %v1678, %v1907
      %v1909 = vpop.f32.mrf.mxu0
      %v1910 = vadd.f32 %v1678, %v1909
      %1911 = vmatmul.bf16.gmra.mxu0 %v1702
      %v1912 = vpop.f32.mrf.mxu0
      %v1913 = vadd.f32 %v1678, %v1912
      %v1914 = vpop.f32.mrf.mxu0
      %v1915 = vadd.f32 %v1678, %v1914
      %1916 = vmatmul.bf16.gmra.mxu0 %v1703
      %v1917 = vpop.f32.mrf.mxu0
      %v1918 = vadd.f32 %v1678, %v1917
      %v1919 = vpop.f32.mrf.mxu0
      %v1920 = vadd.f32 %v1678, %v1919
      %1921 = vmatmul.bf16.gmra.mxu0 %v1704
      %v1922 = vpop.f32.mrf.mxu0
      %v1923 = vadd.f32 %v1678, %v1922
      %v1924 = vpop.f32.mrf.mxu0
      %v1925 = vadd.f32 %v1678, %v1924
      %1926 = vdwg.mxu0
      %1927 = vmatpush.bf16.msra.mxu0 %v1835
      %1928 = vmatpush.bf16.msra.mxu0 %v1831
      %1929 = vmatpush.bf16.msra.mxu0 %v1827
      %1930 = vmatpush.bf16.msra.mxu0 %v1823
      %1931 = vmatpush.bf16.msra.mxu0 %v1819
      %1932 = vmatpush.bf16.msra.mxu0 %v1815
      %1933 = vmatpush.bf16.msra.mxu0 %v1811
      %1934 = vmatpush.bf16.msra.mxu0 %v1807
      %1935 = vmatmul.bf16.gmra.mxu0 %v1701
      %v1936 = vpop.f32.mrf.mxu0
      %v1937 = vadd.f32 %v1679, %v1936
      %v1938 = vpop.f32.mrf.mxu0
      %v1939 = vadd.f32 %v1679, %v1938
      %1940 = vmatmul.bf16.gmra.mxu0 %v1702
      %v1941 = vpop.f32.mrf.mxu0
      %v1942 = vadd.f32 %v1679, %v1941
      %v1943 = vpop.f32.mrf.mxu0
      %v1944 = vadd.f32 %v1679, %v1943
      %1945 = vmatmul.bf16.gmra.mxu0 %v1703
      %v1946 = vpop.f32.mrf.mxu0
      %v1947 = vadd.f32 %v1679, %v1946
      %v1948 = vpop.f32.mrf.mxu0
      %v1949 = vadd.f32 %v1679, %v1948
      %1950 = vmatmul.bf16.gmra.mxu0 %v1704
      %v1951 = vpop.f32.mrf.mxu0
      %v1952 = vadd.f32 %v1679, %v1951
      %v1953 = vpop.f32.mrf.mxu0
      %v1954 = vadd.f32 %v1679, %v1953
      %1955 = vdwg.mxu0
      %1956 = vmatpush.bf16.msra.mxu0 %v1836
      %1957 = vmatpush.bf16.msra.mxu0 %v1832
      %1958 = vmatpush.bf16.msra.mxu0 %v1828
      %1959 = vmatpush.bf16.msra.mxu0 %v1824
      %1960 = vmatpush.bf16.msra.mxu0 %v1820
      %1961 = vmatpush.bf16.msra.mxu0 %v1816
      %1962 = vmatpush.bf16.msra.mxu0 %v1812
      %1963 = vmatpush.bf16.msra.mxu0 %v1808
      %1964 = vmatmul.bf16.gmra.mxu0 %v1701
      %v1965 = vpop.f32.mrf.mxu0
      %v1966 = vadd.f32 %v1680, %v1965
      %v1967 = vpop.f32.mrf.mxu0
      %v1968 = vadd.f32 %v1680, %v1967
      %1969 = vmatmul.bf16.gmra.mxu0 %v1702
      %v1970 = vpop.f32.mrf.mxu0
      %v1971 = vadd.f32 %v1680, %v1970
      %v1972 = vpop.f32.mrf.mxu0
      %v1973 = vadd.f32 %v1680, %v1972
      %1974 = vmatmul.bf16.gmra.mxu0 %v1703
      %v1975 = vpop.f32.mrf.mxu0
      %v1976 = vadd.f32 %v1680, %v1975
      %v1977 = vpop.f32.mrf.mxu0
      %v1978 = vadd.f32 %v1680, %v1977
      %1979 = vmatmul.bf16.gmra.mxu0 %v1704
      %v1980 = vpop.f32.mrf.mxu0
      %v1981 = vadd.f32 %v1680, %v1980
      %v1982 = vpop.f32.mrf.mxu0
      %v1983 = vadd.f32 %v1680, %v1982
      %1984 = vdwg.mxu0
      %1985 = vst [vmem:[#allocation2] sm:$0xff] %v1879
      %1986 = vst [vmem:[#allocation2 + $0x8] sm:$0xff] %v1908
      %1987 = vst [vmem:[#allocation2 + $0x10] sm:$0xff] %v1937
      %1988 = vst [vmem:[#allocation2 + $0x18] sm:$0xff] %v1966
      %1989 = vst [vmem:[#allocation2 + $0x20] sm:$0xff] %v1881
      %1990 = vst [vmem:[#allocation2 + $0x28] sm:$0xff] %v1910
      %1991 = vst [vmem:[#allocation2 + $0x30] sm:$0xff] %v1939
      %1992 = vst [vmem:[#allocation2 + $0x38] sm:$0xff] %v1968
      %1993 = vst [vmem:[#allocation2 + $0x40] sm:$0xff] %v1884
      %1994 = vst [vmem:[#allocation2 + $0x48] sm:$0xff] %v1913
      %1995 = vst [vmem:[#allocation2 + $0x50] sm:$0xff] %v1942
      %1996 = vst [vmem:[#allocation2 + $0x58] sm:$0xff] %v1971
      %1997 = vst [vmem:[#allocation2 + $0x60] sm:$0xff] %v1886
      %1998 = vst [vmem:[#allocation2 + $0x68] sm:$0xff] %v1915
      %1999 = vst [vmem:[#allocation2 + $0x70] sm:$0xff] %v1944
      %2000 = vst [vmem:[#allocation2 + $0x78] sm:$0xff] %v1973
      %2001 = vst [vmem:[#allocation2 + $0x80] sm:$0xff] %v1889
      %2002 = vst [vmem:[#allocation2 + $0x88] sm:$0xff] %v1918
      %2003 = vst [vmem:[#allocation2 + $0x90] sm:$0xff] %v1947
      %2004 = vst [vmem:[#allocation2 + $0x98] sm:$0xff] %v1976
      %2005 = vst [vmem:[#allocation2 + $0xa0] sm:$0xff] %v1891
      %2006 = vst [vmem:[#allocation2 + $0xa8] sm:$0xff] %v1920
      %2007 = vst [vmem:[#allocation2 + $0xb0] sm:$0xff] %v1949
      %2008 = vst [vmem:[#allocation2 + $0xb8] sm:$0xff] %v1978
      %2009 = vst [vmem:[#allocation2 + $0xc0] sm:$0xff] %v1894
      %2010 = vst [vmem:[#allocation2 + $0xc8] sm:$0xff] %v1923
      %2011 = vst [vmem:[#allocation2 + $0xd0] sm:$0xff] %v1952
      %2012 = vst [vmem:[#allocation2 + $0xd8] sm:$0xff] %v1981
      %2013 = vst [vmem:[#allocation2 + $0xe0] sm:$0xff] %v1896
      %2014 = vst [vmem:[#allocation2 + $0xe8] sm:$0xff] %v1925
      %2015 = vst [vmem:[#allocation2 + $0xf0] sm:$0xff] %v1954
      %2016 = vst [vmem:[#allocation2 + $0xf8] sm:$0xff] %v1983
      %v2017 = vld [vmem:[%s429] sm:$0xff]
      %v2018 = vld [vmem:[%s429 + $0x8] sm:$0xff]
      %v2019 = vld [vmem:[%s429 + $0x10] sm:$0xff]
      %v2020 = vld [vmem:[%s429 + $0x18] sm:$0xff]
      %v2053 = vunpack.c.l.b16 %v395
      %v2054 = vunpack.c.h.b16 %v395
      %v2055 = vunpack.c.l.b16 %v396
      %v2056 = vunpack.c.h.b16 %v396
      %v2057 = vunpack.c.l.b16 %v397
      %v2058 = vunpack.c.h.b16 %v397
      %v2059 = vunpack.c.l.b16 %v398
      %v2060 = vunpack.c.h.b16 %v398
      %v2061 = vunpack.c.l.b16 %v399
      %v2062 = vunpack.c.h.b16 %v399
      %v2063 = vunpack.c.l.b16 %v400
      %v2064 = vunpack.c.h.b16 %v400
      %v2065 = vunpack.c.l.b16 %v401
      %v2066 = vunpack.c.h.b16 %v401
      %v2067 = vunpack.c.l.b16 %v402
      %v2068 = vunpack.c.h.b16 %v402
      %v2069 = vunpack.c.l.b16 %v403
      %v2070 = vunpack.c.h.b16 %v403
      %v2071 = vunpack.c.l.b16 %v404
      %v2072 = vunpack.c.h.b16 %v404
      %v2073 = vunpack.c.l.b16 %v405
      %v2074 = vunpack.c.h.b16 %v405
      %v2075 = vunpack.c.l.b16 %v406
      %v2076 = vunpack.c.h.b16 %v406
      %v2077 = vunpack.c.l.b16 %v407
      %v2078 = vunpack.c.h.b16 %v407
      %v2079 = vunpack.c.l.b16 %v408
      %v2080 = vunpack.c.h.b16 %v408
      %v2081 = vunpack.c.l.b16 %v409
      %v2082 = vunpack.c.h.b16 %v409
      %v2083 = vunpack.c.l.b16 %v410
      %v2084 = vunpack.c.h.b16 %v410
      %v2085 = vunpack.c.l.b16 %v411
      %v2086 = vunpack.c.h.b16 %v411
      %v2087 = vunpack.c.l.b16 %v412
      %v2088 = vunpack.c.h.b16 %v412
      %v2089 = vunpack.c.l.b16 %v413
      %v2090 = vunpack.c.h.b16 %v413
      %v2091 = vunpack.c.l.b16 %v414
      %v2092 = vunpack.c.h.b16 %v414
      %v2093 = vunpack.c.l.b16 %v415
      %v2094 = vunpack.c.h.b16 %v415
      %v2095 = vunpack.c.l.b16 %v416
      %v2096 = vunpack.c.h.b16 %v416
      %v2097 = vunpack.c.l.b16 %v417
      %v2098 = vunpack.c.h.b16 %v417
      %v2099 = vunpack.c.l.b16 %v418
      %v2100 = vunpack.c.h.b16 %v418
      %v2101 = vunpack.c.l.b16 %v419
      %v2102 = vunpack.c.h.b16 %v419
      %v2103 = vunpack.c.l.b16 %v420
      %v2104 = vunpack.c.h.b16 %v420
      %v2105 = vunpack.c.l.b16 %v421
      %v2106 = vunpack.c.h.b16 %v421
      %v2107 = vunpack.c.l.b16 %v422
      %v2108 = vunpack.c.h.b16 %v422
      %v2109 = vunpack.c.l.b16 %v423
      %v2110 = vunpack.c.h.b16 %v423
      %v2111 = vunpack.c.l.b16 %v424
      %v2112 = vunpack.c.h.b16 %v424
      %v2113 = vunpack.c.l.b16 %v425
      %v2114 = vunpack.c.h.b16 %v425
      %v2115 = vunpack.c.l.b16 %v426
      %v2116 = vunpack.c.h.b16 %v426
      %v2117 = vpack.c.b16 %v2057, %v2053
      %v2118 = vpack.c.b16 %v2058, %v2054
      %v2119 = vpack.c.b16 %v2059, %v2055
      %v2120 = vpack.c.b16 %v2060, %v2056
      %v2121 = vpack.c.b16 %v2065, %v2061
      %v2122 = vpack.c.b16 %v2066, %v2062
      %v2123 = vpack.c.b16 %v2067, %v2063
      %v2124 = vpack.c.b16 %v2068, %v2064
      %v2125 = vpack.c.b16 %v2073, %v2069
      %v2126 = vpack.c.b16 %v2074, %v2070
      %v2127 = vpack.c.b16 %v2075, %v2071
      %v2128 = vpack.c.b16 %v2076, %v2072
      %v2129 = vpack.c.b16 %v2081, %v2077
      %v2130 = vpack.c.b16 %v2082, %v2078
      %v2131 = vpack.c.b16 %v2083, %v2079
      %v2132 = vpack.c.b16 %v2084, %v2080
      %v2133 = vpack.c.b16 %v2089, %v2085
      %v2134 = vpack.c.b16 %v2090, %v2086
      %v2135 = vpack.c.b16 %v2091, %v2087
      %v2136 = vpack.c.b16 %v2092, %v2088
      %v2137 = vpack.c.b16 %v2097, %v2093
      %v2138 = vpack.c.b16 %v2098, %v2094
      %v2139 = vpack.c.b16 %v2099, %v2095
      %v2140 = vpack.c.b16 %v2100, %v2096
      %v2141 = vpack.c.b16 %v2105, %v2101
      %v2142 = vpack.c.b16 %v2106, %v2102
      %v2143 = vpack.c.b16 %v2107, %v2103
      %v2144 = vpack.c.b16 %v2108, %v2104
      %v2145 = vpack.c.b16 %v2113, %v2109
      %v2146 = vpack.c.b16 %v2114, %v2110
      %v2147 = vpack.c.b16 %v2115, %v2111
      %v2148 = vpack.c.b16 %v2116, %v2112
      %2181 = vmatpush.bf16.msra.mxu0 %v2145
      %2182 = vmatpush.bf16.msra.mxu0 %v2141
      %2183 = vmatpush.bf16.msra.mxu0 %v2137
      %2184 = vmatpush.bf16.msra.mxu0 %v2133
      %2185 = vmatpush.bf16.msra.mxu0 %v2129
      %2186 = vmatpush.bf16.msra.mxu0 %v2125
      %2187 = vmatpush.bf16.msra.mxu0 %v2121
      %2188 = vmatpush.bf16.msra.mxu0 %v2117
      %2189 = vmatmul.bf16.gmra.mxu0 0
      %v2190 = vpop.f32.mrf.mxu0
      %v2191 = vadd.f32 0.0, %v2190
      %v2192 = vpop.f32.mrf.mxu0
      %2193 = vdwg.mxu0
      %2194 = vmatpush.bf16.msra.mxu0 %v2146
      %2195 = vmatpush.bf16.msra.mxu0 %v2142
      %2196 = vmatpush.bf16.msra.mxu0 %v2138
      %2197 = vmatpush.bf16.msra.mxu0 %v2134
      %2198 = vmatpush.bf16.msra.mxu0 %v2130
      %2199 = vmatpush.bf16.msra.mxu0 %v2126
      %2200 = vmatpush.bf16.msra.mxu0 %v2122
      %2201 = vmatpush.bf16.msra.mxu0 %v2118
      %2202 = vmatmul.bf16.gmra.mxu0 0
      %v2203 = vpop.f32.mrf.mxu0
      %v2204 = vadd.f32 0.0, %v2203
      %v2205 = vpop.f32.mrf.mxu0
      %2206 = vdwg.mxu0
      %2207 = vmatpush.bf16.msra.mxu0 %v2147
      %2208 = vmatpush.bf16.msra.mxu0 %v2143
      %2209 = vmatpush.bf16.msra.mxu0 %v2139
      %2210 = vmatpush.bf16.msra.mxu0 %v2135
      %2211 = vmatpush.bf16.msra.mxu0 %v2131
      %2212 = vmatpush.bf16.msra.mxu0 %v2127
      %2213 = vmatpush.bf16.msra.mxu0 %v2123
      %2214 = vmatpush.bf16.msra.mxu0 %v2119
      %2215 = vmatmul.bf16.gmra.mxu0 0
      %v2216 = vpop.f32.mrf.mxu0
      %v2217 = vadd.f32 0.0, %v2216
      %v2218 = vpop.f32.mrf.mxu0
      %2219 = vdwg.mxu0
      %2220 = vmatpush.bf16.msra.mxu0 %v2148
      %2221 = vmatpush.bf16.msra.mxu0 %v2144
      %2222 = vmatpush.bf16.msra.mxu0 %v2140
      %2223 = vmatpush.bf16.msra.mxu0 %v2136
      %2224 = vmatpush.bf16.msra.mxu0 %v2132
      %2225 = vmatpush.bf16.msra.mxu0 %v2128
      %2226 = vmatpush.bf16.msra.mxu0 %v2124
      %2227 = vmatpush.bf16.msra.mxu0 %v2120
      %2228 = vmatmul.bf16.gmra.mxu0 0
      %v2229 = vpop.f32.mrf.mxu0
      %v2230 = vadd.f32 0.0, %v2229
      %v2231 = vpop.f32.mrf.mxu0
      %2232 = vdwg.mxu0
      %v2233 = vadd.f32 %v2017, %v2191
      %v2234 = vadd.f32 %v2018, %v2204
      %v2235 = vadd.f32 %v2019, %v2217
      %v2236 = vadd.f32 %v2020, %v2230
      %v2237 = vxor.u32 %v2233, 2147483648
      %v2238 = vmul.f32 %v2237, 1.442695
      %v2239 = vpow.pop %v2238
      %v2240 = vadd.f32 %v2239, 1.0
      %v2241 = vrcp.pop %v2240
      %v2242 = vmul.f32 %v2240, %v2241
      %v2243 = vsub.f32 1.0, %v2242
      %v2244 = vmul.f32 %v2241, %v2243
      %v2245 = vadd.f32 %v2241, %v2244
      %vm2246 = vweird.f32 %v2240
      %vm2247 = vweird.f32 %v2241
      %vm2248 = vmor %vm2246, %vm2247
      %v2249 = vsel %vm2248, %v2241, %v2245
      %v2250 = vand.u32 2147483647, %v2240
      %vm2251 = vcmp.eq.f32.partialorder %v2250, 8.507059e+37
      %v2252 = vand.u32 %v2240, 2147483648
      %v2253 = vor.u32 1.1754944e-38, %v2252
      %v2254 = vsel %vm2251, %v2253, %v2249
      %v2255 = vmul.f32 1.0, %v2254
      %v2256 = vxor.u32 %v2234, 2147483648
      %v2257 = vmul.f32 %v2256, 1.442695
      %v2258 = vpow.pop %v2257
      %v2259 = vadd.f32 %v2258, 1.0
      %v2260 = vrcp.pop %v2259
      %v2261 = vmul.f32 %v2259, %v2260
      %v2262 = vsub.f32 1.0, %v2261
      %v2263 = vmul.f32 %v2260, %v2262
      %v2264 = vadd.f32 %v2260, %v2263
      %vm2265 = vweird.f32 %v2259
      %vm2266 = vweird.f32 %v2260
      %vm2267 = vmor %vm2265, %vm2266
      %v2268 = vsel %vm2267, %v2260, %v2264
      %v2269 = vand.u32 2147483647, %v2259
      %vm2270 = vcmp.eq.f32.partialorder %v2269, 8.507059e+37
      %v2271 = vand.u32 %v2259, 2147483648
      %v2272 = vor.u32 1.1754944e-38, %v2271
      %v2273 = vsel %vm2270, %v2272, %v2268
      %v2274 = vmul.f32 1.0, %v2273
      %v2275 = vtanh.pop %v2235
      %v2276 = vxor.u32 %v2236, 2147483648
      %v2277 = vmul.f32 %v2276, 1.442695
      %v2278 = vpow.pop %v2277
      %v2279 = vadd.f32 %v2278, 1.0
      %v2280 = vrcp.pop %v2279
      %v2281 = vmul.f32 %v2279, %v2280
      %v2282 = vsub.f32 1.0, %v2281
      %v2283 = vmul.f32 %v2280, %v2282
      %v2284 = vadd.f32 %v2280, %v2283
      %vm2285 = vweird.f32 %v2279
      %vm2286 = vweird.f32 %v2280
      %vm2287 = vmor %vm2285, %vm2286
      %v2288 = vsel %vm2287, %v2280, %v2284
      %v2289 = vand.u32 2147483647, %v2279
      %vm2290 = vcmp.eq.f32.partialorder %v2289, 8.507059e+37
      %v2291 = vand.u32 %v2279, 2147483648
      %v2292 = vor.u32 1.1754944e-38, %v2291
      %v2293 = vsel %vm2290, %v2292, %v2288
      %v2294 = vmul.f32 1.0, %v2293
      %v2295 = vmul.f32 %v2274, 0.0
      %v2296 = vmul.f32 %v2255, %v2275
      %v2297 = vadd.f32 %v2295, %v2296
      %v2298 = vtanh.pop %v2297
      %v2299 = vmul.f32 %v2294, %v2298
      %v2300 = vpack.c.bf16 %v2299, %v2299
      %2301 = vst [vmem:[%s716 + $0x4] sm:$0xf] %v2300
      %v2302 = vld [vmem:[%s720] sm:$0xff]
      %v2303 = vld [vmem:[%s720 + $0x8] sm:$0xff]
      %v2304 = vld [vmem:[%s720 + $0x10] sm:$0xff]
      %v2305 = vld [vmem:[%s720 + $0x18] sm:$0xff]
      %2306 = vmatpush.bf16.msra.mxu0 %v2145
      %2307 = vmatpush.bf16.msra.mxu0 %v2141
      %2308 = vmatpush.bf16.msra.mxu0 %v2137
      %2309 = vmatpush.bf16.msra.mxu0 %v2133
      %2310 = vmatpush.bf16.msra.mxu0 %v2129
      %2311 = vmatpush.bf16.msra.mxu0 %v2125
      %2312 = vmatpush.bf16.msra.mxu0 %v2121
      %2313 = vmatpush.bf16.msra.mxu0 %v2117
      %2314 = vmatmul.bf16.gmra.mxu0 %v2300
      %v2315 = vpop.f32.mrf.mxu0
      %v2316 = vadd.f32 0.0, %v2315
      %v2317 = vpop.f32.mrf.mxu0
      %2318 = vdwg.mxu0
      %2319 = vmatpush.bf16.msra.mxu0 %v2146
      %2320 = vmatpush.bf16.msra.mxu0 %v2142
      %2321 = vmatpush.bf16.msra.mxu0 %v2138
      %2322 = vmatpush.bf16.msra.mxu0 %v2134
      %2323 = vmatpush.bf16.msra.mxu0 %v2130
      %2324 = vmatpush.bf16.msra.mxu0 %v2126
      %2325 = vmatpush.bf16.msra.mxu0 %v2122
      %2326 = vmatpush.bf16.msra.mxu0 %v2118
      %2327 = vmatmul.bf16.gmra.mxu0 %v2300
      %v2328 = vpop.f32.mrf.mxu0
      %v2329 = vadd.f32 0.0, %v2328
      %v2330 = vpop.f32.mrf.mxu0
      %2331 = vdwg.mxu0
      %2332 = vmatpush.bf16.msra.mxu0 %v2147
      %2333 = vmatpush.bf16.msra.mxu0 %v2143
      %2334 = vmatpush.bf16.msra.mxu0 %v2139
      %2335 = vmatpush.bf16.msra.mxu0 %v2135
      %2336 = vmatpush.bf16.msra.mxu0 %v2131
      %2337 = vmatpush.bf16.msra.mxu0 %v2127
      %2338 = vmatpush.bf16.msra.mxu0 %v2123
      %2339 = vmatpush.bf16.msra.mxu0 %v2119
      %2340 = vmatmul.bf16.gmra.mxu0 %v2300
      %v2341 = vpop.f32.mrf.mxu0
      %v2342 = vadd.f32 0.0, %v2341
      %v2343 = vpop.f32.mrf.mxu0
      %2344 = vdwg.mxu0
      %2345 = vmatpush.bf16.msra.mxu0 %v2148
      %2346 = vmatpush.bf16.msra.mxu0 %v2144
      %2347 = vmatpush.bf16.msra.mxu0 %v2140
      %2348 = vmatpush.bf16.msra.mxu0 %v2136
      %2349 = vmatpush.bf16.msra.mxu0 %v2132
      %2350 = vmatpush.bf16.msra.mxu0 %v2128
      %2351 = vmatpush.bf16.msra.mxu0 %v2124
      %2352 = vmatpush.bf16.msra.mxu0 %v2120
      %2353 = vmatmul.bf16.gmra.mxu0 %v2300
      %v2354 = vpop.f32.mrf.mxu0
      %v2355 = vadd.f32 0.0, %v2354
      %v2356 = vpop.f32.mrf.mxu0
      %2357 = vdwg.mxu0
      %v2358 = vadd.f32 %v2302, %v2316
      %v2359 = vadd.f32 %v2303, %v2329
      %v2360 = vadd.f32 %v2304, %v2342
      %v2361 = vadd.f32 %v2305, %v2355
      %v2362 = vxor.u32 %v2358, 2147483648
      %v2363 = vmul.f32 %v2362, 1.442695
      %v2364 = vpow.pop %v2363
      %v2365 = vadd.f32 %v2364, 1.0
      %v2366 = vrcp.pop %v2365
      %v2367 = vmul.f32 %v2365, %v2366
      %v2368 = vsub.f32 1.0, %v2367
      %v2369 = vmul.f32 %v2366, %v2368
      %v2370 = vadd.f32 %v2366, %v2369
      %vm2371 = vweird.f32 %v2365
      %vm2372 = vweird.f32 %v2366
      %vm2373 = vmor %vm2371, %vm2372
      %v2374 = vsel %vm2373, %v2366, %v2370
      %v2375 = vand.u32 2147483647, %v2365
      %vm2376 = vcmp.eq.f32.partialorder %v2375, 8.507059e+37
      %v2377 = vand.u32 %v2365, 2147483648
      %v2378 = vor.u32 1.1754944e-38, %v2377
      %v2379 = vsel %vm2376, %v2378, %v2374
      %v2380 = vmul.f32 1.0, %v2379
      %v2381 = vxor.u32 %v2359, 2147483648
      %v2382 = vmul.f32 %v2381, 1.442695
      %v2383 = vpow.pop %v2382
      %v2384 = vadd.f32 %v2383, 1.0
      %v2385 = vrcp.pop %v2384
      %v2386 = vmul.f32 %v2384, %v2385
      %v2387 = vsub.f32 1.0, %v2386
      %v2388 = vmul.f32 %v2385, %v2387
      %v2389 = vadd.f32 %v2385, %v2388
      %vm2390 = vweird.f32 %v2384
      %vm2391 = vweird.f32 %v2385
      %vm2392 = vmor %vm2390, %vm2391
      %v2393 = vsel %vm2392, %v2385, %v2389
      %v2394 = vand.u32 2147483647, %v2384
      %vm2395 = vcmp.eq.f32.partialorder %v2394, 8.507059e+37
      %v2396 = vand.u32 %v2384, 2147483648
      %v2397 = vor.u32 1.1754944e-38, %v2396
      %v2398 = vsel %vm2395, %v2397, %v2393
      %v2399 = vmul.f32 1.0, %v2398
      %v2400 = vtanh.pop %v2360
      %v2401 = vxor.u32 %v2361, 2147483648
      %v2402 = vmul.f32 %v2401, 1.442695
      %v2403 = vpow.pop %v2402
      %v2404 = vadd.f32 %v2403, 1.0
      %v2405 = vrcp.pop %v2404
      %v2406 = vmul.f32 %v2404, %v2405
      %v2407 = vsub.f32 1.0, %v2406
      %v2408 = vmul.f32 %v2405, %v2407
      %v2409 = vadd.f32 %v2405, %v2408
      %vm2410 = vweird.f32 %v2404
      %vm2411 = vweird.f32 %v2405
      %vm2412 = vmor %vm2410, %vm2411
      %v2413 = vsel %vm2412, %v2405, %v2409
      %v2414 = vand.u32 2147483647, %v2404
      %vm2415 = vcmp.eq.f32.partialorder %v2414, 8.507059e+37
      %v2416 = vand.u32 %v2404, 2147483648
      %v2417 = vor.u32 1.1754944e-38, %v2416
      %v2418 = vsel %vm2415, %v2417, %v2413
      %v2419 = vmul.f32 1.0, %v2418
      %v2420 = vmul.f32 %v2399, %v2297
      %v2421 = vmul.f32 %v2380, %v2400
      %v2422 = vadd.f32 %v2420, %v2421
      %v2423 = vtanh.pop %v2422
      %v2424 = vmul.f32 %v2419, %v2423
      %v2425 = vpack.c.bf16 %v2424, %v2424
      %2426 = vst [vmem:[%s847 + $0x4] sm:$0xf] %v2425
      %v2427 = vld [vmem:[%s851] sm:$0xff]
      %v2428 = vld [vmem:[%s851 + $0x8] sm:$0xff]
      %v2429 = vld [vmem:[%s851 + $0x10] sm:$0xff]
      %v2430 = vld [vmem:[%s851 + $0x18] sm:$0xff]
      %2431 = vmatpush.bf16.msra.mxu0 %v2145
      %2432 = vmatpush.bf16.msra.mxu0 %v2141
      %2433 = vmatpush.bf16.msra.mxu0 %v2137
      %2434 = vmatpush.bf16.msra.mxu0 %v2133
      %2435 = vmatpush.bf16.msra.mxu0 %v2129
      %2436 = vmatpush.bf16.msra.mxu0 %v2125
      %2437 = vmatpush.bf16.msra.mxu0 %v2121
      %2438 = vmatpush.bf16.msra.mxu0 %v2117
      %2439 = vmatmul.bf16.gmra.mxu0 %v2425
      %v2440 = vpop.f32.mrf.mxu0
      %v2441 = vadd.f32 0.0, %v2440
      %v2442 = vpop.f32.mrf.mxu0
      %2443 = vdwg.mxu0
      %2444 = vmatpush.bf16.msra.mxu0 %v2146
      %2445 = vmatpush.bf16.msra.mxu0 %v2142
      %2446 = vmatpush.bf16.msra.mxu0 %v2138
      %2447 = vmatpush.bf16.msra.mxu0 %v2134
      %2448 = vmatpush.bf16.msra.mxu0 %v2130
      %2449 = vmatpush.bf16.msra.mxu0 %v2126
      %2450 = vmatpush.bf16.msra.mxu0 %v2122
      %2451 = vmatpush.bf16.msra.mxu0 %v2118
      %2452 = vmatmul.bf16.gmra.mxu0 %v2425
      %v2453 = vpop.f32.mrf.mxu0
      %v2454 = vadd.f32 0.0, %v2453
      %v2455 = vpop.f32.mrf.mxu0
      %2456 = vdwg.mxu0
      %2457 = vmatpush.bf16.msra.mxu0 %v2147
      %2458 = vmatpush.bf16.msra.mxu0 %v2143
      %2459 = vmatpush.bf16.msra.mxu0 %v2139
      %2460 = vmatpush.bf16.msra.mxu0 %v2135
      %2461 = vmatpush.bf16.msra.mxu0 %v2131
      %2462 = vmatpush.bf16.msra.mxu0 %v2127
      %2463 = vmatpush.bf16.msra.mxu0 %v2123
      %2464 = vmatpush.bf16.msra.mxu0 %v2119
      %2465 = vmatmul.bf16.gmra.mxu0 %v2425
      %v2466 = vpop.f32.mrf.mxu0
      %v2467 = vadd.f32 0.0, %v2466
      %v2468 = vpop.f32.mrf.mxu0
      %2469 = vdwg.mxu0
      %2470 = vmatpush.bf16.msra.mxu0 %v2148
      %2471 = vmatpush.bf16.msra.mxu0 %v2144
      %2472 = vmatpush.bf16.msra.mxu0 %v2140
      %2473 = vmatpush.bf16.msra.mxu0 %v2136
      %2474 = vmatpush.bf16.msra.mxu0 %v2132
      %2475 = vmatpush.bf16.msra.mxu0 %v2128
      %2476 = vmatpush.bf16.msra.mxu0 %v2124
      %2477 = vmatpush.bf16.msra.mxu0 %v2120
      %2478 = vmatmul.bf16.gmra.mxu0 %v2425
      %v2479 = vpop.f32.mrf.mxu0
      %v2480 = vadd.f32 0.0, %v2479
      %v2481 = vpop.f32.mrf.mxu0
      %2482 = vdwg.mxu0
      %v2483 = vadd.f32 %v2427, %v2441
      %v2484 = vadd.f32 %v2428, %v2454
      %v2485 = vadd.f32 %v2429, %v2467
      %v2486 = vadd.f32 %v2430, %v2480
      %v2487 = vxor.u32 %v2483, 2147483648
      %v2488 = vmul.f32 %v2487, 1.442695
      %v2489 = vpow.pop %v2488
      %v2490 = vadd.f32 %v2489, 1.0
      %v2491 = vrcp.pop %v2490
      %v2492 = vmul.f32 %v2490, %v2491
      %v2493 = vsub.f32 1.0, %v2492
      %v2494 = vmul.f32 %v2491, %v2493
      %v2495 = vadd.f32 %v2491, %v2494
      %vm2496 = vweird.f32 %v2490
      %vm2497 = vweird.f32 %v2491
      %vm2498 = vmor %vm2496, %vm2497
      %v2499 = vsel %vm2498, %v2491, %v2495
      %v2500 = vand.u32 2147483647, %v2490
      %vm2501 = vcmp.eq.f32.partialorder %v2500, 8.507059e+37
      %v2502 = vand.u32 %v2490, 2147483648
      %v2503 = vor.u32 1.1754944e-38, %v2502
      %v2504 = vsel %vm2501, %v2503, %v2499
      %v2505 = vmul.f32 1.0, %v2504
      %v2506 = vxor.u32 %v2484, 2147483648
      %v2507 = vmul.f32 %v2506, 1.442695
      %v2508 = vpow.pop %v2507
      %v2509 = vadd.f32 %v2508, 1.0
      %v2510 = vrcp.pop %v2509
      %v2511 = vmul.f32 %v2509, %v2510
      %v2512 = vsub.f32 1.0, %v2511
      %v2513 = vmul.f32 %v2510, %v2512
      %v2514 = vadd.f32 %v2510, %v2513
      %vm2515 = vweird.f32 %v2509
      %vm2516 = vweird.f32 %v2510
      %vm2517 = vmor %vm2515, %vm2516
      %v2518 = vsel %vm2517, %v2510, %v2514
      %v2519 = vand.u32 2147483647, %v2509
      %vm2520 = vcmp.eq.f32.partialorder %v2519, 8.507059e+37
      %v2521 = vand.u32 %v2509, 2147483648
      %v2522 = vor.u32 1.1754944e-38, %v2521
      %v2523 = vsel %vm2520, %v2522, %v2518
      %v2524 = vmul.f32 1.0, %v2523
      %v2525 = vtanh.pop %v2485
      %v2526 = vxor.u32 %v2486, 2147483648
      %v2527 = vmul.f32 %v2526, 1.442695
      %v2528 = vpow.pop %v2527
      %v2529 = vadd.f32 %v2528, 1.0
      %v2530 = vrcp.pop %v2529
      %v2531 = vmul.f32 %v2529, %v2530
      %v2532 = vsub.f32 1.0, %v2531
      %v2533 = vmul.f32 %v2530, %v2532
      %v2534 = vadd.f32 %v2530, %v2533
      %vm2535 = vweird.f32 %v2529
      %vm2536 = vweird.f32 %v2530
      %vm2537 = vmor %vm2535, %vm2536
      %v2538 = vsel %vm2537, %v2530, %v2534
      %v2539 = vand.u32 2147483647, %v2529
      %vm2540 = vcmp.eq.f32.partialorder %v2539, 8.507059e+37
      %v2541 = vand.u32 %v2529, 2147483648
      %v2542 = vor.u32 1.1754944e-38, %v2541
      %v2543 = vsel %vm2540, %v2542, %v2538
      %v2544 = vmul.f32 1.0, %v2543
      %v2545 = vmul.f32 %v2524, %v2422
      %v2546 = vmul.f32 %v2505, %v2525
      %v2547 = vadd.f32 %v2545, %v2546
      %v2548 = vtanh.pop %v2547
      %v2549 = vmul.f32 %v2544, %v2548
      %v2550 = vpack.c.bf16 %v2549, %v2549
      %2551 = vst [vmem:[%s978 + $0x4] sm:$0xf] %v2550
      %v2552 = vld [vmem:[%s982] sm:$0xff]
      %v2553 = vld [vmem:[%s982 + $0x8] sm:$0xff]
      %v2554 = vld [vmem:[%s982 + $0x10] sm:$0xff]
      %v2555 = vld [vmem:[%s982 + $0x18] sm:$0xff]
      %2556 = vmatpush.bf16.msra.mxu0 %v2145
      %2557 = vmatpush.bf16.msra.mxu0 %v2141
      %2558 = vmatpush.bf16.msra.mxu0 %v2137
      %2559 = vmatpush.bf16.msra.mxu0 %v2133
      %2560 = vmatpush.bf16.msra.mxu0 %v2129
      %2561 = vmatpush.bf16.msra.mxu0 %v2125
      %2562 = vmatpush.bf16.msra.mxu0 %v2121
      %2563 = vmatpush.bf16.msra.mxu0 %v2117
      %2564 = vmatmul.bf16.gmra.mxu0 %v2550
      %v2565 = vpop.f32.mrf.mxu0
      %v2566 = vadd.f32 0.0, %v2565
      %v2567 = vpop.f32.mrf.mxu0
      %2568 = vdwg.mxu0
      %2569 = vmatpush.bf16.msra.mxu0 %v2146
      %2570 = vmatpush.bf16.msra.mxu0 %v2142
      %2571 = vmatpush.bf16.msra.mxu0 %v2138
      %2572 = vmatpush.bf16.msra.mxu0 %v2134
      %2573 = vmatpush.bf16.msra.mxu0 %v2130
      %2574 = vmatpush.bf16.msra.mxu0 %v2126
      %2575 = vmatpush.bf16.msra.mxu0 %v2122
      %2576 = vmatpush.bf16.msra.mxu0 %v2118
      %2577 = vmatmul.bf16.gmra.mxu0 %v2550
      %v2578 = vpop.f32.mrf.mxu0
      %v2579 = vadd.f32 0.0, %v2578
      %v2580 = vpop.f32.mrf.mxu0
      %2581 = vdwg.mxu0
      %2582 = vmatpush.bf16.msra.mxu0 %v2147
      %2583 = vmatpush.bf16.msra.mxu0 %v2143
      %2584 = vmatpush.bf16.msra.mxu0 %v2139
      %2585 = vmatpush.bf16.msra.mxu0 %v2135
      %2586 = vmatpush.bf16.msra.mxu0 %v2131
      %2587 = vmatpush.bf16.msra.mxu0 %v2127
      %2588 = vmatpush.bf16.msra.mxu0 %v2123
      %2589 = vmatpush.bf16.msra.mxu0 %v2119
      %2590 = vmatmul.bf16.gmra.mxu0 %v2550
      %v2591 = vpop.f32.mrf.mxu0
      %v2592 = vadd.f32 0.0, %v2591
      %v2593 = vpop.f32.mrf.mxu0
      %2594 = vdwg.mxu0
      %2595 = vmatpush.bf16.msra.mxu0 %v2148
      %2596 = vmatpush.bf16.msra.mxu0 %v2144
      %2597 = vmatpush.bf16.msra.mxu0 %v2140
      %2598 = vmatpush.bf16.msra.mxu0 %v2136
      %2599 = vmatpush.bf16.msra.mxu0 %v2132
      %2600 = vmatpush.bf16.msra.mxu0 %v2128
      %2601 = vmatpush.bf16.msra.mxu0 %v2124
      %2602 = vmatpush.bf16.msra.mxu0 %v2120
      %2603 = vmatmul.bf16.gmra.mxu0 %v2550
      %v2604 = vpop.f32.mrf.mxu0
      %v2605 = vadd.f32 0.0, %v2604
      %v2606 = vpop.f32.mrf.mxu0
      %2607 = vdwg.mxu0
      %v2608 = vadd.f32 %v2552, %v2566
      %v2609 = vadd.f32 %v2553, %v2579
      %v2610 = vadd.f32 %v2554, %v2592
      %v2611 = vadd.f32 %v2555, %v2605
      %v2612 = vxor.u32 %v2608, 2147483648
      %v2613 = vmul.f32 %v2612, 1.442695
      %v2614 = vpow.pop %v2613
      %v2615 = vadd.f32 %v2614, 1.0
      %v2616 = vrcp.pop %v2615
      %v2617 = vmul.f32 %v2615, %v2616
      %v2618 = vsub.f32 1.0, %v2617
      %v2619 = vmul.f32 %v2616, %v2618
      %v2620 = vadd.f32 %v2616, %v2619
      %vm2621 = vweird.f32 %v2615
      %vm2622 = vweird.f32 %v2616
      %vm2623 = vmor %vm2621, %vm2622
      %v2624 = vsel %vm2623, %v2616, %v2620
      %v2625 = vand.u32 2147483647, %v2615
      %vm2626 = vcmp.eq.f32.partialorder %v2625, 8.507059e+37
      %v2627 = vand.u32 %v2615, 2147483648
      %v2628 = vor.u32 1.1754944e-38, %v2627
      %v2629 = vsel %vm2626, %v2628, %v2624
      %v2630 = vmul.f32 1.0, %v2629
      %v2631 = vxor.u32 %v2609, 2147483648
      %v2632 = vmul.f32 %v2631, 1.442695
      %v2633 = vpow.pop %v2632
      %v2634 = vadd.f32 %v2633, 1.0
      %v2635 = vrcp.pop %v2634
      %v2636 = vmul.f32 %v2634, %v2635
      %v2637 = vsub.f32 1.0, %v2636
      %v2638 = vmul.f32 %v2635, %v2637
      %v2639 = vadd.f32 %v2635, %v2638
      %vm2640 = vweird.f32 %v2634
      %vm2641 = vweird.f32 %v2635
      %vm2642 = vmor %vm2640, %vm2641
      %v2643 = vsel %vm2642, %v2635, %v2639
      %v2644 = vand.u32 2147483647, %v2634
      %vm2645 = vcmp.eq.f32.partialorder %v2644, 8.507059e+37
      %v2646 = vand.u32 %v2634, 2147483648
      %v2647 = vor.u32 1.1754944e-38, %v2646
      %v2648 = vsel %vm2645, %v2647, %v2643
      %v2649 = vmul.f32 1.0, %v2648
      %v2650 = vtanh.pop %v2610
      %v2651 = vxor.u32 %v2611, 2147483648
      %v2652 = vmul.f32 %v2651, 1.442695
      %v2653 = vpow.pop %v2652
      %v2654 = vadd.f32 %v2653, 1.0
      %v2655 = vrcp.pop %v2654
      %v2656 = vmul.f32 %v2654, %v2655
      %v2657 = vsub.f32 1.0, %v2656
      %v2658 = vmul.f32 %v2655, %v2657
      %v2659 = vadd.f32 %v2655, %v2658
      %vm2660 = vweird.f32 %v2654
      %vm2661 = vweird.f32 %v2655
      %vm2662 = vmor %vm2660, %vm2661
      %v2663 = vsel %vm2662, %v2655, %v2659
      %v2664 = vand.u32 2147483647, %v2654
      %vm2665 = vcmp.eq.f32.partialorder %v2664, 8.507059e+37
      %v2666 = vand.u32 %v2654, 2147483648
      %v2667 = vor.u32 1.1754944e-38, %v2666
      %v2668 = vsel %vm2665, %v2667, %v2663
      %v2669 = vmul.f32 1.0, %v2668
      %v2670 = vmul.f32 %v2649, %v2547
      %v2671 = vmul.f32 %v2630, %v2650
      %v2672 = vadd.f32 %v2670, %v2671
      %v2673 = vtanh.pop %v2672
      %v2674 = vmul.f32 %v2669, %v2673
      %v2675 = vpack.c.bf16 %v2674, %v2674
      %2676 = vst [vmem:[%s1109 + $0x4] sm:$0xf] %v2675
      %v2677 = vld [vmem:[%s1113] sm:$0xff]
      %v2678 = vld [vmem:[%s1113 + $0x8] sm:$0xff]
      %v2679 = vld [vmem:[%s1113 + $0x10] sm:$0xff]
      %v2680 = vld [vmem:[%s1113 + $0x18] sm:$0xff]
      %2681 = vmatpush.bf16.msra.mxu0 %v2145
      %2682 = vmatpush.bf16.msra.mxu0 %v2141
      %2683 = vmatpush.bf16.msra.mxu0 %v2137
      %2684 = vmatpush.bf16.msra.mxu0 %v2133
      %2685 = vmatpush.bf16.msra.mxu0 %v2129
      %2686 = vmatpush.bf16.msra.mxu0 %v2125
      %2687 = vmatpush.bf16.msra.mxu0 %v2121
      %2688 = vmatpush.bf16.msra.mxu0 %v2117
      %2689 = vmatmul.bf16.gmra.mxu0 %v2675
      %v2690 = vpop.f32.mrf.mxu0
      %v2691 = vadd.f32 0.0, %v2690
      %v2692 = vpop.f32.mrf.mxu0
      %2693 = vdwg.mxu0
      %2694 = vmatpush.bf16.msra.mxu0 %v2146
      %2695 = vmatpush.bf16.msra.mxu0 %v2142
      %2696 = vmatpush.bf16.msra.mxu0 %v2138
      %2697 = vmatpush.bf16.msra.mxu0 %v2134
      %2698 = vmatpush.bf16.msra.mxu0 %v2130
      %2699 = vmatpush.bf16.msra.mxu0 %v2126
      %2700 = vmatpush.bf16.msra.mxu0 %v2122
      %2701 = vmatpush.bf16.msra.mxu0 %v2118
      %2702 = vmatmul.bf16.gmra.mxu0 %v2675
      %v2703 = vpop.f32.mrf.mxu0
      %v2704 = vadd.f32 0.0, %v2703
      %v2705 = vpop.f32.mrf.mxu0
      %2706 = vdwg.mxu0
      %2707 = vmatpush.bf16.msra.mxu0 %v2147
      %2708 = vmatpush.bf16.msra.mxu0 %v2143
      %2709 = vmatpush.bf16.msra.mxu0 %v2139
      %2710 = vmatpush.bf16.msra.mxu0 %v2135
      %2711 = vmatpush.bf16.msra.mxu0 %v2131
      %2712 = vmatpush.bf16.msra.mxu0 %v2127
      %2713 = vmatpush.bf16.msra.mxu0 %v2123
      %2714 = vmatpush.bf16.msra.mxu0 %v2119
      %2715 = vmatmul.bf16.gmra.mxu0 %v2675
      %v2716 = vpop.f32.mrf.mxu0
      %v2717 = vadd.f32 0.0, %v2716
      %v2718 = vpop.f32.mrf.mxu0
      %2719 = vdwg.mxu0
      %2720 = vmatpush.bf16.msra.mxu0 %v2148
      %2721 = vmatpush.bf16.msra.mxu0 %v2144
      %2722 = vmatpush.bf16.msra.mxu0 %v2140
      %2723 = vmatpush.bf16.msra.mxu0 %v2136
      %2724 = vmatpush.bf16.msra.mxu0 %v2132
      %2725 = vmatpush.bf16.msra.mxu0 %v2128
      %2726 = vmatpush.bf16.msra.mxu0 %v2124
      %2727 = vmatpush.bf16.msra.mxu0 %v2120
      %2728 = vmatmul.bf16.gmra.mxu0 %v2675
      %v2729 = vpop.f32.mrf.mxu0
      %v2730 = vadd.f32 0.0, %v2729
      %v2731 = vpop.f32.mrf.mxu0
      %2732 = vdwg.mxu0
      %v2733 = vadd.f32 %v2677, %v2691
      %v2734 = vadd.f32 %v2678, %v2704
      %v2735 = vadd.f32 %v2679, %v2717
      %v2736 = vadd.f32 %v2680, %v2730
      %v2737 = vxor.u32 %v2733, 2147483648
      %v2738 = vmul.f32 %v2737, 1.442695
      %v2739 = vpow.pop %v2738
      %v2740 = vadd.f32 %v2739, 1.0
      %v2741 = vrcp.pop %v2740
      %v2742 = vmul.f32 %v2740, %v2741
      %v2743 = vsub.f32 1.0, %v2742
      %v2744 = vmul.f32 %v2741, %v2743
      %v2745 = vadd.f32 %v2741, %v2744
      %vm2746 = vweird.f32 %v2740
      %vm2747 = vweird.f32 %v2741
      %vm2748 = vmor %vm2746, %vm2747
      %v2749 = vsel %vm2748, %v2741, %v2745
      %v2750 = vand.u32 2147483647, %v2740
      %vm2751 = vcmp.eq.f32.partialorder %v2750, 8.507059e+37
      %v2752 = vand.u32 %v2740, 2147483648
      %v2753 = vor.u32 1.1754944e-38, %v2752
      %v2754 = vsel %vm2751, %v2753, %v2749
      %v2755 = vmul.f32 1.0, %v2754
      %v2756 = vxor.u32 %v2734, 2147483648
      %v2757 = vmul.f32 %v2756, 1.442695
      %v2758 = vpow.pop %v2757
      %v2759 = vadd.f32 %v2758, 1.0
      %v2760 = vrcp.pop %v2759
      %v2761 = vmul.f32 %v2759, %v2760
      %v2762 = vsub.f32 1.0, %v2761
      %v2763 = vmul.f32 %v2760, %v2762
      %v2764 = vadd.f32 %v2760, %v2763
      %vm2765 = vweird.f32 %v2759
      %vm2766 = vweird.f32 %v2760
      %vm2767 = vmor %vm2765, %vm2766
      %v2768 = vsel %vm2767, %v2760, %v2764
      %v2769 = vand.u32 2147483647, %v2759
      %vm2770 = vcmp.eq.f32.partialorder %v2769, 8.507059e+37
      %v2771 = vand.u32 %v2759, 2147483648
      %v2772 = vor.u32 1.1754944e-38, %v2771
      %v2773 = vsel %vm2770, %v2772, %v2768
      %v2774 = vmul.f32 1.0, %v2773
      %v2775 = vtanh.pop %v2735
      %v2776 = vxor.u32 %v2736, 2147483648
      %v2777 = vmul.f32 %v2776, 1.442695
      %v2778 = vpow.pop %v2777
      %v2779 = vadd.f32 %v2778, 1.0
      %v2780 = vrcp.pop %v2779
      %v2781 = vmul.f32 %v2779, %v2780
      %v2782 = vsub.f32 1.0, %v2781
      %v2783 = vmul.f32 %v2780, %v2782
      %v2784 = vadd.f32 %v2780, %v2783
      %vm2785 = vweird.f32 %v2779
      %vm2786 = vweird.f32 %v2780
      %vm2787 = vmor %vm2785, %vm2786
      %v2788 = vsel %vm2787, %v2780, %v2784
      %v2789 = vand.u32 2147483647, %v2779
      %vm2790 = vcmp.eq.f32.partialorder %v2789, 8.507059e+37
      %v2791 = vand.u32 %v2779, 2147483648
      %v2792 = vor.u32 1.1754944e-38, %v2791
      %v2793 = vsel %vm2790, %v2792, %v2788
      %v2794 = vmul.f32 1.0, %v2793
      %v2795 = vmul.f32 %v2774, %v2672
      %v2796 = vmul.f32 %v2755, %v2775
      %v2797 = vadd.f32 %v2795, %v2796
      %v2798 = vtanh.pop %v2797
      %v2799 = vmul.f32 %v2794, %v2798
      %v2800 = vpack.c.bf16 %v2799, %v2799
      %2801 = vst [vmem:[%s1240 + $0x4] sm:$0xf] %v2800
      %v2802 = vld [vmem:[%s1244] sm:$0xff]
      %v2803 = vld [vmem:[%s1244 + $0x8] sm:$0xff]
      %v2804 = vld [vmem:[%s1244 + $0x10] sm:$0xff]
      %v2805 = vld [vmem:[%s1244 + $0x18] sm:$0xff]
      %2806 = vmatpush.bf16.msra.mxu0 %v2145
      %2807 = vmatpush.bf16.msra.mxu0 %v2141
      %2808 = vmatpush.bf16.msra.mxu0 %v2137
      %2809 = vmatpush.bf16.msra.mxu0 %v2133
      %2810 = vmatpush.bf16.msra.mxu0 %v2129
      %2811 = vmatpush.bf16.msra.mxu0 %v2125
      %2812 = vmatpush.bf16.msra.mxu0 %v2121
      %2813 = vmatpush.bf16.msra.mxu0 %v2117
      %2814 = vmatmul.bf16.gmra.mxu0 %v2800
      %v2815 = vpop.f32.mrf.mxu0
      %v2816 = vadd.f32 0.0, %v2815
      %v2817 = vpop.f32.mrf.mxu0
      %2818 = vdwg.mxu0
      %2819 = vmatpush.bf16.msra.mxu0 %v2146
      %2820 = vmatpush.bf16.msra.mxu0 %v2142
      %2821 = vmatpush.bf16.msra.mxu0 %v2138
      %2822 = vmatpush.bf16.msra.mxu0 %v2134
      %2823 = vmatpush.bf16.msra.mxu0 %v2130
      %2824 = vmatpush.bf16.msra.mxu0 %v2126
      %2825 = vmatpush.bf16.msra.mxu0 %v2122
      %2826 = vmatpush.bf16.msra.mxu0 %v2118
      %2827 = vmatmul.bf16.gmra.mxu0 %v2800
      %v2828 = vpop.f32.mrf.mxu0
      %v2829 = vadd.f32 0.0, %v2828
      %v2830 = vpop.f32.mrf.mxu0
      %2831 = vdwg.mxu0
      %2832 = vmatpush.bf16.msra.mxu0 %v2147
      %2833 = vmatpush.bf16.msra.mxu0 %v2143
      %2834 = vmatpush.bf16.msra.mxu0 %v2139
      %2835 = vmatpush.bf16.msra.mxu0 %v2135
      %2836 = vmatpush.bf16.msra.mxu0 %v2131
      %2837 = vmatpush.bf16.msra.mxu0 %v2127
      %2838 = vmatpush.bf16.msra.mxu0 %v2123
      %2839 = vmatpush.bf16.msra.mxu0 %v2119
      %2840 = vmatmul.bf16.gmra.mxu0 %v2800
      %v2841 = vpop.f32.mrf.mxu0
      %v2842 = vadd.f32 0.0, %v2841
      %v2843 = vpop.f32.mrf.mxu0
      %2844 = vdwg.mxu0
      %2845 = vmatpush.bf16.msra.mxu0 %v2148
      %2846 = vmatpush.bf16.msra.mxu0 %v2144
      %2847 = vmatpush.bf16.msra.mxu0 %v2140
      %2848 = vmatpush.bf16.msra.mxu0 %v2136
      %2849 = vmatpush.bf16.msra.mxu0 %v2132
      %2850 = vmatpush.bf16.msra.mxu0 %v2128
      %2851 = vmatpush.bf16.msra.mxu0 %v2124
      %2852 = vmatpush.bf16.msra.mxu0 %v2120
      %2853 = vmatmul.bf16.gmra.mxu0 %v2800
      %v2854 = vpop.f32.mrf.mxu0
      %v2855 = vadd.f32 0.0, %v2854
      %v2856 = vpop.f32.mrf.mxu0
      %2857 = vdwg.mxu0
      %v2858 = vadd.f32 %v2802, %v2816
      %v2859 = vadd.f32 %v2803, %v2829
      %v2860 = vadd.f32 %v2804, %v2842
      %v2861 = vadd.f32 %v2805, %v2855
      %v2862 = vxor.u32 %v2858, 2147483648
      %v2863 = vmul.f32 %v2862, 1.442695
      %v2864 = vpow.pop %v2863
      %v2865 = vadd.f32 %v2864, 1.0
      %v2866 = vrcp.pop %v2865
      %v2867 = vmul.f32 %v2865, %v2866
      %v2868 = vsub.f32 1.0, %v2867
      %v2869 = vmul.f32 %v2866, %v2868
      %v2870 = vadd.f32 %v2866, %v2869
      %vm2871 = vweird.f32 %v2865
      %vm2872 = vweird.f32 %v2866
      %vm2873 = vmor %vm2871, %vm2872
      %v2874 = vsel %vm2873, %v2866, %v2870
      %v2875 = vand.u32 2147483647, %v2865
      %vm2876 = vcmp.eq.f32.partialorder %v2875, 8.507059e+37
      %v2877 = vand.u32 %v2865, 2147483648
      %v2878 = vor.u32 1.1754944e-38, %v2877
      %v2879 = vsel %vm2876, %v2878, %v2874
      %v2880 = vmul.f32 1.0, %v2879
      %v2881 = vxor.u32 %v2859, 2147483648
      %v2882 = vmul.f32 %v2881, 1.442695
      %v2883 = vpow.pop %v2882
      %v2884 = vadd.f32 %v2883, 1.0
      %v2885 = vrcp.pop %v2884
      %v2886 = vmul.f32 %v2884, %v2885
      %v2887 = vsub.f32 1.0, %v2886
      %v2888 = vmul.f32 %v2885, %v2887
      %v2889 = vadd.f32 %v2885, %v2888
      %vm2890 = vweird.f32 %v2884
      %vm2891 = vweird.f32 %v2885
      %vm2892 = vmor %vm2890, %vm2891
      %v2893 = vsel %vm2892, %v2885, %v2889
      %v2894 = vand.u32 2147483647, %v2884
      %vm2895 = vcmp.eq.f32.partialorder %v2894, 8.507059e+37
      %v2896 = vand.u32 %v2884, 2147483648
      %v2897 = vor.u32 1.1754944e-38, %v2896
      %v2898 = vsel %vm2895, %v2897, %v2893
      %v2899 = vmul.f32 1.0, %v2898
      %v2900 = vtanh.pop %v2860
      %v2901 = vxor.u32 %v2861, 2147483648
      %v2902 = vmul.f32 %v2901, 1.442695
      %v2903 = vpow.pop %v2902
      %v2904 = vadd.f32 %v2903, 1.0
      %v2905 = vrcp.pop %v2904
      %v2906 = vmul.f32 %v2904, %v2905
      %v2907 = vsub.f32 1.0, %v2906
      %v2908 = vmul.f32 %v2905, %v2907
      %v2909 = vadd.f32 %v2905, %v2908
      %vm2910 = vweird.f32 %v2904
      %vm2911 = vweird.f32 %v2905
      %vm2912 = vmor %vm2910, %vm2911
      %v2913 = vsel %vm2912, %v2905, %v2909
      %v2914 = vand.u32 2147483647, %v2904
      %vm2915 = vcmp.eq.f32.partialorder %v2914, 8.507059e+37
      %v2916 = vand.u32 %v2904, 2147483648
      %v2917 = vor.u32 1.1754944e-38, %v2916
      %v2918 = vsel %vm2915, %v2917, %v2913
      %v2919 = vmul.f32 1.0, %v2918
      %v2920 = vmul.f32 %v2899, %v2797
      %v2921 = vmul.f32 %v2880, %v2900
      %v2922 = vadd.f32 %v2920, %v2921
      %v2923 = vtanh.pop %v2922
      %v2924 = vmul.f32 %v2919, %v2923
      %v2925 = vpack.c.bf16 %v2924, %v2924
      %2926 = vst [vmem:[%s1371 + $0x4] sm:$0xf] %v2925
      %v2927 = vld [vmem:[%s1375] sm:$0xff]
      %v2928 = vld [vmem:[%s1375 + $0x8] sm:$0xff]
      %v2929 = vld [vmem:[%s1375 + $0x10] sm:$0xff]
      %v2930 = vld [vmem:[%s1375 + $0x18] sm:$0xff]
      %2931 = vmatpush.bf16.msra.mxu0 %v2145
      %2932 = vmatpush.bf16.msra.mxu0 %v2141
      %2933 = vmatpush.bf16.msra.mxu0 %v2137
      %2934 = vmatpush.bf16.msra.mxu0 %v2133
      %2935 = vmatpush.bf16.msra.mxu0 %v2129
      %2936 = vmatpush.bf16.msra.mxu0 %v2125
      %2937 = vmatpush.bf16.msra.mxu0 %v2121
      %2938 = vmatpush.bf16.msra.mxu0 %v2117
      %2939 = vmatmul.bf16.gmra.mxu0 %v2925
      %v2940 = vpop.f32.mrf.mxu0
      %v2941 = vadd.f32 0.0, %v2940
      %v2942 = vpop.f32.mrf.mxu0
      %2943 = vdwg.mxu0
      %2944 = vmatpush.bf16.msra.mxu0 %v2146
      %2945 = vmatpush.bf16.msra.mxu0 %v2142
      %2946 = vmatpush.bf16.msra.mxu0 %v2138
      %2947 = vmatpush.bf16.msra.mxu0 %v2134
      %2948 = vmatpush.bf16.msra.mxu0 %v2130
      %2949 = vmatpush.bf16.msra.mxu0 %v2126
      %2950 = vmatpush.bf16.msra.mxu0 %v2122
      %2951 = vmatpush.bf16.msra.mxu0 %v2118
      %2952 = vmatmul.bf16.gmra.mxu0 %v2925
      %v2953 = vpop.f32.mrf.mxu0
      %v2954 = vadd.f32 0.0, %v2953
      %v2955 = vpop.f32.mrf.mxu0
      %2956 = vdwg.mxu0
      %2957 = vmatpush.bf16.msra.mxu0 %v2147
      %2958 = vmatpush.bf16.msra.mxu0 %v2143
      %2959 = vmatpush.bf16.msra.mxu0 %v2139
      %2960 = vmatpush.bf16.msra.mxu0 %v2135
      %2961 = vmatpush.bf16.msra.mxu0 %v2131
      %2962 = vmatpush.bf16.msra.mxu0 %v2127
      %2963 = vmatpush.bf16.msra.mxu0 %v2123
      %2964 = vmatpush.bf16.msra.mxu0 %v2119
      %2965 = vmatmul.bf16.gmra.mxu0 %v2925
      %v2966 = vpop.f32.mrf.mxu0
      %v2967 = vadd.f32 0.0, %v2966
      %v2968 = vpop.f32.mrf.mxu0
      %2969 = vdwg.mxu0
      %2970 = vmatpush.bf16.msra.mxu0 %v2148
      %2971 = vmatpush.bf16.msra.mxu0 %v2144
      %2972 = vmatpush.bf16.msra.mxu0 %v2140
      %2973 = vmatpush.bf16.msra.mxu0 %v2136
      %2974 = vmatpush.bf16.msra.mxu0 %v2132
      %2975 = vmatpush.bf16.msra.mxu0 %v2128
      %2976 = vmatpush.bf16.msra.mxu0 %v2124
      %2977 = vmatpush.bf16.msra.mxu0 %v2120
      %2978 = vmatmul.bf16.gmra.mxu0 %v2925
      %v2979 = vpop.f32.mrf.mxu0
      %v2980 = vadd.f32 0.0, %v2979
      %v2981 = vpop.f32.mrf.mxu0
      %2982 = vdwg.mxu0
      %v2983 = vadd.f32 %v2927, %v2941
      %v2984 = vadd.f32 %v2928, %v2954
      %v2985 = vadd.f32 %v2929, %v2967
      %v2986 = vadd.f32 %v2930, %v2980
      %v2987 = vxor.u32 %v2983, 2147483648
      %v2988 = vmul.f32 %v2987, 1.442695
      %v2989 = vpow.pop %v2988
      %v2990 = vadd.f32 %v2989, 1.0
      %v2991 = vrcp.pop %v2990
      %v2992 = vmul.f32 %v2990, %v2991
      %v2993 = vsub.f32 1.0, %v2992
      %v2994 = vmul.f32 %v2991, %v2993
      %v2995 = vadd.f32 %v2991, %v2994
      %vm2996 = vweird.f32 %v2990
      %vm2997 = vweird.f32 %v2991
      %vm2998 = vmor %vm2996, %vm2997
      %v2999 = vsel %vm2998, %v2991, %v2995
      %v3000 = vand.u32 2147483647, %v2990
      %vm3001 = vcmp.eq.f32.partialorder %v3000, 8.507059e+37
      %v3002 = vand.u32 %v2990, 2147483648
      %v3003 = vor.u32 1.1754944e-38, %v3002
      %v3004 = vsel %vm3001, %v3003, %v2999
      %v3005 = vmul.f32 1.0, %v3004
      %v3006 = vxor.u32 %v2984, 2147483648
      %v3007 = vmul.f32 %v3006, 1.442695
      %v3008 = vpow.pop %v3007
      %v3009 = vadd.f32 %v3008, 1.0
      %v3010 = vrcp.pop %v3009
      %v3011 = vmul.f32 %v3009, %v3010
      %v3012 = vsub.f32 1.0, %v3011
      %v3013 = vmul.f32 %v3010, %v3012
      %v3014 = vadd.f32 %v3010, %v3013
      %vm3015 = vweird.f32 %v3009
      %vm3016 = vweird.f32 %v3010
      %vm3017 = vmor %vm3015, %vm3016
      %v3018 = vsel %vm3017, %v3010, %v3014
      %v3019 = vand.u32 2147483647, %v3009
      %vm3020 = vcmp.eq.f32.partialorder %v3019, 8.507059e+37
      %v3021 = vand.u32 %v3009, 2147483648
      %v3022 = vor.u32 1.1754944e-38, %v3021
      %v3023 = vsel %vm3020, %v3022, %v3018
      %v3024 = vmul.f32 1.0, %v3023
      %v3025 = vtanh.pop %v2985
      %v3026 = vxor.u32 %v2986, 2147483648
      %v3027 = vmul.f32 %v3026, 1.442695
      %v3028 = vpow.pop %v3027
      %v3029 = vadd.f32 %v3028, 1.0
      %v3030 = vrcp.pop %v3029
      %v3031 = vmul.f32 %v3029, %v3030
      %v3032 = vsub.f32 1.0, %v3031
      %v3033 = vmul.f32 %v3030, %v3032
      %v3034 = vadd.f32 %v3030, %v3033
      %vm3035 = vweird.f32 %v3029
      %vm3036 = vweird.f32 %v3030
      %vm3037 = vmor %vm3035, %vm3036
      %v3038 = vsel %vm3037, %v3030, %v3034
      %v3039 = vand.u32 2147483647, %v3029
      %vm3040 = vcmp.eq.f32.partialorder %v3039, 8.507059e+37
      %v3041 = vand.u32 %v3029, 2147483648
      %v3042 = vor.u32 1.1754944e-38, %v3041
      %v3043 = vsel %vm3040, %v3042, %v3038
      %v3044 = vmul.f32 1.0, %v3043
      %v3045 = vmul.f32 %v3024, %v2922
      %v3046 = vmul.f32 %v3005, %v3025
      %v3047 = vadd.f32 %v3045, %v3046
      %v3048 = vtanh.pop %v3047
      %v3049 = vmul.f32 %v3044, %v3048
      %v3050 = vpack.c.bf16 %v3049, %v3049
      %3051 = vst [vmem:[%s1502 + $0x4] sm:$0xf] %v3050
      %v3052 = vld [vmem:[%s1506] sm:$0xff]
      %v3053 = vld [vmem:[%s1506 + $0x8] sm:$0xff]
      %v3054 = vld [vmem:[%s1506 + $0x10] sm:$0xff]
      %v3055 = vld [vmem:[%s1506 + $0x18] sm:$0xff]
      %3056 = vmatpush.bf16.msra.mxu0 %v2145
      %3057 = vmatpush.bf16.msra.mxu0 %v2141
      %3058 = vmatpush.bf16.msra.mxu0 %v2137
      %3059 = vmatpush.bf16.msra.mxu0 %v2133
      %3060 = vmatpush.bf16.msra.mxu0 %v2129
      %3061 = vmatpush.bf16.msra.mxu0 %v2125
      %3062 = vmatpush.bf16.msra.mxu0 %v2121
      %3063 = vmatpush.bf16.msra.mxu0 %v2117
      %3064 = vmatmul.bf16.gmra.mxu0 %v3050
      %v3065 = vpop.f32.mrf.mxu0
      %v3066 = vadd.f32 0.0, %v3065
      %v3067 = vpop.f32.mrf.mxu0
      %3068 = vdwg.mxu0
      %3069 = vmatpush.bf16.msra.mxu0 %v2146
      %3070 = vmatpush.bf16.msra.mxu0 %v2142
      %3071 = vmatpush.bf16.msra.mxu0 %v2138
      %3072 = vmatpush.bf16.msra.mxu0 %v2134
      %3073 = vmatpush.bf16.msra.mxu0 %v2130
      %3074 = vmatpush.bf16.msra.mxu0 %v2126
      %3075 = vmatpush.bf16.msra.mxu0 %v2122
      %3076 = vmatpush.bf16.msra.mxu0 %v2118
      %3077 = vmatmul.bf16.gmra.mxu0 %v3050
      %v3078 = vpop.f32.mrf.mxu0
      %v3079 = vadd.f32 0.0, %v3078
      %v3080 = vpop.f32.mrf.mxu0
      %3081 = vdwg.mxu0
      %3082 = vmatpush.bf16.msra.mxu0 %v2147
      %3083 = vmatpush.bf16.msra.mxu0 %v2143
      %3084 = vmatpush.bf16.msra.mxu0 %v2139
      %3085 = vmatpush.bf16.msra.mxu0 %v2135
      %3086 = vmatpush.bf16.msra.mxu0 %v2131
      %3087 = vmatpush.bf16.msra.mxu0 %v2127
      %3088 = vmatpush.bf16.msra.mxu0 %v2123
      %3089 = vmatpush.bf16.msra.mxu0 %v2119
      %3090 = vmatmul.bf16.gmra.mxu0 %v3050
      %v3091 = vpop.f32.mrf.mxu0
      %v3092 = vadd.f32 0.0, %v3091
      %v3093 = vpop.f32.mrf.mxu0
      %3094 = vdwg.mxu0
      %3095 = vmatpush.bf16.msra.mxu0 %v2148
      %3096 = vmatpush.bf16.msra.mxu0 %v2144
      %3097 = vmatpush.bf16.msra.mxu0 %v2140
      %3098 = vmatpush.bf16.msra.mxu0 %v2136
      %3099 = vmatpush.bf16.msra.mxu0 %v2132
      %3100 = vmatpush.bf16.msra.mxu0 %v2128
      %3101 = vmatpush.bf16.msra.mxu0 %v2124
      %3102 = vmatpush.bf16.msra.mxu0 %v2120
      %3103 = vmatmul.bf16.gmra.mxu0 %v3050
      %v3104 = vpop.f32.mrf.mxu0
      %v3105 = vadd.f32 0.0, %v3104
      %v3106 = vpop.f32.mrf.mxu0
      %3107 = vdwg.mxu0
      %v3108 = vadd.f32 %v3052, %v3066
      %v3109 = vadd.f32 %v3053, %v3079
      %v3110 = vadd.f32 %v3054, %v3092
      %v3111 = vadd.f32 %v3055, %v3105
      %v3112 = vxor.u32 %v3108, 2147483648
      %v3113 = vmul.f32 %v3112, 1.442695
      %v3114 = vpow.pop %v3113
      %v3115 = vadd.f32 %v3114, 1.0
      %v3116 = vrcp.pop %v3115
      %v3117 = vmul.f32 %v3115, %v3116
      %v3118 = vsub.f32 1.0, %v3117
      %v3119 = vmul.f32 %v3116, %v3118
      %v3120 = vadd.f32 %v3116, %v3119
      %vm3121 = vweird.f32 %v3115
      %vm3122 = vweird.f32 %v3116
      %vm3123 = vmor %vm3121, %vm3122
      %v3124 = vsel %vm3123, %v3116, %v3120
      %v3125 = vand.u32 2147483647, %v3115
      %vm3126 = vcmp.eq.f32.partialorder %v3125, 8.507059e+37
      %v3127 = vand.u32 %v3115, 2147483648
      %v3128 = vor.u32 1.1754944e-38, %v3127
      %v3129 = vsel %vm3126, %v3128, %v3124
      %v3130 = vmul.f32 1.0, %v3129
      %v3131 = vxor.u32 %v3109, 2147483648
      %v3132 = vmul.f32 %v3131, 1.442695
      %v3133 = vpow.pop %v3132
      %v3134 = vadd.f32 %v3133, 1.0
      %v3135 = vrcp.pop %v3134
      %v3136 = vmul.f32 %v3134, %v3135
      %v3137 = vsub.f32 1.0, %v3136
      %v3138 = vmul.f32 %v3135, %v3137
      %v3139 = vadd.f32 %v3135, %v3138
      %vm3140 = vweird.f32 %v3134
      %vm3141 = vweird.f32 %v3135
      %vm3142 = vmor %vm3140, %vm3141
      %v3143 = vsel %vm3142, %v3135, %v3139
      %v3144 = vand.u32 2147483647, %v3134
      %vm3145 = vcmp.eq.f32.partialorder %v3144, 8.507059e+37
      %v3146 = vand.u32 %v3134, 2147483648
      %v3147 = vor.u32 1.1754944e-38, %v3146
      %v3148 = vsel %vm3145, %v3147, %v3143
      %v3149 = vmul.f32 1.0, %v3148
      %v3150 = vtanh.pop %v3110
      %v3151 = vxor.u32 %v3111, 2147483648
      %v3152 = vmul.f32 %v3151, 1.442695
      %v3153 = vpow.pop %v3152
      %v3154 = vadd.f32 %v3153, 1.0
      %v3155 = vrcp.pop %v3154
      %v3156 = vmul.f32 %v3154, %v3155
      %v3157 = vsub.f32 1.0, %v3156
      %v3158 = vmul.f32 %v3155, %v3157
      %v3159 = vadd.f32 %v3155, %v3158
      %vm3160 = vweird.f32 %v3154
      %vm3161 = vweird.f32 %v3155
      %vm3162 = vmor %vm3160, %vm3161
      %v3163 = vsel %vm3162, %v3155, %v3159
      %v3164 = vand.u32 2147483647, %v3154
      %vm3165 = vcmp.eq.f32.partialorder %v3164, 8.507059e+37
      %v3166 = vand.u32 %v3154, 2147483648
      %v3167 = vor.u32 1.1754944e-38, %v3166
      %v3168 = vsel %vm3165, %v3167, %v3163
      %v3169 = vmul.f32 1.0, %v3168
      %v3170 = vmul.f32 %v3149, %v3047
      %v3171 = vmul.f32 %v3130, %v3150
      %v3172 = vadd.f32 %v3170, %v3171
      %v3173 = vtanh.pop %v3172
      %v3174 = vmul.f32 %v3169, %v3173
      %v3175 = vpack.c.bf16 %v3174, %v3174
      %3176 = vst [vmem:[%s1633 + $0x4] sm:$0xf] %v3175
    $region61: #{tpu_custom_call.1} parent=1 // pred_fallthru
      _
    %v3177 = vld [vmem:[#allocation3] sm:$0xff]
    %v3178 = vld [vmem:[#allocation3 + $0x8] sm:$0xff]
    %v3179 = vld [vmem:[#allocation3 + $0x10] sm:$0xff]
    %v3180 = vld [vmem:[#allocation3 + $0x18] sm:$0xff]
    %v3181 = vld [vmem:[#allocation3 + $0x20] sm:$0xff]
    %v3182 = vld [vmem:[#allocation3 + $0x28] sm:$0xff]
    %v3183 = vld [vmem:[#allocation3 + $0x30] sm:$0xff]
    %v3184 = vld [vmem:[#allocation3 + $0x38] sm:$0xff]
    %v3185 = vld [vmem:[#allocation12] sm:$0xff]
    %v3186 = vld [vmem:[#allocation12 + $0x8] sm:$0xff]
    %v3187 = vld [vmem:[#allocation12 + $0x10] sm:$0xff]
    %v3188 = vld [vmem:[#allocation12 + $0x18] sm:$0xff]
    %v3189 = vld [vmem:[#allocation12 + $0x20] sm:$0xff]
    %v3190 = vld [vmem:[#allocation12 + $0x28] sm:$0xff]
    %v3191 = vld [vmem:[#allocation12 + $0x30] sm:$0xff]
    %v3192 = vld [vmem:[#allocation12 + $0x38] sm:$0xff]
    %v3193 = vld [vmem:[#allocation12 + $0x40] sm:$0xff]
    %v3194 = vld [vmem:[#allocation12 + $0x48] sm:$0xff]
    %v3195 = vld [vmem:[#allocation12 + $0x50] sm:$0xff]
    %v3196 = vld [vmem:[#allocation12 + $0x58] sm:$0xff]
    %v3197 = vld [vmem:[#allocation12 + $0x60] sm:$0xff]
    %v3198 = vld [vmem:[#allocation12 + $0x68] sm:$0xff]
    %v3199 = vld [vmem:[#allocation12 + $0x70] sm:$0xff]
    %v3200 = vld [vmem:[#allocation12 + $0x78] sm:$0xff]
    %v3201 = vld [vmem:[#allocation12 + $0x80] sm:$0xff]
    %v3202 = vld [vmem:[#allocation12 + $0x88] sm:$0xff]
    %v3203 = vld [vmem:[#allocation12 + $0x90] sm:$0xff]
    %v3204 = vld [vmem:[#allocation12 + $0x98] sm:$0xff]
    %v3205 = vld [vmem:[#allocation12 + $0xa0] sm:$0xff]
    %v3206 = vld [vmem:[#allocation12 + $0xa8] sm:$0xff]
    %v3207 = vld [vmem:[#allocation12 + $0xb0] sm:$0xff]
    %v3208 = vld [vmem:[#allocation12 + $0xb8] sm:$0xff]
    %v3209 = vld [vmem:[#allocation12 + $0xc0] sm:$0xff]
    %v3210 = vld [vmem:[#allocation12 + $0xc8] sm:$0xff]
    %v3211 = vld [vmem:[#allocation12 + $0xd0] sm:$0xff]
    %v3212 = vld [vmem:[#allocation12 + $0xd8] sm:$0xff]
    %v3213 = vld [vmem:[#allocation12 + $0xe0] sm:$0xff]
    %v3214 = vld [vmem:[#allocation12 + $0xe8] sm:$0xff]
    %v3215 = vld [vmem:[#allocation12 + $0xf0] sm:$0xff]
    %v3216 = vld [vmem:[#allocation12 + $0xf8] sm:$0xff]
    %v3217 = vld [vmem:[%s8] sm:$0x3]
    %v3219 = vperm.slane %v3217, 0
    %v3220 = vperm.slane %v3217, 1
    %v3231 = vunpack.c.l.b16 %v3177
    %v3232 = vunpack.c.h.b16 %v3177
    %v3233 = vunpack.c.l.b16 %v3178
    %v3234 = vunpack.c.h.b16 %v3178
    %v3235 = vunpack.c.l.b16 %v3179
    %v3236 = vunpack.c.h.b16 %v3179
    %v3237 = vunpack.c.l.b16 %v3180
    %v3238 = vunpack.c.h.b16 %v3180
    %v3239 = vunpack.c.l.b16 %v3181
    %v3240 = vunpack.c.h.b16 %v3181
    %v3241 = vunpack.c.l.b16 %v3182
    %v3242 = vunpack.c.h.b16 %v3182
    %v3243 = vunpack.c.l.b16 %v3183
    %v3244 = vunpack.c.h.b16 %v3183
    %v3245 = vunpack.c.l.b16 %v3184
    %v3246 = vunpack.c.h.b16 %v3184
    %v3247 = vpack.c.b16 %v3233, %v3231
    %v3248 = vpack.c.b16 %v3234, %v3232
    %v3249 = vpack.c.b16 %v3237, %v3235
    %v3250 = vpack.c.b16 %v3238, %v3236
    %v3251 = vpack.c.b16 %v3241, %v3239
    %v3252 = vpack.c.b16 %v3242, %v3240
    %v3253 = vpack.c.b16 %v3245, %v3243
    %v3254 = vpack.c.b16 %v3246, %v3244
    %v3295 = vunpack.c.l.b16 %v3185
    %v3296 = vunpack.c.h.b16 %v3185
    %v3297 = vunpack.c.l.b16 %v3186
    %v3298 = vunpack.c.h.b16 %v3186
    %v3299 = vunpack.c.l.b16 %v3187
    %v3300 = vunpack.c.h.b16 %v3187
    %v3301 = vunpack.c.l.b16 %v3188
    %v3302 = vunpack.c.h.b16 %v3188
    %v3303 = vunpack.c.l.b16 %v3189
    %v3304 = vunpack.c.h.b16 %v3189
    %v3305 = vunpack.c.l.b16 %v3190
    %v3306 = vunpack.c.h.b16 %v3190
    %v3307 = vunpack.c.l.b16 %v3191
    %v3308 = vunpack.c.h.b16 %v3191
    %v3309 = vunpack.c.l.b16 %v3192
    %v3310 = vunpack.c.h.b16 %v3192
    %v3311 = vunpack.c.l.b16 %v3193
    %v3312 = vunpack.c.h.b16 %v3193
    %v3313 = vunpack.c.l.b16 %v3194
    %v3314 = vunpack.c.h.b16 %v3194
    %v3315 = vunpack.c.l.b16 %v3195
    %v3316 = vunpack.c.h.b16 %v3195
    %v3317 = vunpack.c.l.b16 %v3196
    %v3318 = vunpack.c.h.b16 %v3196
    %v3319 = vunpack.c.l.b16 %v3197
    %v3320 = vunpack.c.h.b16 %v3197
    %v3321 = vunpack.c.l.b16 %v3198
    %v3322 = vunpack.c.h.b16 %v3198
    %v3323 = vunpack.c.l.b16 %v3199
    %v3324 = vunpack.c.h.b16 %v3199
    %v3325 = vunpack.c.l.b16 %v3200
    %v3326 = vunpack.c.h.b16 %v3200
    %v3327 = vunpack.c.l.b16 %v3201
    %v3328 = vunpack.c.h.b16 %v3201
    %v3329 = vunpack.c.l.b16 %v3202
    %v3330 = vunpack.c.h.b16 %v3202
    %v3331 = vunpack.c.l.b16 %v3203
    %v3332 = vunpack.c.h.b16 %v3203
    %v3333 = vunpack.c.l.b16 %v3204
    %v3334 = vunpack.c.h.b16 %v3204
    %v3335 = vunpack.c.l.b16 %v3205
    %v3336 = vunpack.c.h.b16 %v3205
    %v3337 = vunpack.c.l.b16 %v3206
    %v3338 = vunpack.c.h.b16 %v3206
    %v3339 = vunpack.c.l.b16 %v3207
    %v3340 = vunpack.c.h.b16 %v3207
    %v3341 = vunpack.c.l.b16 %v3208
    %v3342 = vunpack.c.h.b16 %v3208
    %v3343 = vunpack.c.l.b16 %v3209
    %v3344 = vunpack.c.h.b16 %v3209
    %v3345 = vunpack.c.l.b16 %v3210
    %v3346 = vunpack.c.h.b16 %v3210
    %v3347 = vunpack.c.l.b16 %v3211
    %v3348 = vunpack.c.h.b16 %v3211
    %v3349 = vunpack.c.l.b16 %v3212
    %v3350 = vunpack.c.h.b16 %v3212
    %v3351 = vunpack.c.l.b16 %v3213
    %v3352 = vunpack.c.h.b16 %v3213
    %v3353 = vunpack.c.l.b16 %v3214
    %v3354 = vunpack.c.h.b16 %v3214
    %v3355 = vunpack.c.l.b16 %v3215
    %v3356 = vunpack.c.h.b16 %v3215
    %v3357 = vunpack.c.l.b16 %v3216
    %v3358 = vunpack.c.h.b16 %v3216
    %v3359 = vpack.c.b16 %v3297, %v3295
    %v3360 = vpack.c.b16 %v3298, %v3296
    %v3361 = vpack.c.b16 %v3301, %v3299
    %v3362 = vpack.c.b16 %v3302, %v3300
    %v3363 = vpack.c.b16 %v3305, %v3303
    %v3364 = vpack.c.b16 %v3306, %v3304
    %v3365 = vpack.c.b16 %v3309, %v3307
    %v3366 = vpack.c.b16 %v3310, %v3308
    %v3367 = vpack.c.b16 %v3313, %v3311
    %v3368 = vpack.c.b16 %v3314, %v3312
    %v3369 = vpack.c.b16 %v3317, %v3315
    %v3370 = vpack.c.b16 %v3318, %v3316
    %v3371 = vpack.c.b16 %v3321, %v3319
    %v3372 = vpack.c.b16 %v3322, %v3320
    %v3373 = vpack.c.b16 %v3325, %v3323
    %v3374 = vpack.c.b16 %v3326, %v3324
    %v3375 = vpack.c.b16 %v3329, %v3327
    %v3376 = vpack.c.b16 %v3330, %v3328
    %v3377 = vpack.c.b16 %v3333, %v3331
    %v3378 = vpack.c.b16 %v3334, %v3332
    %v3379 = vpack.c.b16 %v3337, %v3335
    %v3380 = vpack.c.b16 %v3338, %v3336
    %v3381 = vpack.c.b16 %v3341, %v3339
    %v3382 = vpack.c.b16 %v3342, %v3340
    %v3383 = vpack.c.b16 %v3345, %v3343
    %v3384 = vpack.c.b16 %v3346, %v3344
    %v3385 = vpack.c.b16 %v3349, %v3347
    %v3386 = vpack.c.b16 %v3350, %v3348
    %v3387 = vpack.c.b16 %v3353, %v3351
    %v3388 = vpack.c.b16 %v3354, %v3352
    %v3389 = vpack.c.b16 %v3357, %v3355
    %v3390 = vpack.c.b16 %v3358, %v3356
    %3423 = vmatpush.bf16.msra.mxu0 %v3373
    %3424 = vmatpush.bf16.msra.mxu0 %v3371
    %3425 = vmatpush.bf16.msra.mxu0 %v3369
    %3426 = vmatpush.bf16.msra.mxu0 %v3367
    %3427 = vmatpush.bf16.msra.mxu0 %v3365
    %3428 = vmatpush.bf16.msra.mxu0 %v3363
    %3429 = vmatpush.bf16.msra.mxu0 %v3361
    %3430 = vmatpush.bf16.msra.mxu0 %v3359
    %3431 = vmatmul.bf16.gmra.mxu0 %v3247
    %v3432 = vpop.f32.mrf.mxu0
    %v3433 = vadd.f32 %v3219, %v3432
    %v3434 = vpop.f32.mrf.mxu0
    %v3435 = vadd.f32 %v3219, %v3434
    %3436 = vmatmul.bf16.gmra.mxu0 %v3249
    %v3437 = vpop.f32.mrf.mxu0
    %v3438 = vadd.f32 %v3219, %v3437
    %v3439 = vpop.f32.mrf.mxu0
    %v3440 = vadd.f32 %v3219, %v3439
    %3441 = vmatmul.bf16.gmra.mxu0 %v3251
    %v3442 = vpop.f32.mrf.mxu0
    %v3443 = vadd.f32 %v3219, %v3442
    %v3444 = vpop.f32.mrf.mxu0
    %v3445 = vadd.f32 %v3219, %v3444
    %3446 = vmatmul.bf16.gmra.mxu0 %v3253
    %v3447 = vpop.f32.mrf.mxu0
    %v3448 = vadd.f32 %v3219, %v3447
    %v3449 = vpop.f32.mrf.mxu0
    %v3450 = vadd.f32 %v3219, %v3449
    %3451 = vdwg.mxu0
    %3452 = vmatpush.bf16.msra.mxu0 %v3389
    %3453 = vmatpush.bf16.msra.mxu0 %v3387
    %3454 = vmatpush.bf16.msra.mxu0 %v3385
    %3455 = vmatpush.bf16.msra.mxu0 %v3383
    %3456 = vmatpush.bf16.msra.mxu0 %v3381
    %3457 = vmatpush.bf16.msra.mxu0 %v3379
    %3458 = vmatpush.bf16.msra.mxu0 %v3377
    %3459 = vmatpush.bf16.msra.mxu0 %v3375
    %3460 = vmatmul.bf16.gmra.mxu0 %v3248
    %v3461 = vpop.f32.mrf.mxu0
    %v3462 = vadd.f32 %v3433, %v3461
    %v3463 = vpop.f32.mrf.mxu0
    %v3464 = vadd.f32 %v3435, %v3463
    %3465 = vmatmul.bf16.gmra.mxu0 %v3250
    %v3466 = vpop.f32.mrf.mxu0
    %v3467 = vadd.f32 %v3438, %v3466
    %v3468 = vpop.f32.mrf.mxu0
    %v3469 = vadd.f32 %v3440, %v3468
    %3470 = vmatmul.bf16.gmra.mxu0 %v3252
    %v3471 = vpop.f32.mrf.mxu0
    %v3472 = vadd.f32 %v3443, %v3471
    %v3473 = vpop.f32.mrf.mxu0
    %v3474 = vadd.f32 %v3445, %v3473
    %3475 = vmatmul.bf16.gmra.mxu0 %v3254
    %v3476 = vpop.f32.mrf.mxu0
    %v3477 = vadd.f32 %v3448, %v3476
    %v3478 = vpop.f32.mrf.mxu0
    %v3479 = vadd.f32 %v3450, %v3478
    %3480 = vdwg.mxu0
    %3481 = vmatpush.bf16.msra.mxu0 %v3374
    %3482 = vmatpush.bf16.msra.mxu0 %v3372
    %3483 = vmatpush.bf16.msra.mxu0 %v3370
    %3484 = vmatpush.bf16.msra.mxu0 %v3368
    %3485 = vmatpush.bf16.msra.mxu0 %v3366
    %3486 = vmatpush.bf16.msra.mxu0 %v3364
    %3487 = vmatpush.bf16.msra.mxu0 %v3362
    %3488 = vmatpush.bf16.msra.mxu0 %v3360
    %3489 = vmatmul.bf16.gmra.mxu0 %v3247
    %v3490 = vpop.f32.mrf.mxu0
    %v3491 = vadd.f32 %v3220, %v3490
    %v3492 = vpop.f32.mrf.mxu0
    %v3493 = vadd.f32 %v3220, %v3492
    %3494 = vmatmul.bf16.gmra.mxu0 %v3249
    %v3495 = vpop.f32.mrf.mxu0
    %v3496 = vadd.f32 %v3220, %v3495
    %v3497 = vpop.f32.mrf.mxu0
    %v3498 = vadd.f32 %v3220, %v3497
    %3499 = vmatmul.bf16.gmra.mxu0 %v3251
    %v3500 = vpop.f32.mrf.mxu0
    %v3501 = vadd.f32 %v3220, %v3500
    %v3502 = vpop.f32.mrf.mxu0
    %v3503 = vadd.f32 %v3220, %v3502
    %3504 = vmatmul.bf16.gmra.mxu0 %v3253
    %v3505 = vpop.f32.mrf.mxu0
    %v3506 = vadd.f32 %v3220, %v3505
    %v3507 = vpop.f32.mrf.mxu0
    %v3508 = vadd.f32 %v3220, %v3507
    %3509 = vdwg.mxu0
    %3510 = vmatpush.bf16.msra.mxu0 %v3390
    %3511 = vmatpush.bf16.msra.mxu0 %v3388
    %3512 = vmatpush.bf16.msra.mxu0 %v3386
    %3513 = vmatpush.bf16.msra.mxu0 %v3384
    %3514 = vmatpush.bf16.msra.mxu0 %v3382
    %3515 = vmatpush.bf16.msra.mxu0 %v3380
    %3516 = vmatpush.bf16.msra.mxu0 %v3378
    %3517 = vmatpush.bf16.msra.mxu0 %v3376
    %3518 = vmatmul.bf16.gmra.mxu0 %v3248
    %v3519 = vpop.f32.mrf.mxu0
    %v3520 = vadd.f32 %v3491, %v3519
    %v3521 = vpop.f32.mrf.mxu0
    %v3522 = vadd.f32 %v3493, %v3521
    %3523 = vmatmul.bf16.gmra.mxu0 %v3250
    %v3524 = vpop.f32.mrf.mxu0
    %v3525 = vadd.f32 %v3496, %v3524
    %v3526 = vpop.f32.mrf.mxu0
    %v3527 = vadd.f32 %v3498, %v3526
    %3528 = vmatmul.bf16.gmra.mxu0 %v3252
    %v3529 = vpop.f32.mrf.mxu0
    %v3530 = vadd.f32 %v3501, %v3529
    %v3531 = vpop.f32.mrf.mxu0
    %v3532 = vadd.f32 %v3503, %v3531
    %3533 = vmatmul.bf16.gmra.mxu0 %v3254
    %v3534 = vpop.f32.mrf.mxu0
    %v3535 = vadd.f32 %v3506, %v3534
    %v3536 = vpop.f32.mrf.mxu0
    %v3537 = vadd.f32 %v3508, %v3536
    %3538 = vdwg.mxu0
    %3539 = vst [vmem:[#allocation13] sm:$0xff] %v3462
    %3540 = vst [vmem:[#allocation13 + $0x8] sm:$0xff] %v3520
    %3541 = vst [vmem:[#allocation13 + $0x10] sm:$0xff] %v3464
    %3542 = vst [vmem:[#allocation13 + $0x18] sm:$0xff] %v3522
    %3543 = vst [vmem:[#allocation13 + $0x20] sm:$0xff] %v3467
    %3544 = vst [vmem:[#allocation13 + $0x28] sm:$0xff] %v3525
    %3545 = vst [vmem:[#allocation13 + $0x30] sm:$0xff] %v3469
    %3546 = vst [vmem:[#allocation13 + $0x38] sm:$0xff] %v3527
    %3547 = vst [vmem:[#allocation13 + $0x40] sm:$0xff] %v3472
    %3548 = vst [vmem:[#allocation13 + $0x48] sm:$0xff] %v3530
    %3549 = vst [vmem:[#allocation13 + $0x50] sm:$0xff] %v3474
    %3550 = vst [vmem:[#allocation13 + $0x58] sm:$0xff] %v3532
    %3551 = vst [vmem:[#allocation13 + $0x60] sm:$0xff] %v3477
    %3552 = vst [vmem:[#allocation13 + $0x68] sm:$0xff] %v3535
    %3553 = vst [vmem:[#allocation13 + $0x70] sm:$0xff] %v3479
    %3554 = vst [vmem:[#allocation13 + $0x78] sm:$0xff] %v3537
    // Predicated region
    $region62: #{tpu_custom_call.1} parent=1 // pred_check
      _
    $region63: #{tpu_custom_call.1} parent=1 // pred_check_branch
      %3556 = sbr.rel (0) target = $region65
    $region64: #{tpu_custom_call.1} parent=1 // pred_region
      %3558 = vsyncadd [#allocation6], 0
      %s3559 = sshll.u32 [#allocation13], 4
      %s3560 = int_to_ptr.vmem [resolvable:$true] %s3559
      %s3561 = sshll.u32 %s9, 4
      %s3562 = int_to_ptr.hbm [resolvable:$true] %s3561
      %3567 = dma.vmem_to_hbm [thread:$0]  %s3560, 2048, %s3562, [#allocation6], 256, 256, 16
    $region65: #{tpu_custom_call.1} parent=1 // pred_fallthru
      _
    // Predicated region
    $region66: #{tpu_custom_call.1} parent=1 // pred_check
      _
    $region67: #{tpu_custom_call.1} parent=1 // pred_check_branch
      %3569 = sbr.rel (0) target = $region69
    $region68: #{tpu_custom_call.1} parent=1 // pred_region
      %3571 = dma.done [#allocation6], 2048
    $region69: #{tpu_custom_call.1} parent=1 // pred_fallthru
      _
    %3572 = vsyncpa [#allocation5], 1
    %3573 = vsyncpa [#allocation8], 1
    %3574 = vsyncpa [#allocation11], 1
    %3575 = vsyncpa [#allocation6], 1

// kernel: tpu_custom_call.1
$region0: #{tpu_custom_call.1}
  #allocation0 [shape = 'u32[]', space=smem, size = 0x4, offset = 0x4, fixed_abs, tag = 'smem constant byte address 0x4 - core index']
  #allocation1 [shape = 'u32[72,128]{1,0:T(1,128)}', space=vmem, size = 0x9000, scoped, tag = 'internal scratch']
  #allocation2 [shape = 'f32[64,512]{1,0:T(8,128)}', space=vmem, size = 0x20000, scoped, tag = 'scratch operand']
  #allocation3 [shape = 'bf16[64,256]{1,0:T(8,128)(2,1)}', space=vmem, size = 0x8000, scoped, tag = 'scratch operand']
  %s0 = inlined_call_operand.vmem [shape: bf16[64,32], index: 0, kind: input, shape index: {}]
  %s1 = inlined_call_operand.hbm [shape: bf16[32,512], index: 1, kind: input, shape index: {}]
  %s2 = inlined_call_operand.hbm [shape: bf16[128,512], index: 2, kind: input, shape index: {}]
  %s3 = inlined_call_operand.vmem [shape: f32[1,512], index: 3, kind: input, shape index: {}]
  %s4 = inlined_call_operand.hbm [shape: bf16[128,512], index: 4, kind: input, shape index: {}]
  %s5 = inlined_call_operand.hbm [shape: bf16[128,512], index: 5, kind: input, shape index: {}]
  %s6 = inlined_call_operand.vmem [shape: f32[1,512], index: 6, kind: input, shape index: {}]
  %s7 = inlined_call_operand.hbm [shape: bf16[256,256], index: 7, kind: input, shape index: {}]
  %s8 = inlined_call_operand.vmem [shape: f32[1,256], index: 8, kind: input, shape index: {}]
  %s9 = inlined_call_operand.hbm [shape: f32[64,256], index: 9, kind: output, shape index: {}]
  %s10 = sld [smem:[#allocation0]]
  $region70: #{tpu_custom_call.1} parent=0
    _
  %s12 = ssub.s32 1, %s10
  %s13 = scalar_select 0, %s12, %s10
  $region1: #{tpu_custom_call.1} parent=0
    #allocation4 [shape = 'u8[32768]{0}', space=vmem, size = 0x8000, scoped, tag = 'input window, operand 1, single buffered']
    #allocation5 [shape = 's32[1]{0}', space=sflag, size = 0x4, scoped, tag = 'scoped memory for tpu_custom_call.1']
    #allocation6 [shape = 's32[1]{0}', space=sflag, size = 0x4, scoped, tag = 'scoped memory for tpu_custom_call.1']
    #allocation7 [shape = 'u8[131072]{0}', space=vmem, size = 0x20000, scoped, tag = 'input window, operand 2, single buffered']
    #allocation8 [shape = 's32[1]{0}', space=sflag, size = 0x4, scoped, tag = 'scoped memory for tpu_custom_call.1']
    #allocation9 [shape = 'u8[131072]{0}', space=vmem, size = 0x20000, scoped, tag = 'input window, operand 4, single buffered']
    #allocation10 [shape = 'u8[131072]{0}', space=vmem, size = 0x20000, scoped, tag = 'input window, operand 5, single buffered']
    #allocation11 [shape = 's32[1]{0}', space=sflag, size = 0x4, scoped, tag = 'scoped memory for tpu_custom_call.1']
    #allocation12 [shape = 'u8[131072]{0}', space=vmem, size = 0x20000, scoped, tag = 'input window, operand 7, single buffered']
    #allocation13 [shape = 'u8[65536]{0}', space=vmem, size = 0x10000, scoped, tag = 'output window, operand 0, single buffered']
    %14 = vsyncpa [#allocation5], 0
    %15 = vsyncpa [#allocation8], 0
    %16 = vsyncpa [#allocation11], 0
    %17 = vsyncpa [#allocation6], 0
    // Predicated region
    $region2: #{tpu_custom_call.1} parent=1 // pred_check
      _
    $region3: #{tpu_custom_call.1} parent=1 // pred_check_branch
      %19 = sbr.rel (0) target = $region5
    $region4: #{tpu_custom_call.1} parent=1 // pred_region
      _
    $region5: #{tpu_custom_call.1} parent=1 // pred_fallthru
      _
    // Predicated region
    $region6: #{tpu_custom_call.1} parent=1 // pred_check
      _
    $region7: #{tpu_custom_call.1} parent=1 // pred_check_branch
      %21 = sbr.rel (0) target = $region9
    $region8: #{tpu_custom_call.1} parent=1 // pred_region
      %23 = vsyncadd [#allocation5], 0
      %s24 = sshll.u32 %s1, 4
      %s25 = int_to_ptr.hbm [resolvable:$true] %s24
      %s26 = sshll.u32 [#allocation4], 4
      %s27 = int_to_ptr.vmem [resolvable:$true] %s26
      %32 = dma.hbm_to_vmem [thread:$0]  %s25, 1024, %s27, [#allocation5], 256, 256, 16
    $region9: #{tpu_custom_call.1} parent=1 // pred_fallthru
      _
    // Predicated region
    $region10: #{tpu_custom_call.1} parent=1 // pred_check
      _
    $region11: #{tpu_custom_call.1} parent=1 // pred_check_branch
      %34 = sbr.rel (0) target = $region13
    $region12: #{tpu_custom_call.1} parent=1 // pred_region
      %36 = vsyncadd [#allocation8], 0
      %s37 = sshll.u32 %s2, 4
      %s38 = int_to_ptr.hbm [resolvable:$true] %s37
      %s39 = sshll.u32 [#allocation7], 4
      %s40 = int_to_ptr.vmem [resolvable:$true] %s39
      %45 = dma.hbm_to_vmem [thread:$0]  %s38, 4096, %s40, [#allocation8], 256, 256, 16
    $region13: #{tpu_custom_call.1} parent=1 // pred_fallthru
      _
    // Predicated region
    $region14: #{tpu_custom_call.1} parent=1 // pred_check
      _
    $region15: #{tpu_custom_call.1} parent=1 // pred_check_branch
      %47 = sbr.rel (0) target = $region17
    $region16: #{tpu_custom_call.1} parent=1 // pred_region
      _
    $region17: #{tpu_custom_call.1} parent=1 // pred_fallthru
      _
    // Predicated region
    $region18: #{tpu_custom_call.1} parent=1 // pred_check
      _
    $region19: #{tpu_custom_call.1} parent=1 // pred_check_branch
      %49 = sbr.rel (0) target = $region21
    $region20: #{tpu_custom_call.1} parent=1 // pred_region
      %51 = vsyncadd [#allocation8], 0
      %s52 = sshll.u32 %s4, 4
      %s53 = int_to_ptr.hbm [resolvable:$true] %s52
      %s54 = sshll.u32 [#allocation9], 4
      %s55 = int_to_ptr.vmem [resolvable:$true] %s54
      %60 = dma.hbm_to_vmem [thread:$0]  %s53, 4096, %s55, [#allocation8], 256, 256, 16
    $region21: #{tpu_custom_call.1} parent=1 // pred_fallthru
      _
    // Predicated region
    $region22: #{tpu_custom_call.1} parent=1 // pred_check
      _
    $region23: #{tpu_custom_call.1} parent=1 // pred_check_branch
      %62 = sbr.rel (0) target = $region25
    $region24: #{tpu_custom_call.1} parent=1 // pred_region
      %64 = vsyncadd [#allocation11], 0
      %s65 = sshll.u32 %s5, 4
      %s66 = int_to_ptr.hbm [resolvable:$true] %s65
      %s67 = sshll.u32 [#allocation10], 4
      %s68 = int_to_ptr.vmem [resolvable:$true] %s67
      %73 = dma.hbm_to_vmem [thread:$0]  %s66, 4096, %s68, [#allocation11], 256, 256, 16
    $region25: #{tpu_custom_call.1} parent=1 // pred_fallthru
      _
    // Predicated region
    $region26: #{tpu_custom_call.1} parent=1 // pred_check
      _
    $region27: #{tpu_custom_call.1} parent=1 // pred_check_branch
      %75 = sbr.rel (0) target = $region29
    $region28: #{tpu_custom_call.1} parent=1 // pred_region
      _
    $region29: #{tpu_custom_call.1} parent=1 // pred_fallthru
      _
    // Predicated region
    $region30: #{tpu_custom_call.1} parent=1 // pred_check
      _
    $region31: #{tpu_custom_call.1} parent=1 // pred_check_branch
      %77 = sbr.rel (0) target = $region33
    $region32: #{tpu_custom_call.1} parent=1 // pred_region
      %79 = vsyncadd [#allocation11], 0
      %s80 = sshll.u32 %s7, 4
      %s81 = int_to_ptr.hbm [resolvable:$true] %s80
      %s82 = sshll.u32 [#allocation12], 4
      %s83 = int_to_ptr.vmem [resolvable:$true] %s82
      %88 = dma.hbm_to_vmem [thread:$0]  %s81, 4096, %s83, [#allocation11], 128, 128, 8
    $region33: #{tpu_custom_call.1} parent=1 // pred_fallthru
      _
    // Predicated region
    $region34: #{tpu_custom_call.1} parent=1 // pred_check
      _
    $region35: #{tpu_custom_call.1} parent=1 // pred_check_branch
      %90 = sbr.rel (0) target = $region37
    $region36: #{tpu_custom_call.1} parent=1 // pred_region
      _
    $region37: #{tpu_custom_call.1} parent=1 // pred_fallthru
      _
    // Predicated region
    $region38: #{tpu_custom_call.1} parent=1 // pred_check
      _
    $region39: #{tpu_custom_call.1} parent=1 // pred_check_branch
      %92 = sbr.rel (0) target = $region41
    $region40: #{tpu_custom_call.1} parent=1 // pred_region
      %94 = dma.done [#allocation5], 1024
    $region41: #{tpu_custom_call.1} parent=1 // pred_fallthru
      _
    // Predicated region
    $region42: #{tpu_custom_call.1} parent=1 // pred_check
      _
    $region43: #{tpu_custom_call.1} parent=1 // pred_check_branch
      %96 = sbr.rel (0) target = $region45
    $region44: #{tpu_custom_call.1} parent=1 // pred_region
      %98 = dma.done [#allocation8], 4096
    $region45: #{tpu_custom_call.1} parent=1 // pred_fallthru
      _
    // Predicated region
    $region46: #{tpu_custom_call.1} parent=1 // pred_check
      _
    $region47: #{tpu_custom_call.1} parent=1 // pred_check_branch
      %100 = sbr.rel (0) target = $region49
    $region48: #{tpu_custom_call.1} parent=1 // pred_region
      %102 = dma.done [#allocation8], 4096
    $region49: #{tpu_custom_call.1} parent=1 // pred_fallthru
      _
    // Predicated region
    $region50: #{tpu_custom_call.1} parent=1 // pred_check
      _
    $region51: #{tpu_custom_call.1} parent=1 // pred_check_branch
      %104 = sbr.rel (0) target = $region53
    $region52: #{tpu_custom_call.1} parent=1 // pred_region
      %106 = dma.done [#allocation11], 4096
    $region53: #{tpu_custom_call.1} parent=1 // pred_fallthru
      _
    // Predicated region
    $region54: #{tpu_custom_call.1} parent=1 // pred_check
      _
    $region55: #{tpu_custom_call.1} parent=1 // pred_check_branch
      %108 = sbr.rel (0) target = $region57
    $region56: #{tpu_custom_call.1} parent=1 // pred_region
      %110 = dma.done [#allocation11], 4096
    $region57: #{tpu_custom_call.1} parent=1 // pred_fallthru
      _
    %p112 = scmp.eq.s32.totalorder 0, 0
    // Predicated region
    $region58: #{tpu_custom_call.1} parent=1 // pred_check
      %p113 = pneg %p112
    $region59: #{tpu_custom_call.1} parent=1 // pred_check_branch
      %115 = sbr.rel (%p113) target = $region61
    $region60: #{tpu_custom_call.1} parent=1 // pred_region
      %v116 = vld [vmem:[%s0] sm:$0xf]
      %v117 = vld [vmem:[%s0 + $0x4] sm:$0xf]
      %v118 = vld [vmem:[%s0 + $0x8] sm:$0xf]
      %v119 = vld [vmem:[%s0 + $0xc] sm:$0xf]
      %v120 = vld [vmem:[%s0 + $0x10] sm:$0xf]
      %v121 = vld [vmem:[%s0 + $0x14] sm:$0xf]
      %v122 = vld [vmem:[%s0 + $0x18] sm:$0xf]
      %v123 = vld [vmem:[%s0 + $0x1c] sm:$0xf]
      %v124 = vld [vmem:[#allocation4] sm:$0xff]
      %v125 = vld [vmem:[#allocation4 + $0x8] sm:$0xff]
      %v126 = vld [vmem:[#allocation4 + $0x10] sm:$0xff]
      %v127 = vld [vmem:[#allocation4 + $0x18] sm:$0xff]
      %v128 = vld [vmem:[#allocation4 + $0x20] sm:$0xff]
      %v129 = vld [vmem:[#allocation4 + $0x28] sm:$0xff]
      %v130 = vld [vmem:[#allocation4 + $0x30] sm:$0xff]
      %v131 = vld [vmem:[#allocation4 + $0x38] sm:$0xff]
      %v132 = vld [vmem:[%s3] sm:$0xf]
      %v134 = vperm.slane %v132, 0
      %v135 = vperm.slane %v132, 1
      %v136 = vperm.slane %v132, 2
      %v137 = vperm.slane %v132, 3
      %v150 = vunpack.c.l.b16 %v116
      %v151 = vunpack.c.l.b16 %v117
      %v152 = vunpack.c.l.b16 %v118
      %v153 = vunpack.c.l.b16 %v119
      %v154 = vunpack.c.l.b16 %v120
      %v155 = vunpack.c.l.b16 %v121
      %v156 = vunpack.c.l.b16 %v122
      %v157 = vunpack.c.l.b16 %v123
      %v158 = vpack.c.b16 %v151, %v150
      %v159 = vpack.c.b16 %v153, %v152
      %v160 = vpack.c.b16 %v155, %v154
      %v161 = vpack.c.b16 %v157, %v156
      %v170 = vunpack.c.l.b16 %v124
      %v171 = vunpack.c.h.b16 %v124
      %v172 = vunpack.c.l.b16 %v125
      %v173 = vunpack.c.h.b16 %v125
      %v174 = vunpack.c.l.b16 %v126
      %v175 = vunpack.c.h.b16 %v126
      %v176 = vunpack.c.l.b16 %v127
      %v177 = vunpack.c.h.b16 %v127
      %v178 = vunpack.c.l.b16 %v128
      %v179 = vunpack.c.h.b16 %v128
      %v180 = vunpack.c.l.b16 %v129
      %v181 = vunpack.c.h.b16 %v129
      %v182 = vunpack.c.l.b16 %v130
      %v183 = vunpack.c.h.b16 %v130
      %v184 = vunpack.c.l.b16 %v131
      %v185 = vunpack.c.h.b16 %v131
      %v186 = vpack.c.b16 %v174, %v170
      %v187 = vpack.c.b16 %v175, %v171
      %v188 = vpack.c.b16 %v176, %v172
      %v189 = vpack.c.b16 %v177, %v173
      %v190 = vpack.c.b16 %v182, %v178
      %v191 = vpack.c.b16 %v183, %v179
      %v192 = vpack.c.b16 %v184, %v180
      %v193 = vpack.c.b16 %v185, %v181
      %vm202 = vcmask 261120
      %v204 = vsel %vm202, %v158, 0
      %v207 = vsel %vm202, %v159, 0
      %v210 = vsel %vm202, %v160, 0
      %v213 = vsel %vm202, %v161, 0
      %215 = vmatpush.bf16.msra.mxu0 0
      %216 = vmatpush.bf16.msra.mxu0 0
      %217 = vmatpush.bf16.msra.mxu0 0
      %218 = vmatpush.bf16.msra.mxu0 0
      %219 = vmatpush.bf16.msra.mxu0 0
      %220 = vmatpush.bf16.msra.mxu0 0
      %221 = vmatpush.bf16.msra.mxu0 %v190
      %222 = vmatpush.bf16.msra.mxu0 %v186
      %223 = vmatmul.bf16.gmra.mxu0 %v204
      %v224 = vpop.f32.mrf.mxu0
      %v225 = vadd.f32 %v134, %v224
      %v226 = vpop.f32.mrf.mxu0
      %v227 = vadd.f32 %v134, %v226
      %228 = vmatmul.bf16.gmra.mxu0 %v207
      %v229 = vpop.f32.mrf.mxu0
      %v230 = vadd.f32 %v134, %v229
      %v231 = vpop.f32.mrf.mxu0
      %v232 = vadd.f32 %v134, %v231
      %233 = vmatmul.bf16.gmra.mxu0 %v210
      %v234 = vpop.f32.mrf.mxu0
      %v235 = vadd.f32 %v134, %v234
      %v236 = vpop.f32.mrf.mxu0
      %v237 = vadd.f32 %v134, %v236
      %238 = vmatmul.bf16.gmra.mxu0 %v213
      %v239 = vpop.f32.mrf.mxu0
      %v240 = vadd.f32 %v134, %v239
      %v241 = vpop.f32.mrf.mxu0
      %v242 = vadd.f32 %v134, %v241
      %243 = vdwg.mxu0
      %244 = vmatpush.bf16.msra.mxu0 0
      %245 = vmatpush.bf16.msra.mxu0 0
      %246 = vmatpush.bf16.msra.mxu0 0
      %247 = vmatpush.bf16.msra.mxu0 0
      %248 = vmatpush.bf16.msra.mxu0 0
      %249 = vmatpush.bf16.msra.mxu0 0
      %250 = vmatpush.bf16.msra.mxu0 %v191
      %251 = vmatpush.bf16.msra.mxu0 %v187
      %252 = vmatmul.bf16.gmra.mxu0 %v204
      %v253 = vpop.f32.mrf.mxu0
      %v254 = vadd.f32 %v135, %v253
      %v255 = vpop.f32.mrf.mxu0
      %v256 = vadd.f32 %v135, %v255
      %257 = vmatmul.bf16.gmra.mxu0 %v207
      %v258 = vpop.f32.mrf.mxu0
      %v259 = vadd.f32 %v135, %v258
      %v260 = vpop.f32.mrf.mxu0
      %v261 = vadd.f32 %v135, %v260
      %262 = vmatmul.bf16.gmra.mxu0 %v210
      %v263 = vpop.f32.mrf.mxu0
      %v264 = vadd.f32 %v135, %v263
      %v265 = vpop.f32.mrf.mxu0
      %v266 = vadd.f32 %v135, %v265
      %267 = vmatmul.bf16.gmra.mxu0 %v213
      %v268 = vpop.f32.mrf.mxu0
      %v269 = vadd.f32 %v135, %v268
      %v270 = vpop.f32.mrf.mxu0
      %v271 = vadd.f32 %v135, %v270
      %272 = vdwg.mxu0
      %273 = vmatpush.bf16.msra.mxu0 0
      %274 = vmatpush.bf16.msra.mxu0 0
      %275 = vmatpush.bf16.msra.mxu0 0
      %276 = vmatpush.bf16.msra.mxu0 0
      %277 = vmatpush.bf16.msra.mxu0 0
      %278 = vmatpush.bf16.msra.mxu0 0
      %279 = vmatpush.bf16.msra.mxu0 %v192
      %280 = vmatpush.bf16.msra.mxu0 %v188
      %281 = vmatmul.bf16.gmra.mxu0 %v204
      %v282 = vpop.f32.mrf.mxu0
      %v283 = vadd.f32 %v136, %v282
      %v284 = vpop.f32.mrf.mxu0
      %v285 = vadd.f32 %v136, %v284
      %286 = vmatmul.bf16.gmra.mxu0 %v207
      %v287 = vpop.f32.mrf.mxu0
      %v288 = vadd.f32 %v136, %v287
      %v289 = vpop.f32.mrf.mxu0
      %v290 = vadd.f32 %v136, %v289
      %291 = vmatmul.bf16.gmra.mxu0 %v210
      %v292 = vpop.f32.mrf.mxu0
      %v293 = vadd.f32 %v136, %v292
      %v294 = vpop.f32.mrf.mxu0
      %v295 = vadd.f32 %v136, %v294
      %296 = vmatmul.bf16.gmra.mxu0 %v213
      %v297 = vpop.f32.mrf.mxu0
      %v298 = vadd.f32 %v136, %v297
      %v299 = vpop.f32.mrf.mxu0
      %v300 = vadd.f32 %v136, %v299
      %301 = vdwg.mxu0
      %302 = vmatpush.bf16.msra.mxu0 0
      %303 = vmatpush.bf16.msra.mxu0 0
      %304 = vmatpush.bf16.msra.mxu0 0
      %305 = vmatpush.bf16.msra.mxu0 0
      %306 = vmatpush.bf16.msra.mxu0 0
      %307 = vmatpush.bf16.msra.mxu0 0
      %308 = vmatpush.bf16.msra.mxu0 %v193
      %309 = vmatpush.bf16.msra.mxu0 %v189
      %310 = vmatmul.bf16.gmra.mxu0 %v204
      %v311 = vpop.f32.mrf.mxu0
      %v312 = vadd.f32 %v137, %v311
      %v313 = vpop.f32.mrf.mxu0
      %v314 = vadd.f32 %v137, %v313
      %315 = vmatmul.bf16.gmra.mxu0 %v207
      %v316 = vpop.f32.mrf.mxu0
      %v317 = vadd.f32 %v137, %v316
      %v318 = vpop.f32.mrf.mxu0
      %v319 = vadd.f32 %v137, %v318
      %320 = vmatmul.bf16.gmra.mxu0 %v210
      %v321 = vpop.f32.mrf.mxu0
      %v322 = vadd.f32 %v137, %v321
      %v323 = vpop.f32.mrf.mxu0
      %v324 = vadd.f32 %v137, %v323
      %325 = vmatmul.bf16.gmra.mxu0 %v213
      %v326 = vpop.f32.mrf.mxu0
      %v327 = vadd.f32 %v137, %v326
      %v328 = vpop.f32.mrf.mxu0
      %v329 = vadd.f32 %v137, %v328
      %330 = vdwg.mxu0
      %331 = vst [vmem:[#allocation2] sm:$0xff] %v225
      %332 = vst [vmem:[#allocation2 + $0x8] sm:$0xff] %v254
      %333 = vst [vmem:[#allocation2 + $0x10] sm:$0xff] %v283
      %334 = vst [vmem:[#allocation2 + $0x18] sm:$0xff] %v312
      %335 = vst [vmem:[#allocation2 + $0x20] sm:$0xff] %v227
      %336 = vst [vmem:[#allocation2 + $0x28] sm:$0xff] %v256
      %337 = vst [vmem:[#allocation2 + $0x30] sm:$0xff] %v285
      %338 = vst [vmem:[#allocation2 + $0x38] sm:$0xff] %v314
      %339 = vst [vmem:[#allocation2 + $0x40] sm:$0xff] %v230
      %340 = vst [vmem:[#allocation2 + $0x48] sm:$0xff] %v259
      %341 = vst [vmem:[#allocation2 + $0x50] sm:$0xff] %v288
      %342 = vst [vmem:[#allocation2 + $0x58] sm:$0xff] %v317
      %343 = vst [vmem:[#allocation2 + $0x60] sm:$0xff] %v232
      %344 = vst [vmem:[#allocation2 + $0x68] sm:$0xff] %v261
      %345 = vst [vmem:[#allocation2 + $0x70] sm:$0xff] %v290
      %346 = vst [vmem:[#allocation2 + $0x78] sm:$0xff] %v319
      %347 = vst [vmem:[#allocation2 + $0x80] sm:$0xff] %v235
      %348 = vst [vmem:[#allocation2 + $0x88] sm:$0xff] %v264
      %349 = vst [vmem:[#allocation2 + $0x90] sm:$0xff] %v293
      %350 = vst [vmem:[#allocation2 + $0x98] sm:$0xff] %v322
      %351 = vst [vmem:[#allocation2 + $0xa0] sm:$0xff] %v237
      %352 = vst [vmem:[#allocation2 + $0xa8] sm:$0xff] %v266
      %353 = vst [vmem:[#allocation2 + $0xb0] sm:$0xff] %v295
      %354 = vst [vmem:[#allocation2 + $0xb8] sm:$0xff] %v324
      %355 = vst [vmem:[#allocation2 + $0xc0] sm:$0xff] %v240
      %356 = vst [vmem:[#allocation2 + $0xc8] sm:$0xff] %v269
      %357 = vst [vmem:[#allocation2 + $0xd0] sm:$0xff] %v298
      %358 = vst [vmem:[#allocation2 + $0xd8] sm:$0xff] %v327
      %359 = vst [vmem:[#allocation2 + $0xe0] sm:$0xff] %v242
      %360 = vst [vmem:[#allocation2 + $0xe8] sm:$0xff] %v271
      %361 = vst [vmem:[#allocation2 + $0xf0] sm:$0xff] %v300
      %362 = vst [vmem:[#allocation2 + $0xf8] sm:$0xff] %v329
      %v363 = vld [vmem:[#allocation7] sm:$0xff]
      %v364 = vld [vmem:[#allocation7 + $0x8] sm:$0xff]
      %v365 = vld [vmem:[#allocation7 + $0x10] sm:$0xff]
      %v366 = vld [vmem:[#allocation7 + $0x18] sm:$0xff]
      %v367 = vld [vmem:[#allocation7 + $0x20] sm:$0xff]
      %v368 = vld [vmem:[#allocation7 + $0x28] sm:$0xff]
      %v369 = vld [vmem:[#allocation7 + $0x30] sm:$0xff]
      %v370 = vld [vmem:[#allocation7 + $0x38] sm:$0xff]
      %v371 = vld [vmem:[#allocation7 + $0x40] sm:$0xff]
      %v372 = vld [vmem:[#allocation7 + $0x48] sm:$0xff]
      %v373 = vld [vmem:[#allocation7 + $0x50] sm:$0xff]
      %v374 = vld [vmem:[#allocation7 + $0x58] sm:$0xff]
      %v375 = vld [vmem:[#allocation7 + $0x60] sm:$0xff]
      %v376 = vld [vmem:[#allocation7 + $0x68] sm:$0xff]
      %v377 = vld [vmem:[#allocation7 + $0x70] sm:$0xff]
      %v378 = vld [vmem:[#allocation7 + $0x78] sm:$0xff]
      %v379 = vld [vmem:[#allocation7 + $0x80] sm:$0xff]
      %v380 = vld [vmem:[#allocation7 + $0x88] sm:$0xff]
      %v381 = vld [vmem:[#allocation7 + $0x90] sm:$0xff]
      %v382 = vld [vmem:[#allocation7 + $0x98] sm:$0xff]
      %v383 = vld [vmem:[#allocation7 + $0xa0] sm:$0xff]
      %v384 = vld [vmem:[#allocation7 + $0xa8] sm:$0xff]
      %v385 = vld [vmem:[#allocation7 + $0xb0] sm:$0xff]
      %v386 = vld [vmem:[#allocation7 + $0xb8] sm:$0xff]
      %v387 = vld [vmem:[#allocation7 + $0xc0] sm:$0xff]
      %v388 = vld [vmem:[#allocation7 + $0xc8] sm:$0xff]
      %v389 = vld [vmem:[#allocation7 + $0xd0] sm:$0xff]
      %v390 = vld [vmem:[#allocation7 + $0xd8] sm:$0xff]
      %v391 = vld [vmem:[#allocation7 + $0xe0] sm:$0xff]
      %v392 = vld [vmem:[#allocation7 + $0xe8] sm:$0xff]
      %v393 = vld [vmem:[#allocation7 + $0xf0] sm:$0xff]
      %v394 = vld [vmem:[#allocation7 + $0xf8] sm:$0xff]
      %v395 = vld [vmem:[#allocation10] sm:$0xff]
      %v396 = vld [vmem:[#allocation10 + $0x8] sm:$0xff]
      %v397 = vld [vmem:[#allocation10 + $0x10] sm:$0xff]
      %v398 = vld [vmem:[#allocation10 + $0x18] sm:$0xff]
      %v399 = vld [vmem:[#allocation10 + $0x20] sm:$0xff]
      %v400 = vld [vmem:[#allocation10 + $0x28] sm:$0xff]
      %v401 = vld [vmem:[#allocation10 + $0x30] sm:$0xff]
      %v402 = vld [vmem:[#allocation10 + $0x38] sm:$0xff]
      %v403 = vld [vmem:[#allocation10 + $0x40] sm:$0xff]
      %v404 = vld [vmem:[#allocation10 + $0x48] sm:$0xff]
      %v405 = vld [vmem:[#allocation10 + $0x50] sm:$0xff]
      %v406 = vld [vmem:[#allocation10 + $0x58] sm:$0xff]
      %v407 = vld [vmem:[#allocation10 + $0x60] sm:$0xff]
      %v408 = vld [vmem:[#allocation10 + $0x68] sm:$0xff]
      %v409 = vld [vmem:[#allocation10 + $0x70] sm:$0xff]
      %v410 = vld [vmem:[#allocation10 + $0x78] sm:$0xff]
      %v411 = vld [vmem:[#allocation10 + $0x80] sm:$0xff]
      %v412 = vld [vmem:[#allocation10 + $0x88] sm:$0xff]
      %v413 = vld [vmem:[#allocation10 + $0x90] sm:$0xff]
      %v414 = vld [vmem:[#allocation10 + $0x98] sm:$0xff]
      %v415 = vld [vmem:[#allocation10 + $0xa0] sm:$0xff]
      %v416 = vld [vmem:[#allocation10 + $0xa8] sm:$0xff]
      %v417 = vld [vmem:[#allocation10 + $0xb0] sm:$0xff]
      %v418 = vld [vmem:[#allocation10 + $0xb8] sm:$0xff]
      %v419 = vld [vmem:[#allocation10 + $0xc0] sm:$0xff]
      %v420 = vld [vmem:[#allocation10 + $0xc8] sm:$0xff]
      %v421 = vld [vmem:[#allocation10 + $0xd0] sm:$0xff]
      %v422 = vld [vmem:[#allocation10 + $0xd8] sm:$0xff]
      %v423 = vld [vmem:[#allocation10 + $0xe0] sm:$0xff]
      %v424 = vld [vmem:[#allocation10 + $0xe8] sm:$0xff]
      %v425 = vld [vmem:[#allocation10 + $0xf0] sm:$0xff]
      %v426 = vld [vmem:[#allocation10 + $0xf8] sm:$0xff]
      %s427 = smul.u32 0, 4
      %s428 = smul.addr %s427, 8
      %s429 = scalar_lea.vmem [#allocation2], %s428
      %v430 = vld [vmem:[%s429] sm:$0xff]
      %v431 = vld [vmem:[%s429 + $0x8] sm:$0xff]
      %v432 = vld [vmem:[%s429 + $0x10] sm:$0xff]
      %v433 = vld [vmem:[%s429 + $0x18] sm:$0xff]
      %v466 = vunpack.c.l.b16 %v363
      %v467 = vunpack.c.h.b16 %v363
      %v468 = vunpack.c.l.b16 %v364
      %v469 = vunpack.c.h.b16 %v364
      %v470 = vunpack.c.l.b16 %v365
      %v471 = vunpack.c.h.b16 %v365
      %v472 = vunpack.c.l.b16 %v366
      %v473 = vunpack.c.h.b16 %v366
      %v474 = vunpack.c.l.b16 %v367
      %v475 = vunpack.c.h.b16 %v367
      %v476 = vunpack.c.l.b16 %v368
      %v477 = vunpack.c.h.b16 %v368
      %v478 = vunpack.c.l.b16 %v369
      %v479 = vunpack.c.h.b16 %v369
      %v480 = vunpack.c.l.b16 %v370
      %v481 = vunpack.c.h.b16 %v370
      %v482 = vunpack.c.l.b16 %v371
      %v483 = vunpack.c.h.b16 %v371
      %v484 = vunpack.c.l.b16 %v372
      %v485 = vunpack.c.h.b16 %v372
      %v486 = vunpack.c.l.b16 %v373
      %v487 = vunpack.c.h.b16 %v373
      %v488 = vunpack.c.l.b16 %v374
      %v489 = vunpack.c.h.b16 %v374
      %v490 = vunpack.c.l.b16 %v375
      %v491 = vunpack.c.h.b16 %v375
      %v492 = vunpack.c.l.b16 %v376
      %v493 = vunpack.c.h.b16 %v376
      %v494 = vunpack.c.l.b16 %v377
      %v495 = vunpack.c.h.b16 %v377
      %v496 = vunpack.c.l.b16 %v378
      %v497 = vunpack.c.h.b16 %v378
      %v498 = vunpack.c.l.b16 %v379
      %v499 = vunpack.c.h.b16 %v379
      %v500 = vunpack.c.l.b16 %v380
      %v501 = vunpack.c.h.b16 %v380
      %v502 = vunpack.c.l.b16 %v381
      %v503 = vunpack.c.h.b16 %v381
      %v504 = vunpack.c.l.b16 %v382
      %v505 = vunpack.c.h.b16 %v382
      %v506 = vunpack.c.l.b16 %v383
      %v507 = vunpack.c.h.b16 %v383
      %v508 = vunpack.c.l.b16 %v384
      %v509 = vunpack.c.h.b16 %v384
      %v510 = vunpack.c.l.b16 %v385
      %v511 = vunpack.c.h.b16 %v385
      %v512 = vunpack.c.l.b16 %v386
      %v513 = vunpack.c.h.b16 %v386
      %v514 = vunpack.c.l.b16 %v387
      %v515 = vunpack.c.h.b16 %v387
      %v516 = vunpack.c.l.b16 %v388
      %v517 = vunpack.c.h.b16 %v388
      %v518 = vunpack.c.l.b16 %v389
      %v519 = vunpack.c.h.b16 %v389
      %v520 = vunpack.c.l.b16 %v390
      %v521 = vunpack.c.h.b16 %v390
      %v522 = vunpack.c.l.b16 %v391
      %v523 = vunpack.c.h.b16 %v391
      %v524 = vunpack.c.l.b16 %v392
      %v525 = vunpack.c.h.b16 %v392
      %v526 = vunpack.c.l.b16 %v393
      %v527 = vunpack.c.h.b16 %v393
      %v528 = vunpack.c.l.b16 %v394
      %v529 = vunpack.c.h.b16 %v394
      %v530 = vpack.c.b16 %v470, %v466
      %v531 = vpack.c.b16 %v471, %v467
      %v532 = vpack.c.b16 %v472, %v468
      %v533 = vpack.c.b16 %v473, %v469
      %v534 = vpack.c.b16 %v478, %v474
      %v535 = vpack.c.b16 %v479, %v475
      %v536 = vpack.c.b16 %v480, %v476
      %v537 = vpack.c.b16 %v481, %v477
      %v538 = vpack.c.b16 %v486, %v482
      %v539 = vpack.c.b16 %v487, %v483
      %v540 = vpack.c.b16 %v488, %v484
      %v541 = vpack.c.b16 %v489, %v485
      %v542 = vpack.c.b16 %v494, %v490
      %v543 = vpack.c.b16 %v495, %v491
      %v544 = vpack.c.b16 %v496, %v492
      %v545 = vpack.c.b16 %v497, %v493
      %v546 = vpack.c.b16 %v502, %v498
      %v547 = vpack.c.b16 %v503, %v499
      %v548 = vpack.c.b16 %v504, %v500
      %v549 = vpack.c.b16 %v505, %v501
      %v550 = vpack.c.b16 %v510, %v506
      %v551 = vpack.c.b16 %v511, %v507
      %v552 = vpack.c.b16 %v512, %v508
      %v553 = vpack.c.b16 %v513, %v509
      %v554 = vpack.c.b16 %v518, %v514
      %v555 = vpack.c.b16 %v519, %v515
      %v556 = vpack.c.b16 %v520, %v516
      %v557 = vpack.c.b16 %v521, %v517
      %v558 = vpack.c.b16 %v526, %v522
      %v559 = vpack.c.b16 %v527, %v523
      %v560 = vpack.c.b16 %v528, %v524
      %v561 = vpack.c.b16 %v529, %v525
      %594 = vmatpush.bf16.msra.mxu0 %v558
      %595 = vmatpush.bf16.msra.mxu0 %v554
      %596 = vmatpush.bf16.msra.mxu0 %v550
      %597 = vmatpush.bf16.msra.mxu0 %v546
      %598 = vmatpush.bf16.msra.mxu0 %v542
      %599 = vmatpush.bf16.msra.mxu0 %v538
      %600 = vmatpush.bf16.msra.mxu0 %v534
      %601 = vmatpush.bf16.msra.mxu0 %v530
      %602 = vmatmul.bf16.gmra.mxu0 0
      %v603 = vpop.f32.mrf.mxu0
      %v604 = vadd.f32 0.0, %v603
      %v605 = vpop.f32.mrf.mxu0
      %606 = vdwg.mxu0
      %607 = vmatpush.bf16.msra.mxu0 %v559
      %608 = vmatpush.bf16.msra.mxu0 %v555
      %609 = vmatpush.bf16.msra.mxu0 %v551
      %610 = vmatpush.bf16.msra.mxu0 %v547
      %611 = vmatpush.bf16.msra.mxu0 %v543
      %612 = vmatpush.bf16.msra.mxu0 %v539
      %613 = vmatpush.bf16.msra.mxu0 %v535
      %614 = vmatpush.bf16.msra.mxu0 %v531
      %615 = vmatmul.bf16.gmra.mxu0 0
      %v616 = vpop.f32.mrf.mxu0
      %v617 = vadd.f32 0.0, %v616
      %v618 = vpop.f32.mrf.mxu0
      %619 = vdwg.mxu0
      %620 = vmatpush.bf16.msra.mxu0 %v560
      %621 = vmatpush.bf16.msra.mxu0 %v556
      %622 = vmatpush.bf16.msra.mxu0 %v552
      %623 = vmatpush.bf16.msra.mxu0 %v548
      %624 = vmatpush.bf16.msra.mxu0 %v544
      %625 = vmatpush.bf16.msra.mxu0 %v540
      %626 = vmatpush.bf16.msra.mxu0 %v536
      %627 = vmatpush.bf16.msra.mxu0 %v532
      %628 = vmatmul.bf16.gmra.mxu0 0
      %v629 = vpop.f32.mrf.mxu0
      %v630 = vadd.f32 0.0, %v629
      %v631 = vpop.f32.mrf.mxu0
      %632 = vdwg.mxu0
      %633 = vmatpush.bf16.msra.mxu0 %v561
      %634 = vmatpush.bf16.msra.mxu0 %v557
      %635 = vmatpush.bf16.msra.mxu0 %v553
      %636 = vmatpush.bf16.msra.mxu0 %v549
      %637 = vmatpush.bf16.msra.mxu0 %v545
      %638 = vmatpush.bf16.msra.mxu0 %v541
      %639 = vmatpush.bf16.msra.mxu0 %v537
      %640 = vmatpush.bf16.msra.mxu0 %v533
      %641 = vmatmul.bf16.gmra.mxu0 0
      %v642 = vpop.f32.mrf.mxu0
      %v643 = vadd.f32 0.0, %v642
      %v644 = vpop.f32.mrf.mxu0
      %645 = vdwg.mxu0
      %v646 = vadd.f32 %v430, %v604
      %v647 = vadd.f32 %v431, %v617
      %v648 = vadd.f32 %v432, %v630
      %v649 = vadd.f32 %v433, %v643
      %v650 = vxor.u32 %v646, 2147483648
      %v651 = vmul.f32 %v650, 1.442695
      %v652 = vpow.pop %v651
      %v653 = vadd.f32 %v652, 1.0
      %v654 = vrcp.pop %v653
      %v655 = vmul.f32 %v653, %v654
      %v656 = vsub.f32 1.0, %v655
      %v657 = vmul.f32 %v654, %v656
      %v658 = vadd.f32 %v654, %v657
      %vm659 = vweird.f32 %v653
      %vm660 = vweird.f32 %v654
      %vm661 = vmor %vm659, %vm660
      %v662 = vsel %vm661, %v654, %v658
      %v663 = vand.u32 2147483647, %v653
      %vm664 = vcmp.eq.f32.partialorder %v663, 8.507059e+37
      %v665 = vand.u32 %v653, 2147483648
      %v666 = vor.u32 1.1754944e-38, %v665
      %v667 = vsel %vm664, %v666, %v662
      %v668 = vmul.f32 1.0, %v667
      %v669 = vxor.u32 %v647, 2147483648
      %v670 = vmul.f32 %v669, 1.442695
      %v671 = vpow.pop %v670
      %v672 = vadd.f32 %v671, 1.0
      %v673 = vrcp.pop %v672
      %v674 = vmul.f32 %v672, %v673
      %v675 = vsub.f32 1.0, %v674
      %v676 = vmul.f32 %v673, %v675
      %v677 = vadd.f32 %v673, %v676
      %vm678 = vweird.f32 %v672
      %vm679 = vweird.f32 %v673
      %vm680 = vmor %vm678, %vm679
      %v681 = vsel %vm680, %v673, %v677
      %v682 = vand.u32 2147483647, %v672
      %vm683 = vcmp.eq.f32.partialorder %v682, 8.507059e+37
      %v684 = vand.u32 %v672, 2147483648
      %v685 = vor.u32 1.1754944e-38, %v684
      %v686 = vsel %vm683, %v685, %v681
      %v687 = vmul.f32 1.0, %v686
      %v688 = vtanh.pop %v648
      %v689 = vxor.u32 %v649, 2147483648
      %v690 = vmul.f32 %v689, 1.442695
      %v691 = vpow.pop %v690
      %v692 = vadd.f32 %v691, 1.0
      %v693 = vrcp.pop %v692
      %v694 = vmul.f32 %v692, %v693
      %v695 = vsub.f32 1.0, %v694
      %v696 = vmul.f32 %v693, %v695
      %v697 = vadd.f32 %v693, %v696
      %vm698 = vweird.f32 %v692
      %vm699 = vweird.f32 %v693
      %vm700 = vmor %vm698, %vm699
      %v701 = vsel %vm700, %v693, %v697
      %v702 = vand.u32 2147483647, %v692
      %vm703 = vcmp.eq.f32.partialorder %v702, 8.507059e+37
      %v704 = vand.u32 %v692, 2147483648
      %v705 = vor.u32 1.1754944e-38, %v704
      %v706 = vsel %vm703, %v705, %v701
      %v707 = vmul.f32 1.0, %v706
      %v708 = vmul.f32 %v687, 0.0
      %v709 = vmul.f32 %v668, %v688
      %v710 = vadd.f32 %v708, %v709
      %v711 = vtanh.pop %v710
      %v712 = vmul.f32 %v707, %v711
      %v713 = vpack.c.bf16 %v712, %v712
      %s714 = smul.u32 0, 2
      %s715 = smul.addr %s714, 4
      %s716 = scalar_lea.vmem [#allocation3], %s715
      %717 = vst [vmem:[%s716] sm:$0xf] %v713
      %s718 = smul.u32 1, 4
      %s719 = smul.addr %s718, 8
      %s720 = scalar_lea.vmem [#allocation2], %s719
      %v721 = vld [vmem:[%s720] sm:$0xff]
      %v722 = vld [vmem:[%s720 + $0x8] sm:$0xff]
      %v723 = vld [vmem:[%s720 + $0x10] sm:$0xff]
      %v724 = vld [vmem:[%s720 + $0x18] sm:$0xff]
      %725 = vmatpush.bf16.msra.mxu0 %v558
      %726 = vmatpush.bf16.msra.mxu0 %v554
      %727 = vmatpush.bf16.msra.mxu0 %v550
      %728 = vmatpush.bf16.msra.mxu0 %v546
      %729 = vmatpush.bf16.msra.mxu0 %v542
      %730 = vmatpush.bf16.msra.mxu0 %v538
      %731 = vmatpush.bf16.msra.mxu0 %v534
      %732 = vmatpush.bf16.msra.mxu0 %v530
      %733 = vmatmul.bf16.gmra.mxu0 %v713
      %v734 = vpop.f32.mrf.mxu0
      %v735 = vadd.f32 0.0, %v734
      %v736 = vpop.f32.mrf.mxu0
      %737 = vdwg.mxu0
      %738 = vmatpush.bf16.msra.mxu0 %v559
      %739 = vmatpush.bf16.msra.mxu0 %v555
      %740 = vmatpush.bf16.msra.mxu0 %v551
      %741 = vmatpush.bf16.msra.mxu0 %v547
      %742 = vmatpush.bf16.msra.mxu0 %v543
      %743 = vmatpush.bf16.msra.mxu0 %v539
      %744 = vmatpush.bf16.msra.mxu0 %v535
      %745 = vmatpush.bf16.msra.mxu0 %v531
      %746 = vmatmul.bf16.gmra.mxu0 %v713
      %v747 = vpop.f32.mrf.mxu0
      %v748 = vadd.f32 0.0, %v747
      %v749 = vpop.f32.mrf.mxu0
      %750 = vdwg.mxu0
      %751 = vmatpush.bf16.msra.mxu0 %v560
      %752 = vmatpush.bf16.msra.mxu0 %v556
      %753 = vmatpush.bf16.msra.mxu0 %v552
      %754 = vmatpush.bf16.msra.mxu0 %v548
      %755 = vmatpush.bf16.msra.mxu0 %v544
      %756 = vmatpush.bf16.msra.mxu0 %v540
      %757 = vmatpush.bf16.msra.mxu0 %v536
      %758 = vmatpush.bf16.msra.mxu0 %v532
      %759 = vmatmul.bf16.gmra.mxu0 %v713
      %v760 = vpop.f32.mrf.mxu0
      %v761 = vadd.f32 0.0, %v760
      %v762 = vpop.f32.mrf.mxu0
      %763 = vdwg.mxu0
      %764 = vmatpush.bf16.msra.mxu0 %v561
      %765 = vmatpush.bf16.msra.mxu0 %v557
      %766 = vmatpush.bf16.msra.mxu0 %v553
      %767 = vmatpush.bf16.msra.mxu0 %v549
      %768 = vmatpush.bf16.msra.mxu0 %v545
      %769 = vmatpush.bf16.msra.mxu0 %v541
      %770 = vmatpush.bf16.msra.mxu0 %v537
      %771 = vmatpush.bf16.msra.mxu0 %v533
      %772 = vmatmul.bf16.gmra.mxu0 %v713
      %v773 = vpop.f32.mrf.mxu0
      %v774 = vadd.f32 0.0, %v773
      %v775 = vpop.f32.mrf.mxu0
      %776 = vdwg.mxu0
      %v777 = vadd.f32 %v721, %v735
      %v778 = vadd.f32 %v722, %v748
      %v779 = vadd.f32 %v723, %v761
      %v780 = vadd.f32 %v724, %v774
      %v781 = vxor.u32 %v777, 2147483648
      %v782 = vmul.f32 %v781, 1.442695
      %v783 = vpow.pop %v782
      %v784 = vadd.f32 %v783, 1.0
      %v785 = vrcp.pop %v784
      %v786 = vmul.f32 %v784, %v785
      %v787 = vsub.f32 1.0, %v786
      %v788 = vmul.f32 %v785, %v787
      %v789 = vadd.f32 %v785, %v788
      %vm790 = vweird.f32 %v784
      %vm791 = vweird.f32 %v785
      %vm792 = vmor %vm790, %vm791
      %v793 = vsel %vm792, %v785, %v789
      %v794 = vand.u32 2147483647, %v784
      %vm795 = vcmp.eq.f32.partialorder %v794, 8.507059e+37
      %v796 = vand.u32 %v784, 2147483648
      %v797 = vor.u32 1.1754944e-38, %v796
      %v798 = vsel %vm795, %v797, %v793
      %v799 = vmul.f32 1.0, %v798
      %v800 = vxor.u32 %v778, 2147483648
      %v801 = vmul.f32 %v800, 1.442695
      %v802 = vpow.pop %v801
      %v803 = vadd.f32 %v802, 1.0
      %v804 = vrcp.pop %v803
      %v805 = vmul.f32 %v803, %v804
      %v806 = vsub.f32 1.0, %v805
      %v807 = vmul.f32 %v804, %v806
      %v808 = vadd.f32 %v804, %v807
      %vm809 = vweird.f32 %v803
      %vm810 = vweird.f32 %v804
      %vm811 = vmor %vm809, %vm810
      %v812 = vsel %vm811, %v804, %v808
      %v813 = vand.u32 2147483647, %v803
      %vm814 = vcmp.eq.f32.partialorder %v813, 8.507059e+37
      %v815 = vand.u32 %v803, 2147483648
      %v816 = vor.u32 1.1754944e-38, %v815
      %v817 = vsel %vm814, %v816, %v812
      %v818 = vmul.f32 1.0, %v817
      %v819 = vtanh.pop %v779
      %v820 = vxor.u32 %v780, 2147483648
      %v821 = vmul.f32 %v820, 1.442695
      %v822 = vpow.pop %v821
      %v823 = vadd.f32 %v822, 1.0
      %v824 = vrcp.pop %v823
      %v825 = vmul.f32 %v823, %v824
      %v826 = vsub.f32 1.0, %v825
      %v827 = vmul.f32 %v824, %v826
      %v828 = vadd.f32 %v824, %v827
      %vm829 = vweird.f32 %v823
      %vm830 = vweird.f32 %v824
      %vm831 = vmor %vm829, %vm830
      %v832 = vsel %vm831, %v824, %v828
      %v833 = vand.u32 2147483647, %v823
      %vm834 = vcmp.eq.f32.partialorder %v833, 8.507059e+37
      %v835 = vand.u32 %v823, 2147483648
      %v836 = vor.u32 1.1754944e-38, %v835
      %v837 = vsel %vm834, %v836, %v832
      %v838 = vmul.f32 1.0, %v837
      %v839 = vmul.f32 %v818, %v710
      %v840 = vmul.f32 %v799, %v819
      %v841 = vadd.f32 %v839, %v840
      %v842 = vtanh.pop %v841
      %v843 = vmul.f32 %v838, %v842
      %v844 = vpack.c.bf16 %v843, %v843
      %s845 = smul.u32 1, 2
      %s846 = smul.addr %s845, 4
      %s847 = scalar_lea.vmem [#allocation3], %s846
      %848 = vst [vmem:[%s847] sm:$0xf] %v844
      %s849 = smul.u32 2, 4
      %s850 = smul.addr %s849, 8
      %s851 = scalar_lea.vmem [#allocation2], %s850
      %v852 = vld [vmem:[%s851] sm:$0xff]
      %v853 = vld [vmem:[%s851 + $0x8] sm:$0xff]
      %v854 = vld [vmem:[%s851 + $0x10] sm:$0xff]
      %v855 = vld [vmem:[%s851 + $0x18] sm:$0xff]
      %856 = vmatpush.bf16.msra.mxu0 %v558
      %857 = vmatpush.bf16.msra.mxu0 %v554
      %858 = vmatpush.bf16.msra.mxu0 %v550
      %859 = vmatpush.bf16.msra.mxu0 %v546
      %860 = vmatpush.bf16.msra.mxu0 %v542
      %861 = vmatpush.bf16.msra.mxu0 %v538
      %862 = vmatpush.bf16.msra.mxu0 %v534
      %863 = vmatpush.bf16.msra.mxu0 %v530
      %864 = vmatmul.bf16.gmra.mxu0 %v844
      %v865 = vpop.f32.mrf.mxu0
      %v866 = vadd.f32 0.0, %v865
      %v867 = vpop.f32.mrf.mxu0
      %868 = vdwg.mxu0
      %869 = vmatpush.bf16.msra.mxu0 %v559
      %870 = vmatpush.bf16.msra.mxu0 %v555
      %871 = vmatpush.bf16.msra.mxu0 %v551
      %872 = vmatpush.bf16.msra.mxu0 %v547
      %873 = vmatpush.bf16.msra.mxu0 %v543
      %874 = vmatpush.bf16.msra.mxu0 %v539
      %875 = vmatpush.bf16.msra.mxu0 %v535
      %876 = vmatpush.bf16.msra.mxu0 %v531
      %877 = vmatmul.bf16.gmra.mxu0 %v844
      %v878 = vpop.f32.mrf.mxu0
      %v879 = vadd.f32 0.0, %v878
      %v880 = vpop.f32.mrf.mxu0
      %881 = vdwg.mxu0
      %882 = vmatpush.bf16.msra.mxu0 %v560
      %883 = vmatpush.bf16.msra.mxu0 %v556
      %884 = vmatpush.bf16.msra.mxu0 %v552
      %885 = vmatpush.bf16.msra.mxu0 %v548
      %886 = vmatpush.bf16.msra.mxu0 %v544
      %887 = vmatpush.bf16.msra.mxu0 %v540
      %888 = vmatpush.bf16.msra.mxu0 %v536
      %889 = vmatpush.bf16.msra.mxu0 %v532
      %890 = vmatmul.bf16.gmra.mxu0 %v844
      %v891 = vpop.f32.mrf.mxu0
      %v892 = vadd.f32 0.0, %v891
      %v893 = vpop.f32.mrf.mxu0
      %894 = vdwg.mxu0
      %895 = vmatpush.bf16.msra.mxu0 %v561
      %896 = vmatpush.bf16.msra.mxu0 %v557
      %897 = vmatpush.bf16.msra.mxu0 %v553
      %898 = vmatpush.bf16.msra.mxu0 %v549
      %899 = vmatpush.bf16.msra.mxu0 %v545
      %900 = vmatpush.bf16.msra.mxu0 %v541
      %901 = vmatpush.bf16.msra.mxu0 %v537
      %902 = vmatpush.bf16.msra.mxu0 %v533
      %903 = vmatmul.bf16.gmra.mxu0 %v844
      %v904 = vpop.f32.mrf.mxu0
      %v905 = vadd.f32 0.0, %v904
      %v906 = vpop.f32.mrf.mxu0
      %907 = vdwg.mxu0
      %v908 = vadd.f32 %v852, %v866
      %v909 = vadd.f32 %v853, %v879
      %v910 = vadd.f32 %v854, %v892
      %v911 = vadd.f32 %v855, %v905
      %v912 = vxor.u32 %v908, 2147483648
      %v913 = vmul.f32 %v912, 1.442695
      %v914 = vpow.pop %v913
      %v915 = vadd.f32 %v914, 1.0
      %v916 = vrcp.pop %v915
      %v917 = vmul.f32 %v915, %v916
      %v918 = vsub.f32 1.0, %v917
      %v919 = vmul.f32 %v916, %v918
      %v920 = vadd.f32 %v916, %v919
      %vm921 = vweird.f32 %v915
      %vm922 = vweird.f32 %v916
      %vm923 = vmor %vm921, %vm922
      %v924 = vsel %vm923, %v916, %v920
      %v925 = vand.u32 2147483647, %v915
      %vm926 = vcmp.eq.f32.partialorder %v925, 8.507059e+37
      %v927 = vand.u32 %v915, 2147483648
      %v928 = vor.u32 1.1754944e-38, %v927
      %v929 = vsel %vm926, %v928, %v924
      %v930 = vmul.f32 1.0, %v929
      %v931 = vxor.u32 %v909, 2147483648
      %v932 = vmul.f32 %v931, 1.442695
      %v933 = vpow.pop %v932
      %v934 = vadd.f32 %v933, 1.0
      %v935 = vrcp.pop %v934
      %v936 = vmul.f32 %v934, %v935
      %v937 = vsub.f32 1.0, %v936
      %v938 = vmul.f32 %v935, %v937
      %v939 = vadd.f32 %v935, %v938
      %vm940 = vweird.f32 %v934
      %vm941 = vweird.f32 %v935
      %vm942 = vmor %vm940, %vm941
      %v943 = vsel %vm942, %v935, %v939
      %v944 = vand.u32 2147483647, %v934
      %vm945 = vcmp.eq.f32.partialorder %v944, 8.507059e+37
      %v946 = vand.u32 %v934, 2147483648
      %v947 = vor.u32 1.1754944e-38, %v946
      %v948 = vsel %vm945, %v947, %v943
      %v949 = vmul.f32 1.0, %v948
      %v950 = vtanh.pop %v910
      %v951 = vxor.u32 %v911, 2147483648
      %v952 = vmul.f32 %v951, 1.442695
      %v953 = vpow.pop %v952
      %v954 = vadd.f32 %v953, 1.0
      %v955 = vrcp.pop %v954
      %v956 = vmul.f32 %v954, %v955
      %v957 = vsub.f32 1.0, %v956
      %v958 = vmul.f32 %v955, %v957
      %v959 = vadd.f32 %v955, %v958
      %vm960 = vweird.f32 %v954
      %vm961 = vweird.f32 %v955
      %vm962 = vmor %vm960, %vm961
      %v963 = vsel %vm962, %v955, %v959
      %v964 = vand.u32 2147483647, %v954
      %vm965 = vcmp.eq.f32.partialorder %v964, 8.507059e+37
      %v966 = vand.u32 %v954, 2147483648
      %v967 = vor.u32 1.1754944e-38, %v966
      %v968 = vsel %vm965, %v967, %v963
      %v969 = vmul.f32 1.0, %v968
      %v970 = vmul.f32 %v949, %v841
      %v971 = vmul.f32 %v930, %v950
      %v972 = vadd.f32 %v970, %v971
      %v973 = vtanh.pop %v972
      %v974 = vmul.f32 %v969, %v973
      %v975 = vpack.c.bf16 %v974, %v974
      %s976 = smul.u32 2, 2
      %s977 = smul.addr %s976, 4
      %s978 = scalar_lea.vmem [#allocation3], %s977
      %979 = vst [vmem:[%s978] sm:$0xf] %v975
      %s980 = smul.u32 3, 4
      %s981 = smul.addr %s980, 8
      %s982 = scalar_lea.vmem [#allocation2], %s981
      %v983 = vld [vmem:[%s982] sm:$0xff]
      %v984 = vld [vmem:[%s982 + $0x8] sm:$0xff]
      %v985 = vld [vmem:[%s982 + $0x10] sm:$0xff]
      %v986 = vld [vmem:[%s982 + $0x18] sm:$0xff]
      %987 = vmatpush.bf16.msra.mxu0 %v558
      %988 = vmatpush.bf16.msra.mxu0 %v554
      %989 = vmatpush.bf16.msra.mxu0 %v550
      %990 = vmatpush.bf16.msra.mxu0 %v546
      %991 = vmatpush.bf16.msra.mxu0 %v542
      %992 = vmatpush.bf16.msra.mxu0 %v538
      %993 = vmatpush.bf16.msra.mxu0 %v534
      %994 = vmatpush.bf16.msra.mxu0 %v530
      %995 = vmatmul.bf16.gmra.mxu0 %v975
      %v996 = vpop.f32.mrf.mxu0
      %v997 = vadd.f32 0.0, %v996
      %v998 = vpop.f32.mrf.mxu0
      %999 = vdwg.mxu0
      %1000 = vmatpush.bf16.msra.mxu0 %v559
      %1001 = vmatpush.bf16.msra.mxu0 %v555
      %1002 = vmatpush.bf16.msra.mxu0 %v551
      %1003 = vmatpush.bf16.msra.mxu0 %v547
      %1004 = vmatpush.bf16.msra.mxu0 %v543
      %1005 = vmatpush.bf16.msra.mxu0 %v539
      %1006 = vmatpush.bf16.msra.mxu0 %v535
      %1007 = vmatpush.bf16.msra.mxu0 %v531
      %1008 = vmatmul.bf16.gmra.mxu0 %v975
      %v1009 = vpop.f32.mrf.mxu0
      %v1010 = vadd.f32 0.0, %v1009
      %v1011 = vpop.f32.mrf.mxu0
      %1012 = vdwg.mxu0
      %1013 = vmatpush.bf16.msra.mxu0 %v560
      %1014 = vmatpush.bf16.msra.mxu0 %v556
      %1015 = vmatpush.bf16.msra.mxu0 %v552
      %1016 = vmatpush.bf16.msra.mxu0 %v548
      %1017 = vmatpush.bf16.msra.mxu0 %v544
      %1018 = vmatpush.bf16.msra.mxu0 %v540
      %1019 = vmatpush.bf16.msra.mxu0 %v536
      %1020 = vmatpush.bf16.msra.mxu0 %v532
      %1021 = vmatmul.bf16.gmra.mxu0 %v975
      %v1022 = vpop.f32.mrf.mxu0
      %v1023 = vadd.f32 0.0, %v1022
      %v1024 = vpop.f32.mrf.mxu0
      %1025 = vdwg.mxu0
      %1026 = vmatpush.bf16.msra.mxu0 %v561
      %1027 = vmatpush.bf16.msra.mxu0 %v557
      %1028 = vmatpush.bf16.msra.mxu0 %v553
      %1029 = vmatpush.bf16.msra.mxu0 %v549
      %1030 = vmatpush.bf16.msra.mxu0 %v545
      %1031 = vmatpush.bf16.msra.mxu0 %v541
      %1032 = vmatpush.bf16.msra.mxu0 %v537
      %1033 = vmatpush.bf16.msra.mxu0 %v533
      %1034 = vmatmul.bf16.gmra.mxu0 %v975
      %v1035 = vpop.f32.mrf.mxu0
      %v1036 = vadd.f32 0.0, %v1035
      %v1037 = vpop.f32.mrf.mxu0
      %1038 = vdwg.mxu0
      %v1039 = vadd.f32 %v983, %v997
      %v1040 = vadd.f32 %v984, %v1010
      %v1041 = vadd.f32 %v985, %v1023
      %v1042 = vadd.f32 %v986, %v1036
      %v1043 = vxor.u32 %v1039, 2147483648
      %v1044 = vmul.f32 %v1043, 1.442695
      %v1045 = vpow.pop %v1044
      %v1046 = vadd.f32 %v1045, 1.0
      %v1047 = vrcp.pop %v1046
      %v1048 = vmul.f32 %v1046, %v1047
      %v1049 = vsub.f32 1.0, %v1048
      %v1050 = vmul.f32 %v1047, %v1049
      %v1051 = vadd.f32 %v1047, %v1050
      %vm1052 = vweird.f32 %v1046
      %vm1053 = vweird.f32 %v1047
      %vm1054 = vmor %vm1052, %vm1053
      %v1055 = vsel %vm1054, %v1047, %v1051
      %v1056 = vand.u32 2147483647, %v1046
      %vm1057 = vcmp.eq.f32.partialorder %v1056, 8.507059e+37
      %v1058 = vand.u32 %v1046, 2147483648
      %v1059 = vor.u32 1.1754944e-38, %v1058
      %v1060 = vsel %vm1057, %v1059, %v1055
      %v1061 = vmul.f32 1.0, %v1060
      %v1062 = vxor.u32 %v1040, 2147483648
      %v1063 = vmul.f32 %v1062, 1.442695
      %v1064 = vpow.pop %v1063
      %v1065 = vadd.f32 %v1064, 1.0
      %v1066 = vrcp.pop %v1065
      %v1067 = vmul.f32 %v1065, %v1066
      %v1068 = vsub.f32 1.0, %v1067
      %v1069 = vmul.f32 %v1066, %v1068
      %v1070 = vadd.f32 %v1066, %v1069
      %vm1071 = vweird.f32 %v1065
      %vm1072 = vweird.f32 %v1066
      %vm1073 = vmor %vm1071, %vm1072
      %v1074 = vsel %vm1073, %v1066, %v1070
      %v1075 = vand.u32 2147483647, %v1065
      %vm1076 = vcmp.eq.f32.partialorder %v1075, 8.507059e+37
      %v1077 = vand.u32 %v1065, 2147483648
      %v1078 = vor.u32 1.1754944e-38, %v1077
      %v1079 = vsel %vm1076, %v1078, %v1074
      %v1080 = vmul.f32 1.0, %v1079
      %v1081 = vtanh.pop %v1041
      %v1082 = vxor.u32 %v1042, 2147483648
      %v1083 = vmul.f32 %v1082, 1.442695
      %v1084 = vpow.pop %v1083
      %v1085 = vadd.f32 %v1084, 1.0
      %v1086 = vrcp.pop %v1085
      %v1087 = vmul.f32 %v1085, %v1086
      %v1088 = vsub.f32 1.0, %v1087
      %v1089 = vmul.f32 %v1086, %v1088
      %v1090 = vadd.f32 %v1086, %v1089
      %vm1091 = vweird.f32 %v1085
      %vm1092 = vweird.f32 %v1086
      %vm1093 = vmor %vm1091, %vm1092
      %v1094 = vsel %vm1093, %v1086, %v1090
      %v1095 = vand.u32 2147483647, %v1085
      %vm1096 = vcmp.eq.f32.partialorder %v1095, 8.507059e+37
      %v1097 = vand.u32 %v1085, 2147483648
      %v1098 = vor.u32 1.1754944e-38, %v1097
      %v1099 = vsel %vm1096, %v1098, %v1094
      %v1100 = vmul.f32 1.0, %v1099
      %v1101 = vmul.f32 %v1080, %v972
      %v1102 = vmul.f32 %v1061, %v1081
      %v1103 = vadd.f32 %v1101, %v1102
      %v1104 = vtanh.pop %v1103
      %v1105 = vmul.f32 %v1100, %v1104
      %v1106 = vpack.c.bf16 %v1105, %v1105
      %s1107 = smul.u32 3, 2
      %s1108 = smul.addr %s1107, 4
      %s1109 = scalar_lea.vmem [#allocation3], %s1108
      %1110 = vst [vmem:[%s1109] sm:$0xf] %v1106
      %s1111 = smul.u32 4, 4
      %s1112 = smul.addr %s1111, 8
      %s1113 = scalar_lea.vmem [#allocation2], %s1112
      %v1114 = vld [vmem:[%s1113] sm:$0xff]
      %v1115 = vld [vmem:[%s1113 + $0x8] sm:$0xff]
      %v1116 = vld [vmem:[%s1113 + $0x10] sm:$0xff]
      %v1117 = vld [vmem:[%s1113 + $0x18] sm:$0xff]
      %1118 = vmatpush.bf16.msra.mxu0 %v558
      %1119 = vmatpush.bf16.msra.mxu0 %v554
      %1120 = vmatpush.bf16.msra.mxu0 %v550
      %1121 = vmatpush.bf16.msra.mxu0 %v546
      %1122 = vmatpush.bf16.msra.mxu0 %v542
      %1123 = vmatpush.bf16.msra.mxu0 %v538
      %1124 = vmatpush.bf16.msra.mxu0 %v534
      %1125 = vmatpush.bf16.msra.mxu0 %v530
      %1126 = vmatmul.bf16.gmra.mxu0 %v1106
      %v1127 = vpop.f32.mrf.mxu0
      %v1128 = vadd.f32 0.0, %v1127
      %v1129 = vpop.f32.mrf.mxu0
      %1130 = vdwg.mxu0
      %1131 = vmatpush.bf16.msra.mxu0 %v559
      %1132 = vmatpush.bf16.msra.mxu0 %v555
      %1133 = vmatpush.bf16.msra.mxu0 %v551
      %1134 = vmatpush.bf16.msra.mxu0 %v547
      %1135 = vmatpush.bf16.msra.mxu0 %v543
      %1136 = vmatpush.bf16.msra.mxu0 %v539
      %1137 = vmatpush.bf16.msra.mxu0 %v535
      %1138 = vmatpush.bf16.msra.mxu0 %v531
      %1139 = vmatmul.bf16.gmra.mxu0 %v1106
      %v1140 = vpop.f32.mrf.mxu0
      %v1141 = vadd.f32 0.0, %v1140
      %v1142 = vpop.f32.mrf.mxu0
      %1143 = vdwg.mxu0
      %1144 = vmatpush.bf16.msra.mxu0 %v560
      %1145 = vmatpush.bf16.msra.mxu0 %v556
      %1146 = vmatpush.bf16.msra.mxu0 %v552
      %1147 = vmatpush.bf16.msra.mxu0 %v548
      %1148 = vmatpush.bf16.msra.mxu0 %v544
      %1149 = vmatpush.bf16.msra.mxu0 %v540
      %1150 = vmatpush.bf16.msra.mxu0 %v536
      %1151 = vmatpush.bf16.msra.mxu0 %v532
      %1152 = vmatmul.bf16.gmra.mxu0 %v1106
      %v1153 = vpop.f32.mrf.mxu0
      %v1154 = vadd.f32 0.0, %v1153
      %v1155 = vpop.f32.mrf.mxu0
      %1156 = vdwg.mxu0
      %1157 = vmatpush.bf16.msra.mxu0 %v561
      %1158 = vmatpush.bf16.msra.mxu0 %v557
      %1159 = vmatpush.bf16.msra.mxu0 %v553
      %1160 = vmatpush.bf16.msra.mxu0 %v549
      %1161 = vmatpush.bf16.msra.mxu0 %v545
      %1162 = vmatpush.bf16.msra.mxu0 %v541
      %1163 = vmatpush.bf16.msra.mxu0 %v537
      %1164 = vmatpush.bf16.msra.mxu0 %v533
      %1165 = vmatmul.bf16.gmra.mxu0 %v1106
      %v1166 = vpop.f32.mrf.mxu0
      %v1167 = vadd.f32 0.0, %v1166
      %v1168 = vpop.f32.mrf.mxu0
      %1169 = vdwg.mxu0
      %v1170 = vadd.f32 %v1114, %v1128
      %v1171 = vadd.f32 %v1115, %v1141
      %v1172 = vadd.f32 %v1116, %v1154
      %v1173 = vadd.f32 %v1117, %v1167
      %v1174 = vxor.u32 %v1170, 2147483648
      %v1175 = vmul.f32 %v1174, 1.442695
      %v1176 = vpow.pop %v1175
      %v1177 = vadd.f32 %v1176, 1.0
      %v1178 = vrcp.pop %v1177
      %v1179 = vmul.f32 %v1177, %v1178
      %v1180 = vsub.f32 1.0, %v1179
      %v1181 = vmul.f32 %v1178, %v1180
      %v1182 = vadd.f32 %v1178, %v1181
      %vm1183 = vweird.f32 %v1177
      %vm1184 = vweird.f32 %v1178
      %vm1185 = vmor %vm1183, %vm1184
      %v1186 = vsel %vm1185, %v1178, %v1182
      %v1187 = vand.u32 2147483647, %v1177
      %vm1188 = vcmp.eq.f32.partialorder %v1187, 8.507059e+37
      %v1189 = vand.u32 %v1177, 2147483648
      %v1190 = vor.u32 1.1754944e-38, %v1189
      %v1191 = vsel %vm1188, %v1190, %v1186
      %v1192 = vmul.f32 1.0, %v1191
      %v1193 = vxor.u32 %v1171, 2147483648
      %v1194 = vmul.f32 %v1193, 1.442695
      %v1195 = vpow.pop %v1194
      %v1196 = vadd.f32 %v1195, 1.0
      %v1197 = vrcp.pop %v1196
      %v1198 = vmul.f32 %v1196, %v1197
      %v1199 = vsub.f32 1.0, %v1198
      %v1200 = vmul.f32 %v1197, %v1199
      %v1201 = vadd.f32 %v1197, %v1200
      %vm1202 = vweird.f32 %v1196
      %vm1203 = vweird.f32 %v1197
      %vm1204 = vmor %vm1202, %vm1203
      %v1205 = vsel %vm1204, %v1197, %v1201
      %v1206 = vand.u32 2147483647, %v1196
      %vm1207 = vcmp.eq.f32.partialorder %v1206, 8.507059e+37
      %v1208 = vand.u32 %v1196, 2147483648
      %v1209 = vor.u32 1.1754944e-38, %v1208
      %v1210 = vsel %vm1207, %v1209, %v1205
      %v1211 = vmul.f32 1.0, %v1210
      %v1212 = vtanh.pop %v1172
      %v1213 = vxor.u32 %v1173, 2147483648
      %v1214 = vmul.f32 %v1213, 1.442695
      %v1215 = vpow.pop %v1214
      %v1216 = vadd.f32 %v1215, 1.0
      %v1217 = vrcp.pop %v1216
      %v1218 = vmul.f32 %v1216, %v1217
      %v1219 = vsub.f32 1.0, %v1218
      %v1220 = vmul.f32 %v1217, %v1219
      %v1221 = vadd.f32 %v1217, %v1220
      %vm1222 = vweird.f32 %v1216
      %vm1223 = vweird.f32 %v1217
      %vm1224 = vmor %vm1222, %vm1223
      %v1225 = vsel %vm1224, %v1217, %v1221
      %v1226 = vand.u32 2147483647, %v1216
      %vm1227 = vcmp.eq.f32.partialorder %v1226, 8.507059e+37
      %v1228 = vand.u32 %v1216, 2147483648
      %v1229 = vor.u32 1.1754944e-38, %v1228
      %v1230 = vsel %vm1227, %v1229, %v1225
      %v1231 = vmul.f32 1.0, %v1230
      %v1232 = vmul.f32 %v1211, %v1103
      %v1233 = vmul.f32 %v1192, %v1212
      %v1234 = vadd.f32 %v1232, %v1233
      %v1235 = vtanh.pop %v1234
      %v1236 = vmul.f32 %v1231, %v1235
      %v1237 = vpack.c.bf16 %v1236, %v1236
      %s1238 = smul.u32 4, 2
      %s1239 = smul.addr %s1238, 4
      %s1240 = scalar_lea.vmem [#allocation3], %s1239
      %1241 = vst [vmem:[%s1240] sm:$0xf] %v1237
      %s1242 = smul.u32 5, 4
      %s1243 = smul.addr %s1242, 8
      %s1244 = scalar_lea.vmem [#allocation2], %s1243
      %v1245 = vld [vmem:[%s1244] sm:$0xff]
      %v1246 = vld [vmem:[%s1244 + $0x8] sm:$0xff]
      %v1247 = vld [vmem:[%s1244 + $0x10] sm:$0xff]
      %v1248 = vld [vmem:[%s1244 + $0x18] sm:$0xff]
      %1249 = vmatpush.bf16.msra.mxu0 %v558
      %1250 = vmatpush.bf16.msra.mxu0 %v554
      %1251 = vmatpush.bf16.msra.mxu0 %v550
      %1252 = vmatpush.bf16.msra.mxu0 %v546
      %1253 = vmatpush.bf16.msra.mxu0 %v542
      %1254 = vmatpush.bf16.msra.mxu0 %v538
      %1255 = vmatpush.bf16.msra.mxu0 %v534
      %1256 = vmatpush.bf16.msra.mxu0 %v530
      %1257 = vmatmul.bf16.gmra.mxu0 %v1237
      %v1258 = vpop.f32.mrf.mxu0
      %v1259 = vadd.f32 0.0, %v1258
      %v1260 = vpop.f32.mrf.mxu0
      %1261 = vdwg.mxu0
      %1262 = vmatpush.bf16.msra.mxu0 %v559
      %1263 = vmatpush.bf16.msra.mxu0 %v555
      %1264 = vmatpush.bf16.msra.mxu0 %v551
      %1265 = vmatpush.bf16.msra.mxu0 %v547
      %1266 = vmatpush.bf16.msra.mxu0 %v543
      %1267 = vmatpush.bf16.msra.mxu0 %v539
      %1268 = vmatpush.bf16.msra.mxu0 %v535
      %1269 = vmatpush.bf16.msra.mxu0 %v531
      %1270 = vmatmul.bf16.gmra.mxu0 %v1237
      %v1271 = vpop.f32.mrf.mxu0
      %v1272 = vadd.f32 0.0, %v1271
      %v1273 = vpop.f32.mrf.mxu0
      %1274 = vdwg.mxu0
      %1275 = vmatpush.bf16.msra.mxu0 %v560
      %1276 = vmatpush.bf16.msra.mxu0 %v556
      %1277 = vmatpush.bf16.msra.mxu0 %v552
      %1278 = vmatpush.bf16.msra.mxu0 %v548
      %1279 = vmatpush.bf16.msra.mxu0 %v544
      %1280 = vmatpush.bf16.msra.mxu0 %v540
      %1281 = vmatpush.bf16.msra.mxu0 %v536
      %1282 = vmatpush.bf16.msra.mxu0 %v532
      %1283 = vmatmul.bf16.gmra.mxu0 %v1237
      %v1284 = vpop.f32.mrf.mxu0
      %v1285 = vadd.f32 0.0, %v1284
      %v1286 = vpop.f32.mrf.mxu0
      %1287 = vdwg.mxu0
      %1288 = vmatpush.bf16.msra.mxu0 %v561
      %1289 = vmatpush.bf16.msra.mxu0 %v557
      %1290 = vmatpush.bf16.msra.mxu0 %v553
      %1291 = vmatpush.bf16.msra.mxu0 %v549
      %1292 = vmatpush.bf16.msra.mxu0 %v545
      %1293 = vmatpush.bf16.msra.mxu0 %v541
      %1294 = vmatpush.bf16.msra.mxu0 %v537
      %1295 = vmatpush.bf16.msra.mxu0 %v533
      %1296 = vmatmul.bf16.gmra.mxu0 %v1237
      %v1297 = vpop.f32.mrf.mxu0
      %v1298 = vadd.f32 0.0, %v1297
      %v1299 = vpop.f32.mrf.mxu0
      %1300 = vdwg.mxu0
      %v1301 = vadd.f32 %v1245, %v1259
      %v1302 = vadd.f32 %v1246, %v1272
      %v1303 = vadd.f32 %v1247, %v1285
      %v1304 = vadd.f32 %v1248, %v1298
      %v1305 = vxor.u32 %v1301, 2147483648
      %v1306 = vmul.f32 %v1305, 1.442695
      %v1307 = vpow.pop %v1306
      %v1308 = vadd.f32 %v1307, 1.0
      %v1309 = vrcp.pop %v1308
      %v1310 = vmul.f32 %v1308, %v1309
      %v1311 = vsub.f32 1.0, %v1310
      %v1312 = vmul.f32 %v1309, %v1311
      %v1313 = vadd.f32 %v1309, %v1312
      %vm1314 = vweird.f32 %v1308
      %vm1315 = vweird.f32 %v1309
      %vm1316 = vmor %vm1314, %vm1315
      %v1317 = vsel %vm1316, %v1309, %v1313
      %v1318 = vand.u32 2147483647, %v1308
      %vm1319 = vcmp.eq.f32.partialorder %v1318, 8.507059e+37
      %v1320 = vand.u32 %v1308, 2147483648
      %v1321 = vor.u32 1.1754944e-38, %v1320
      %v1322 = vsel %vm1319, %v1321, %v1317
      %v1323 = vmul.f32 1.0, %v1322
      %v1324 = vxor.u32 %v1302, 2147483648
      %v1325 = vmul.f32 %v1324, 1.442695
      %v1326 = vpow.pop %v1325
      %v1327 = vadd.f32 %v1326, 1.0
      %v1328 = vrcp.pop %v1327
      %v1329 = vmul.f32 %v1327, %v1328
      %v1330 = vsub.f32 1.0, %v1329
      %v1331 = vmul.f32 %v1328, %v1330
      %v1332 = vadd.f32 %v1328, %v1331
      %vm1333 = vweird.f32 %v1327
      %vm1334 = vweird.f32 %v1328
      %vm1335 = vmor %vm1333, %vm1334
      %v1336 = vsel %vm1335, %v1328, %v1332
      %v1337 = vand.u32 2147483647, %v1327
      %vm1338 = vcmp.eq.f32.partialorder %v1337, 8.507059e+37
      %v1339 = vand.u32 %v1327, 2147483648
      %v1340 = vor.u32 1.1754944e-38, %v1339
      %v1341 = vsel %vm1338, %v1340, %v1336
      %v1342 = vmul.f32 1.0, %v1341
      %v1343 = vtanh.pop %v1303
      %v1344 = vxor.u32 %v1304, 2147483648
      %v1345 = vmul.f32 %v1344, 1.442695
      %v1346 = vpow.pop %v1345
      %v1347 = vadd.f32 %v1346, 1.0
      %v1348 = vrcp.pop %v1347
      %v1349 = vmul.f32 %v1347, %v1348
      %v1350 = vsub.f32 1.0, %v1349
      %v1351 = vmul.f32 %v1348, %v1350
      %v1352 = vadd.f32 %v1348, %v1351
      %vm1353 = vweird.f32 %v1347
      %vm1354 = vweird.f32 %v1348
      %vm1355 = vmor %vm1353, %vm1354
      %v1356 = vsel %vm1355, %v1348, %v1352
      %v1357 = vand.u32 2147483647, %v1347
      %vm1358 = vcmp.eq.f32.partialorder %v1357, 8.507059e+37
      %v1359 = vand.u32 %v1347, 2147483648
      %v1360 = vor.u32 1.1754944e-38, %v1359
      %v1361 = vsel %vm1358, %v1360, %v1356
      %v1362 = vmul.f32 1.0, %v1361
      %v1363 = vmul.f32 %v1342, %v1234
      %v1364 = vmul.f32 %v1323, %v1343
      %v1365 = vadd.f32 %v1363, %v1364
      %v1366 = vtanh.pop %v1365
      %v1367 = vmul.f32 %v1362, %v1366
      %v1368 = vpack.c.bf16 %v1367, %v1367
      %s1369 = smul.u32 5, 2
      %s1370 = smul.addr %s1369, 4
      %s1371 = scalar_lea.vmem [#allocation3], %s1370
      %1372 = vst [vmem:[%s1371] sm:$0xf] %v1368
      %s1373 = smul.u32 6, 4
      %s1374 = smul.addr %s1373, 8
      %s1375 = scalar_lea.vmem [#allocation2], %s1374
      %v1376 = vld [vmem:[%s1375] sm:$0xff]
      %v1377 = vld [vmem:[%s1375 + $0x8] sm:$0xff]
      %v1378 = vld [vmem:[%s1375 + $0x10] sm:$0xff]
      %v1379 = vld [vmem:[%s1375 + $0x18] sm:$0xff]
      %1380 = vmatpush.bf16.msra.mxu0 %v558
      %1381 = vmatpush.bf16.msra.mxu0 %v554
      %1382 = vmatpush.bf16.msra.mxu0 %v550
      %1383 = vmatpush.bf16.msra.mxu0 %v546
      %1384 = vmatpush.bf16.msra.mxu0 %v542
      %1385 = vmatpush.bf16.msra.mxu0 %v538
      %1386 = vmatpush.bf16.msra.mxu0 %v534
      %1387 = vmatpush.bf16.msra.mxu0 %v530
      %1388 = vmatmul.bf16.gmra.mxu0 %v1368
      %v1389 = vpop.f32.mrf.mxu0
      %v1390 = vadd.f32 0.0, %v1389
      %v1391 = vpop.f32.mrf.mxu0
      %1392 = vdwg.mxu0
      %1393 = vmatpush.bf16.msra.mxu0 %v559
      %1394 = vmatpush.bf16.msra.mxu0 %v555
      %1395 = vmatpush.bf16.msra.mxu0 %v551
      %1396 = vmatpush.bf16.msra.mxu0 %v547
      %1397 = vmatpush.bf16.msra.mxu0 %v543
      %1398 = vmatpush.bf16.msra.mxu0 %v539
      %1399 = vmatpush.bf16.msra.mxu0 %v535
      %1400 = vmatpush.bf16.msra.mxu0 %v531
      %1401 = vmatmul.bf16.gmra.mxu0 %v1368
      %v1402 = vpop.f32.mrf.mxu0
      %v1403 = vadd.f32 0.0, %v1402
      %v1404 = vpop.f32.mrf.mxu0
      %1405 = vdwg.mxu0
      %1406 = vmatpush.bf16.msra.mxu0 %v560
      %1407 = vmatpush.bf16.msra.mxu0 %v556
      %1408 = vmatpush.bf16.msra.mxu0 %v552
      %1409 = vmatpush.bf16.msra.mxu0 %v548
      %1410 = vmatpush.bf16.msra.mxu0 %v544
      %1411 = vmatpush.bf16.msra.mxu0 %v540
      %1412 = vmatpush.bf16.msra.mxu0 %v536
      %1413 = vmatpush.bf16.msra.mxu0 %v532
      %1414 = vmatmul.bf16.gmra.mxu0 %v1368
      %v1415 = vpop.f32.mrf.mxu0
      %v1416 = vadd.f32 0.0, %v1415
      %v1417 = vpop.f32.mrf.mxu0
      %1418 = vdwg.mxu0
      %1419 = vmatpush.bf16.msra.mxu0 %v561
      %1420 = vmatpush.bf16.msra.mxu0 %v557
      %1421 = vmatpush.bf16.msra.mxu0 %v553
      %1422 = vmatpush.bf16.msra.mxu0 %v549
      %1423 = vmatpush.bf16.msra.mxu0 %v545
      %1424 = vmatpush.bf16.msra.mxu0 %v541
      %1425 = vmatpush.bf16.msra.mxu0 %v537
      %1426 = vmatpush.bf16.msra.mxu0 %v533
      %1427 = vmatmul.bf16.gmra.mxu0 %v1368
      %v1428 = vpop.f32.mrf.mxu0
      %v1429 = vadd.f32 0.0, %v1428
      %v1430 = vpop.f32.mrf.mxu0
      %1431 = vdwg.mxu0
      %v1432 = vadd.f32 %v1376, %v1390
      %v1433 = vadd.f32 %v1377, %v1403
      %v1434 = vadd.f32 %v1378, %v1416
      %v1435 = vadd.f32 %v1379, %v1429
      %v1436 = vxor.u32 %v1432, 2147483648
      %v1437 = vmul.f32 %v1436, 1.442695
      %v1438 = vpow.pop %v1437
      %v1439 = vadd.f32 %v1438, 1.0
      %v1440 = vrcp.pop %v1439
      %v1441 = vmul.f32 %v1439, %v1440
      %v1442 = vsub.f32 1.0, %v1441
      %v1443 = vmul.f32 %v1440, %v1442
      %v1444 = vadd.f32 %v1440, %v1443
      %vm1445 = vweird.f32 %v1439
      %vm1446 = vweird.f32 %v1440
      %vm1447 = vmor %vm1445, %vm1446
      %v1448 = vsel %vm1447, %v1440, %v1444
      %v1449 = vand.u32 2147483647, %v1439
      %vm1450 = vcmp.eq.f32.partialorder %v1449, 8.507059e+37
      %v1451 = vand.u32 %v1439, 2147483648
      %v1452 = vor.u32 1.1754944e-38, %v1451
      %v1453 = vsel %vm1450, %v1452, %v1448
      %v1454 = vmul.f32 1.0, %v1453
      %v1455 = vxor.u32 %v1433, 2147483648
      %v1456 = vmul.f32 %v1455, 1.442695
      %v1457 = vpow.pop %v1456
      %v1458 = vadd.f32 %v1457, 1.0
      %v1459 = vrcp.pop %v1458
      %v1460 = vmul.f32 %v1458, %v1459
      %v1461 = vsub.f32 1.0, %v1460
      %v1462 = vmul.f32 %v1459, %v1461
      %v1463 = vadd.f32 %v1459, %v1462
      %vm1464 = vweird.f32 %v1458
      %vm1465 = vweird.f32 %v1459
      %vm1466 = vmor %vm1464, %vm1465
      %v1467 = vsel %vm1466, %v1459, %v1463
      %v1468 = vand.u32 2147483647, %v1458
      %vm1469 = vcmp.eq.f32.partialorder %v1468, 8.507059e+37
      %v1470 = vand.u32 %v1458, 2147483648
      %v1471 = vor.u32 1.1754944e-38, %v1470
      %v1472 = vsel %vm1469, %v1471, %v1467
      %v1473 = vmul.f32 1.0, %v1472
      %v1474 = vtanh.pop %v1434
      %v1475 = vxor.u32 %v1435, 2147483648
      %v1476 = vmul.f32 %v1475, 1.442695
      %v1477 = vpow.pop %v1476
      %v1478 = vadd.f32 %v1477, 1.0
      %v1479 = vrcp.pop %v1478
      %v1480 = vmul.f32 %v1478, %v1479
      %v1481 = vsub.f32 1.0, %v1480
      %v1482 = vmul.f32 %v1479, %v1481
      %v1483 = vadd.f32 %v1479, %v1482
      %vm1484 = vweird.f32 %v1478
      %vm1485 = vweird.f32 %v1479
      %vm1486 = vmor %vm1484, %vm1485
      %v1487 = vsel %vm1486, %v1479, %v1483
      %v1488 = vand.u32 2147483647, %v1478
      %vm1489 = vcmp.eq.f32.partialorder %v1488, 8.507059e+37
      %v1490 = vand.u32 %v1478, 2147483648
      %v1491 = vor.u32 1.1754944e-38, %v1490
      %v1492 = vsel %vm1489, %v1491, %v1487
      %v1493 = vmul.f32 1.0, %v1492
      %v1494 = vmul.f32 %v1473, %v1365
      %v1495 = vmul.f32 %v1454, %v1474
      %v1496 = vadd.f32 %v1494, %v1495
      %v1497 = vtanh.pop %v1496
      %v1498 = vmul.f32 %v1493, %v1497
      %v1499 = vpack.c.bf16 %v1498, %v1498
      %s1500 = smul.u32 6, 2
      %s1501 = smul.addr %s1500, 4
      %s1502 = scalar_lea.vmem [#allocation3], %s1501
      %1503 = vst [vmem:[%s1502] sm:$0xf] %v1499
      %s1504 = smul.u32 7, 4
      %s1505 = smul.addr %s1504, 8
      %s1506 = scalar_lea.vmem [#allocation2], %s1505
      %v1507 = vld [vmem:[%s1506] sm:$0xff]
      %v1508 = vld [vmem:[%s1506 + $0x8] sm:$0xff]
      %v1509 = vld [vmem:[%s1506 + $0x10] sm:$0xff]
      %v1510 = vld [vmem:[%s1506 + $0x18] sm:$0xff]
      %1511 = vmatpush.bf16.msra.mxu0 %v558
      %1512 = vmatpush.bf16.msra.mxu0 %v554
      %1513 = vmatpush.bf16.msra.mxu0 %v550
      %1514 = vmatpush.bf16.msra.mxu0 %v546
      %1515 = vmatpush.bf16.msra.mxu0 %v542
      %1516 = vmatpush.bf16.msra.mxu0 %v538
      %1517 = vmatpush.bf16.msra.mxu0 %v534
      %1518 = vmatpush.bf16.msra.mxu0 %v530
      %1519 = vmatmul.bf16.gmra.mxu0 %v1499
      %v1520 = vpop.f32.mrf.mxu0
      %v1521 = vadd.f32 0.0, %v1520
      %v1522 = vpop.f32.mrf.mxu0
      %1523 = vdwg.mxu0
      %1524 = vmatpush.bf16.msra.mxu0 %v559
      %1525 = vmatpush.bf16.msra.mxu0 %v555
      %1526 = vmatpush.bf16.msra.mxu0 %v551
      %1527 = vmatpush.bf16.msra.mxu0 %v547
      %1528 = vmatpush.bf16.msra.mxu0 %v543
      %1529 = vmatpush.bf16.msra.mxu0 %v539
      %1530 = vmatpush.bf16.msra.mxu0 %v535
      %1531 = vmatpush.bf16.msra.mxu0 %v531
      %1532 = vmatmul.bf16.gmra.mxu0 %v1499
      %v1533 = vpop.f32.mrf.mxu0
      %v1534 = vadd.f32 0.0, %v1533
      %v1535 = vpop.f32.mrf.mxu0
      %1536 = vdwg.mxu0
      %1537 = vmatpush.bf16.msra.mxu0 %v560
      %1538 = vmatpush.bf16.msra.mxu0 %v556
      %1539 = vmatpush.bf16.msra.mxu0 %v552
      %1540 = vmatpush.bf16.msra.mxu0 %v548
      %1541 = vmatpush.bf16.msra.mxu0 %v544
      %1542 = vmatpush.bf16.msra.mxu0 %v540
      %1543 = vmatpush.bf16.msra.mxu0 %v536
      %1544 = vmatpush.bf16.msra.mxu0 %v532
      %1545 = vmatmul.bf16.gmra.mxu0 %v1499
      %v1546 = vpop.f32.mrf.mxu0
      %v1547 = vadd.f32 0.0, %v1546
      %v1548 = vpop.f32.mrf.mxu0
      %1549 = vdwg.mxu0
      %1550 = vmatpush.bf16.msra.mxu0 %v561
      %1551 = vmatpush.bf16.msra.mxu0 %v557
      %1552 = vmatpush.bf16.msra.mxu0 %v553
      %1553 = vmatpush.bf16.msra.mxu0 %v549
      %1554 = vmatpush.bf16.msra.mxu0 %v545
      %1555 = vmatpush.bf16.msra.mxu0 %v541
      %1556 = vmatpush.bf16.msra.mxu0 %v537
      %1557 = vmatpush.bf16.msra.mxu0 %v533
      %1558 = vmatmul.bf16.gmra.mxu0 %v1499
      %v1559 = vpop.f32.mrf.mxu0
      %v1560 = vadd.f32 0.0, %v1559
      %v1561 = vpop.f32.mrf.mxu0
      %1562 = vdwg.mxu0
      %v1563 = vadd.f32 %v1507, %v1521
      %v1564 = vadd.f32 %v1508, %v1534
      %v1565 = vadd.f32 %v1509, %v1547
      %v1566 = vadd.f32 %v1510, %v1560
      %v1567 = vxor.u32 %v1563, 2147483648
      %v1568 = vmul.f32 %v1567, 1.442695
      %v1569 = vpow.pop %v1568
      %v1570 = vadd.f32 %v1569, 1.0
      %v1571 = vrcp.pop %v1570
      %v1572 = vmul.f32 %v1570, %v1571
      %v1573 = vsub.f32 1.0, %v1572
      %v1574 = vmul.f32 %v1571, %v1573
      %v1575 = vadd.f32 %v1571, %v1574
      %vm1576 = vweird.f32 %v1570
      %vm1577 = vweird.f32 %v1571
      %vm1578 = vmor %vm1576, %vm1577
      %v1579 = vsel %vm1578, %v1571, %v1575
      %v1580 = vand.u32 2147483647, %v1570
      %vm1581 = vcmp.eq.f32.partialorder %v1580, 8.507059e+37
      %v1582 = vand.u32 %v1570, 2147483648
      %v1583 = vor.u32 1.1754944e-38, %v1582
      %v1584 = vsel %vm1581, %v1583, %v1579
      %v1585 = vmul.f32 1.0, %v1584
      %v1586 = vxor.u32 %v1564, 2147483648
      %v1587 = vmul.f32 %v1586, 1.442695
      %v1588 = vpow.pop %v1587
      %v1589 = vadd.f32 %v1588, 1.0
      %v1590 = vrcp.pop %v1589
      %v1591 = vmul.f32 %v1589, %v1590
      %v1592 = vsub.f32 1.0, %v1591
      %v1593 = vmul.f32 %v1590, %v1592
      %v1594 = vadd.f32 %v1590, %v1593
      %vm1595 = vweird.f32 %v1589
      %vm1596 = vweird.f32 %v1590
      %vm1597 = vmor %vm1595, %vm1596
      %v1598 = vsel %vm1597, %v1590, %v1594
      %v1599 = vand.u32 2147483647, %v1589
      %vm1600 = vcmp.eq.f32.partialorder %v1599, 8.507059e+37
      %v1601 = vand.u32 %v1589, 2147483648
      %v1602 = vor.u32 1.1754944e-38, %v1601
      %v1603 = vsel %vm1600, %v1602, %v1598
      %v1604 = vmul.f32 1.0, %v1603
      %v1605 = vtanh.pop %v1565
      %v1606 = vxor.u32 %v1566, 2147483648
      %v1607 = vmul.f32 %v1606, 1.442695
      %v1608 = vpow.pop %v1607
      %v1609 = vadd.f32 %v1608, 1.0
      %v1610 = vrcp.pop %v1609
      %v1611 = vmul.f32 %v1609, %v1610
      %v1612 = vsub.f32 1.0, %v1611
      %v1613 = vmul.f32 %v1610, %v1612
      %v1614 = vadd.f32 %v1610, %v1613
      %vm1615 = vweird.f32 %v1609
      %vm1616 = vweird.f32 %v1610
      %vm1617 = vmor %vm1615, %vm1616
      %v1618 = vsel %vm1617, %v1610, %v1614
      %v1619 = vand.u32 2147483647, %v1609
      %vm1620 = vcmp.eq.f32.partialorder %v1619, 8.507059e+37
      %v1621 = vand.u32 %v1609, 2147483648
      %v1622 = vor.u32 1.1754944e-38, %v1621
      %v1623 = vsel %vm1620, %v1622, %v1618
      %v1624 = vmul.f32 1.0, %v1623
      %v1625 = vmul.f32 %v1604, %v1496
      %v1626 = vmul.f32 %v1585, %v1605
      %v1627 = vadd.f32 %v1625, %v1626
      %v1628 = vtanh.pop %v1627
      %v1629 = vmul.f32 %v1624, %v1628
      %v1630 = vpack.c.bf16 %v1629, %v1629
      %s1631 = smul.u32 7, 2
      %s1632 = smul.addr %s1631, 4
      %s1633 = scalar_lea.vmem [#allocation3], %s1632
      %1634 = vst [vmem:[%s1633] sm:$0xf] %v1630
      %v1635 = vld [vmem:[#allocation3] sm:$0xf]
      %v1636 = vld [vmem:[#allocation3 + $0x8] sm:$0xf]
      %v1637 = vld [vmem:[#allocation3 + $0x10] sm:$0xf]
      %v1638 = vld [vmem:[#allocation3 + $0x18] sm:$0xf]
      %v1639 = vld [vmem:[#allocation3 + $0x20] sm:$0xf]
      %v1640 = vld [vmem:[#allocation3 + $0x28] sm:$0xf]
      %v1641 = vld [vmem:[#allocation3 + $0x30] sm:$0xf]
      %v1642 = vld [vmem:[#allocation3 + $0x38] sm:$0xf]
      %v1643 = vld [vmem:[#allocation9] sm:$0xff]
      %v1644 = vld [vmem:[#allocation9 + $0x8] sm:$0xff]
      %v1645 = vld [vmem:[#allocation9 + $0x10] sm:$0xff]
      %v1646 = vld [vmem:[#allocation9 + $0x18] sm:$0xff]
      %v1647 = vld [vmem:[#allocation9 + $0x20] sm:$0xff]
      %v1648 = vld [vmem:[#allocation9 + $0x28] sm:$0xff]
      %v1649 = vld [vmem:[#allocation9 + $0x30] sm:$0xff]
      %v1650 = vld [vmem:[#allocation9 + $0x38] sm:$0xff]
      %v1651 = vld [vmem:[#allocation9 + $0x40] sm:$0xff]
      %v1652 = vld [vmem:[#allocation9 + $0x48] sm:$0xff]
      %v1653 = vld [vmem:[#allocation9 + $0x50] sm:$0xff]
      %v1654 = vld [vmem:[#allocation9 + $0x58] sm:$0xff]
      %v1655 = vld [vmem:[#allocation9 + $0x60] sm:$0xff]
      %v1656 = vld [vmem:[#allocation9 + $0x68] sm:$0xff]
      %v1657 = vld [vmem:[#allocation9 + $0x70] sm:$0xff]
      %v1658 = vld [vmem:[#allocation9 + $0x78] sm:$0xff]
      %v1659 = vld [vmem:[#allocation9 + $0x80] sm:$0xff]
      %v1660 = vld [vmem:[#allocation9 + $0x88] sm:$0xff]
      %v1661 = vld [vmem:[#allocation9 + $0x90] sm:$0xff]
      %v1662 = vld [vmem:[#allocation9 + $0x98] sm:$0xff]
      %v1663 = vld [vmem:[#allocation9 + $0xa0] sm:$0xff]
      %v1664 = vld [vmem:[#allocation9 + $0xa8] sm:$0xff]
      %v1665 = vld [vmem:[#allocation9 + $0xb0] sm:$0xff]
      %v1666 = vld [vmem:[#allocation9 + $0xb8] sm:$0xff]
      %v1667 = vld [vmem:[#allocation9 + $0xc0] sm:$0xff]
      %v1668 = vld [vmem:[#allocation9 + $0xc8] sm:$0xff]
      %v1669 = vld [vmem:[#allocation9 + $0xd0] sm:$0xff]
      %v1670 = vld [vmem:[#allocation9 + $0xd8] sm:$0xff]
      %v1671 = vld [vmem:[#allocation9 + $0xe0] sm:$0xff]
      %v1672 = vld [vmem:[#allocation9 + $0xe8] sm:$0xff]
      %v1673 = vld [vmem:[#allocation9 + $0xf0] sm:$0xff]
      %v1674 = vld [vmem:[#allocation9 + $0xf8] sm:$0xff]
      %v1675 = vld [vmem:[%s6] sm:$0xf]
      %v1677 = vperm.slane %v1675, 0
      %v1678 = vperm.slane %v1675, 1
      %v1679 = vperm.slane %v1675, 2
      %v1680 = vperm.slane %v1675, 3
      %v1693 = vunpack.c.l.b16 %v1635
      %v1694 = vunpack.c.l.b16 %v1636
      %v1695 = vunpack.c.l.b16 %v1637
      %v1696 = vunpack.c.l.b16 %v1638
      %v1697 = vunpack.c.l.b16 %v1639
      %v1698 = vunpack.c.l.b16 %v1640
      %v1699 = vunpack.c.l.b16 %v1641
      %v1700 = vunpack.c.l.b16 %v1642
      %v1701 = vpack.c.b16 %v1694, %v1693
      %v1702 = vpack.c.b16 %v1696, %v1695
      %v1703 = vpack.c.b16 %v1698, %v1697
      %v1704 = vpack.c.b16 %v1700, %v1699
      %v1741 = vunpack.c.l.b16 %v1643
      %v1742 = vunpack.c.h.b16 %v1643
      %v1743 = vunpack.c.l.b16 %v1644
      %v1744 = vunpack.c.h.b16 %v1644
      %v1745 = vunpack.c.l.b16 %v1645
      %v1746 = vunpack.c.h.b16 %v1645
      %v1747 = vunpack.c.l.b16 %v1646
      %v1748 = vunpack.c.h.b16 %v1646
      %v1749 = vunpack.c.l.b16 %v1647
      %v1750 = vunpack.c.h.b16 %v1647
      %v1751 = vunpack.c.l.b16 %v1648
      %v1752 = vunpack.c.h.b16 %v1648
      %v1753 = vunpack.c.l.b16 %v1649
      %v1754 = vunpack.c.h.b16 %v1649
      %v1755 = vunpack.c.l.b16 %v1650
      %v1756 = vunpack.c.h.b16 %v1650
      %v1757 = vunpack.c.l.b16 %v1651
      %v1758 = vunpack.c.h.b16 %v1651
      %v1759 = vunpack.c.l.b16 %v1652
      %v1760 = vunpack.c.h.b16 %v1652
      %v1761 = vunpack.c.l.b16 %v1653
      %v1762 = vunpack.c.h.b16 %v1653
      %v1763 = vunpack.c.l.b16 %v1654
      %v1764 = vunpack.c.h.b16 %v1654
      %v1765 = vunpack.c.l.b16 %v1655
      %v1766 = vunpack.c.h.b16 %v1655
      %v1767 = vunpack.c.l.b16 %v1656
      %v1768 = vunpack.c.h.b16 %v1656
      %v1769 = vunpack.c.l.b16 %v1657
      %v1770 = vunpack.c.h.b16 %v1657
      %v1771 = vunpack.c.l.b16 %v1658
      %v1772 = vunpack.c.h.b16 %v1658
      %v1773 = vunpack.c.l.b16 %v1659
      %v1774 = vunpack.c.h.b16 %v1659
      %v1775 = vunpack.c.l.b16 %v1660
      %v1776 = vunpack.c.h.b16 %v1660
      %v1777 = vunpack.c.l.b16 %v1661
      %v1778 = vunpack.c.h.b16 %v1661
      %v1779 = vunpack.c.l.b16 %v1662
      %v1780 = vunpack.c.h.b16 %v1662
      %v1781 = vunpack.c.l.b16 %v1663
      %v1782 = vunpack.c.h.b16 %v1663
      %v1783 = vunpack.c.l.b16 %v1664
      %v1784 = vunpack.c.h.b16 %v1664
      %v1785 = vunpack.c.l.b16 %v1665
      %v1786 = vunpack.c.h.b16 %v1665
      %v1787 = vunpack.c.l.b16 %v1666
      %v1788 = vunpack.c.h.b16 %v1666
      %v1789 = vunpack.c.l.b16 %v1667
      %v1790 = vunpack.c.h.b16 %v1667
      %v1791 = vunpack.c.l.b16 %v1668
      %v1792 = vunpack.c.h.b16 %v1668
      %v1793 = vunpack.c.l.b16 %v1669
      %v1794 = vunpack.c.h.b16 %v1669
      %v1795 = vunpack.c.l.b16 %v1670
      %v1796 = vunpack.c.h.b16 %v1670
      %v1797 = vunpack.c.l.b16 %v1671
      %v1798 = vunpack.c.h.b16 %v1671
      %v1799 = vunpack.c.l.b16 %v1672
      %v1800 = vunpack.c.h.b16 %v1672
      %v1801 = vunpack.c.l.b16 %v1673
      %v1802 = vunpack.c.h.b16 %v1673
      %v1803 = vunpack.c.l.b16 %v1674
      %v1804 = vunpack.c.h.b16 %v1674
      %v1805 = vpack.c.b16 %v1745, %v1741
      %v1806 = vpack.c.b16 %v1746, %v1742
      %v1807 = vpack.c.b16 %v1747, %v1743
      %v1808 = vpack.c.b16 %v1748, %v1744
      %v1809 = vpack.c.b16 %v1753, %v1749
      %v1810 = vpack.c.b16 %v1754, %v1750
      %v1811 = vpack.c.b16 %v1755, %v1751
      %v1812 = vpack.c.b16 %v1756, %v1752
      %v1813 = vpack.c.b16 %v1761, %v1757
      %v1814 = vpack.c.b16 %v1762, %v1758
      %v1815 = vpack.c.b16 %v1763, %v1759
      %v1816 = vpack.c.b16 %v1764, %v1760
      %v1817 = vpack.c.b16 %v1769, %v1765
      %v1818 = vpack.c.b16 %v1770, %v1766
      %v1819 = vpack.c.b16 %v1771, %v1767
      %v1820 = vpack.c.b16 %v1772, %v1768
      %v1821 = vpack.c.b16 %v1777, %v1773
      %v1822 = vpack.c.b16 %v1778, %v1774
      %v1823 = vpack.c.b16 %v1779, %v1775
      %v1824 = vpack.c.b16 %v1780, %v1776
      %v1825 = vpack.c.b16 %v1785, %v1781
      %v1826 = vpack.c.b16 %v1786, %v1782
      %v1827 = vpack.c.b16 %v1787, %v1783
      %v1828 = vpack.c.b16 %v1788, %v1784
      %v1829 = vpack.c.b16 %v1793, %v1789
      %v1830 = vpack.c.b16 %v1794, %v1790
      %v1831 = vpack.c.b16 %v1795, %v1791
      %v1832 = vpack.c.b16 %v1796, %v1792
      %v1833 = vpack.c.b16 %v1801, %v1797
      %v1834 = vpack.c.b16 %v1802, %v1798
      %v1835 = vpack.c.b16 %v1803, %v1799
      %v1836 = vpack.c.b16 %v1804, %v1800
      %1869 = vmatpush.bf16.msra.mxu0 %v1833
      %1870 = vmatpush.bf16.msra.mxu0 %v1829
      %1871 = vmatpush.bf16.msra.mxu0 %v1825
      %1872 = vmatpush.bf16.msra.mxu0 %v1821
      %1873 = vmatpush.bf16.msra.mxu0 %v1817
      %1874 = vmatpush.bf16.msra.mxu0 %v1813
      %1875 = vmatpush.bf16.msra.mxu0 %v1809
      %1876 = vmatpush.bf16.msra.mxu0 %v1805
      %1877 = vmatmul.bf16.gmra.mxu0 %v1701
      %v1878 = vpop.f32.mrf.mxu0
      %v1879 = vadd.f32 %v1677, %v1878
      %v1880 = vpop.f32.mrf.mxu0
      %v1881 = vadd.f32 %v1677, %v1880
      %1882 = vmatmul.bf16.gmra.mxu0 %v1702
      %v1883 = vpop.f32.mrf.mxu0
      %v1884 = vadd.f32 %v1677, %v1883
      %v1885 = vpop.f32.mrf.mxu0
      %v1886 = vadd.f32 %v1677, %v1885
      %1887 = vmatmul.bf16.gmra.mxu0 %v1703
      %v1888 = vpop.f32.mrf.mxu0
      %v1889 = vadd.f32 %v1677, %v1888
      %v1890 = vpop.f32.mrf.mxu0
      %v1891 = vadd.f32 %v1677, %v1890
      %1892 = vmatmul.bf16.gmra.mxu0 %v1704
      %v1893 = vpop.f32.mrf.mxu0
      %v1894 = vadd.f32 %v1677, %v1893
      %v1895 = vpop.f32.mrf.mxu0
      %v1896 = vadd.f32 %v1677, %v1895
      %1897 = vdwg.mxu0
      %1898 = vmatpush.bf16.msra.mxu0 %v1834
      %1899 = vmatpush.bf16.msra.mxu0 %v1830
      %1900 = vmatpush.bf16.msra.mxu0 %v1826
      %1901 = vmatpush.bf16.msra.mxu0 %v1822
      %1902 = vmatpush.bf16.msra.mxu0 %v1818
      %1903 = vmatpush.bf16.msra.mxu0 %v1814
      %1904 = vmatpush.bf16.msra.mxu0 %v1810
      %1905 = vmatpush.bf16.msra.mxu0 %v1806
      %1906 = vmatmul.bf16.gmra.mxu0 %v1701
      %v1907 = vpop.f32.mrf.mxu0
      %v1908 = vadd.f32 %v1678, %v1907
      %v1909 = vpop.f32.mrf.mxu0
      %v1910 = vadd.f32 %v1678, %v1909
      %1911 = vmatmul.bf16.gmra.mxu0 %v1702
      %v1912 = vpop.f32.mrf.mxu0
      %v1913 = vadd.f32 %v1678, %v1912
      %v1914 = vpop.f32.mrf.mxu0
      %v1915 = vadd.f32 %v1678, %v1914
      %1916 = vmatmul.bf16.gmra.mxu0 %v1703
      %v1917 = vpop.f32.mrf.mxu0
      %v1918 = vadd.f32 %v1678, %v1917
      %v1919 = vpop.f32.mrf.mxu0
      %v1920 = vadd.f32 %v1678, %v1919
      %1921 = vmatmul.bf16.gmra.mxu0 %v1704
      %v1922 = vpop.f32.mrf.mxu0
      %v1923 = vadd.f32 %v1678, %v1922
      %v1924 = vpop.f32.mrf.mxu0
      %v1925 = vadd.f32 %v1678, %v1924
      %1926 = vdwg.mxu0
      %1927 = vmatpush.bf16.msra.mxu0 %v1835
      %1928 = vmatpush.bf16.msra.mxu0 %v1831
      %1929 = vmatpush.bf16.msra.mxu0 %v1827
      %1930 = vmatpush.bf16.msra.mxu0 %v1823
      %1931 = vmatpush.bf16.msra.mxu0 %v1819
      %1932 = vmatpush.bf16.msra.mxu0 %v1815
      %1933 = vmatpush.bf16.msra.mxu0 %v1811
      %1934 = vmatpush.bf16.msra.mxu0 %v1807
      %1935 = vmatmul.bf16.gmra.mxu0 %v1701
      %v1936 = vpop.f32.mrf.mxu0
      %v1937 = vadd.f32 %v1679, %v1936
      %v1938 = vpop.f32.mrf.mxu0
      %v1939 = vadd.f32 %v1679, %v1938
      %1940 = vmatmul.bf16.gmra.mxu0 %v1702
      %v1941 = vpop.f32.mrf.mxu0
      %v1942 = vadd.f32 %v1679, %v1941
      %v1943 = vpop.f32.mrf.mxu0
      %v1944 = vadd.f32 %v1679, %v1943
      %1945 = vmatmul.bf16.gmra.mxu0 %v1703
      %v1946 = vpop.f32.mrf.mxu0
      %v1947 = vadd.f32 %v1679, %v1946
      %v1948 = vpop.f32.mrf.mxu0
      %v1949 = vadd.f32 %v1679, %v1948
      %1950 = vmatmul.bf16.gmra.mxu0 %v1704
      %v1951 = vpop.f32.mrf.mxu0
      %v1952 = vadd.f32 %v1679, %v1951
      %v1953 = vpop.f32.mrf.mxu0
      %v1954 = vadd.f32 %v1679, %v1953
      %1955 = vdwg.mxu0
      %1956 = vmatpush.bf16.msra.mxu0 %v1836
      %1957 = vmatpush.bf16.msra.mxu0 %v1832
      %1958 = vmatpush.bf16.msra.mxu0 %v1828
      %1959 = vmatpush.bf16.msra.mxu0 %v1824
      %1960 = vmatpush.bf16.msra.mxu0 %v1820
      %1961 = vmatpush.bf16.msra.mxu0 %v1816
      %1962 = vmatpush.bf16.msra.mxu0 %v1812
      %1963 = vmatpush.bf16.msra.mxu0 %v1808
      %1964 = vmatmul.bf16.gmra.mxu0 %v1701
      %v1965 = vpop.f32.mrf.mxu0
      %v1966 = vadd.f32 %v1680, %v1965
      %v1967 = vpop.f32.mrf.mxu0
      %v1968 = vadd.f32 %v1680, %v1967
      %1969 = vmatmul.bf16.gmra.mxu0 %v1702
      %v1970 = vpop.f32.mrf.mxu0
      %v1971 = vadd.f32 %v1680, %v1970
      %v1972 = vpop.f32.mrf.mxu0
      %v1973 = vadd.f32 %v1680, %v1972
      %1974 = vmatmul.bf16.gmra.mxu0 %v1703
      %v1975 = vpop.f32.mrf.mxu0
      %v1976 = vadd.f32 %v1680, %v1975
      %v1977 = vpop.f32.mrf.mxu0
      %v1978 = vadd.f32 %v1680, %v1977
      %1979 = vmatmul.bf16.gmra.mxu0 %v1704
      %v1980 = vpop.f32.mrf.mxu0
      %v1981 = vadd.f32 %v1680, %v1980
      %v1982 = vpop.f32.mrf.mxu0
      %v1983 = vadd.f32 %v1680, %v1982
      %1984 = vdwg.mxu0
      %1985 = vst [vmem:[#allocation2] sm:$0xff] %v1879
      %1986 = vst [vmem:[#allocation2 + $0x8] sm:$0xff] %v1908
      %1987 = vst [vmem:[#allocation2 + $0x10] sm:$0xff] %v1937
      %1988 = vst [vmem:[#allocation2 + $0x18] sm:$0xff] %v1966
      %1989 = vst [vmem:[#allocation2 + $0x20] sm:$0xff] %v1881
      %1990 = vst [vmem:[#allocation2 + $0x28] sm:$0xff] %v1910
      %1991 = vst [vmem:[#allocation2 + $0x30] sm:$0xff] %v1939
      %1992 = vst [vmem:[#allocation2 + $0x38] sm:$0xff] %v1968
      %1993 = vst [vmem:[#allocation2 + $0x40] sm:$0xff] %v1884
      %1994 = vst [vmem:[#allocation2 + $0x48] sm:$0xff] %v1913
      %1995 = vst [vmem:[#allocation2 + $0x50] sm:$0xff] %v1942
      %1996 = vst [vmem:[#allocation2 + $0x58] sm:$0xff] %v1971
      %1997 = vst [vmem:[#allocation2 + $0x60] sm:$0xff] %v1886
      %1998 = vst [vmem:[#allocation2 + $0x68] sm:$0xff] %v1915
      %1999 = vst [vmem:[#allocation2 + $0x70] sm:$0xff] %v1944
      %2000 = vst [vmem:[#allocation2 + $0x78] sm:$0xff] %v1973
      %2001 = vst [vmem:[#allocation2 + $0x80] sm:$0xff] %v1889
      %2002 = vst [vmem:[#allocation2 + $0x88] sm:$0xff] %v1918
      %2003 = vst [vmem:[#allocation2 + $0x90] sm:$0xff] %v1947
      %2004 = vst [vmem:[#allocation2 + $0x98] sm:$0xff] %v1976
      %2005 = vst [vmem:[#allocation2 + $0xa0] sm:$0xff] %v1891
      %2006 = vst [vmem:[#allocation2 + $0xa8] sm:$0xff] %v1920
      %2007 = vst [vmem:[#allocation2 + $0xb0] sm:$0xff] %v1949
      %2008 = vst [vmem:[#allocation2 + $0xb8] sm:$0xff] %v1978
      %2009 = vst [vmem:[#allocation2 + $0xc0] sm:$0xff] %v1894
      %2010 = vst [vmem:[#allocation2 + $0xc8] sm:$0xff] %v1923
      %2011 = vst [vmem:[#allocation2 + $0xd0] sm:$0xff] %v1952
      %2012 = vst [vmem:[#allocation2 + $0xd8] sm:$0xff] %v1981
      %2013 = vst [vmem:[#allocation2 + $0xe0] sm:$0xff] %v1896
      %2014 = vst [vmem:[#allocation2 + $0xe8] sm:$0xff] %v1925
      %2015 = vst [vmem:[#allocation2 + $0xf0] sm:$0xff] %v1954
      %2016 = vst [vmem:[#allocation2 + $0xf8] sm:$0xff] %v1983
      %v2017 = vld [vmem:[%s429] sm:$0xff]
      %v2018 = vld [vmem:[%s429 + $0x8] sm:$0xff]
      %v2019 = vld [vmem:[%s429 + $0x10] sm:$0xff]
      %v2020 = vld [vmem:[%s429 + $0x18] sm:$0xff]
      %v2053 = vunpack.c.l.b16 %v395
      %v2054 = vunpack.c.h.b16 %v395
      %v2055 = vunpack.c.l.b16 %v396
      %v2056 = vunpack.c.h.b16 %v396
      %v2057 = vunpack.c.l.b16 %v397
      %v2058 = vunpack.c.h.b16 %v397
      %v2059 = vunpack.c.l.b16 %v398
      %v2060 = vunpack.c.h.b16 %v398
      %v2061 = vunpack.c.l.b16 %v399
      %v2062 = vunpack.c.h.b16 %v399
      %v2063 = vunpack.c.l.b16 %v400
      %v2064 = vunpack.c.h.b16 %v400
      %v2065 = vunpack.c.l.b16 %v401
      %v2066 = vunpack.c.h.b16 %v401
      %v2067 = vunpack.c.l.b16 %v402
      %v2068 = vunpack.c.h.b16 %v402
      %v2069 = vunpack.c.l.b16 %v403
      %v2070 = vunpack.c.h.b16 %v403
      %v2071 = vunpack.c.l.b16 %v404
      %v2072 = vunpack.c.h.b16 %v404
      %v2073 = vunpack.c.l.b16 %v405
      %v2074 = vunpack.c.h.b16 %v405
      %v2075 = vunpack.c.l.b16 %v406
      %v2076 = vunpack.c.h.b16 %v406
      %v2077 = vunpack.c.l.b16 %v407
      %v2078 = vunpack.c.h.b16 %v407
      %v2079 = vunpack.c.l.b16 %v408
      %v2080 = vunpack.c.h.b16 %v408
      %v2081 = vunpack.c.l.b16 %v409
      %v2082 = vunpack.c.h.b16 %v409
      %v2083 = vunpack.c.l.b16 %v410
      %v2084 = vunpack.c.h.b16 %v410
      %v2085 = vunpack.c.l.b16 %v411
      %v2086 = vunpack.c.h.b16 %v411
      %v2087 = vunpack.c.l.b16 %v412
      %v2088 = vunpack.c.h.b16 %v412
      %v2089 = vunpack.c.l.b16 %v413
      %v2090 = vunpack.c.h.b16 %v413
      %v2091 = vunpack.c.l.b16 %v414
      %v2092 = vunpack.c.h.b16 %v414
      %v2093 = vunpack.c.l.b16 %v415
      %v2094 = vunpack.c.h.b16 %v415
      %v2095 = vunpack.c.l.b16 %v416
      %v2096 = vunpack.c.h.b16 %v416
      %v2097 = vunpack.c.l.b16 %v417
      %v2098 = vunpack.c.h.b16 %v417
      %v2099 = vunpack.c.l.b16 %v418
      %v2100 = vunpack.c.h.b16 %v418
      %v2101 = vunpack.c.l.b16 %v419
      %v2102 = vunpack.c.h.b16 %v419
      %v2103 = vunpack.c.l.b16 %v420
      %v2104 = vunpack.c.h.b16 %v420
      %v2105 = vunpack.c.l.b16 %v421
      %v2106 = vunpack.c.h.b16 %v421
      %v2107 = vunpack.c.l.b16 %v422
      %v2108 = vunpack.c.h.b16 %v422
      %v2109 = vunpack.c.l.b16 %v423
      %v2110 = vunpack.c.h.b16 %v423
      %v2111 = vunpack.c.l.b16 %v424
      %v2112 = vunpack.c.h.b16 %v424
      %v2113 = vunpack.c.l.b16 %v425
      %v2114 = vunpack.c.h.b16 %v425
      %v2115 = vunpack.c.l.b16 %v426
      %v2116 = vunpack.c.h.b16 %v426
      %v2117 = vpack.c.b16 %v2057, %v2053
      %v2118 = vpack.c.b16 %v2058, %v2054
      %v2119 = vpack.c.b16 %v2059, %v2055
      %v2120 = vpack.c.b16 %v2060, %v2056
      %v2121 = vpack.c.b16 %v2065, %v2061
      %v2122 = vpack.c.b16 %v2066, %v2062
      %v2123 = vpack.c.b16 %v2067, %v2063
      %v2124 = vpack.c.b16 %v2068, %v2064
      %v2125 = vpack.c.b16 %v2073, %v2069
      %v2126 = vpack.c.b16 %v2074, %v2070
      %v2127 = vpack.c.b16 %v2075, %v2071
      %v2128 = vpack.c.b16 %v2076, %v2072
      %v2129 = vpack.c.b16 %v2081, %v2077
      %v2130 = vpack.c.b16 %v2082, %v2078
      %v2131 = vpack.c.b16 %v2083, %v2079
      %v2132 = vpack.c.b16 %v2084, %v2080
      %v2133 = vpack.c.b16 %v2089, %v2085
      %v2134 = vpack.c.b16 %v2090, %v2086
      %v2135 = vpack.c.b16 %v2091, %v2087
      %v2136 = vpack.c.b16 %v2092, %v2088
      %v2137 = vpack.c.b16 %v2097, %v2093
      %v2138 = vpack.c.b16 %v2098, %v2094
      %v2139 = vpack.c.b16 %v2099, %v2095
      %v2140 = vpack.c.b16 %v2100, %v2096
      %v2141 = vpack.c.b16 %v2105, %v2101
      %v2142 = vpack.c.b16 %v2106, %v2102
      %v2143 = vpack.c.b16 %v2107, %v2103
      %v2144 = vpack.c.b16 %v2108, %v2104
      %v2145 = vpack.c.b16 %v2113, %v2109
      %v2146 = vpack.c.b16 %v2114, %v2110
      %v2147 = vpack.c.b16 %v2115, %v2111
      %v2148 = vpack.c.b16 %v2116, %v2112
      %2181 = vmatpush.bf16.msra.mxu0 %v2145
      %2182 = vmatpush.bf16.msra.mxu0 %v2141
      %2183 = vmatpush.bf16.msra.mxu0 %v2137
      %2184 = vmatpush.bf16.msra.mxu0 %v2133
      %2185 = vmatpush.bf16.msra.mxu0 %v2129
      %2186 = vmatpush.bf16.msra.mxu0 %v2125
      %2187 = vmatpush.bf16.msra.mxu0 %v2121
      %2188 = vmatpush.bf16.msra.mxu0 %v2117
      %2189 = vmatmul.bf16.gmra.mxu0 0
      %v2190 = vpop.f32.mrf.mxu0
      %v2191 = vadd.f32 0.0, %v2190
      %v2192 = vpop.f32.mrf.mxu0
      %2193 = vdwg.mxu0
      %2194 = vmatpush.bf16.msra.mxu0 %v2146
      %2195 = vmatpush.bf16.msra.mxu0 %v2142
      %2196 = vmatpush.bf16.msra.mxu0 %v2138
      %2197 = vmatpush.bf16.msra.mxu0 %v2134
      %2198 = vmatpush.bf16.msra.mxu0 %v2130
      %2199 = vmatpush.bf16.msra.mxu0 %v2126
      %2200 = vmatpush.bf16.msra.mxu0 %v2122
      %2201 = vmatpush.bf16.msra.mxu0 %v2118
      %2202 = vmatmul.bf16.gmra.mxu0 0
      %v2203 = vpop.f32.mrf.mxu0
      %v2204 = vadd.f32 0.0, %v2203
      %v2205 = vpop.f32.mrf.mxu0
      %2206 = vdwg.mxu0
      %2207 = vmatpush.bf16.msra.mxu0 %v2147
      %2208 = vmatpush.bf16.msra.mxu0 %v2143
      %2209 = vmatpush.bf16.msra.mxu0 %v2139
      %2210 = vmatpush.bf16.msra.mxu0 %v2135
      %2211 = vmatpush.bf16.msra.mxu0 %v2131
      %2212 = vmatpush.bf16.msra.mxu0 %v2127
      %2213 = vmatpush.bf16.msra.mxu0 %v2123
      %2214 = vmatpush.bf16.msra.mxu0 %v2119
      %2215 = vmatmul.bf16.gmra.mxu0 0
      %v2216 = vpop.f32.mrf.mxu0
      %v2217 = vadd.f32 0.0, %v2216
      %v2218 = vpop.f32.mrf.mxu0
      %2219 = vdwg.mxu0
      %2220 = vmatpush.bf16.msra.mxu0 %v2148
      %2221 = vmatpush.bf16.msra.mxu0 %v2144
      %2222 = vmatpush.bf16.msra.mxu0 %v2140
      %2223 = vmatpush.bf16.msra.mxu0 %v2136
      %2224 = vmatpush.bf16.msra.mxu0 %v2132
      %2225 = vmatpush.bf16.msra.mxu0 %v2128
      %2226 = vmatpush.bf16.msra.mxu0 %v2124
      %2227 = vmatpush.bf16.msra.mxu0 %v2120
      %2228 = vmatmul.bf16.gmra.mxu0 0
      %v2229 = vpop.f32.mrf.mxu0
      %v2230 = vadd.f32 0.0, %v2229
      %v2231 = vpop.f32.mrf.mxu0
      %2232 = vdwg.mxu0
      %v2233 = vadd.f32 %v2017, %v2191
      %v2234 = vadd.f32 %v2018, %v2204
      %v2235 = vadd.f32 %v2019, %v2217
      %v2236 = vadd.f32 %v2020, %v2230
      %v2237 = vxor.u32 %v2233, 2147483648
      %v2238 = vmul.f32 %v2237, 1.442695
      %v2239 = vpow.pop %v2238
      %v2240 = vadd.f32 %v2239, 1.0
      %v2241 = vrcp.pop %v2240
      %v2242 = vmul.f32 %v2240, %v2241
      %v2243 = vsub.f32 1.0, %v2242
      %v2244 = vmul.f32 %v2241, %v2243
      %v2245 = vadd.f32 %v2241, %v2244
      %vm2246 = vweird.f32 %v2240
      %vm2247 = vweird.f32 %v2241
      %vm2248 = vmor %vm2246, %vm2247
      %v2249 = vsel %vm2248, %v2241, %v2245
      %v2250 = vand.u32 2147483647, %v2240
      %vm2251 = vcmp.eq.f32.partialorder %v2250, 8.507059e+37
      %v2252 = vand.u32 %v2240, 2147483648
      %v2253 = vor.u32 1.1754944e-38, %v2252
      %v2254 = vsel %vm2251, %v2253, %v2249
      %v2255 = vmul.f32 1.0, %v2254
      %v2256 = vxor.u32 %v2234, 2147483648
      %v2257 = vmul.f32 %v2256, 1.442695
      %v2258 = vpow.pop %v2257
      %v2259 = vadd.f32 %v2258, 1.0
      %v2260 = vrcp.pop %v2259
      %v2261 = vmul.f32 %v2259, %v2260
      %v2262 = vsub.f32 1.0, %v2261
      %v2263 = vmul.f32 %v2260, %v2262
      %v2264 = vadd.f32 %v2260, %v2263
      %vm2265 = vweird.f32 %v2259
      %vm2266 = vweird.f32 %v2260
      %vm2267 = vmor %vm2265, %vm2266
      %v2268 = vsel %vm2267, %v2260, %v2264
      %v2269 = vand.u32 2147483647, %v2259
      %vm2270 = vcmp.eq.f32.partialorder %v2269, 8.507059e+37
      %v2271 = vand.u32 %v2259, 2147483648
      %v2272 = vor.u32 1.1754944e-38, %v2271
      %v2273 = vsel %vm2270, %v2272, %v2268
      %v2274 = vmul.f32 1.0, %v2273
      %v2275 = vtanh.pop %v2235
      %v2276 = vxor.u32 %v2236, 2147483648
      %v2277 = vmul.f32 %v2276, 1.442695
      %v2278 = vpow.pop %v2277
      %v2279 = vadd.f32 %v2278, 1.0
      %v2280 = vrcp.pop %v2279
      %v2281 = vmul.f32 %v2279, %v2280
      %v2282 = vsub.f32 1.0, %v2281
      %v2283 = vmul.f32 %v2280, %v2282
      %v2284 = vadd.f32 %v2280, %v2283
      %vm2285 = vweird.f32 %v2279
      %vm2286 = vweird.f32 %v2280
      %vm2287 = vmor %vm2285, %vm2286
      %v2288 = vsel %vm2287, %v2280, %v2284
      %v2289 = vand.u32 2147483647, %v2279
      %vm2290 = vcmp.eq.f32.partialorder %v2289, 8.507059e+37
      %v2291 = vand.u32 %v2279, 2147483648
      %v2292 = vor.u32 1.1754944e-38, %v2291
      %v2293 = vsel %vm2290, %v2292, %v2288
      %v2294 = vmul.f32 1.0, %v2293
      %v2295 = vmul.f32 %v2274, 0.0
      %v2296 = vmul.f32 %v2255, %v2275
      %v2297 = vadd.f32 %v2295, %v2296
      %v2298 = vtanh.pop %v2297
      %v2299 = vmul.f32 %v2294, %v2298
      %v2300 = vpack.c.bf16 %v2299, %v2299
      %2301 = vst [vmem:[%s716 + $0x4] sm:$0xf] %v2300
      %v2302 = vld [vmem:[%s720] sm:$0xff]
      %v2303 = vld [vmem:[%s720 + $0x8] sm:$0xff]
      %v2304 = vld [vmem:[%s720 + $0x10] sm:$0xff]
      %v2305 = vld [vmem:[%s720 + $0x18] sm:$0xff]
      %2306 = vmatpush.bf16.msra.mxu0 %v2145
      %2307 = vmatpush.bf16.msra.mxu0 %v2141
      %2308 = vmatpush.bf16.msra.mxu0 %v2137
      %2309 = vmatpush.bf16.msra.mxu0 %v2133
      %2310 = vmatpush.bf16.msra.mxu0 %v2129
      %2311 = vmatpush.bf16.msra.mxu0 %v2125
      %2312 = vmatpush.bf16.msra.mxu0 %v2121
      %2313 = vmatpush.bf16.msra.mxu0 %v2117
      %2314 = vmatmul.bf16.gmra.mxu0 %v2300
      %v2315 = vpop.f32.mrf.mxu0
      %v2316 = vadd.f32 0.0, %v2315
      %v2317 = vpop.f32.mrf.mxu0
      %2318 = vdwg.mxu0
      %2319 = vmatpush.bf16.msra.mxu0 %v2146
      %2320 = vmatpush.bf16.msra.mxu0 %v2142
      %2321 = vmatpush.bf16.msra.mxu0 %v2138
      %2322 = vmatpush.bf16.msra.mxu0 %v2134
      %2323 = vmatpush.bf16.msra.mxu0 %v2130
      %2324 = vmatpush.bf16.msra.mxu0 %v2126
      %2325 = vmatpush.bf16.msra.mxu0 %v2122
      %2326 = vmatpush.bf16.msra.mxu0 %v2118
      %2327 = vmatmul.bf16.gmra.mxu0 %v2300
      %v2328 = vpop.f32.mrf.mxu0
      %v2329 = vadd.f32 0.0, %v2328
      %v2330 = vpop.f32.mrf.mxu0
      %2331 = vdwg.mxu0
      %2332 = vmatpush.bf16.msra.mxu0 %v2147
      %2333 = vmatpush.bf16.msra.mxu0 %v2143
      %2334 = vmatpush.bf16.msra.mxu0 %v2139
      %2335 = vmatpush.bf16.msra.mxu0 %v2135
      %2336 = vmatpush.bf16.msra.mxu0 %v2131
      %2337 = vmatpush.bf16.msra.mxu0 %v2127
      %2338 = vmatpush.bf16.msra.mxu0 %v2123
      %2339 = vmatpush.bf16.msra.mxu0 %v2119
      %2340 = vmatmul.bf16.gmra.mxu0 %v2300
      %v2341 = vpop.f32.mrf.mxu0
      %v2342 = vadd.f32 0.0, %v2341
      %v2343 = vpop.f32.mrf.mxu0
      %2344 = vdwg.mxu0
      %2345 = vmatpush.bf16.msra.mxu0 %v2148
      %2346 = vmatpush.bf16.msra.mxu0 %v2144
      %2347 = vmatpush.bf16.msra.mxu0 %v2140
      %2348 = vmatpush.bf16.msra.mxu0 %v2136
      %2349 = vmatpush.bf16.msra.mxu0 %v2132
      %2350 = vmatpush.bf16.msra.mxu0 %v2128
      %2351 = vmatpush.bf16.msra.mxu0 %v2124
      %2352 = vmatpush.bf16.msra.mxu0 %v2120
      %2353 = vmatmul.bf16.gmra.mxu0 %v2300
      %v2354 = vpop.f32.mrf.mxu0
      %v2355 = vadd.f32 0.0, %v2354
      %v2356 = vpop.f32.mrf.mxu0
      %2357 = vdwg.mxu0
      %v2358 = vadd.f32 %v2302, %v2316
      %v2359 = vadd.f32 %v2303, %v2329
      %v2360 = vadd.f32 %v2304, %v2342
      %v2361 = vadd.f32 %v2305, %v2355
      %v2362 = vxor.u32 %v2358, 2147483648
      %v2363 = vmul.f32 %v2362, 1.442695
      %v2364 = vpow.pop %v2363
      %v2365 = vadd.f32 %v2364, 1.0
      %v2366 = vrcp.pop %v2365
      %v2367 = vmul.f32 %v2365, %v2366
      %v2368 = vsub.f32 1.0, %v2367
      %v2369 = vmul.f32 %v2366, %v2368
      %v2370 = vadd.f32 %v2366, %v2369
      %vm2371 = vweird.f32 %v2365
      %vm2372 = vweird.f32 %v2366
      %vm2373 = vmor %vm2371, %vm2372
      %v2374 = vsel %vm2373, %v2366, %v2370
      %v2375 = vand.u32 2147483647, %v2365
      %vm2376 = vcmp.eq.f32.partialorder %v2375, 8.507059e+37
      %v2377 = vand.u32 %v2365, 2147483648
      %v2378 = vor.u32 1.1754944e-38, %v2377
      %v2379 = vsel %vm2376, %v2378, %v2374
      %v2380 = vmul.f32 1.0, %v2379
      %v2381 = vxor.u32 %v2359, 2147483648
      %v2382 = vmul.f32 %v2381, 1.442695
      %v2383 = vpow.pop %v2382
      %v2384 = vadd.f32 %v2383, 1.0
      %v2385 = vrcp.pop %v2384
      %v2386 = vmul.f32 %v2384, %v2385
      %v2387 = vsub.f32 1.0, %v2386
      %v2388 = vmul.f32 %v2385, %v2387
      %v2389 = vadd.f32 %v2385, %v2388
      %vm2390 = vweird.f32 %v2384
      %vm2391 = vweird.f32 %v2385
      %vm2392 = vmor %vm2390, %vm2391
      %v2393 = vsel %vm2392, %v2385, %v2389
      %v2394 = vand.u32 2147483647, %v2384
      %vm2395 = vcmp.eq.f32.partialorder %v2394, 8.507059e+37
      %v2396 = vand.u32 %v2384, 2147483648
      %v2397 = vor.u32 1.1754944e-38, %v2396
      %v2398 = vsel %vm2395, %v2397, %v2393
      %v2399 = vmul.f32 1.0, %v2398
      %v2400 = vtanh.pop %v2360
      %v2401 = vxor.u32 %v2361, 2147483648
      %v2402 = vmul.f32 %v2401, 1.442695
      %v2403 = vpow.pop %v2402
      %v2404 = vadd.f32 %v2403, 1.0
      %v2405 = vrcp.pop %v2404
      %v2406 = vmul.f32 %v2404, %v2405
      %v2407 = vsub.f32 1.0, %v2406
      %v2408 = vmul.f32 %v2405, %v2407
      %v2409 = vadd.f32 %v2405, %v2408
      %vm2410 = vweird.f32 %v2404
      %vm2411 = vweird.f32 %v2405
      %vm2412 = vmor %vm2410, %vm2411
      %v2413 = vsel %vm2412, %v2405, %v2409
      %v2414 = vand.u32 2147483647, %v2404
      %vm2415 = vcmp.eq.f32.partialorder %v2414, 8.507059e+37
      %v2416 = vand.u32 %v2404, 2147483648
      %v2417 = vor.u32 1.1754944e-38, %v2416
      %v2418 = vsel %vm2415, %v2417, %v2413
      %v2419 = vmul.f32 1.0, %v2418
      %v2420 = vmul.f32 %v2399, %v2297
      %v2421 = vmul.f32 %v2380, %v2400
      %v2422 = vadd.f32 %v2420, %v2421
      %v2423 = vtanh.pop %v2422
      %v2424 = vmul.f32 %v2419, %v2423
      %v2425 = vpack.c.bf16 %v2424, %v2424
      %2426 = vst [vmem:[%s847 + $0x4] sm:$0xf] %v2425
      %v2427 = vld [vmem:[%s851] sm:$0xff]
      %v2428 = vld [vmem:[%s851 + $0x8] sm:$0xff]
      %v2429 = vld [vmem:[%s851 + $0x10] sm:$0xff]
      %v2430 = vld [vmem:[%s851 + $0x18] sm:$0xff]
      %2431 = vmatpush.bf16.msra.mxu0 %v2145
      %2432 = vmatpush.bf16.msra.mxu0 %v2141
      %2433 = vmatpush.bf16.msra.mxu0 %v2137
      %2434 = vmatpush.bf16.msra.mxu0 %v2133
      %2435 = vmatpush.bf16.msra.mxu0 %v2129
      %2436 = vmatpush.bf16.msra.mxu0 %v2125
      %2437 = vmatpush.bf16.msra.mxu0 %v2121
      %2438 = vmatpush.bf16.msra.mxu0 %v2117
      %2439 = vmatmul.bf16.gmra.mxu0 %v2425
      %v2440 = vpop.f32.mrf.mxu0
      %v2441 = vadd.f32 0.0, %v2440
      %v2442 = vpop.f32.mrf.mxu0
      %2443 = vdwg.mxu0
      %2444 = vmatpush.bf16.msra.mxu0 %v2146
      %2445 = vmatpush.bf16.msra.mxu0 %v2142
      %2446 = vmatpush.bf16.msra.mxu0 %v2138
      %2447 = vmatpush.bf16.msra.mxu0 %v2134
      %2448 = vmatpush.bf16.msra.mxu0 %v2130
      %2449 = vmatpush.bf16.msra.mxu0 %v2126
      %2450 = vmatpush.bf16.msra.mxu0 %v2122
      %2451 = vmatpush.bf16.msra.mxu0 %v2118
      %2452 = vmatmul.bf16.gmra.mxu0 %v2425
      %v2453 = vpop.f32.mrf.mxu0
      %v2454 = vadd.f32 0.0, %v2453
      %v2455 = vpop.f32.mrf.mxu0
      %2456 = vdwg.mxu0
      %2457 = vmatpush.bf16.msra.mxu0 %v2147
      %2458 = vmatpush.bf16.msra.mxu0 %v2143
      %2459 = vmatpush.bf16.msra.mxu0 %v2139
      %2460 = vmatpush.bf16.msra.mxu0 %v2135
      %2461 = vmatpush.bf16.msra.mxu0 %v2131
      %2462 = vmatpush.bf16.msra.mxu0 %v2127
      %2463 = vmatpush.bf16.msra.mxu0 %v2123
      %2464 = vmatpush.bf16.msra.mxu0 %v2119
      %2465 = vmatmul.bf16.gmra.mxu0 %v2425
      %v2466 = vpop.f32.mrf.mxu0
      %v2467 = vadd.f32 0.0, %v2466
      %v2468 = vpop.f32.mrf.mxu0
      %2469 = vdwg.mxu0
      %2470 = vmatpush.bf16.msra.mxu0 %v2148
      %2471 = vmatpush.bf16.msra.mxu0 %v2144
      %2472 = vmatpush.bf16.msra.mxu0 %v2140
      %2473 = vmatpush.bf16.msra.mxu0 %v2136
      %2474 = vmatpush.bf16.msra.mxu0 %v2132
      %2475 = vmatpush.bf16.msra.mxu0 %v2128
      %2476 = vmatpush.bf16.msra.mxu0 %v2124
      %2477 = vmatpush.bf16.msra.mxu0 %v2120
      %2478 = vmatmul.bf16.gmra.mxu0 %v2425
      %v2479 = vpop.f32.mrf.mxu0
      %v2480 = vadd.f32 0.0, %v2479
      %v2481 = vpop.f32.mrf.mxu0
      %2482 = vdwg.mxu0
      %v2483 = vadd.f32 %v2427, %v2441
      %v2484 = vadd.f32 %v2428, %v2454
      %v2485 = vadd.f32 %v2429, %v2467
      %v2486 = vadd.f32 %v2430, %v2480
      %v2487 = vxor.u32 %v2483, 2147483648
      %v2488 = vmul.f32 %v2487, 1.442695
      %v2489 = vpow.pop %v2488
      %v2490 = vadd.f32 %v2489, 1.0
      %v2491 = vrcp.pop %v2490
      %v2492 = vmul.f32 %v2490, %v2491
      %v2493 = vsub.f32 1.0, %v2492
      %v2494 = vmul.f32 %v2491, %v2493
      %v2495 = vadd.f32 %v2491, %v2494
      %vm2496 = vweird.f32 %v2490
      %vm2497 = vweird.f32 %v2491
      %vm2498 = vmor %vm2496, %vm2497
      %v2499 = vsel %vm2498, %v2491, %v2495
      %v2500 = vand.u32 2147483647, %v2490
      %vm2501 = vcmp.eq.f32.partialorder %v2500, 8.507059e+37
      %v2502 = vand.u32 %v2490, 2147483648
      %v2503 = vor.u32 1.1754944e-38, %v2502
      %v2504 = vsel %vm2501, %v2503, %v2499
      %v2505 = vmul.f32 1.0, %v2504
      %v2506 = vxor.u32 %v2484, 2147483648
      %v2507 = vmul.f32 %v2506, 1.442695
      %v2508 = vpow.pop %v2507
      %v2509 = vadd.f32 %v2508, 1.0
      %v2510 = vrcp.pop %v2509
      %v2511 = vmul.f32 %v2509, %v2510
      %v2512 = vsub.f32 1.0, %v2511
      %v2513 = vmul.f32 %v2510, %v2512
      %v2514 = vadd.f32 %v2510, %v2513
      %vm2515 = vweird.f32 %v2509
      %vm2516 = vweird.f32 %v2510
      %vm2517 = vmor %vm2515, %vm2516
      %v2518 = vsel %vm2517, %v2510, %v2514
      %v2519 = vand.u32 2147483647, %v2509
      %vm2520 = vcmp.eq.f32.partialorder %v2519, 8.507059e+37
      %v2521 = vand.u32 %v2509, 2147483648
      %v2522 = vor.u32 1.1754944e-38, %v2521
      %v2523 = vsel %vm2520, %v2522, %v2518
      %v2524 = vmul.f32 1.0, %v2523
      %v2525 = vtanh.pop %v2485
      %v2526 = vxor.u32 %v2486, 2147483648
      %v2527 = vmul.f32 %v2526, 1.442695
      %v2528 = vpow.pop %v2527
      %v2529 = vadd.f32 %v2528, 1.0
      %v2530 = vrcp.pop %v2529
      %v2531 = vmul.f32 %v2529, %v2530
      %v2532 = vsub.f32 1.0, %v2531
      %v2533 = vmul.f32 %v2530, %v2532
      %v2534 = vadd.f32 %v2530, %v2533
      %vm2535 = vweird.f32 %v2529
      %vm2536 = vweird.f32 %v2530
      %vm2537 = vmor %vm2535, %vm2536
      %v2538 = vsel %vm2537, %v2530, %v2534
      %v2539 = vand.u32 2147483647, %v2529
      %vm2540 = vcmp.eq.f32.partialorder %v2539, 8.507059e+37
      %v2541 = vand.u32 %v2529, 2147483648
      %v2542 = vor.u32 1.1754944e-38, %v2541
      %v2543 = vsel %vm2540, %v2542, %v2538
      %v2544 = vmul.f32 1.0, %v2543
      %v2545 = vmul.f32 %v2524, %v2422
      %v2546 = vmul.f32 %v2505, %v2525
      %v2547 = vadd.f32 %v2545, %v2546
      %v2548 = vtanh.pop %v2547
      %v2549 = vmul.f32 %v2544, %v2548
      %v2550 = vpack.c.bf16 %v2549, %v2549
      %2551 = vst [vmem:[%s978 + $0x4] sm:$0xf] %v2550
      %v2552 = vld [vmem:[%s982] sm:$0xff]
      %v2553 = vld [vmem:[%s982 + $0x8] sm:$0xff]
      %v2554 = vld [vmem:[%s982 + $0x10] sm:$0xff]
      %v2555 = vld [vmem:[%s982 + $0x18] sm:$0xff]
      %2556 = vmatpush.bf16.msra.mxu0 %v2145
      %2557 = vmatpush.bf16.msra.mxu0 %v2141
      %2558 = vmatpush.bf16.msra.mxu0 %v2137
      %2559 = vmatpush.bf16.msra.mxu0 %v2133
      %2560 = vmatpush.bf16.msra.mxu0 %v2129
      %2561 = vmatpush.bf16.msra.mxu0 %v2125
      %2562 = vmatpush.bf16.msra.mxu0 %v2121
      %2563 = vmatpush.bf16.msra.mxu0 %v2117
      %2564 = vmatmul.bf16.gmra.mxu0 %v2550
      %v2565 = vpop.f32.mrf.mxu0
      %v2566 = vadd.f32 0.0, %v2565
      %v2567 = vpop.f32.mrf.mxu0
      %2568 = vdwg.mxu0
      %2569 = vmatpush.bf16.msra.mxu0 %v2146
      %2570 = vmatpush.bf16.msra.mxu0 %v2142
      %2571 = vmatpush.bf16.msra.mxu0 %v2138
      %2572 = vmatpush.bf16.msra.mxu0 %v2134
      %2573 = vmatpush.bf16.msra.mxu0 %v2130
      %2574 = vmatpush.bf16.msra.mxu0 %v2126
      %2575 = vmatpush.bf16.msra.mxu0 %v2122
      %2576 = vmatpush.bf16.msra.mxu0 %v2118
      %2577 = vmatmul.bf16.gmra.mxu0 %v2550
      %v2578 = vpop.f32.mrf.mxu0
      %v2579 = vadd.f32 0.0, %v2578
      %v2580 = vpop.f32.mrf.mxu0
      %2581 = vdwg.mxu0
      %2582 = vmatpush.bf16.msra.mxu0 %v2147
      %2583 = vmatpush.bf16.msra.mxu0 %v2143
      %2584 = vmatpush.bf16.msra.mxu0 %v2139
      %2585 = vmatpush.bf16.msra.mxu0 %v2135
      %2586 = vmatpush.bf16.msra.mxu0 %v2131
      %2587 = vmatpush.bf16.msra.mxu0 %v2127
      %2588 = vmatpush.bf16.msra.mxu0 %v2123
      %2589 = vmatpush.bf16.msra.mxu0 %v2119
      %2590 = vmatmul.bf16.gmra.mxu0 %v2550
      %v2591 = vpop.f32.mrf.mxu0
      %v2592 = vadd.f32 0.0, %v2591
      %v2593 = vpop.f32.mrf.mxu0
      %2594 = vdwg.mxu0
      %2595 = vmatpush.bf16.msra.mxu0 %v2148
      %2596 = vmatpush.bf16.msra.mxu0 %v2144
      %2597 = vmatpush.bf16.msra.mxu0 %v2140
      %2598 = vmatpush.bf16.msra.mxu0 %v2136
      %2599 = vmatpush.bf16.msra.mxu0 %v2132
      %2600 = vmatpush.bf16.msra.mxu0 %v2128
      %2601 = vmatpush.bf16.msra.mxu0 %v2124
      %2602 = vmatpush.bf16.msra.mxu0 %v2120
      %2603 = vmatmul.bf16.gmra.mxu0 %v2550
      %v2604 = vpop.f32.mrf.mxu0
      %v2605 = vadd.f32 0.0, %v2604
      %v2606 = vpop.f32.mrf.mxu0
      %2607 = vdwg.mxu0
      %v2608 = vadd.f32 %v2552, %v2566
      %v2609 = vadd.f32 %v2553, %v2579
      %v2610 = vadd.f32 %v2554, %v2592
      %v2611 = vadd.f32 %v2555, %v2605
      %v2612 = vxor.u32 %v2608, 2147483648
      %v2613 = vmul.f32 %v2612, 1.442695
      %v2614 = vpow.pop %v2613
      %v2615 = vadd.f32 %v2614, 1.0
      %v2616 = vrcp.pop %v2615
      %v2617 = vmul.f32 %v2615, %v2616
      %v2618 = vsub.f32 1.0, %v2617
      %v2619 = vmul.f32 %v2616, %v2618
      %v2620 = vadd.f32 %v2616, %v2619
      %vm2621 = vweird.f32 %v2615
      %vm2622 = vweird.f32 %v2616
      %vm2623 = vmor %vm2621, %vm2622
      %v2624 = vsel %vm2623, %v2616, %v2620
      %v2625 = vand.u32 2147483647, %v2615
      %vm2626 = vcmp.eq.f32.partialorder %v2625, 8.507059e+37
      %v2627 = vand.u32 %v2615, 2147483648
      %v2628 = vor.u32 1.1754944e-38, %v2627
      %v2629 = vsel %vm2626, %v2628, %v2624
      %v2630 = vmul.f32 1.0, %v2629
      %v2631 = vxor.u32 %v2609, 2147483648
      %v2632 = vmul.f32 %v2631, 1.442695
      %v2633 = vpow.pop %v2632
      %v2634 = vadd.f32 %v2633, 1.0
      %v2635 = vrcp.pop %v2634
      %v2636 = vmul.f32 %v2634, %v2635
      %v2637 = vsub.f32 1.0, %v2636
      %v2638 = vmul.f32 %v2635, %v2637
      %v2639 = vadd.f32 %v2635, %v2638
      %vm2640 = vweird.f32 %v2634
      %vm2641 = vweird.f32 %v2635
      %vm2642 = vmor %vm2640, %vm2641
      %v2643 = vsel %vm2642, %v2635, %v2639
      %v2644 = vand.u32 2147483647, %v2634
      %vm2645 = vcmp.eq.f32.partialorder %v2644, 8.507059e+37
      %v2646 = vand.u32 %v2634, 2147483648
      %v2647 = vor.u32 1.1754944e-38, %v2646
      %v2648 = vsel %vm2645, %v2647, %v2643
      %v2649 = vmul.f32 1.0, %v2648
      %v2650 = vtanh.pop %v2610
      %v2651 = vxor.u32 %v2611, 2147483648
      %v2652 = vmul.f32 %v2651, 1.442695
      %v2653 = vpow.pop %v2652
      %v2654 = vadd.f32 %v2653, 1.0
      %v2655 = vrcp.pop %v2654
      %v2656 = vmul.f32 %v2654, %v2655
      %v2657 = vsub.f32 1.0, %v2656
      %v2658 = vmul.f32 %v2655, %v2657
      %v2659 = vadd.f32 %v2655, %v2658
      %vm2660 = vweird.f32 %v2654
      %vm2661 = vweird.f32 %v2655
      %vm2662 = vmor %vm2660, %vm2661
      %v2663 = vsel %vm2662, %v2655, %v2659
      %v2664 = vand.u32 2147483647, %v2654
      %vm2665 = vcmp.eq.f32.partialorder %v2664, 8.507059e+37
      %v2666 = vand.u32 %v2654, 2147483648
      %v2667 = vor.u32 1.1754944e-38, %v2666
      %v2668 = vsel %vm2665, %v2667, %v2663
      %v2669 = vmul.f32 1.0, %v2668
      %v2670 = vmul.f32 %v2649, %v2547
      %v2671 = vmul.f32 %v2630, %v2650
      %v2672 = vadd.f32 %v2670, %v2671
      %v2673 = vtanh.pop %v2672
      %v2674 = vmul.f32 %v2669, %v2673
      %v2675 = vpack.c.bf16 %v2674, %v2674
      %2676 = vst [vmem:[%s1109 + $0x4] sm:$0xf] %v2675
      %v2677 = vld [vmem:[%s1113] sm:$0xff]
      %v2678 = vld [vmem:[%s1113 + $0x8] sm:$0xff]
      %v2679 = vld [vmem:[%s1113 + $0x10] sm:$0xff]
      %v2680 = vld [vmem:[%s1113 + $0x18] sm:$0xff]
      %2681 = vmatpush.bf16.msra.mxu0 %v2145
      %2682 = vmatpush.bf16.msra.mxu0 %v2141
      %2683 = vmatpush.bf16.msra.mxu0 %v2137
      %2684 = vmatpush.bf16.msra.mxu0 %v2133
      %2685 = vmatpush.bf16.msra.mxu0 %v2129
      %2686 = vmatpush.bf16.msra.mxu0 %v2125
      %2687 = vmatpush.bf16.msra.mxu0 %v2121
      %2688 = vmatpush.bf16.msra.mxu0 %v2117
      %2689 = vmatmul.bf16.gmra.mxu0 %v2675
      %v2690 = vpop.f32.mrf.mxu0
      %v2691 = vadd.f32 0.0, %v2690
      %v2692 = vpop.f32.mrf.mxu0
      %2693 = vdwg.mxu0
      %2694 = vmatpush.bf16.msra.mxu0 %v2146
      %2695 = vmatpush.bf16.msra.mxu0 %v2142
      %2696 = vmatpush.bf16.msra.mxu0 %v2138
      %2697 = vmatpush.bf16.msra.mxu0 %v2134
      %2698 = vmatpush.bf16.msra.mxu0 %v2130
      %2699 = vmatpush.bf16.msra.mxu0 %v2126
      %2700 = vmatpush.bf16.msra.mxu0 %v2122
      %2701 = vmatpush.bf16.msra.mxu0 %v2118
      %2702 = vmatmul.bf16.gmra.mxu0 %v2675
      %v2703 = vpop.f32.mrf.mxu0
      %v2704 = vadd.f32 0.0, %v2703
      %v2705 = vpop.f32.mrf.mxu0
      %2706 = vdwg.mxu0
      %2707 = vmatpush.bf16.msra.mxu0 %v2147
      %2708 = vmatpush.bf16.msra.mxu0 %v2143
      %2709 = vmatpush.bf16.msra.mxu0 %v2139
      %2710 = vmatpush.bf16.msra.mxu0 %v2135
      %2711 = vmatpush.bf16.msra.mxu0 %v2131
      %2712 = vmatpush.bf16.msra.mxu0 %v2127
      %2713 = vmatpush.bf16.msra.mxu0 %v2123
      %2714 = vmatpush.bf16.msra.mxu0 %v2119
      %2715 = vmatmul.bf16.gmra.mxu0 %v2675
      %v2716 = vpop.f32.mrf.mxu0
      %v2717 = vadd.f32 0.0, %v2716
      %v2718 = vpop.f32.mrf.mxu0
      %2719 = vdwg.mxu0
      %2720 = vmatpush.bf16.msra.mxu0 %v2148
      %2721 = vmatpush.bf16.msra.mxu0 %v2144
      %2722 = vmatpush.bf16.msra.mxu0 %v2140
      %2723 = vmatpush.bf16.msra.mxu0 %v2136
      %2724 = vmatpush.bf16.msra.mxu0 %v2132
      %2725 = vmatpush.bf16.msra.mxu0 %v2128
      %2726 = vmatpush.bf16.msra.mxu0 %v2124
      %2727 = vmatpush.bf16.msra.mxu0 %v2120
      %2728 = vmatmul.bf16.gmra.mxu0 %v2675
      %v2729 = vpop.f32.mrf.mxu0
      %v2730 = vadd.f32 0.0, %v2729
      %v2731 = vpop.f32.mrf.mxu0
      %2732 = vdwg.mxu0
      %v2733 = vadd.f32 %v2677, %v2691
      %v2734 = vadd.f32 %v2678, %v2704
      %v2735 = vadd.f32 %v2679, %v2717
      %v2736 = vadd.f32 %v2680, %v2730
      %v2737 = vxor.u32 %v2733, 2147483648
      %v2738 = vmul.f32 %v2737, 1.442695
      %v2739 = vpow.pop %v2738
      %v2740 = vadd.f32 %v2739, 1.0
      %v2741 = vrcp.pop %v2740
      %v2742 = vmul.f32 %v2740, %v2741
      %v2743 = vsub.f32 1.0, %v2742
      %v2744 = vmul.f32 %v2741, %v2743
      %v2745 = vadd.f32 %v2741, %v2744
      %vm2746 = vweird.f32 %v2740
      %vm2747 = vweird.f32 %v2741
      %vm2748 = vmor %vm2746, %vm2747
      %v2749 = vsel %vm2748, %v2741, %v2745
      %v2750 = vand.u32 2147483647, %v2740
      %vm2751 = vcmp.eq.f32.partialorder %v2750, 8.507059e+37
      %v2752 = vand.u32 %v2740, 2147483648
      %v2753 = vor.u32 1.1754944e-38, %v2752
      %v2754 = vsel %vm2751, %v2753, %v2749
      %v2755 = vmul.f32 1.0, %v2754
      %v2756 = vxor.u32 %v2734, 2147483648
      %v2757 = vmul.f32 %v2756, 1.442695
      %v2758 = vpow.pop %v2757
      %v2759 = vadd.f32 %v2758, 1.0
      %v2760 = vrcp.pop %v2759
      %v2761 = vmul.f32 %v2759, %v2760
      %v2762 = vsub.f32 1.0, %v2761
      %v2763 = vmul.f32 %v2760, %v2762
      %v2764 = vadd.f32 %v2760, %v2763
      %vm2765 = vweird.f32 %v2759
      %vm2766 = vweird.f32 %v2760
      %vm2767 = vmor %vm2765, %vm2766
      %v2768 = vsel %vm2767, %v2760, %v2764
      %v2769 = vand.u32 2147483647, %v2759
      %vm2770 = vcmp.eq.f32.partialorder %v2769, 8.507059e+37
      %v2771 = vand.u32 %v2759, 2147483648
      %v2772 = vor.u32 1.1754944e-38, %v2771
      %v2773 = vsel %vm2770, %v2772, %v2768
      %v2774 = vmul.f32 1.0, %v2773
      %v2775 = vtanh.pop %v2735
      %v2776 = vxor.u32 %v2736, 2147483648
      %v2777 = vmul.f32 %v2776, 1.442695
      %v2778 = vpow.pop %v2777
      %v2779 = vadd.f32 %v2778, 1.0
      %v2780 = vrcp.pop %v2779
      %v2781 = vmul.f32 %v2779, %v2780
      %v2782 = vsub.f32 1.0, %v2781
      %v2783 = vmul.f32 %v2780, %v2782
      %v2784 = vadd.f32 %v2780, %v2783
      %vm2785 = vweird.f32 %v2779
      %vm2786 = vweird.f32 %v2780
      %vm2787 = vmor %vm2785, %vm2786
      %v2788 = vsel %vm2787, %v2780, %v2784
      %v2789 = vand.u32 2147483647, %v2779
      %vm2790 = vcmp.eq.f32.partialorder %v2789, 8.507059e+37
      %v2791 = vand.u32 %v2779, 2147483648
      %v2792 = vor.u32 1.1754944e-38, %v2791
      %v2793 = vsel %vm2790, %v2792, %v2788
      %v2794 = vmul.f32 1.0, %v2793
      %v2795 = vmul.f32 %v2774, %v2672
      %v2796 = vmul.f32 %v2755, %v2775
      %v2797 = vadd.f32 %v2795, %v2796
      %v2798 = vtanh.pop %v2797
      %v2799 = vmul.f32 %v2794, %v2798
      %v2800 = vpack.c.bf16 %v2799, %v2799
      %2801 = vst [vmem:[%s1240 + $0x4] sm:$0xf] %v2800
      %v2802 = vld [vmem:[%s1244] sm:$0xff]
      %v2803 = vld [vmem:[%s1244 + $0x8] sm:$0xff]
      %v2804 = vld [vmem:[%s1244 + $0x10] sm:$0xff]
      %v2805 = vld [vmem:[%s1244 + $0x18] sm:$0xff]
      %2806 = vmatpush.bf16.msra.mxu0 %v2145
      %2807 = vmatpush.bf16.msra.mxu0 %v2141
      %2808 = vmatpush.bf16.msra.mxu0 %v2137
      %2809 = vmatpush.bf16.msra.mxu0 %v2133
      %2810 = vmatpush.bf16.msra.mxu0 %v2129
      %2811 = vmatpush.bf16.msra.mxu0 %v2125
      %2812 = vmatpush.bf16.msra.mxu0 %v2121
      %2813 = vmatpush.bf16.msra.mxu0 %v2117
      %2814 = vmatmul.bf16.gmra.mxu0 %v2800
      %v2815 = vpop.f32.mrf.mxu0
      %v2816 = vadd.f32 0.0, %v2815
      %v2817 = vpop.f32.mrf.mxu0
      %2818 = vdwg.mxu0
      %2819 = vmatpush.bf16.msra.mxu0 %v2146
      %2820 = vmatpush.bf16.msra.mxu0 %v2142
      %2821 = vmatpush.bf16.msra.mxu0 %v2138
      %2822 = vmatpush.bf16.msra.mxu0 %v2134
      %2823 = vmatpush.bf16.msra.mxu0 %v2130
      %2824 = vmatpush.bf16.msra.mxu0 %v2126
      %2825 = vmatpush.bf16.msra.mxu0 %v2122
      %2826 = vmatpush.bf16.msra.mxu0 %v2118
      %2827 = vmatmul.bf16.gmra.mxu0 %v2800
      %v2828 = vpop.f32.mrf.mxu0
      %v2829 = vadd.f32 0.0, %v2828
      %v2830 = vpop.f32.mrf.mxu0
      %2831 = vdwg.mxu0
      %2832 = vmatpush.bf16.msra.mxu0 %v2147
      %2833 = vmatpush.bf16.msra.mxu0 %v2143
      %2834 = vmatpush.bf16.msra.mxu0 %v2139
      %2835 = vmatpush.bf16.msra.mxu0 %v2135
      %2836 = vmatpush.bf16.msra.mxu0 %v2131
      %2837 = vmatpush.bf16.msra.mxu0 %v2127
      %2838 = vmatpush.bf16.msra.mxu0 %v2123
      %2839 = vmatpush.bf16.msra.mxu0 %v2119
      %2840 = vmatmul.bf16.gmra.mxu0 %v2800
      %v2841 = vpop.f32.mrf.mxu0
      %v2842 = vadd.f32 0.0, %v2841
      %v2843 = vpop.f32.mrf.mxu0
      %2844 = vdwg.mxu0
      %2845 = vmatpush.bf16.msra.mxu0 %v2148
      %2846 = vmatpush.bf16.msra.mxu0 %v2144
      %2847 = vmatpush.bf16.msra.mxu0 %v2140
      %2848 = vmatpush.bf16.msra.mxu0 %v2136
      %2849 = vmatpush.bf16.msra.mxu0 %v2132
      %2850 = vmatpush.bf16.msra.mxu0 %v2128
      %2851 = vmatpush.bf16.msra.mxu0 %v2124
      %2852 = vmatpush.bf16.msra.mxu0 %v2120
      %2853 = vmatmul.bf16.gmra.mxu0 %v2800
      %v2854 = vpop.f32.mrf.mxu0
      %v2855 = vadd.f32 0.0, %v2854
      %v2856 = vpop.f32.mrf.mxu0
      %2857 = vdwg.mxu0
      %v2858 = vadd.f32 %v2802, %v2816
      %v2859 = vadd.f32 %v2803, %v2829
      %v2860 = vadd.f32 %v2804, %v2842
      %v2861 = vadd.f32 %v2805, %v2855
      %v2862 = vxor.u32 %v2858, 2147483648
      %v2863 = vmul.f32 %v2862, 1.442695
      %v2864 = vpow.pop %v2863
      %v2865 = vadd.f32 %v2864, 1.0
      %v2866 = vrcp.pop %v2865
      %v2867 = vmul.f32 %v2865, %v2866
      %v2868 = vsub.f32 1.0, %v2867
      %v2869 = vmul.f32 %v2866, %v2868
      %v2870 = vadd.f32 %v2866, %v2869
      %vm2871 = vweird.f32 %v2865
      %vm2872 = vweird.f32 %v2866
      %vm2873 = vmor %vm2871, %vm2872
      %v2874 = vsel %vm2873, %v2866, %v2870
      %v2875 = vand.u32 2147483647, %v2865
      %vm2876 = vcmp.eq.f32.partialorder %v2875, 8.507059e+37
      %v2877 = vand.u32 %v2865, 2147483648
      %v2878 = vor.u32 1.1754944e-38, %v2877
      %v2879 = vsel %vm2876, %v2878, %v2874
      %v2880 = vmul.f32 1.0, %v2879
      %v2881 = vxor.u32 %v2859, 2147483648
      %v2882 = vmul.f32 %v2881, 1.442695
      %v2883 = vpow.pop %v2882
      %v2884 = vadd.f32 %v2883, 1.0
      %v2885 = vrcp.pop %v2884
      %v2886 = vmul.f32 %v2884, %v2885
      %v2887 = vsub.f32 1.0, %v2886
      %v2888 = vmul.f32 %v2885, %v2887
      %v2889 = vadd.f32 %v2885, %v2888
      %vm2890 = vweird.f32 %v2884
      %vm2891 = vweird.f32 %v2885
      %vm2892 = vmor %vm2890, %vm2891
      %v2893 = vsel %vm2892, %v2885, %v2889
      %v2894 = vand.u32 2147483647, %v2884
      %vm2895 = vcmp.eq.f32.partialorder %v2894, 8.507059e+37
      %v2896 = vand.u32 %v2884, 2147483648
      %v2897 = vor.u32 1.1754944e-38, %v2896
      %v2898 = vsel %vm2895, %v2897, %v2893
      %v2899 = vmul.f32 1.0, %v2898
      %v2900 = vtanh.pop %v2860
      %v2901 = vxor.u32 %v2861, 2147483648
      %v2902 = vmul.f32 %v2901, 1.442695
      %v2903 = vpow.pop %v2902
      %v2904 = vadd.f32 %v2903, 1.0
      %v2905 = vrcp.pop %v2904
      %v2906 = vmul.f32 %v2904, %v2905
      %v2907 = vsub.f32 1.0, %v2906
      %v2908 = vmul.f32 %v2905, %v2907
      %v2909 = vadd.f32 %v2905, %v2908
      %vm2910 = vweird.f32 %v2904
      %vm2911 = vweird.f32 %v2905
      %vm2912 = vmor %vm2910, %vm2911
      %v2913 = vsel %vm2912, %v2905, %v2909
      %v2914 = vand.u32 2147483647, %v2904
      %vm2915 = vcmp.eq.f32.partialorder %v2914, 8.507059e+37
      %v2916 = vand.u32 %v2904, 2147483648
      %v2917 = vor.u32 1.1754944e-38, %v2916
      %v2918 = vsel %vm2915, %v2917, %v2913
      %v2919 = vmul.f32 1.0, %v2918
      %v2920 = vmul.f32 %v2899, %v2797
      %v2921 = vmul.f32 %v2880, %v2900
      %v2922 = vadd.f32 %v2920, %v2921
      %v2923 = vtanh.pop %v2922
      %v2924 = vmul.f32 %v2919, %v2923
      %v2925 = vpack.c.bf16 %v2924, %v2924
      %2926 = vst [vmem:[%s1371 + $0x4] sm:$0xf] %v2925
      %v2927 = vld [vmem:[%s1375] sm:$0xff]
      %v2928 = vld [vmem:[%s1375 + $0x8] sm:$0xff]
      %v2929 = vld [vmem:[%s1375 + $0x10] sm:$0xff]
      %v2930 = vld [vmem:[%s1375 + $0x18] sm:$0xff]
      %2931 = vmatpush.bf16.msra.mxu0 %v2145
      %2932 = vmatpush.bf16.msra.mxu0 %v2141
      %2933 = vmatpush.bf16.msra.mxu0 %v2137
      %2934 = vmatpush.bf16.msra.mxu0 %v2133
      %2935 = vmatpush.bf16.msra.mxu0 %v2129
      %2936 = vmatpush.bf16.msra.mxu0 %v2125
      %2937 = vmatpush.bf16.msra.mxu0 %v2121
      %2938 = vmatpush.bf16.msra.mxu0 %v2117
      %2939 = vmatmul.bf16.gmra.mxu0 %v2925
      %v2940 = vpop.f32.mrf.mxu0
      %v2941 = vadd.f32 0.0, %v2940
      %v2942 = vpop.f32.mrf.mxu0
      %2943 = vdwg.mxu0
      %2944 = vmatpush.bf16.msra.mxu0 %v2146
      %2945 = vmatpush.bf16.msra.mxu0 %v2142
      %2946 = vmatpush.bf16.msra.mxu0 %v2138
      %2947 = vmatpush.bf16.msra.mxu0 %v2134
      %2948 = vmatpush.bf16.msra.mxu0 %v2130
      %2949 = vmatpush.bf16.msra.mxu0 %v2126
      %2950 = vmatpush.bf16.msra.mxu0 %v2122
      %2951 = vmatpush.bf16.msra.mxu0 %v2118
      %2952 = vmatmul.bf16.gmra.mxu0 %v2925
      %v2953 = vpop.f32.mrf.mxu0
      %v2954 = vadd.f32 0.0, %v2953
      %v2955 = vpop.f32.mrf.mxu0
      %2956 = vdwg.mxu0
      %2957 = vmatpush.bf16.msra.mxu0 %v2147
      %2958 = vmatpush.bf16.msra.mxu0 %v2143
      %2959 = vmatpush.bf16.msra.mxu0 %v2139
      %2960 = vmatpush.bf16.msra.mxu0 %v2135
      %2961 = vmatpush.bf16.msra.mxu0 %v2131
      %2962 = vmatpush.bf16.msra.mxu0 %v2127
      %2963 = vmatpush.bf16.msra.mxu0 %v2123
      %2964 = vmatpush.bf16.msra.mxu0 %v2119
      %2965 = vmatmul.bf16.gmra.mxu0 %v2925
      %v2966 = vpop.f32.mrf.mxu0
      %v2967 = vadd.f32 0.0, %v2966
      %v2968 = vpop.f32.mrf.mxu0
      %2969 = vdwg.mxu0
      %2970 = vmatpush.bf16.msra.mxu0 %v2148
      %2971 = vmatpush.bf16.msra.mxu0 %v2144
      %2972 = vmatpush.bf16.msra.mxu0 %v2140
      %2973 = vmatpush.bf16.msra.mxu0 %v2136
      %2974 = vmatpush.bf16.msra.mxu0 %v2132
      %2975 = vmatpush.bf16.msra.mxu0 %v2128
      %2976 = vmatpush.bf16.msra.mxu0 %v2124
      %2977 = vmatpush.bf16.msra.mxu0 %v2120
      %2978 = vmatmul.bf16.gmra.mxu0 %v2925
      %v2979 = vpop.f32.mrf.mxu0
      %v2980 = vadd.f32 0.0, %v2979
      %v2981 = vpop.f32.mrf.mxu0
      %2982 = vdwg.mxu0
      %v2983 = vadd.f32 %v2927, %v2941
      %v2984 = vadd.f32 %v2928, %v2954
      %v2985 = vadd.f32 %v2929, %v2967
      %v2986 = vadd.f32 %v2930, %v2980
      %v2987 = vxor.u32 %v2983, 2147483648
      %v2988 = vmul.f32 %v2987, 1.442695
      %v2989 = vpow.pop %v2988
      %v2990 = vadd.f32 %v2989, 1.0
      %v2991 = vrcp.pop %v2990
      %v2992 = vmul.f32 %v2990, %v2991
      %v2993 = vsub.f32 1.0, %v2992
      %v2994 = vmul.f32 %v2991, %v2993
      %v2995 = vadd.f32 %v2991, %v2994
      %vm2996 = vweird.f32 %v2990
      %vm2997 = vweird.f32 %v2991
      %vm2998 = vmor %vm2996, %vm2997
      %v2999 = vsel %vm2998, %v2991, %v2995
      %v3000 = vand.u32 2147483647, %v2990
      %vm3001 = vcmp.eq.f32.partialorder %v3000, 8.507059e+37
      %v3002 = vand.u32 %v2990, 2147483648
      %v3003 = vor.u32 1.1754944e-38, %v3002
      %v3004 = vsel %vm3001, %v3003, %v2999
      %v3005 = vmul.f32 1.0, %v3004
      %v3006 = vxor.u32 %v2984, 2147483648
      %v3007 = vmul.f32 %v3006, 1.442695
      %v3008 = vpow.pop %v3007
      %v3009 = vadd.f32 %v3008, 1.0
      %v3010 = vrcp.pop %v3009
      %v3011 = vmul.f32 %v3009, %v3010
      %v3012 = vsub.f32 1.0, %v3011
      %v3013 = vmul.f32 %v3010, %v3012
      %v3014 = vadd.f32 %v3010, %v3013
      %vm3015 = vweird.f32 %v3009
      %vm3016 = vweird.f32 %v3010
      %vm3017 = vmor %vm3015, %vm3016
      %v3018 = vsel %vm3017, %v3010, %v3014
      %v3019 = vand.u32 2147483647, %v3009
      %vm3020 = vcmp.eq.f32.partialorder %v3019, 8.507059e+37
      %v3021 = vand.u32 %v3009, 2147483648
      %v3022 = vor.u32 1.1754944e-38, %v3021
      %v3023 = vsel %vm3020, %v3022, %v3018
      %v3024 = vmul.f32 1.0, %v3023
      %v3025 = vtanh.pop %v2985
      %v3026 = vxor.u32 %v2986, 2147483648
      %v3027 = vmul.f32 %v3026, 1.442695
      %v3028 = vpow.pop %v3027
      %v3029 = vadd.f32 %v3028, 1.0
      %v3030 = vrcp.pop %v3029
      %v3031 = vmul.f32 %v3029, %v3030
      %v3032 = vsub.f32 1.0, %v3031
      %v3033 = vmul.f32 %v3030, %v3032
      %v3034 = vadd.f32 %v3030, %v3033
      %vm3035 = vweird.f32 %v3029
      %vm3036 = vweird.f32 %v3030
      %vm3037 = vmor %vm3035, %vm3036
      %v3038 = vsel %vm3037, %v3030, %v3034
      %v3039 = vand.u32 2147483647, %v3029
      %vm3040 = vcmp.eq.f32.partialorder %v3039, 8.507059e+37
      %v3041 = vand.u32 %v3029, 2147483648
      %v3042 = vor.u32 1.1754944e-38, %v3041
      %v3043 = vsel %vm3040, %v3042, %v3038
      %v3044 = vmul.f32 1.0, %v3043
      %v3045 = vmul.f32 %v3024, %v2922
      %v3046 = vmul.f32 %v3005, %v3025
      %v3047 = vadd.f32 %v3045, %v3046
      %v3048 = vtanh.pop %v3047
      %v3049 = vmul.f32 %v3044, %v3048
      %v3050 = vpack.c.bf16 %v3049, %v3049
      %3051 = vst [vmem:[%s1502 + $0x4] sm:$0xf] %v3050
      %v3052 = vld [vmem:[%s1506] sm:$0xff]
      %v3053 = vld [vmem:[%s1506 + $0x8] sm:$0xff]
      %v3054 = vld [vmem:[%s1506 + $0x10] sm:$0xff]
      %v3055 = vld [vmem:[%s1506 + $0x18] sm:$0xff]
      %3056 = vmatpush.bf16.msra.mxu0 %v2145
      %3057 = vmatpush.bf16.msra.mxu0 %v2141
      %3058 = vmatpush.bf16.msra.mxu0 %v2137
      %3059 = vmatpush.bf16.msra.mxu0 %v2133
      %3060 = vmatpush.bf16.msra.mxu0 %v2129
      %3061 = vmatpush.bf16.msra.mxu0 %v2125
      %3062 = vmatpush.bf16.msra.mxu0 %v2121
      %3063 = vmatpush.bf16.msra.mxu0 %v2117
      %3064 = vmatmul.bf16.gmra.mxu0 %v3050
      %v3065 = vpop.f32.mrf.mxu0
      %v3066 = vadd.f32 0.0, %v3065
      %v3067 = vpop.f32.mrf.mxu0
      %3068 = vdwg.mxu0
      %3069 = vmatpush.bf16.msra.mxu0 %v2146
      %3070 = vmatpush.bf16.msra.mxu0 %v2142
      %3071 = vmatpush.bf16.msra.mxu0 %v2138
      %3072 = vmatpush.bf16.msra.mxu0 %v2134
      %3073 = vmatpush.bf16.msra.mxu0 %v2130
      %3074 = vmatpush.bf16.msra.mxu0 %v2126
      %3075 = vmatpush.bf16.msra.mxu0 %v2122
      %3076 = vmatpush.bf16.msra.mxu0 %v2118
      %3077 = vmatmul.bf16.gmra.mxu0 %v3050
      %v3078 = vpop.f32.mrf.mxu0
      %v3079 = vadd.f32 0.0, %v3078
      %v3080 = vpop.f32.mrf.mxu0
      %3081 = vdwg.mxu0
      %3082 = vmatpush.bf16.msra.mxu0 %v2147
      %3083 = vmatpush.bf16.msra.mxu0 %v2143
      %3084 = vmatpush.bf16.msra.mxu0 %v2139
      %3085 = vmatpush.bf16.msra.mxu0 %v2135
      %3086 = vmatpush.bf16.msra.mxu0 %v2131
      %3087 = vmatpush.bf16.msra.mxu0 %v2127
      %3088 = vmatpush.bf16.msra.mxu0 %v2123
      %3089 = vmatpush.bf16.msra.mxu0 %v2119
      %3090 = vmatmul.bf16.gmra.mxu0 %v3050
      %v3091 = vpop.f32.mrf.mxu0
      %v3092 = vadd.f32 0.0, %v3091
      %v3093 = vpop.f32.mrf.mxu0
      %3094 = vdwg.mxu0
      %3095 = vmatpush.bf16.msra.mxu0 %v2148
      %3096 = vmatpush.bf16.msra.mxu0 %v2144
      %3097 = vmatpush.bf16.msra.mxu0 %v2140
      %3098 = vmatpush.bf16.msra.mxu0 %v2136
      %3099 = vmatpush.bf16.msra.mxu0 %v2132
      %3100 = vmatpush.bf16.msra.mxu0 %v2128
      %3101 = vmatpush.bf16.msra.mxu0 %v2124
      %3102 = vmatpush.bf16.msra.mxu0 %v2120
      %3103 = vmatmul.bf16.gmra.mxu0 %v3050
      %v3104 = vpop.f32.mrf.mxu0
      %v3105 = vadd.f32 0.0, %v3104
      %v3106 = vpop.f32.mrf.mxu0
      %3107 = vdwg.mxu0
      %v3108 = vadd.f32 %v3052, %v3066
      %v3109 = vadd.f32 %v3053, %v3079
      %v3110 = vadd.f32 %v3054, %v3092
      %v3111 = vadd.f32 %v3055, %v3105
      %v3112 = vxor.u32 %v3108, 2147483648
      %v3113 = vmul.f32 %v3112, 1.442695
      %v3114 = vpow.pop %v3113
      %v3115 = vadd.f32 %v3114, 1.0
      %v3116 = vrcp.pop %v3115
      %v3117 = vmul.f32 %v3115, %v3116
      %v3118 = vsub.f32 1.0, %v3117
      %v3119 = vmul.f32 %v3116, %v3118
      %v3120 = vadd.f32 %v3116, %v3119
      %vm3121 = vweird.f32 %v3115
      %vm3122 = vweird.f32 %v3116
      %vm3123 = vmor %vm3121, %vm3122
      %v3124 = vsel %vm3123, %v3116, %v3120
      %v3125 = vand.u32 2147483647, %v3115
      %vm3126 = vcmp.eq.f32.partialorder %v3125, 8.507059e+37
      %v3127 = vand.u32 %v3115, 2147483648
      %v3128 = vor.u32 1.1754944e-38, %v3127
      %v3129 = vsel %vm3126, %v3128, %v3124
      %v3130 = vmul.f32 1.0, %v3129
      %v3131 = vxor.u32 %v3109, 2147483648
      %v3132 = vmul.f32 %v3131, 1.442695
      %v3133 = vpow.pop %v3132
      %v3134 = vadd.f32 %v3133, 1.0
      %v3135 = vrcp.pop %v3134
      %v3136 = vmul.f32 %v3134, %v3135
      %v3137 = vsub.f32 1.0, %v3136
      %v3138 = vmul.f32 %v3135, %v3137
      %v3139 = vadd.f32 %v3135, %v3138
      %vm3140 = vweird.f32 %v3134
      %vm3141 = vweird.f32 %v3135
      %vm3142 = vmor %vm3140, %vm3141
      %v3143 = vsel %vm3142, %v3135, %v3139
      %v3144 = vand.u32 2147483647, %v3134
      %vm3145 = vcmp.eq.f32.partialorder %v3144, 8.507059e+37
      %v3146 = vand.u32 %v3134, 2147483648
      %v3147 = vor.u32 1.1754944e-38, %v3146
      %v3148 = vsel %vm3145, %v3147, %v3143
      %v3149 = vmul.f32 1.0, %v3148
      %v3150 = vtanh.pop %v3110
      %v3151 = vxor.u32 %v3111, 2147483648
      %v3152 = vmul.f32 %v3151, 1.442695
      %v3153 = vpow.pop %v3152
      %v3154 = vadd.f32 %v3153, 1.0
      %v3155 = vrcp.pop %v3154
      %v3156 = vmul.f32 %v3154, %v3155
      %v3157 = vsub.f32 1.0, %v3156
      %v3158 = vmul.f32 %v3155, %v3157
      %v3159 = vadd.f32 %v3155, %v3158
      %vm3160 = vweird.f32 %v3154
      %vm3161 = vweird.f32 %v3155
      %vm3162 = vmor %vm3160, %vm3161
      %v3163 = vsel %vm3162, %v3155, %v3159
      %v3164 = vand.u32 2147483647, %v3154
      %vm3165 = vcmp.eq.f32.partialorder %v3164, 8.507059e+37
      %v3166 = vand.u32 %v3154, 2147483648
      %v3167 = vor.u32 1.1754944e-38, %v3166
      %v3168 = vsel %vm3165, %v3167, %v3163
      %v3169 = vmul.f32 1.0, %v3168
      %v3170 = vmul.f32 %v3149, %v3047
      %v3171 = vmul.f32 %v3130, %v3150
      %v3172 = vadd.f32 %v3170, %v3171
      %v3173 = vtanh.pop %v3172
      %v3174 = vmul.f32 %v3169, %v3173
      %v3175 = vpack.c.bf16 %v3174, %v3174
      %3176 = vst [vmem:[%s1633 + $0x4] sm:$0xf] %v3175
    $region61: #{tpu_custom_call.1} parent=1 // pred_fallthru
      _
    %v3177 = vld [vmem:[#allocation3] sm:$0xff]
    %v3178 = vld [vmem:[#allocation3 + $0x8] sm:$0xff]
    %v3179 = vld [vmem:[#allocation3 + $0x10] sm:$0xff]
    %v3180 = vld [vmem:[#allocation3 + $0x18] sm:$0xff]
    %v3181 = vld [vmem:[#allocation3 + $0x20] sm:$0xff]
    %v3182 = vld [vmem:[#allocation3 + $0x28] sm:$0xff]
    %v3183 = vld [vmem:[#allocation3 + $0x30] sm:$0xff]
    %v3184 = vld [vmem:[#allocation3 + $0x38] sm:$0xff]
    %v3185 = vld [vmem:[#allocation12] sm:$0xff]
    %v3186 = vld [vmem:[#allocation12 + $0x8] sm:$0xff]
    %v3187 = vld [vmem:[#allocation12 + $0x10] sm:$0xff]
    %v3188 = vld [vmem:[#allocation12 + $0x18] sm:$0xff]
    %v3189 = vld [vmem:[#allocation12 + $0x20] sm:$0xff]
    %v3190 = vld [vmem:[#allocation12 + $0x28] sm:$0xff]
    %v3191 = vld [vmem:[#allocation12 + $0x30] sm:$0xff]
    %v3192 = vld [vmem:[#allocation12 + $0x38] sm:$0xff]
    %v3193 = vld [vmem:[#allocation12 + $0x40] sm:$0xff]
    %v3194 = vld [vmem:[#allocation12 + $0x48] sm:$0xff]
    %v3195 = vld [vmem:[#allocation12 + $0x50] sm:$0xff]
    %v3196 = vld [vmem:[#allocation12 + $0x58] sm:$0xff]
    %v3197 = vld [vmem:[#allocation12 + $0x60] sm:$0xff]
    %v3198 = vld [vmem:[#allocation12 + $0x68] sm:$0xff]
    %v3199 = vld [vmem:[#allocation12 + $0x70] sm:$0xff]
    %v3200 = vld [vmem:[#allocation12 + $0x78] sm:$0xff]
    %v3201 = vld [vmem:[#allocation12 + $0x80] sm:$0xff]
    %v3202 = vld [vmem:[#allocation12 + $0x88] sm:$0xff]
    %v3203 = vld [vmem:[#allocation12 + $0x90] sm:$0xff]
    %v3204 = vld [vmem:[#allocation12 + $0x98] sm:$0xff]
    %v3205 = vld [vmem:[#allocation12 + $0xa0] sm:$0xff]
    %v3206 = vld [vmem:[#allocation12 + $0xa8] sm:$0xff]
    %v3207 = vld [vmem:[#allocation12 + $0xb0] sm:$0xff]
    %v3208 = vld [vmem:[#allocation12 + $0xb8] sm:$0xff]
    %v3209 = vld [vmem:[#allocation12 + $0xc0] sm:$0xff]
    %v3210 = vld [vmem:[#allocation12 + $0xc8] sm:$0xff]
    %v3211 = vld [vmem:[#allocation12 + $0xd0] sm:$0xff]
    %v3212 = vld [vmem:[#allocation12 + $0xd8] sm:$0xff]
    %v3213 = vld [vmem:[#allocation12 + $0xe0] sm:$0xff]
    %v3214 = vld [vmem:[#allocation12 + $0xe8] sm:$0xff]
    %v3215 = vld [vmem:[#allocation12 + $0xf0] sm:$0xff]
    %v3216 = vld [vmem:[#allocation12 + $0xf8] sm:$0xff]
    %v3217 = vld [vmem:[%s8] sm:$0x3]
    %v3219 = vperm.slane %v3217, 0
    %v3220 = vperm.slane %v3217, 1
    %v3231 = vunpack.c.l.b16 %v3177
    %v3232 = vunpack.c.h.b16 %v3177
    %v3233 = vunpack.c.l.b16 %v3178
    %v3234 = vunpack.c.h.b16 %v3178
    %v3235 = vunpack.c.l.b16 %v3179
    %v3236 = vunpack.c.h.b16 %v3179
    %v3237 = vunpack.c.l.b16 %v3180
    %v3238 = vunpack.c.h.b16 %v3180
    %v3239 = vunpack.c.l.b16 %v3181
    %v3240 = vunpack.c.h.b16 %v3181
    %v3241 = vunpack.c.l.b16 %v3182
    %v3242 = vunpack.c.h.b16 %v3182
    %v3243 = vunpack.c.l.b16 %v3183
    %v3244 = vunpack.c.h.b16 %v3183
    %v3245 = vunpack.c.l.b16 %v3184
    %v3246 = vunpack.c.h.b16 %v3184
    %v3247 = vpack.c.b16 %v3233, %v3231
    %v3248 = vpack.c.b16 %v3234, %v3232
    %v3249 = vpack.c.b16 %v3237, %v3235
    %v3250 = vpack.c.b16 %v3238, %v3236
    %v3251 = vpack.c.b16 %v3241, %v3239
    %v3252 = vpack.c.b16 %v3242, %v3240
    %v3253 = vpack.c.b16 %v3245, %v3243
    %v3254 = vpack.c.b16 %v3246, %v3244
    %v3295 = vunpack.c.l.b16 %v3185
    %v3296 = vunpack.c.h.b16 %v3185
    %v3297 = vunpack.c.l.b16 %v3186
    %v3298 = vunpack.c.h.b16 %v3186
    %v3299 = vunpack.c.l.b16 %v3187
    %v3300 = vunpack.c.h.b16 %v3187
    %v3301 = vunpack.c.l.b16 %v3188
    %v3302 = vunpack.c.h.b16 %v3188
    %v3303 = vunpack.c.l.b16 %v3189
    %v3304 = vunpack.c.h.b16 %v3189
    %v3305 = vunpack.c.l.b16 %v3190
    %v3306 = vunpack.c.h.b16 %v3190
    %v3307 = vunpack.c.l.b16 %v3191
    %v3308 = vunpack.c.h.b16 %v3191
    %v3309 = vunpack.c.l.b16 %v3192
    %v3310 = vunpack.c.h.b16 %v3192
    %v3311 = vunpack.c.l.b16 %v3193
    %v3312 = vunpack.c.h.b16 %v3193
    %v3313 = vunpack.c.l.b16 %v3194
    %v3314 = vunpack.c.h.b16 %v3194
    %v3315 = vunpack.c.l.b16 %v3195
    %v3316 = vunpack.c.h.b16 %v3195
    %v3317 = vunpack.c.l.b16 %v3196
    %v3318 = vunpack.c.h.b16 %v3196
    %v3319 = vunpack.c.l.b16 %v3197
    %v3320 = vunpack.c.h.b16 %v3197
    %v3321 = vunpack.c.l.b16 %v3198
    %v3322 = vunpack.c.h.b16 %v3198
    %v3323 = vunpack.c.l.b16 %v3199
    %v3324 = vunpack.c.h.b16 %v3199
    %v3325 = vunpack.c.l.b16 %v3200
    %v3326 = vunpack.c.h.b16 %v3200
    %v3327 = vunpack.c.l.b16 %v3201
    %v3328 = vunpack.c.h.b16 %v3201
    %v3329 = vunpack.c.l.b16 %v3202
    %v3330 = vunpack.c.h.b16 %v3202
    %v3331 = vunpack.c.l.b16 %v3203
    %v3332 = vunpack.c.h.b16 %v3203
    %v3333 = vunpack.c.l.b16 %v3204
    %v3334 = vunpack.c.h.b16 %v3204
    %v3335 = vunpack.c.l.b16 %v3205
    %v3336 = vunpack.c.h.b16 %v3205
    %v3337 = vunpack.c.l.b16 %v3206
    %v3338 = vunpack.c.h.b16 %v3206
    %v3339 = vunpack.c.l.b16 %v3207
    %v3340 = vunpack.c.h.b16 %v3207
    %v3341 = vunpack.c.l.b16 %v3208
    %v3342 = vunpack.c.h.b16 %v3208
    %v3343 = vunpack.c.l.b16 %v3209
    %v3344 = vunpack.c.h.b16 %v3209
    %v3345 = vunpack.c.l.b16 %v3210
    %v3346 = vunpack.c.h.b16 %v3210
    %v3347 = vunpack.c.l.b16 %v3211
    %v3348 = vunpack.c.h.b16 %v3211
    %v3349 = vunpack.c.l.b16 %v3212
    %v3350 = vunpack.c.h.b16 %v3212
    %v3351 = vunpack.c.l.b16 %v3213
    %v3352 = vunpack.c.h.b16 %v3213
    %v3353 = vunpack.c.l.b16 %v3214
    %v3354 = vunpack.c.h.b16 %v3214
    %v3355 = vunpack.c.l.b16 %v3215
    %v3356 = vunpack.c.h.b16 %v3215
    %v3357 = vunpack.c.l.b16 %v3216
    %v3358 = vunpack.c.h.b16 %v3216
    %v3359 = vpack.c.b16 %v3297, %v3295
    %v3360 = vpack.c.b16 %v3298, %v3296
    %v3361 = vpack.c.b16 %v3301, %v3299
    %v3362 = vpack.c.b16 %v3302, %v3300
    %v3363 = vpack.c.b16 %v3305, %v3303
    %v3364 = vpack.c.b16 %v3306, %v3304
    %v3365 = vpack.c.b16 %v3309, %v3307
    %v3366 = vpack.c.b16 %v3310, %v3308
    %v3367 = vpack.c.b16 %v3313, %v3311
    %v3368 = vpack.c.b16 %v3314, %v3312
    %v3369 = vpack.c.b16 %v3317, %v3315
    %v3370 = vpack.c.b16 %v3318, %v3316
    %v3371 = vpack.c.b16 %v3321, %v3319
    %v3372 = vpack.c.b16 %v3322, %v3320
    %v3373 = vpack.c.b16 %v3325, %v3323
    %v3374 = vpack.c.b16 %v3326, %v3324
    %v3375 = vpack.c.b16 %v3329, %v3327
    %v3376 = vpack.c.b16 %v3330, %v3328
    %v3377 = vpack.c.b16 %v3333, %v3331
    %v3378 = vpack.c.b16 %v3334, %v3332
    %v3379 = vpack.c.b16 %v3337, %v3335
    %v3380 = vpack.c.b16 %v3338, %v3336
    %v3381 = vpack.c.b16 %v3341, %v3339
    %v3382 = vpack.c.b16 %v3342, %v3340
    %v3383 = vpack.c.b16 %v3345, %v3343
    %v3384 = vpack.c.b16 %v3346, %v3344
    %v3385 = vpack.c.b16 %v3349, %v3347
    %v3386 = vpack.c.b16 %v3350, %v3348
    %v3387 = vpack.c.b16 %v3353, %v3351
    %v3388 = vpack.c.b16 %v3354, %v3352
    %v3389 = vpack.c.b16 %v3357, %v3355
    %v3390 = vpack.c.b16 %v3358, %v3356
    %3423 = vmatpush.bf16.msra.mxu0 %v3373
    %3424 = vmatpush.bf16.msra.mxu0 %v3371
    %3425 = vmatpush.bf16.msra.mxu0 %v3369
    %3426 = vmatpush.bf16.msra.mxu0 %v3367
    %3427 = vmatpush.bf16.msra.mxu0 %v3365
    %3428 = vmatpush.bf16.msra.mxu0 %v3363
    %3429 = vmatpush.bf16.msra.mxu0 %v3361
    %3430 = vmatpush.bf16.msra.mxu0 %v3359
    %3431 = vmatmul.bf16.gmra.mxu0 %v3247
    %v3432 = vpop.f32.mrf.mxu0
    %v3433 = vadd.f32 %v3219, %v3432
    %v3434 = vpop.f32.mrf.mxu0
    %v3435 = vadd.f32 %v3219, %v3434
    %3436 = vmatmul.bf16.gmra.mxu0 %v3249
    %v3437 = vpop.f32.mrf.mxu0
    %v3438 = vadd.f32 %v3219, %v3437
    %v3439 = vpop.f32.mrf.mxu0
    %v3440 = vadd.f32 %v3219, %v3439
    %3441 = vmatmul.bf16.gmra.mxu0 %v3251
    %v3442 = vpop.f32.mrf.mxu0
    %v3443 = vadd.f32 %v3219, %v3442
    %v3444 = vpop.f32.mrf.mxu0
    %v3445 = vadd.f32 %v3219, %v3444
    %3446 = vmatmul.bf16.gmra.mxu0 %v3253
    %v3447 = vpop.f32.mrf.mxu0
    %v3448 = vadd.f32 %v3219, %v3447
    %v3449 = vpop.f32.mrf.mxu0
    %v3450 = vadd.f32 %v3219, %v3449
    %3451 = vdwg.mxu0
    %3452 = vmatpush.bf16.msra.mxu0 %v3389
    %3453 = vmatpush.bf16.msra.mxu0 %v3387
    %3454 = vmatpush.bf16.msra.mxu0 %v3385
    %3455 = vmatpush.bf16.msra.mxu0 %v3383
    %3456 = vmatpush.bf16.msra.mxu0 %v3381
    %3457 = vmatpush.bf16.msra.mxu0 %v3379
    %3458 = vmatpush.bf16.msra.mxu0 %v3377
    %3459 = vmatpush.bf16.msra.mxu0 %v3375
    %3460 = vmatmul.bf16.gmra.mxu0 %v3248
    %v3461 = vpop.f32.mrf.mxu0
    %v3462 = vadd.f32 %v3433, %v3461
    %v3463 = vpop.f32.mrf.mxu0
    %v3464 = vadd.f32 %v3435, %v3463
    %3465 = vmatmul.bf16.gmra.mxu0 %v3250
    %v3466 = vpop.f32.mrf.mxu0
    %v3467 = vadd.f32 %v3438, %v3466
    %v3468 = vpop.f32.mrf.mxu0
    %v3469 = vadd.f32 %v3440, %v3468
    %3470 = vmatmul.bf16.gmra.mxu0 %v3252
    %v3471 = vpop.f32.mrf.mxu0
    %v3472 = vadd.f32 %v3443, %v3471
    %v3473 = vpop.f32.mrf.mxu0
    %v3474 = vadd.f32 %v3445, %v3473
    %3475 = vmatmul.bf16.gmra.mxu0 %v3254
    %v3476 = vpop.f32.mrf.mxu0
    %v3477 = vadd.f32 %v3448, %v3476
    %v3478 = vpop.f32.mrf.mxu0
    %v3479 = vadd.f32 %v3450, %v3478
    %3480 = vdwg.mxu0
    %3481 = vmatpush.bf16.msra.mxu0 %v3374
    %3482 = vmatpush.bf16.msra.mxu0 %v3372
    %3483 = vmatpush.bf16.msra.mxu0 %v3370
    %3484 = vmatpush.bf16.msra.mxu0 %v3368
    %3485 = vmatpush.bf16.msra.mxu0 %v3366
    %3486 = vmatpush.bf16.msra.mxu0 %v3364
    %3487 = vmatpush.bf16.msra.mxu0 %v3362
    %3488 = vmatpush.bf16.msra.mxu0 %v3360
    %3489 = vmatmul.bf16.gmra.mxu0 %v3247
    %v3490 = vpop.f32.mrf.mxu0
    %v3491 = vadd.f32 %v3220, %v3490
    %v3492 = vpop.f32.mrf.mxu0
    %v3493 = vadd.f32 %v3220, %v3492
    %3494 = vmatmul.bf16.gmra.mxu0 %v3249
    %v3495 = vpop.f32.mrf.mxu0
    %v3496 = vadd.f32 %v3220, %v3495
    %v3497 = vpop.f32.mrf.mxu0
    %v3498 = vadd.f32 %v3220, %v3497
    %3499 = vmatmul.bf16.gmra.mxu0 %v3251
    %v3500 = vpop.f32.mrf.mxu0
    %v3501 = vadd.f32 %v3220, %v3500
    %v3502 = vpop.f32.mrf.mxu0
    %v3503 = vadd.f32 %v3220, %v3502
    %3504 = vmatmul.bf16.gmra.mxu0 %v3253
    %v3505 = vpop.f32.mrf.mxu0
    %v3506 = vadd.f32 %v3220, %v3505
    %v3507 = vpop.f32.mrf.mxu0
    %v3508 = vadd.f32 %v3220, %v3507
    %3509 = vdwg.mxu0
    %3510 = vmatpush.bf16.msra.mxu0 %v3390
    %3511 = vmatpush.bf16.msra.mxu0 %v3388
    %3512 = vmatpush.bf16.msra.mxu0 %v3386
    %3513 = vmatpush.bf16.msra.mxu0 %v3384
    %3514 = vmatpush.bf16.msra.mxu0 %v3382
    %3515 = vmatpush.bf16.msra.mxu0 %v3380
    %3516 = vmatpush.bf16.msra.mxu0 %v3378
    %3517 = vmatpush.bf16.msra.mxu0 %v3376
    %3518 = vmatmul.bf16.gmra.mxu0 %v3248
    %v3519 = vpop.f32.mrf.mxu0
    %v3520 = vadd.f32 %v3491, %v3519
    %v3521 = vpop.f32.mrf.mxu0
    %v3522 = vadd.f32 %v3493, %v3521
    %3523 = vmatmul.bf16.gmra.mxu0 %v3250
    %v3524 = vpop.f32.mrf.mxu0
    %v3525 = vadd.f32 %v3496, %v3524
    %v3526 = vpop.f32.mrf.mxu0
    %v3527 = vadd.f32 %v3498, %v3526
    %3528 = vmatmul.bf16.gmra.mxu0 %v3252
    %v3529 = vpop.f32.mrf.mxu0
    %v3530 = vadd.f32 %v3501, %v3529
    %v3531 = vpop.f32.mrf.mxu0
    %v3532 = vadd.f32 %v3503, %v3531
    %3533 = vmatmul.bf16.gmra.mxu0 %v3254
    %v3534 = vpop.f32.mrf.mxu0
    %v3535 = vadd.f32 %v3506, %v3534
    %v3536 = vpop.f32.mrf.mxu0
    %v3537 = vadd.f32 %v3508, %v3536
    %3538 = vdwg.mxu0
    %3539 = vst [vmem:[#allocation13] sm:$0xff] %v3462
    %3540 = vst [vmem:[#allocation13 + $0x8] sm:$0xff] %v3520
    %3541 = vst [vmem:[#allocation13 + $0x10] sm:$0xff] %v3464
    %3542 = vst [vmem:[#allocation13 + $0x18] sm:$0xff] %v3522
    %3543 = vst [vmem:[#allocation13 + $0x20] sm:$0xff] %v3467
    %3544 = vst [vmem:[#allocation13 + $0x28] sm:$0xff] %v3525
    %3545 = vst [vmem:[#allocation13 + $0x30] sm:$0xff] %v3469
    %3546 = vst [vmem:[#allocation13 + $0x38] sm:$0xff] %v3527
    %3547 = vst [vmem:[#allocation13 + $0x40] sm:$0xff] %v3472
    %3548 = vst [vmem:[#allocation13 + $0x48] sm:$0xff] %v3530
    %3549 = vst [vmem:[#allocation13 + $0x50] sm:$0xff] %v3474
    %3550 = vst [vmem:[#allocation13 + $0x58] sm:$0xff] %v3532
    %3551 = vst [vmem:[#allocation13 + $0x60] sm:$0xff] %v3477
    %3552 = vst [vmem:[#allocation13 + $0x68] sm:$0xff] %v3535
    %3553 = vst [vmem:[#allocation13 + $0x70] sm:$0xff] %v3479
    %3554 = vst [vmem:[#allocation13 + $0x78] sm:$0xff] %v3537
    // Predicated region
    $region62: #{tpu_custom_call.1} parent=1 // pred_check
      _
    $region63: #{tpu_custom_call.1} parent=1 // pred_check_branch
      %3556 = sbr.rel (0) target = $region65
    $region64: #{tpu_custom_call.1} parent=1 // pred_region
      %3558 = vsyncadd [#allocation6], 0
      %s3559 = sshll.u32 [#allocation13], 4
      %s3560 = int_to_ptr.vmem [resolvable:$true] %s3559
      %s3561 = sshll.u32 %s9, 4
      %s3562 = int_to_ptr.hbm [resolvable:$true] %s3561
      %3567 = dma.vmem_to_hbm [thread:$0]  %s3560, 2048, %s3562, [#allocation6], 256, 256, 16
    $region65: #{tpu_custom_call.1} parent=1 // pred_fallthru
      _
    // Predicated region
    $region66: #{tpu_custom_call.1} parent=1 // pred_check
      _
    $region67: #{tpu_custom_call.1} parent=1 // pred_check_branch
      %3569 = sbr.rel (0) target = $region69
    $region68: #{tpu_custom_call.1} parent=1 // pred_region
      %3571 = dma.done [#allocation6], 2048
    $region69: #{tpu_custom_call.1} parent=1 // pred_fallthru
      _
    %3572 = vsyncpa [#allocation5], 1
    %3573 = vsyncpa [#allocation8], 1
    %3574 = vsyncpa [#allocation11], 1
    %3575 = vsyncpa [#allocation6], 1

</llo_original>
